<compile_context>
chip_gen: v7x
topology: tpu7x:2x2x1
jax: 0.10.0
libtpu: 0.0.40
codegen_flags: <defaults>
</compile_context>

<pallas_src>
import jax
import jax.numpy as jnp
from jax.experimental import pallas as pl
from jax.experimental.pallas import tpu as pltpu


# ----------------------------------------------------------------------------
# Pallas kernels
# ----------------------------------------------------------------------------

def _conv_bn_relu_pool_kernel(p_ref, w_ref, scale_ref, shift_ref, o_ref):
    """Fused Conv(matmul) + folded bias/BN affine + ReLU + 2x2 MaxPool.

    p_ref:     [TM, g*4*9*Cin]       bf16 patches; each row = g pooled pixels x
               4 pool quadrants x 3x3xCin conv taps.
    w_ref:     [g*4*9*Cin, 4*g*Cout] bf16 block-diagonal weight; output lanes
               ordered (quadrant, pixel-in-group, channel), g*Cout == 128.
    scale/shift: [1, 4*g*Cout] f32 folded conv-bias + BN(eval) affine.
    o_ref:     [TM, g*Cout] bf16 pooled output (lane-dense, 128 lanes).
    """
    res = jnp.dot(p_ref[...], w_ref[...], preferred_element_type=jnp.float32)
    res = jnp.maximum(res * scale_ref[...] + shift_ref[...], 0.0)
    gc = o_ref.shape[1]                       # g * Cout (= 128)
    pooled = jnp.maximum(jnp.maximum(res[:, 0 * gc:1 * gc], res[:, 1 * gc:2 * gc]),
                         jnp.maximum(res[:, 2 * gc:3 * gc], res[:, 3 * gc:4 * gc]))
    o_ref[...] = pooled.astype(o_ref.dtype)


def _layer3_head_kernel(p_ref, w3_ref, sc_ref, sh_ref,
                        w1_ref, b1_ref, w2_ref, b2_ref, o_ref):
    """Fused layer3 (conv+BN+ReLU+pool) + fc1 + ReLU + fc2.

    p_ref rows are ordered (spatial position p, padded batch b8); fc1 is computed
    as per-position [Cout, 10] matmuls accumulated over the 9 positions, so no
    flatten / transpose / reshape is needed in-kernel.
    """
    res = jnp.dot(p_ref[...], w3_ref[...], preferred_element_type=jnp.float32)
    res = jnp.maximum(res * sc_ref[...] + sh_ref[...], 0.0)          # [9*B8, 4*C]
    c = w3_ref.shape[1] // 4                                         # Cout (64)
    pooled = jnp.maximum(jnp.maximum(res[:, 0 * c:1 * c], res[:, 1 * c:2 * c]),
                         jnp.maximum(res[:, 2 * c:3 * c], res[:, 3 * c:4 * c]))
    b8 = o_ref.shape[0]
    npos = w1_ref.shape[0] // c                                      # 9 positions
    acc = jnp.zeros((b8, w1_ref.shape[1]), jnp.float32)
    for p in range(npos):                     # static unroll; 8-aligned row slices
        acc = acc + jnp.dot(pooled[p * b8:(p + 1) * b8, :],
                            w1_ref[p * c:(p + 1) * c, :],
                            preferred_element_type=jnp.float32)
    h = jnp.maximum(acc + b1_ref[...], 0.0)
    o_ref[...] = jnp.dot(h, w2_ref[...],
                         preferred_element_type=jnp.float32) + b2_ref[...]


# ----------------------------------------------------------------------------
# Wrapper-side glue (im2col patch extraction, tiling)
# ----------------------------------------------------------------------------

def _round_up(x, m):
    return ((x + m - 1) // m) * m


def _pool_conv_patches(x_nhwc, hp, wp):
    """im2col of the 4 pool-quadrant conv patches, as ONE concatenated array.

    out[b, i, j, q*9*C + (kh*3+kw)*C + c] = x[b, 4i + 2dh + kh, 4j + 2dw + kw, c]
    with q = dh*2 + dw: the patches feeding the four conv pixels max-pooled into
    pooled pixel (i, j).
    """
    cols = []
    for dh in range(2):
        for dw in range(2):
            for kh in range(3):
                for kw in range(3):
                    h0 = 2 * dh + kh
                    w0 = 2 * dw + kw
                    cols.append(x_nhwc[:, h0:h0 + 4 * (hp - 1) + 1:4,
                                          w0:w0 + 4 * (wp - 1) + 1:4, :])
    return jnp.concatenate(cols, axis=-1)                # [B, hp, wp, 4*9*C]


def conv_bn_relu_pool(x_nhwc, lp, tm_max=128):
    """Conv2d(k=3, s=2, p=0) + BatchNorm2d(eval) + ReLU + MaxPool2d(2) (layers 1-2)."""
    B, H, W, Cin = x_nhwc.shape
    Cout, g = lp["cout"], lp["g"]
    Ho, Wo = (H - 3) // 2 + 1, (W - 3) // 2 + 1
    Hp, Wp = Ho // 2, Wo // 2                            # floor-mode pool
    K4 = 4 * 9 * Cin
    M = B * Hp * Wp
    Mpad = _round_up(M, g)
    Mg = Mpad // g

    patches = _pool_conv_patches(x_nhwc, Hp, Wp).reshape(M, K4)
    patches = jnp.pad(patches, ((0, Mpad - M), (0, 0)))
    patches = patches.reshape(Mg, g * K4).astype(jnp.bfloat16)

    tm = Mg if Mg <= tm_max else tm_max                  # tm_max is a multiple of 8
    grid = (pl.cdiv(Mg, tm),)
    out = pl.pallas_call(
        _conv_bn_relu_pool_kernel,
        out_shape=jax.ShapeDtypeStruct((Mg, g * Cout), jnp.bfloat16),
        grid=grid,
        in_specs=[pl.BlockSpec((tm, g * K4), lambda i: (i, 0)),
                  pl.BlockSpec((g * K4, 4 * g * Cout), lambda i: (0, 0)),
                  pl.BlockSpec((1, 4 * g * Cout), lambda i: (0, 0)),
                  pl.BlockSpec((1, 4 * g * Cout), lambda i: (0, 0))],
        out_specs=pl.BlockSpec((tm, g * Cout), lambda i: (i, 0)),
        compiler_params=pltpu.CompilerParams(
            dimension_semantics=("parallel",)),
    )(patches, lp["wbig"], lp["scale4"], lp["shift4"])

    # Lane-dense [Mg, g*Cout] is the same linear layout as [Mpad, Cout]: free reshape.
    return out.reshape(Mpad, Cout)[:M].reshape(B, Hp, Wp, Cout)


def layer3_and_head(x_nhwc, l3, head):
    """Fused layer3 (Conv+BN+ReLU+Pool) + flatten + fc1 + ReLU + fc2."""
    B, H, W, Cin = x_nhwc.shape
    Ho, Wo = (H - 3) // 2 + 1, (W - 3) // 2 + 1
    Hp, Wp = Ho // 2, Wo // 2
    K4 = 4 * 9 * Cin
    B8 = max(8, _round_up(B, 8))   # pad batch so per-position row blocks are 8-aligned

    p3 = _pool_conv_patches(x_nhwc, Hp, Wp)                        # [B, Hp, Wp, K4]
    p3 = jnp.pad(p3, ((0, B8 - B), (0, 0), (0, 0), (0, 0)))
    # rows ordered (spatial position, batch) so the head's per-position slices are
    # contiguous and sublane-aligned.
    p3 = jnp.transpose(p3, (1, 2, 0, 3)).reshape(Hp * Wp * B8, K4).astype(jnp.bfloat16)

    out = pl.pallas_call(
        _layer3_head_kernel,
        out_shape=jax.ShapeDtypeStruct((B8, head["w2"].shape[1]), jnp.float32),
    )(p3, l3["wbig"], l3["scale4"], l3["shift4"],
      head["w1"], head["b1"], head["w2"], head["b2"])
    return out[:B]


# ----------------------------------------------------------------------------
# Full model
# ----------------------------------------------------------------------------

def cnn_forward(x_nchw, prep):
    x = jnp.transpose(x_nchw, (0, 2, 3, 1)).astype(jnp.bfloat16)   # NCHW -> NHWC, bf16
    for lp in prep["convs"]:                                       # layers 1 and 2
        x = conv_bn_relu_pool(x, lp)
    # NOTE: self.dropout is defined in __init__ but never used in forward().
    return layer3_and_head(x, prep["layer3"], prep["head"])


# ----------------------------------------------------------------------------
# One-time parameter preparation (hoisted out of the per-forward path)
# ----------------------------------------------------------------------------

def _prep_conv(lp, g, eps=1e-5):
    cout, cin = int(lp["w"].shape[0]), int(lp["w"].shape[1])
    k = 9 * cin
    # weight [Cout, Cin, kh, kw] -> [K=(kh,kw,cin), Cout] matching the patch layout
    wmat = jnp.transpose(lp["w"], (2, 3, 1, 0)).reshape(k, cout)
    # fold conv bias + BN (inference / running stats) into a per-channel affine
    scale = lp["gamma"] / jnp.sqrt(lp["var"] + eps)
    shift = (lp["conv_b"] - lp["mean"]) * scale + lp["beta"]
    # block-diagonal expansion: patch features ordered (pixel-in-group, quadrant, k),
    # output lanes ordered (quadrant, pixel-in-group, channel).
    wbig = jnp.zeros((g * 4 * k, 4 * g * cout), jnp.float32)
    for gi in range(g):
        for q in range(4):
            wbig = wbig.at[gi * 4 * k + q * k:gi * 4 * k + (q + 1) * k,
                           q * g * cout + gi * cout:q * g * cout + (gi + 1) * cout
                           ].set(wmat)
    return dict(
        wbig=wbig.astype(jnp.bfloat16),
        scale4=jnp.tile(scale, 4 * g).reshape(1, -1).astype(jnp.float32),
        shift4=jnp.tile(shift, 4 * g).reshape(1, -1).astype(jnp.float32),
        cout=cout, g=g)


def prepare_params(params, eps=1e-5):
    # layers 1 & 2: lane-dense grouped kernels (g pooled pixels per output row);
    # layer 3: fused with the MLP head (g=1, output consumed in-kernel).
    convs = []
    for lp in params["layers"][:2]:
        cout = int(lp["w"].shape[0])
        convs.append(_prep_conv(lp, max(1, 128 // cout), eps))
    l3 = _prep_conv(params["layers"][2], 1, eps)

    cf = int(params["layers"][2]["w"].shape[0])          # 64
    w1 = params["fc1_w"]                                 # [576, 10], rows in (c, h, w)
    npos = w1.shape[0] // cf                             # 9 spatial positions
    # re-order fc1 rows to (position, channel) to match the fused head's row layout
    w1k = w1.reshape(cf, npos, -1).transpose(1, 0, 2).reshape(w1.shape[0], -1)
    head = dict(w1=w1k.astype(jnp.float32),
                b1=params["fc1_b"].reshape(1, -1).astype(jnp.float32),
                w2=params["fc2_w"].astype(jnp.float32),
                b2=params["fc2_b"].reshape(1, -1).astype(jnp.float32))
    return dict(convs=convs, layer3=l3, head=head)


def init_params(key):
    def conv_layer(k, cin, cout):
        k1, k2, k3, k4, k5, k6 = jax.random.split(k, 6)
        fan_in = cin * 9
        return dict(
            w=jax.random.normal(k1, (cout, cin, 3, 3), jnp.float32)
              / jnp.sqrt(jnp.float32(fan_in)),
            conv_b=0.01 * jax.random.normal(k2, (cout,), jnp.float32),
            gamma=1.0 + 0.1 * jax.random.normal(k3, (cout,), jnp.float32),
            beta=0.1 * jax.random.normal(k4, (cout,), jnp.float32),
            mean=0.1 * jax.random.normal(k5, (cout,), jnp.float32),
            var=1.0 + jnp.abs(jax.random.normal(k6, (cout,), jnp.float32)),
        )

    k1, k2, k3, k4, k5, k6, k7 = jax.random.split(key, 7)
    return dict(
        layers=[conv_layer(k1, 3, 16),
                conv_layer(k2, 16, 32),
                conv_layer(k3, 32, 64)],
        # fc1_w rows in PyTorch flatten order (c, h, w), stored [in, out].
        # NOTE: a real nn.Linear checkpoint is [out, in] and would need a transpose.
        fc1_w=jax.random.normal(k4, (576, 10), jnp.float32) / jnp.sqrt(576.0),
        fc1_b=0.01 * jax.random.normal(k5, (10,), jnp.float32),
        fc2_w=jax.random.normal(k6, (10, 2), jnp.float32) / jnp.sqrt(10.0),
        fc2_b=0.01 * jax.random.normal(k7, (2,), jnp.float32),
    )


if __name__ == "__main__":
    key = jax.random.PRNGKey(0)
    kx, kp = jax.random.split(key)
    # batch=2, 3 channels, 224x224 (the spatial size nn.Linear(3*3*64, 10) implies)
    x = jax.random.normal(kx, (2, 3, 224, 224), jnp.float32)
    params = init_params(kp)
    prep = prepare_params(params)        # one-time, outside the jitted forward

    fwd = jax.jit(lambda inp: cnn_forward(inp, prep))
    out = jax.block_until_ready(fwd(x))

    assert out.shape == (2, 2), out.shape
    assert bool(jnp.all(jnp.isfinite(out)))
    print("KERNEL_OK")
</pallas_src>

<mosaic_0001>
module attributes {stable_mosaic.version = 11 : i64} {
  func.func @_conv_bn_relu_pool_kernel(%arg0: i32, %arg1: memref<128x864xbf16, #tpu.memory_space<vmem>>, %arg2: memref<864x512xbf16, #tpu.memory_space<vmem>>, %arg3: memref<1x512xf32, #tpu.memory_space<vmem>>, %arg4: memref<1x512xf32, #tpu.memory_space<vmem>>, %arg5: memref<128x128xbf16, #tpu.memory_space<vmem>>) attributes {dimension_semantics = [#tpu.dimension_semantics<parallel>], iteration_bounds = array<i64: 6>, scalar_prefetch = 0 : i64, scratch_operands = 0 : i64, tpu.core_type = #tpu.core_type<tc>, window_params = [{transform_indices = @transform_0, window_bounds = array<i64: 128, 864>}, {pipeline_mode = #tpu.pipeline_mode<synchronous>, transform_indices = @transform_1, window_bounds = array<i64: 864, 512>}, {pipeline_mode = #tpu.pipeline_mode<synchronous>, transform_indices = @transform_2, window_bounds = array<i64: 1, 512>}, {pipeline_mode = #tpu.pipeline_mode<synchronous>, transform_indices = @transform_3, window_bounds = array<i64: 1, 512>}, {transform_indices = @transform_4, window_bounds = array<i64: 128, 128>}]} {
    %c0 = arith.constant 0 : index
    %c0_0 = arith.constant 0 : index
    %0 = vector.load %arg1[%c0, %c0_0] : memref<128x864xbf16, #tpu.memory_space<vmem>>, vector<128x864xbf16>
    %c0_1 = arith.constant 0 : index
    %c0_2 = arith.constant 0 : index
    %1 = vector.load %arg2[%c0_1, %c0_2] : memref<864x512xbf16, #tpu.memory_space<vmem>>, vector<864x512xbf16>
    %cst = arith.constant dense<0.000000e+00> : vector<128x512xf32>
    %2 = tpu.matmul %0, %1, %cst {dimension_numbers = #tpu.dot_dimension_numbers<[1], [0], [0], [1], [0, 0, 1, 1], [], []>} : vector<128x864xbf16>, vector<864x512xbf16>, vector<128x512xf32> -> vector<128x512xf32>
    %c0_3 = arith.constant 0 : index
    %c0_4 = arith.constant 0 : index
    %3 = vector.load %arg3[%c0_3, %c0_4] : memref<1x512xf32, #tpu.memory_space<vmem>>, vector<1x512xf32>
    %4 = vector.broadcast %3 : vector<1x512xf32> to vector<128x512xf32>
    %5 = arith.mulf %2, %4 : vector<128x512xf32>
    %c0_5 = arith.constant 0 : index
    %c0_6 = arith.constant 0 : index
    %6 = vector.load %arg4[%c0_5, %c0_6] : memref<1x512xf32, #tpu.memory_space<vmem>>, vector<1x512xf32>
    %7 = vector.broadcast %6 : vector<1x512xf32> to vector<128x512xf32>
    %8 = arith.addf %5, %7 : vector<128x512xf32>
    %cst_7 = arith.constant 0.000000e+00 : f32
    %9 = vector.broadcast %cst_7 : f32 to vector<128x512xf32>
    %10 = arith.maximumf %8, %9 : vector<128x512xf32>
    %11 = vector.extract_strided_slice %10 {offsets = [0, 0], sizes = [128, 128], strides = [1, 1]} : vector<128x512xf32> to vector<128x128xf32>
    %12 = vector.extract_strided_slice %10 {offsets = [0, 128], sizes = [128, 128], strides = [1, 1]} : vector<128x512xf32> to vector<128x128xf32>
    %13 = arith.maximumf %11, %12 : vector<128x128xf32>
    %14 = vector.extract_strided_slice %10 {offsets = [0, 256], sizes = [128, 128], strides = [1, 1]} : vector<128x512xf32> to vector<128x128xf32>
    %15 = vector.extract_strided_slice %10 {offsets = [0, 384], sizes = [128, 128], strides = [1, 1]} : vector<128x512xf32> to vector<128x128xf32>
    %16 = arith.maximumf %14, %15 : vector<128x128xf32>
    %17 = arith.maximumf %13, %16 : vector<128x128xf32>
    %18 = arith.truncf %17 : vector<128x128xf32> to vector<128x128xbf16>
    %c0_8 = arith.constant 0 : index
    %c0_9 = arith.constant 0 : index
    %19 = vector.load %arg5[%c0_8, %c0_9] : memref<128x128xbf16, #tpu.memory_space<vmem>>, vector<128x128xbf16>
    tpu.vector_store %arg5[%c0_8, %c0_9], %18 {strides = array<i32>} : memref<128x128xbf16, #tpu.memory_space<vmem>>, vector<128x128xbf16>,
    return
  }
  func.func @transform_0(%arg0: i32) -> (i32, i32) {
    %c0_i32 = arith.constant 0 : i32
    %c0_i32_0 = arith.constant 0 : i32
    return %arg0, %c0_i32 : i32, i32
  }
  func.func @transform_1(%arg0: i32) -> (i32, i32) {
    %c0_i32 = arith.constant 0 : i32
    %c0_i32_0 = arith.constant 0 : i32
    %c0_i32_1 = arith.constant 0 : i32
    return %c0_i32, %c0_i32_0 : i32, i32
  }
  func.func @transform_2(%arg0: i32) -> (i32, i32) {
    %c0_i32 = arith.constant 0 : i32
    %c0_i32_0 = arith.constant 0 : i32
    %c0_i32_1 = arith.constant 0 : i32
    return %c0_i32, %c0_i32_0 : i32, i32
  }
  func.func @transform_3(%arg0: i32) -> (i32, i32) {
    %c0_i32 = arith.constant 0 : i32
    %c0_i32_0 = arith.constant 0 : i32
    %c0_i32_1 = arith.constant 0 : i32
    return %c0_i32, %c0_i32_0 : i32, i32
  }
  func.func @transform_4(%arg0: i32) -> (i32, i32) {
    %c0_i32 = arith.constant 0 : i32
    %c0_i32_0 = arith.constant 0 : i32
    return %arg0, %c0_i32 : i32, i32
  }
}

module attributes {stable_mosaic.version = 11 : i64} {
  func.func @_conv_bn_relu_pool_kernel(%arg0: i32, %arg1: memref<85x2304xbf16, #tpu.memory_space<vmem>>, %arg2: memref<2304x512xbf16, #tpu.memory_space<vmem>>, %arg3: memref<1x512xf32, #tpu.memory_space<vmem>>, %arg4: memref<1x512xf32, #tpu.memory_space<vmem>>, %arg5: memref<85x128xbf16, #tpu.memory_space<vmem>>) attributes {dimension_semantics = [#tpu.dimension_semantics<parallel>], iteration_bounds = array<i64: 1>, scalar_prefetch = 0 : i64, scratch_operands = 0 : i64, tpu.core_type = #tpu.core_type<tc>, window_params = [{transform_indices = @transform_0, window_bounds = array<i64: 85, 2304>}, {pipeline_mode = #tpu.pipeline_mode<synchronous>, transform_indices = @transform_1, window_bounds = array<i64: 2304, 512>}, {pipeline_mode = #tpu.pipeline_mode<synchronous>, transform_indices = @transform_2, window_bounds = array<i64: 1, 512>}, {pipeline_mode = #tpu.pipeline_mode<synchronous>, transform_indices = @transform_3, window_bounds = array<i64: 1, 512>}, {transform_indices = @transform_4, window_bounds = array<i64: 85, 128>}]} {
    %c0 = arith.constant 0 : index
    %c0_0 = arith.constant 0 : index
    %0 = vector.load %arg1[%c0, %c0_0] : memref<85x2304xbf16, #tpu.memory_space<vmem>>, vector<85x2304xbf16>
    %c0_1 = arith.constant 0 : index
    %c0_2 = arith.constant 0 : index
    %1 = vector.load %arg2[%c0_1, %c0_2] : memref<2304x512xbf16, #tpu.memory_space<vmem>>, vector<2304x512xbf16>
    %cst = arith.constant dense<0.000000e+00> : vector<85x512xf32>
    %2 = tpu.matmul %0, %1, %cst {dimension_numbers = #tpu.dot_dimension_numbers<[1], [0], [0], [1], [0, 0, 1, 1], [], []>} : vector<85x2304xbf16>, vector<2304x512xbf16>, vector<85x512xf32> -> vector<85x512xf32>
    %c0_3 = arith.constant 0 : index
    %c0_4 = arith.constant 0 : index
    %3 = vector.load %arg3[%c0_3, %c0_4] : memref<1x512xf32, #tpu.memory_space<vmem>>, vector<1x512xf32>
    %4 = vector.broadcast %3 : vector<1x512xf32> to vector<85x512xf32>
    %5 = arith.mulf %2, %4 : vector<85x512xf32>
    %c0_5 = arith.constant 0 : index
    %c0_6 = arith.constant 0 : index
    %6 = vector.load %arg4[%c0_5, %c0_6] : memref<1x512xf32, #tpu.memory_space<vmem>>, vector<1x512xf32>
    %7 = vector.broadcast %6 : vector<1x512xf32> to vector<85x512xf32>
    %8 = arith.addf %5, %7 : vector<85x512xf32>
    %cst_7 = arith.constant 0.000000e+00 : f32
    %9 = vector.broadcast %cst_7 : f32 to vector<85x512xf32>
    %10 = arith.maximumf %8, %9 : vector<85x512xf32>
    %11 = vector.extract_strided_slice %10 {offsets = [0, 0], sizes = [85, 128], strides = [1, 1]} : vector<85x512xf32> to vector<85x128xf32>
    %12 = vector.extract_strided_slice %10 {offsets = [0, 128], sizes = [85, 128], strides = [1, 1]} : vector<85x512xf32> to vector<85x128xf32>
    %13 = arith.maximumf %11, %12 : vector<85x128xf32>
    %14 = vector.extract_strided_slice %10 {offsets = [0, 256], sizes = [85, 128], strides = [1, 1]} : vector<85x512xf32> to vector<85x128xf32>
    %15 = vector.extract_strided_slice %10 {offsets = [0, 384], sizes = [85, 128], strides = [1, 1]} : vector<85x512xf32> to vector<85x128xf32>
    %16 = arith.maximumf %14, %15 : vector<85x128xf32>
    %17 = arith.maximumf %13, %16 : vector<85x128xf32>
    %18 = arith.truncf %17 : vector<85x128xf32> to vector<85x128xbf16>
    %c0_8 = arith.constant 0 : index
    %c0_9 = arith.constant 0 : index
    %19 = vector.load %arg5[%c0_8, %c0_9] : memref<85x128xbf16, #tpu.memory_space<vmem>>, vector<85x128xbf16>
    tpu.vector_store %arg5[%c0_8, %c0_9], %18 {strides = array<i32>} : memref<85x128xbf16, #tpu.memory_space<vmem>>, vector<85x128xbf16>,
    return
  }
  func.func @transform_0(%arg0: i32) -> (i32, i32) {
    %c0_i32 = arith.constant 0 : i32
    %c0_i32_0 = arith.constant 0 : i32
    return %arg0, %c0_i32 : i32, i32
  }
  func.func @transform_1(%arg0: i32) -> (i32, i32) {
    %c0_i32 = arith.constant 0 : i32
    %c0_i32_0 = arith.constant 0 : i32
    %c0_i32_1 = arith.constant 0 : i32
    return %c0_i32, %c0_i32_0 : i32, i32
  }
  func.func @transform_2(%arg0: i32) -> (i32, i32) {
    %c0_i32 = arith.constant 0 : i32
    %c0_i32_0 = arith.constant 0 : i32
    %c0_i32_1 = arith.constant 0 : i32
    return %c0_i32, %c0_i32_0 : i32, i32
  }
  func.func @transform_3(%arg0: i32) -> (i32, i32) {
    %c0_i32 = arith.constant 0 : i32
    %c0_i32_0 = arith.constant 0 : i32
    %c0_i32_1 = arith.constant 0 : i32
    return %c0_i32, %c0_i32_0 : i32, i32
  }
  func.func @transform_4(%arg0: i32) -> (i32, i32) {
    %c0_i32 = arith.constant 0 : i32
    %c0_i32_0 = arith.constant 0 : i32
    return %arg0, %c0_i32 : i32, i32
  }
}

module attributes {stable_mosaic.version = 11 : i64} {
  func.func @_layer3_head_kernel(%arg0: memref<72x1152xbf16, #tpu.memory_space<vmem>>, %arg1: memref<1152x256xbf16, #tpu.memory_space<vmem>>, %arg2: memref<1x256xf32, #tpu.memory_space<vmem>>, %arg3: memref<1x256xf32, #tpu.memory_space<vmem>>, %arg4: memref<576x10xf32, #tpu.memory_space<vmem>>, %arg5: memref<1x10xf32, #tpu.memory_space<vmem>>, %arg6: memref<10x2xf32, #tpu.memory_space<vmem>>, %arg7: memref<1x2xf32, #tpu.memory_space<vmem>>, %arg8: memref<8x2xf32, #tpu.memory_space<vmem>>) attributes {dimension_semantics = [], scalar_prefetch = 0 : i64, scratch_operands = 0 : i64, tpu.core_type = #tpu.core_type<tc>} {
    %c0 = arith.constant 0 : index
    %c0_0 = arith.constant 0 : index
    %0 = vector.load %arg0[%c0, %c0_0] : memref<72x1152xbf16, #tpu.memory_space<vmem>>, vector<72x1152xbf16>
    %c0_1 = arith.constant 0 : index
    %c0_2 = arith.constant 0 : index
    %1 = vector.load %arg1[%c0_1, %c0_2] : memref<1152x256xbf16, #tpu.memory_space<vmem>>, vector<1152x256xbf16>
    %cst = arith.constant dense<0.000000e+00> : vector<72x256xf32>
    %2 = tpu.matmul %0, %1, %cst {dimension_numbers = #tpu.dot_dimension_numbers<[1], [0], [0], [1], [0, 0, 1, 1], [], []>} : vector<72x1152xbf16>, vector<1152x256xbf16>, vector<72x256xf32> -> vector<72x256xf32>
    %c0_3 = arith.constant 0 : index
    %c0_4 = arith.constant 0 : index
    %3 = vector.load %arg2[%c0_3, %c0_4] : memref<1x256xf32, #tpu.memory_space<vmem>>, vector<1x256xf32>
    %4 = vector.broadcast %3 : vector<1x256xf32> to vector<72x256xf32>
    %5 = arith.mulf %2, %4 : vector<72x256xf32>
    %c0_5 = arith.constant 0 : index
    %c0_6 = arith.constant 0 : index
    %6 = vector.load %arg3[%c0_5, %c0_6] : memref<1x256xf32, #tpu.memory_space<vmem>>, vector<1x256xf32>
    %7 = vector.broadcast %6 : vector<1x256xf32> to vector<72x256xf32>
    %8 = arith.addf %5, %7 : vector<72x256xf32>
    %cst_7 = arith.constant 0.000000e+00 : f32
    %9 = vector.broadcast %cst_7 : f32 to vector<72x256xf32>
    %10 = arith.maximumf %8, %9 : vector<72x256xf32>
    %11 = vector.extract_strided_slice %10 {offsets = [0, 0], sizes = [72, 64], strides = [1, 1]} : vector<72x256xf32> to vector<72x64xf32>
    %12 = vector.extract_strided_slice %10 {offsets = [0, 64], sizes = [72, 64], strides = [1, 1]} : vector<72x256xf32> to vector<72x64xf32>
    %13 = arith.maximumf %11, %12 : vector<72x64xf32>
    %14 = vector.extract_strided_slice %10 {offsets = [0, 128], sizes = [72, 64], strides = [1, 1]} : vector<72x256xf32> to vector<72x64xf32>
    %15 = vector.extract_strided_slice %10 {offsets = [0, 192], sizes = [72, 64], strides = [1, 1]} : vector<72x256xf32> to vector<72x64xf32>
    %16 = arith.maximumf %14, %15 : vector<72x64xf32>
    %17 = arith.maximumf %13, %16 : vector<72x64xf32>
    %cst_8 = arith.constant 0.000000e+00 : f32
    %18 = vector.broadcast %cst_8 : f32 to vector<8x10xf32>
    %19 = vector.extract_strided_slice %17 {offsets = [0, 0], sizes = [8, 64], strides = [1, 1]} : vector<72x64xf32> to vector<8x64xf32>
    %c0_9 = arith.constant 0 : index
    %c0_10 = arith.constant 0 : index
    %20 = vector.load %arg4[%c0_9, %c0_10] : memref<576x10xf32, #tpu.memory_space<vmem>>, vector<64x10xf32>
    %cst_11 = arith.constant dense<0.000000e+00> : vector<8x10xf32>
    %21 = tpu.matmul %19, %20, %cst_11 {dimension_numbers = #tpu.dot_dimension_numbers<[1], [0], [0], [1], [0, 0, 1, 1], [], []>} : vector<8x64xf32>, vector<64x10xf32>, vector<8x10xf32> -> vector<8x10xf32>
    %22 = arith.addf %18, %21 : vector<8x10xf32>
    %23 = vector.extract_strided_slice %17 {offsets = [8, 0], sizes = [8, 64], strides = [1, 1]} : vector<72x64xf32> to vector<8x64xf32>
    %c64 = arith.constant 64 : index
    %c0_12 = arith.constant 0 : index
    %24 = vector.load %arg4[%c64, %c0_12] : memref<576x10xf32, #tpu.memory_space<vmem>>, vector<64x10xf32>
    %cst_13 = arith.constant dense<0.000000e+00> : vector<8x10xf32>
    %25 = tpu.matmul %23, %24, %cst_13 {dimension_numbers = #tpu.dot_dimension_numbers<[1], [0], [0], [1], [0, 0, 1, 1], [], []>} : vector<8x64xf32>, vector<64x10xf32>, vector<8x10xf32> -> vector<8x10xf32>
    %26 = arith.addf %22, %25 : vector<8x10xf32>
    %27 = vector.extract_strided_slice %17 {offsets = [16, 0], sizes = [8, 64], strides = [1, 1]} : vector<72x64xf32> to vector<8x64xf32>
    %c128 = arith.constant 128 : index
    %c0_14 = arith.constant 0 : index
    %28 = vector.load %arg4[%c128, %c0_14] : memref<576x10xf32, #tpu.memory_space<vmem>>, vector<64x10xf32>
    %cst_15 = arith.constant dense<0.000000e+00> : vector<8x10xf32>
    %29 = tpu.matmul %27, %28, %cst_15 {dimension_numbers = #tpu.dot_dimension_numbers<[1], [0], [0], [1], [0, 0, 1, 1], [], []>} : vector<8x64xf32>, vector<64x10xf32>, vector<8x10xf32> -> vector<8x10xf32>
    %30 = arith.addf %26, %29 : vector<8x10xf32>
    %31 = vector.extract_strided_slice %17 {offsets = [24, 0], sizes = [8, 64], strides = [1, 1]} : vector<72x64xf32> to vector<8x64xf32>
    %c192 = arith.constant 192 : index
    %c0_16 = arith.constant 0 : index
    %32 = vector.load %arg4[%c192, %c0_16] : memref<576x10xf32, #tpu.memory_space<vmem>>, vector<64x10xf32>
    %cst_17 = arith.constant dense<0.000000e+00> : vector<8x10xf32>
    %33 = tpu.matmul %31, %32, %cst_17 {dimension_numbers = #tpu.dot_dimension_numbers<[1], [0], [0], [1], [0, 0, 1, 1], [], []>} : vector<8x64xf32>, vector<64x10xf32>, vector<8x10xf32> -> vector<8x10xf32>
    %34 = arith.addf %30, %33 : vector<8x10xf32>
    %35 = vector.extract_strided_slice %17 {offsets = [32, 0], sizes = [8, 64], strides = [1, 1]} : vector<72x64xf32> to vector<8x64xf32>
    %c256 = arith.constant 256 : index
    %c0_18 = arith.constant 0 : index
    %36 = vector.load %arg4[%c256, %c0_18] : memref<576x10xf32, #tpu.memory_space<vmem>>, vector<64x10xf32>
    %cst_19 = arith.constant dense<0.000000e+00> : vector<8x10xf32>
    %37 = tpu.matmul %35, %36, %cst_19 {dimension_numbers = #tpu.dot_dimension_numbers<[1], [0], [0], [1], [0, 0, 1, 1], [], []>} : vector<8x64xf32>, vector<64x10xf32>, vector<8x10xf32> -> vector<8x10xf32>
    %38 = arith.addf %34, %37 : vector<8x10xf32>
    %39 = vector.extract_strided_slice %17 {offsets = [40, 0], sizes = [8, 64], strides = [1, 1]} : vector<72x64xf32> to vector<8x64xf32>
    %c320 = arith.constant 320 : index
    %c0_20 = arith.constant 0 : index
    %40 = vector.load %arg4[%c320, %c0_20] : memref<576x10xf32, #tpu.memory_space<vmem>>, vector<64x10xf32>
    %cst_21 = arith.constant dense<0.000000e+00> : vector<8x10xf32>
    %41 = tpu.matmul %39, %40, %cst_21 {dimension_numbers = #tpu.dot_dimension_numbers<[1], [0], [0], [1], [0, 0, 1, 1], [], []>} : vector<8x64xf32>, vector<64x10xf32>, vector<8x10xf32> -> vector<8x10xf32>
    %42 = arith.addf %38, %41 : vector<8x10xf32>
    %43 = vector.extract_strided_slice %17 {offsets = [48, 0], sizes = [8, 64], strides = [1, 1]} : vector<72x64xf32> to vector<8x64xf32>
    %c384 = arith.constant 384 : index
    %c0_22 = arith.constant 0 : index
    %44 = vector.load %arg4[%c384, %c0_22] : memref<576x10xf32, #tpu.memory_space<vmem>>, vector<64x10xf32>
    %cst_23 = arith.constant dense<0.000000e+00> : vector<8x10xf32>
    %45 = tpu.matmul %43, %44, %cst_23 {dimension_numbers = #tpu.dot_dimension_numbers<[1], [0], [0], [1], [0, 0, 1, 1], [], []>} : vector<8x64xf32>, vector<64x10xf32>, vector<8x10xf32> -> vector<8x10xf32>
    %46 = arith.addf %42, %45 : vector<8x10xf32>
    %47 = vector.extract_strided_slice %17 {offsets = [56, 0], sizes = [8, 64], strides = [1, 1]} : vector<72x64xf32> to vector<8x64xf32>
    %c448 = arith.constant 448 : index
    %c0_24 = arith.constant 0 : index
    %48 = vector.load %arg4[%c448, %c0_24] : memref<576x10xf32, #tpu.memory_space<vmem>>, vector<64x10xf32>
    %cst_25 = arith.constant dense<0.000000e+00> : vector<8x10xf32>
    %49 = tpu.matmul %47, %48, %cst_25 {dimension_numbers = #tpu.dot_dimension_numbers<[1], [0], [0], [1], [0, 0, 1, 1], [], []>} : vector<8x64xf32>, vector<64x10xf32>, vector<8x10xf32> -> vector<8x10xf32>
    %50 = arith.addf %46, %49 : vector<8x10xf32>
    %51 = vector.extract_strided_slice %17 {offsets = [64, 0], sizes = [8, 64], strides = [1, 1]} : vector<72x64xf32> to vector<8x64xf32>
    %c512 = arith.constant 512 : index
    %c0_26 = arith.constant 0 : index
    %52 = vector.load %arg4[%c512, %c0_26] : memref<576x10xf32, #tpu.memory_space<vmem>>, vector<64x10xf32>
    %cst_27 = arith.constant dense<0.000000e+00> : vector<8x10xf32>
    %53 = tpu.matmul %51, %52, %cst_27 {dimension_numbers = #tpu.dot_dimension_numbers<[1], [0], [0], [1], [0, 0, 1, 1], [], []>} : vector<8x64xf32>, vector<64x10xf32>, vector<8x10xf32> -> vector<8x10xf32>
    %54 = arith.addf %50, %53 : vector<8x10xf32>
    %c0_28 = arith.constant 0 : index
    %c0_29 = arith.constant 0 : index
    %55 = vector.load %arg5[%c0_28, %c0_29] : memref<1x10xf32, #tpu.memory_space<vmem>>, vector<1x10xf32>
    %56 = vector.broadcast %55 : vector<1x10xf32> to vector<8x10xf32>
    %57 = arith.addf %54, %56 : vector<8x10xf32>
    %cst_30 = arith.constant 0.000000e+00 : f32
    %58 = vector.broadcast %cst_30 : f32 to vector<8x10xf32>
    %59 = arith.maximumf %57, %58 : vector<8x10xf32>
    %c0_31 = arith.constant 0 : index
    %c0_32 = arith.constant 0 : index
    %60 = vector.load %arg6[%c0_31, %c0_32] : memref<10x2xf32, #tpu.memory_space<vmem>>, vector<10x2xf32>
    %cst_33 = arith.constant dense<0.000000e+00> : vector<8x2xf32>
    %61 = tpu.matmul %59, %60, %cst_33 {dimension_numbers = #tpu.dot_dimension_numbers<[1], [0], [0], [1], [0, 0, 1, 1], [], []>} : vector<8x10xf32>, vector<10x2xf32>, vector<8x2xf32> -> vector<8x2xf32>
    %c0_34 = arith.constant 0 : index
    %c0_35 = arith.constant 0 : index
    %62 = vector.load %arg7[%c0_34, %c0_35] : memref<1x2xf32, #tpu.memory_space<vmem>>, vector<1x2xf32>
    %63 = vector.broadcast %62 : vector<1x2xf32> to vector<8x2xf32>
    %64 = arith.addf %61, %63 : vector<8x2xf32>
    %c0_36 = arith.constant 0 : index
    %c0_37 = arith.constant 0 : index
    %65 = vector.load %arg8[%c0_36, %c0_37] : memref<8x2xf32, #tpu.memory_space<vmem>>, vector<8x2xf32>
    tpu.vector_store %arg8[%c0_36, %c0_37], %64 {strides = array<i32>} : memref<8x2xf32, #tpu.memory_space<vmem>>, vector<8x2xf32>,
    return
  }
}

</mosaic_0001>

<llo_original>
// kernel: _lambda_.3
$region0: #{_lambda_.3}
  #allocation0 [shape = 'u32[]', space=smem, size = 0x4, offset = 0x4, fixed_abs, tag = 'smem constant byte address 0x4 - core index']
  #allocation1 [shape = 'u32[144,128]{1,0:T(1,128)}', space=vmem, size = 0x12000, scoped, tag = 'internal scratch']
  %s0 = inlined_call_operand.vmem [shape: bf16[757,864], index: 0, kind: input, shape index: {}]
  %s1 = inlined_call_operand.vmem [shape: bf16[864,512], index: 1, kind: input, shape index: {}]
  %s2 = inlined_call_operand.vmem [shape: f32[1,512], index: 2, kind: input, shape index: {}]
  %s3 = inlined_call_operand.vmem [shape: f32[1,512], index: 3, kind: input, shape index: {}]
  %s4 = inlined_call_operand.vmem [shape: bf16[757,128], index: 4, kind: output, shape index: {}]
  %s5 = sld [smem:[#allocation0]]
  $region93: #{_lambda_.3} parent=0
    _
  %s7 = ssub.s32 1, %s5
  %s8 = scalar_select 0, %s7, %s5
  $region1: #{_lambda_.3} parent=0
    #allocation2 [shape = 'u8[65536]{0}', space=vmem, size = 0x10000, scoped, tag = 'output window, operand 0']
    loop: start=0, step=1, limit=8
    $region2: #{_lambda_.3} parent=1 // loop_pre_header
      _
    $region3: #{_lambda_.3} parent=1 // loop_header
      %s10 = sphi 0, %s14
      %p11 = scmp.ge.s32.totalorder %s10, 8
      %s20 = sphi 0, %s22
      %s23 = sphi 0, %s20
      %s24 = sphi 0, %s23
      %s40 = sphi 0, %s24
      %s44 = sphi 0, %s44
      %s46 = sphi 0, %s44
      %s47 = sphi 0, %s46
      %s61 = sphi 0, %s47
      %s65 = sphi 0, %s65
      %s67 = sphi 0, %s65
      %s68 = sphi 0, %s67
      %s82 = sphi 0, %s68
      %s86 = sphi 0, %s86
      %s88 = sphi 0, %s86
      %s89 = sphi 0, %s88
      %s103 = sphi 0, %s89
      %s109 = sphi 0, %s111
      %s112 = sphi 0, %s109
      %s113 = sphi 0, %s112
      %s129 = sphi 0, %s113
    $region4: #{_lambda_.3} parent=1 // loop_header_branch
      %13 = sbr.rel (%p11) target = $region8
    $region5: #{_lambda_.3} parent=1 // loop_body
      %s15 = ssub.s32 %s10, 1
      %s16 = ssub.s32 %s10, 2
      %s17 = sadd.s32 %s10, 1
      %s18 = ssub.s32 %s10, %s17
      %p19 = scmp.eq.s32.totalorder %s18, 0
      %s21 = sadd.s32 %s20, 1
      %s22 = scalar_select %p19, %s20, %s21
      %p25 = pneg %p19
      %p26 = scmp.eq.s32.totalorder %s10, 5
      %p27 = por %p25, %p26
      %p28 = scmp.ne.s32.totalorder %s20, %s23
      %p29 = scmp.eq.s32.totalorder %s10, 0
      %p30 = por %p28, %p29
      %p31 = scmp.ne.s32.totalorder %s20, %s23
      %p32 = scmp.eq.s32.totalorder %s15, 5
      %p33 = por %p31, %p32
      %p34 = scmp.ne.s32.totalorder %s23, %s24
      %p35 = scmp.eq.s32.totalorder %s15, 0
      %p36 = por %p34, %p35
      %p37 = scmp.ne.s32.totalorder %s23, %s24
      %p38 = scmp.eq.s32.totalorder %s16, 5
      %p39 = por %p37, %p38
      %p41 = scmp.ne.s32.totalorder %s24, %s40
      %p42 = scmp.eq.s32.totalorder %s16, 0
      %p43 = por %p41, %p42
      %s45 = sadd.s32 %s44, 1
      %p48 = scmp.eq.s32.totalorder %s10, 5
      %p49 = scmp.ne.s32.totalorder %s44, %s46
      %p50 = scmp.eq.s32.totalorder %s10, 0
      %p51 = por %p49, %p50
      %p52 = scmp.ne.s32.totalorder %s44, %s46
      %p53 = scmp.eq.s32.totalorder %s15, 5
      %p54 = por %p52, %p53
      %p55 = scmp.ne.s32.totalorder %s46, %s47
      %p56 = scmp.eq.s32.totalorder %s15, 0
      %p57 = por %p55, %p56
      %p58 = scmp.ne.s32.totalorder %s46, %s47
      %p59 = scmp.eq.s32.totalorder %s16, 5
      %p60 = por %p58, %p59
      %p62 = scmp.ne.s32.totalorder %s47, %s61
      %p63 = scmp.eq.s32.totalorder %s16, 0
      %p64 = por %p62, %p63
      %s66 = sadd.s32 %s65, 1
      %p69 = scmp.eq.s32.totalorder %s10, 5
      %p70 = scmp.ne.s32.totalorder %s65, %s67
      %p71 = scmp.eq.s32.totalorder %s10, 0
      %p72 = por %p70, %p71
      %p73 = scmp.ne.s32.totalorder %s65, %s67
      %p74 = scmp.eq.s32.totalorder %s15, 5
      %p75 = por %p73, %p74
      %p76 = scmp.ne.s32.totalorder %s67, %s68
      %p77 = scmp.eq.s32.totalorder %s15, 0
      %p78 = por %p76, %p77
      %p79 = scmp.ne.s32.totalorder %s67, %s68
      %p80 = scmp.eq.s32.totalorder %s16, 5
      %p81 = por %p79, %p80
      %p83 = scmp.ne.s32.totalorder %s68, %s82
      %p84 = scmp.eq.s32.totalorder %s16, 0
      %p85 = por %p83, %p84
      %s87 = sadd.s32 %s86, 1
      %p90 = scmp.eq.s32.totalorder %s10, 5
      %p91 = scmp.ne.s32.totalorder %s86, %s88
      %p92 = scmp.eq.s32.totalorder %s10, 0
      %p93 = por %p91, %p92
      %p94 = scmp.ne.s32.totalorder %s86, %s88
      %p95 = scmp.eq.s32.totalorder %s15, 5
      %p96 = por %p94, %p95
      %p97 = scmp.ne.s32.totalorder %s88, %s89
      %p98 = scmp.eq.s32.totalorder %s15, 0
      %p99 = por %p97, %p98
      %p100 = scmp.ne.s32.totalorder %s88, %s89
      %p101 = scmp.eq.s32.totalorder %s16, 5
      %p102 = por %p100, %p101
      %p104 = scmp.ne.s32.totalorder %s89, %s103
      %p105 = scmp.eq.s32.totalorder %s16, 0
      %p106 = por %p104, %p105
      %s107 = ssub.s32 %s10, %s17
      %p108 = scmp.eq.s32.totalorder %s107, 0
      %s110 = sadd.s32 %s109, 1
      %s111 = scalar_select %p108, %s109, %s110
      %p114 = pneg %p108
      %p115 = scmp.eq.s32.totalorder %s10, 5
      %p116 = por %p114, %p115
      %p117 = scmp.ne.s32.totalorder %s109, %s112
      %p118 = scmp.eq.s32.totalorder %s10, 0
      %p119 = por %p117, %p118
      %p120 = scmp.ne.s32.totalorder %s109, %s112
      %p121 = scmp.eq.s32.totalorder %s15, 5
      %p122 = por %p120, %p121
      %p123 = scmp.ne.s32.totalorder %s112, %s113
      %p124 = scmp.eq.s32.totalorder %s15, 0
      %p125 = por %p123, %p124
      %p126 = scmp.ne.s32.totalorder %s112, %s113
      %p127 = scmp.eq.s32.totalorder %s16, 5
      %p128 = por %p126, %p127
      %p130 = scmp.ne.s32.totalorder %s113, %s129
      %p131 = scmp.eq.s32.totalorder %s16, 0
      %p132 = por %p130, %p131
      %p133 = scmp.le.s32.totalorder 1, %s10
      %p134 = scmp.lt.s32.totalorder %s10, 7
      %p135 = pnand %p133, %p134
      %p136 = pneg %p135
      // Predicated region
      $region9: #{_lambda_.3} parent=5 // pred_check
        _
      $region10: #{_lambda_.3} parent=5 // pred_check_branch
        %138 = sbr.rel (%p135) target = $region12
      $region11: #{_lambda_.3} parent=5 // pred_region
        %s139 = ssub.s32 %s10, 1
        // Predicated region
        $region13: #{_lambda_.3} parent=11 // pred_check
          %p140 = pneg %p57
        $region14: #{_lambda_.3} parent=11 // pred_check_branch
          %142 = sbr.rel (%p140) target = $region16
        $region15: #{_lambda_.3} parent=11 // pred_region
          _
        $region16: #{_lambda_.3} parent=11 // pred_fallthru
          _
        // Predicated region
        $region17: #{_lambda_.3} parent=11 // pred_check
          %p143 = pneg %p78
        $region18: #{_lambda_.3} parent=11 // pred_check_branch
          %145 = sbr.rel (%p143) target = $region20
        $region19: #{_lambda_.3} parent=11 // pred_region
          _
        $region20: #{_lambda_.3} parent=11 // pred_fallthru
          _
        // Predicated region
        $region21: #{_lambda_.3} parent=11 // pred_check
          %p146 = pneg %p99
        $region22: #{_lambda_.3} parent=11 // pred_check_branch
          %148 = sbr.rel (%p146) target = $region24
        $region23: #{_lambda_.3} parent=11 // pred_region
          _
        $region24: #{_lambda_.3} parent=11 // pred_fallthru
          _
      $region12: #{_lambda_.3} parent=5 // pred_fallthru
        _
      %p149 = scmp.lt.s32.totalorder %s10, 6
      // Predicated region
      $region25: #{_lambda_.3} parent=5 // pred_check
        %p150 = pneg %p149
      $region26: #{_lambda_.3} parent=5 // pred_check_branch
        %152 = sbr.rel (%p150) target = $region28
      $region27: #{_lambda_.3} parent=5 // pred_region
        // Predicated region
        $region29: #{_lambda_.3} parent=27 // pred_check
          %p153 = pneg %p30
        $region30: #{_lambda_.3} parent=27 // pred_check_branch
          %155 = sbr.rel (%p153) target = $region32
        $region31: #{_lambda_.3} parent=27 // pred_region
          %s156 = smul.u32 16, %s10
          %s157 = ssub.s32 95, %s156
          %p158 = scmp.lt.s32.totalorder %s157, 16
          %s159 = scalar_select %p158, %s157, 16
          %s160 = smul.u32 64, %s159
          %s161 = smul.u32 %s160, 7
          %p162 = scmp.lt.s32.totalorder %s156, 94
          %s163 = scalar_select %p162, %s156, 94
          %s164 = smul.addr %s163, 7
          %s165 = smul.addr %s164, 4
          %s166 = scalar_lea.vmem %s0, %s165
          %s167 = smul.u32 16, %s10
          %s168 = ssub.s32 95, %s167
          %p169 = scmp.lt.s32.totalorder %s168, 16
          %s170 = scalar_select %p169, %s168, 16
          %s171 = smul.u32 64, %s170
          %s172 = smul.u32 %s171, 7
        $region32: #{_lambda_.3} parent=27 // pred_fallthru
          _
      $region28: #{_lambda_.3} parent=5 // pred_fallthru
        _
      %p173 = scmp.le.s32.totalorder 1, %s10
      %p174 = scmp.lt.s32.totalorder %s10, 7
      %p175 = pnand %p173, %p174
      %p176 = pneg %p175
      // Predicated region
      $region33: #{_lambda_.3} parent=5 // pred_check
        _
      $region34: #{_lambda_.3} parent=5 // pred_check_branch
        %178 = sbr.rel (%p175) target = $region36
      $region35: #{_lambda_.3} parent=5 // pred_region
        %s179 = ssub.s32 %s10, 1
        %s180 = smul.u32 16, %s15
        %s181 = ssub.s32 95, %s180
        %p182 = scmp.lt.s32.totalorder %s181, 16
        %s183 = scalar_select %p182, %s181, 16
        %s184 = smul.u32 64, %s183
        %s185 = smul.u32 %s184, 7
        %p186 = scmp.lt.s32.totalorder %s180, 94
        %s187 = scalar_select %p186, %s180, 94
        %s188 = smul.addr %s187, 7
        %s189 = smul.addr %s188, 4
        %s190 = scalar_lea.vmem %s0, %s189
        %p191 = pneg %p36
        %p192 = pneg %p33
        %p193 = pneg %p57
        %p194 = pneg %p54
        %p195 = pneg %p78
        %p196 = pneg %p75
        %p197 = pneg %p99
        %p198 = pneg %p96
        %p199 = pneg %p125
        %p200 = pneg %p122
        %s201 = sand.u32 %s112, 1
        %s202 = sand.u32 %s112, 1
        %s203 = smul.addr %s202, 64
        %s204 = scalar_lea.vmem [#allocation2], %s203
        %s205 = smul.u32 16, %s15
        %s206 = ssub.s32 95, %s205
        %p207 = scmp.lt.s32.totalorder %s206, 16
        %s208 = scalar_select %p207, %s206, 16
        %s209 = smul.u32 64, %s208
        %s210 = smul.u32 %s209, 7
        %p211 = scmp.lt.s32.totalorder %s205, 94
        %s212 = scalar_select %p211, %s205, 94
        %s213 = smul.addr %s212, 7
        %s214 = smul.addr %s213, 4
        %s215 = scalar_lea.vmem %s0, %s214
        %s216 = smul.u32 16, %s15
        %s217 = ssub.s32 95, %s216
        %p218 = scmp.lt.s32.totalorder %s217, 16
        %s219 = scalar_select %p218, %s217, 16
        %s220 = smul.u32 64, %s219
        %s221 = smul.u32 %s220, 7
        %s222 = smul.u32 16, %s15
        %s223 = ssub.s32 95, %s222
        %p224 = scmp.lt.s32.totalorder %s223, 16
        %s225 = scalar_select %p224, %s223, 16
        %s226 = smul.u32 64, %s225
        %v228 = vld [vmem:[%s215] sm:$0xff]
        %v229 = vld [vmem:[%s215 + $0x8] sm:$0xff]
        %v230 = vld [vmem:[%s215 + $0x10] sm:$0xff]
        %v231 = vld [vmem:[%s215 + $0x18] sm:$0xf]
        %v232 = vld [vmem:[%s215 + $0x1c] sm:$0xff]
        %v233 = vld [vmem:[%s215 + $0x24] sm:$0xff]
        %v234 = vld [vmem:[%s215 + $0x2c] sm:$0xff]
        %v235 = vld [vmem:[%s215 + $0x34] sm:$0xf]
        %v236 = vld [vmem:[%s215 + $0x38] sm:$0xff]
        %v237 = vld [vmem:[%s215 + $0x40] sm:$0xff]
        %v238 = vld [vmem:[%s215 + $0x48] sm:$0xff]
        %v239 = vld [vmem:[%s215 + $0x50] sm:$0xf]
        %v240 = vld [vmem:[%s215 + $0x54] sm:$0xff]
        %v241 = vld [vmem:[%s215 + $0x5c] sm:$0xff]
        %v242 = vld [vmem:[%s215 + $0x64] sm:$0xff]
        %v243 = vld [vmem:[%s215 + $0x6c] sm:$0xf]
        %v244 = vld [vmem:[%s215 + $0x70] sm:$0xff]
        %v245 = vld [vmem:[%s215 + $0x78] sm:$0xff]
        %v246 = vld [vmem:[%s215 + $0x80] sm:$0xff]
        %v247 = vld [vmem:[%s215 + $0x88] sm:$0xf]
        %v248 = vld [vmem:[%s215 + $0x8c] sm:$0xff]
        %v249 = vld [vmem:[%s215 + $0x94] sm:$0xff]
        %v250 = vld [vmem:[%s215 + $0x9c] sm:$0xff]
        %v251 = vld [vmem:[%s215 + $0xa4] sm:$0xf]
        %v252 = vld [vmem:[%s215 + $0xa8] sm:$0xff]
        %v253 = vld [vmem:[%s215 + $0xb0] sm:$0xff]
        %v254 = vld [vmem:[%s215 + $0xb8] sm:$0xff]
        %v255 = vld [vmem:[%s215 + $0xc0] sm:$0xf]
        %v256 = vld [vmem:[%s215 + $0xc4] sm:$0xff]
        %v257 = vld [vmem:[%s215 + $0xcc] sm:$0xff]
        %v258 = vld [vmem:[%s215 + $0xd4] sm:$0xff]
        %v259 = vld [vmem:[%s215 + $0xdc] sm:$0xf]
        %v260 = vld [vmem:[%s215 + $0xe0] sm:$0xff]
        %v261 = vld [vmem:[%s215 + $0xe8] sm:$0xff]
        %v262 = vld [vmem:[%s215 + $0xf0] sm:$0xff]
        %v263 = vld [vmem:[%s215 + $0xf8] sm:$0xf]
        %v264 = vld [vmem:[%s215 + $0xfc] sm:$0xff]
        %v265 = vld [vmem:[%s215 + $0x104] sm:$0xff]
        %v266 = vld [vmem:[%s215 + $0x10c] sm:$0xff]
        %v267 = vld [vmem:[%s215 + $0x114] sm:$0xf]
        %v268 = vld [vmem:[%s215 + $0x118] sm:$0xff]
        %v269 = vld [vmem:[%s215 + $0x120] sm:$0xff]
        %v270 = vld [vmem:[%s215 + $0x128] sm:$0xff]
        %v271 = vld [vmem:[%s215 + $0x130] sm:$0xf]
        %v272 = vld [vmem:[%s215 + $0x134] sm:$0xff]
        %v273 = vld [vmem:[%s215 + $0x13c] sm:$0xff]
        %v274 = vld [vmem:[%s215 + $0x144] sm:$0xff]
        %v275 = vld [vmem:[%s215 + $0x14c] sm:$0xf]
        %v276 = vld [vmem:[%s215 + $0x150] sm:$0xff]
        %v277 = vld [vmem:[%s215 + $0x158] sm:$0xff]
        %v278 = vld [vmem:[%s215 + $0x160] sm:$0xff]
        %v279 = vld [vmem:[%s215 + $0x168] sm:$0xf]
        %v280 = vld [vmem:[%s215 + $0x16c] sm:$0xff]
        %v281 = vld [vmem:[%s215 + $0x174] sm:$0xff]
        %v282 = vld [vmem:[%s215 + $0x17c] sm:$0xff]
        %v283 = vld [vmem:[%s215 + $0x184] sm:$0xf]
        %v284 = vld [vmem:[%s215 + $0x188] sm:$0xff]
        %v285 = vld [vmem:[%s215 + $0x190] sm:$0xff]
        %v286 = vld [vmem:[%s215 + $0x198] sm:$0xff]
        %v287 = vld [vmem:[%s215 + $0x1a0] sm:$0xf]
        %v288 = vld [vmem:[%s215 + $0x1a4] sm:$0xff]
        %v289 = vld [vmem:[%s215 + $0x1ac] sm:$0xff]
        %v290 = vld [vmem:[%s215 + $0x1b4] sm:$0xff]
        %v291 = vld [vmem:[%s215 + $0x1bc] sm:$0xf]
        %v292 = vld [vmem:[%s1] sm:$0xff]
        %v293 = vld [vmem:[%s1 + $0x8] sm:$0xff]
        %v294 = vld [vmem:[%s1 + $0x10] sm:$0xff]
        %v295 = vld [vmem:[%s1 + $0x18] sm:$0xff]
        %v296 = vld [vmem:[%s1 + $0x20] sm:$0xff]
        %v297 = vld [vmem:[%s1 + $0x28] sm:$0xff]
        %v298 = vld [vmem:[%s1 + $0x30] sm:$0xff]
        %v299 = vld [vmem:[%s1 + $0x38] sm:$0xff]
        %v300 = vld [vmem:[%s1 + $0x40] sm:$0xff]
        %v301 = vld [vmem:[%s1 + $0x48] sm:$0xff]
        %v302 = vld [vmem:[%s1 + $0x50] sm:$0xff]
        %v303 = vld [vmem:[%s1 + $0x58] sm:$0xff]
        %v304 = vld [vmem:[%s1 + $0x60] sm:$0xff]
        %v305 = vld [vmem:[%s1 + $0x68] sm:$0xff]
        %v306 = vld [vmem:[%s1 + $0x70] sm:$0xff]
        %v307 = vld [vmem:[%s1 + $0x78] sm:$0xff]
        %v308 = vld [vmem:[%s1 + $0x80] sm:$0xff]
        %v309 = vld [vmem:[%s1 + $0x88] sm:$0xff]
        %v310 = vld [vmem:[%s1 + $0x90] sm:$0xff]
        %v311 = vld [vmem:[%s1 + $0x98] sm:$0xff]
        %v312 = vld [vmem:[%s1 + $0xa0] sm:$0xff]
        %v313 = vld [vmem:[%s1 + $0xa8] sm:$0xff]
        %v314 = vld [vmem:[%s1 + $0xb0] sm:$0xff]
        %v315 = vld [vmem:[%s1 + $0xb8] sm:$0xff]
        %v316 = vld [vmem:[%s1 + $0xc0] sm:$0xff]
        %v317 = vld [vmem:[%s1 + $0xc8] sm:$0xff]
        %v318 = vld [vmem:[%s1 + $0xd0] sm:$0xff]
        %v319 = vld [vmem:[%s1 + $0xd8] sm:$0xff]
        %v320 = vld [vmem:[%s1 + $0xe0] sm:$0xff]
        %v321 = vld [vmem:[%s1 + $0xe8] sm:$0xff]
        %v322 = vld [vmem:[%s1 + $0xf0] sm:$0xff]
        %v323 = vld [vmem:[%s1 + $0xf8] sm:$0xff]
        %v324 = vld [vmem:[%s1 + $0x100] sm:$0xff]
        %v325 = vld [vmem:[%s1 + $0x108] sm:$0xff]
        %v326 = vld [vmem:[%s1 + $0x110] sm:$0xff]
        %v327 = vld [vmem:[%s1 + $0x118] sm:$0xff]
        %v328 = vld [vmem:[%s1 + $0x120] sm:$0xff]
        %v329 = vld [vmem:[%s1 + $0x128] sm:$0xff]
        %v330 = vld [vmem:[%s1 + $0x130] sm:$0xff]
        %v331 = vld [vmem:[%s1 + $0x138] sm:$0xff]
        %v332 = vld [vmem:[%s1 + $0x140] sm:$0xff]
        %v333 = vld [vmem:[%s1 + $0x148] sm:$0xff]
        %v334 = vld [vmem:[%s1 + $0x150] sm:$0xff]
        %v335 = vld [vmem:[%s1 + $0x158] sm:$0xff]
        %v336 = vld [vmem:[%s1 + $0x160] sm:$0xff]
        %v337 = vld [vmem:[%s1 + $0x168] sm:$0xff]
        %v338 = vld [vmem:[%s1 + $0x170] sm:$0xff]
        %v339 = vld [vmem:[%s1 + $0x178] sm:$0xff]
        %v340 = vld [vmem:[%s1 + $0x180] sm:$0xff]
        %v341 = vld [vmem:[%s1 + $0x188] sm:$0xff]
        %v342 = vld [vmem:[%s1 + $0x190] sm:$0xff]
        %v343 = vld [vmem:[%s1 + $0x198] sm:$0xff]
        %v344 = vld [vmem:[%s1 + $0x1a0] sm:$0xff]
        %v345 = vld [vmem:[%s1 + $0x1a8] sm:$0xff]
        %v346 = vld [vmem:[%s1 + $0x1b0] sm:$0xff]
        %v347 = vld [vmem:[%s1 + $0x1b8] sm:$0xff]
        %v348 = vld [vmem:[%s1 + $0x1c0] sm:$0xff]
        %v349 = vld [vmem:[%s1 + $0x1c8] sm:$0xff]
        %v350 = vld [vmem:[%s1 + $0x1d0] sm:$0xff]
        %v351 = vld [vmem:[%s1 + $0x1d8] sm:$0xff]
        %v352 = vld [vmem:[%s1 + $0x1e0] sm:$0xff]
        %v353 = vld [vmem:[%s1 + $0x1e8] sm:$0xff]
        %v354 = vld [vmem:[%s1 + $0x1f0] sm:$0xff]
        %v355 = vld [vmem:[%s1 + $0x1f8] sm:$0xff]
        %v356 = vld [vmem:[%s1 + $0x200] sm:$0xff]
        %v357 = vld [vmem:[%s1 + $0x208] sm:$0xff]
        %v358 = vld [vmem:[%s1 + $0x210] sm:$0xff]
        %v359 = vld [vmem:[%s1 + $0x218] sm:$0xff]
        %v360 = vld [vmem:[%s1 + $0x220] sm:$0xff]
        %v361 = vld [vmem:[%s1 + $0x228] sm:$0xff]
        %v362 = vld [vmem:[%s1 + $0x230] sm:$0xff]
        %v363 = vld [vmem:[%s1 + $0x238] sm:$0xff]
        %v364 = vld [vmem:[%s1 + $0x240] sm:$0xff]
        %v365 = vld [vmem:[%s1 + $0x248] sm:$0xff]
        %v366 = vld [vmem:[%s1 + $0x250] sm:$0xff]
        %v367 = vld [vmem:[%s1 + $0x258] sm:$0xff]
        %v368 = vld [vmem:[%s1 + $0x260] sm:$0xff]
        %v369 = vld [vmem:[%s1 + $0x268] sm:$0xff]
        %v370 = vld [vmem:[%s1 + $0x270] sm:$0xff]
        %v371 = vld [vmem:[%s1 + $0x278] sm:$0xff]
        %v372 = vld [vmem:[%s1 + $0x280] sm:$0xff]
        %v373 = vld [vmem:[%s1 + $0x288] sm:$0xff]
        %v374 = vld [vmem:[%s1 + $0x290] sm:$0xff]
        %v375 = vld [vmem:[%s1 + $0x298] sm:$0xff]
        %v376 = vld [vmem:[%s1 + $0x2a0] sm:$0xff]
        %v377 = vld [vmem:[%s1 + $0x2a8] sm:$0xff]
        %v378 = vld [vmem:[%s1 + $0x2b0] sm:$0xff]
        %v379 = vld [vmem:[%s1 + $0x2b8] sm:$0xff]
        %v380 = vld [vmem:[%s1 + $0x2c0] sm:$0xff]
        %v381 = vld [vmem:[%s1 + $0x2c8] sm:$0xff]
        %v382 = vld [vmem:[%s1 + $0x2d0] sm:$0xff]
        %v383 = vld [vmem:[%s1 + $0x2d8] sm:$0xff]
        %v384 = vld [vmem:[%s1 + $0x2e0] sm:$0xff]
        %v385 = vld [vmem:[%s1 + $0x2e8] sm:$0xff]
        %v386 = vld [vmem:[%s1 + $0x2f0] sm:$0xff]
        %v387 = vld [vmem:[%s1 + $0x2f8] sm:$0xff]
        %v388 = vld [vmem:[%s1 + $0x300] sm:$0xff]
        %v389 = vld [vmem:[%s1 + $0x308] sm:$0xff]
        %v390 = vld [vmem:[%s1 + $0x310] sm:$0xff]
        %v391 = vld [vmem:[%s1 + $0x318] sm:$0xff]
        %v392 = vld [vmem:[%s1 + $0x320] sm:$0xff]
        %v393 = vld [vmem:[%s1 + $0x328] sm:$0xff]
        %v394 = vld [vmem:[%s1 + $0x330] sm:$0xff]
        %v395 = vld [vmem:[%s1 + $0x338] sm:$0xff]
        %v396 = vld [vmem:[%s1 + $0x340] sm:$0xff]
        %v397 = vld [vmem:[%s1 + $0x348] sm:$0xff]
        %v398 = vld [vmem:[%s1 + $0x350] sm:$0xff]
        %v399 = vld [vmem:[%s1 + $0x358] sm:$0xff]
        %v400 = vld [vmem:[%s1 + $0x360] sm:$0xff]
        %v401 = vld [vmem:[%s1 + $0x368] sm:$0xff]
        %v402 = vld [vmem:[%s1 + $0x370] sm:$0xff]
        %v403 = vld [vmem:[%s1 + $0x378] sm:$0xff]
        %v404 = vld [vmem:[%s1 + $0x380] sm:$0xff]
        %v405 = vld [vmem:[%s1 + $0x388] sm:$0xff]
        %v406 = vld [vmem:[%s1 + $0x390] sm:$0xff]
        %v407 = vld [vmem:[%s1 + $0x398] sm:$0xff]
        %v408 = vld [vmem:[%s1 + $0x3a0] sm:$0xff]
        %v409 = vld [vmem:[%s1 + $0x3a8] sm:$0xff]
        %v410 = vld [vmem:[%s1 + $0x3b0] sm:$0xff]
        %v411 = vld [vmem:[%s1 + $0x3b8] sm:$0xff]
        %v412 = vld [vmem:[%s1 + $0x3c0] sm:$0xff]
        %v413 = vld [vmem:[%s1 + $0x3c8] sm:$0xff]
        %v414 = vld [vmem:[%s1 + $0x3d0] sm:$0xff]
        %v415 = vld [vmem:[%s1 + $0x3d8] sm:$0xff]
        %v416 = vld [vmem:[%s1 + $0x3e0] sm:$0xff]
        %v417 = vld [vmem:[%s1 + $0x3e8] sm:$0xff]
        %v418 = vld [vmem:[%s1 + $0x3f0] sm:$0xff]
        %v419 = vld [vmem:[%s1 + $0x3f8] sm:$0xff]
        %v420 = vld [vmem:[%s1 + $0x400] sm:$0xff]
        %v421 = vld [vmem:[%s1 + $0x408] sm:$0xff]
        %v422 = vld [vmem:[%s1 + $0x410] sm:$0xff]
        %v423 = vld [vmem:[%s1 + $0x418] sm:$0xff]
        %v424 = vld [vmem:[%s1 + $0x420] sm:$0xff]
        %v425 = vld [vmem:[%s1 + $0x428] sm:$0xff]
        %v426 = vld [vmem:[%s1 + $0x430] sm:$0xff]
        %v427 = vld [vmem:[%s1 + $0x438] sm:$0xff]
        %v428 = vld [vmem:[%s1 + $0x440] sm:$0xff]
        %v429 = vld [vmem:[%s1 + $0x448] sm:$0xff]
        %v430 = vld [vmem:[%s1 + $0x450] sm:$0xff]
        %v431 = vld [vmem:[%s1 + $0x458] sm:$0xff]
        %v432 = vld [vmem:[%s1 + $0x460] sm:$0xff]
        %v433 = vld [vmem:[%s1 + $0x468] sm:$0xff]
        %v434 = vld [vmem:[%s1 + $0x470] sm:$0xff]
        %v435 = vld [vmem:[%s1 + $0x478] sm:$0xff]
        %v436 = vld [vmem:[%s1 + $0x480] sm:$0xff]
        %v437 = vld [vmem:[%s1 + $0x488] sm:$0xff]
        %v438 = vld [vmem:[%s1 + $0x490] sm:$0xff]
        %v439 = vld [vmem:[%s1 + $0x498] sm:$0xff]
        %v440 = vld [vmem:[%s1 + $0x4a0] sm:$0xff]
        %v441 = vld [vmem:[%s1 + $0x4a8] sm:$0xff]
        %v442 = vld [vmem:[%s1 + $0x4b0] sm:$0xff]
        %v443 = vld [vmem:[%s1 + $0x4b8] sm:$0xff]
        %v444 = vld [vmem:[%s1 + $0x4c0] sm:$0xff]
        %v445 = vld [vmem:[%s1 + $0x4c8] sm:$0xff]
        %v446 = vld [vmem:[%s1 + $0x4d0] sm:$0xff]
        %v447 = vld [vmem:[%s1 + $0x4d8] sm:$0xff]
        %v448 = vld [vmem:[%s1 + $0x4e0] sm:$0xff]
        %v449 = vld [vmem:[%s1 + $0x4e8] sm:$0xff]
        %v450 = vld [vmem:[%s1 + $0x4f0] sm:$0xff]
        %v451 = vld [vmem:[%s1 + $0x4f8] sm:$0xff]
        %v452 = vld [vmem:[%s1 + $0x500] sm:$0xff]
        %v453 = vld [vmem:[%s1 + $0x508] sm:$0xff]
        %v454 = vld [vmem:[%s1 + $0x510] sm:$0xff]
        %v455 = vld [vmem:[%s1 + $0x518] sm:$0xff]
        %v456 = vld [vmem:[%s1 + $0x520] sm:$0xff]
        %v457 = vld [vmem:[%s1 + $0x528] sm:$0xff]
        %v458 = vld [vmem:[%s1 + $0x530] sm:$0xff]
        %v459 = vld [vmem:[%s1 + $0x538] sm:$0xff]
        %v460 = vld [vmem:[%s1 + $0x540] sm:$0xff]
        %v461 = vld [vmem:[%s1 + $0x548] sm:$0xff]
        %v462 = vld [vmem:[%s1 + $0x550] sm:$0xff]
        %v463 = vld [vmem:[%s1 + $0x558] sm:$0xff]
        %v464 = vld [vmem:[%s1 + $0x560] sm:$0xff]
        %v465 = vld [vmem:[%s1 + $0x568] sm:$0xff]
        %v466 = vld [vmem:[%s1 + $0x570] sm:$0xff]
        %v467 = vld [vmem:[%s1 + $0x578] sm:$0xff]
        %v468 = vld [vmem:[%s1 + $0x580] sm:$0xff]
        %v469 = vld [vmem:[%s1 + $0x588] sm:$0xff]
        %v470 = vld [vmem:[%s1 + $0x590] sm:$0xff]
        %v471 = vld [vmem:[%s1 + $0x598] sm:$0xff]
        %v472 = vld [vmem:[%s1 + $0x5a0] sm:$0xff]
        %v473 = vld [vmem:[%s1 + $0x5a8] sm:$0xff]
        %v474 = vld [vmem:[%s1 + $0x5b0] sm:$0xff]
        %v475 = vld [vmem:[%s1 + $0x5b8] sm:$0xff]
        %v476 = vld [vmem:[%s1 + $0x5c0] sm:$0xff]
        %v477 = vld [vmem:[%s1 + $0x5c8] sm:$0xff]
        %v478 = vld [vmem:[%s1 + $0x5d0] sm:$0xff]
        %v479 = vld [vmem:[%s1 + $0x5d8] sm:$0xff]
        %v480 = vld [vmem:[%s1 + $0x5e0] sm:$0xff]
        %v481 = vld [vmem:[%s1 + $0x5e8] sm:$0xff]
        %v482 = vld [vmem:[%s1 + $0x5f0] sm:$0xff]
        %v483 = vld [vmem:[%s1 + $0x5f8] sm:$0xff]
        %v484 = vld [vmem:[%s1 + $0x600] sm:$0xff]
        %v485 = vld [vmem:[%s1 + $0x608] sm:$0xff]
        %v486 = vld [vmem:[%s1 + $0x610] sm:$0xff]
        %v487 = vld [vmem:[%s1 + $0x618] sm:$0xff]
        %v488 = vld [vmem:[%s1 + $0x620] sm:$0xff]
        %v489 = vld [vmem:[%s1 + $0x628] sm:$0xff]
        %v490 = vld [vmem:[%s1 + $0x630] sm:$0xff]
        %v491 = vld [vmem:[%s1 + $0x638] sm:$0xff]
        %v492 = vld [vmem:[%s1 + $0x640] sm:$0xff]
        %v493 = vld [vmem:[%s1 + $0x648] sm:$0xff]
        %v494 = vld [vmem:[%s1 + $0x650] sm:$0xff]
        %v495 = vld [vmem:[%s1 + $0x658] sm:$0xff]
        %v496 = vld [vmem:[%s1 + $0x660] sm:$0xff]
        %v497 = vld [vmem:[%s1 + $0x668] sm:$0xff]
        %v498 = vld [vmem:[%s1 + $0x670] sm:$0xff]
        %v499 = vld [vmem:[%s1 + $0x678] sm:$0xff]
        %v500 = vld [vmem:[%s1 + $0x680] sm:$0xff]
        %v501 = vld [vmem:[%s1 + $0x688] sm:$0xff]
        %v502 = vld [vmem:[%s1 + $0x690] sm:$0xff]
        %v503 = vld [vmem:[%s1 + $0x698] sm:$0xff]
        %v504 = vld [vmem:[%s1 + $0x6a0] sm:$0xff]
        %v505 = vld [vmem:[%s1 + $0x6a8] sm:$0xff]
        %v506 = vld [vmem:[%s1 + $0x6b0] sm:$0xff]
        %v507 = vld [vmem:[%s1 + $0x6b8] sm:$0xff]
        %v572 = vunpack.c.l.b16 %v228
        %v573 = vunpack.c.h.b16 %v228
        %v574 = vunpack.c.l.b16 %v229
        %v575 = vunpack.c.h.b16 %v229
        %v576 = vunpack.c.l.b16 %v230
        %v577 = vunpack.c.h.b16 %v230
        %v578 = vunpack.c.l.b16 %v231
        %v579 = vunpack.c.l.b16 %v232
        %v580 = vunpack.c.h.b16 %v232
        %v581 = vunpack.c.l.b16 %v233
        %v582 = vunpack.c.h.b16 %v233
        %v583 = vunpack.c.l.b16 %v234
        %v584 = vunpack.c.h.b16 %v234
        %v585 = vunpack.c.l.b16 %v235
        %v586 = vunpack.c.l.b16 %v236
        %v587 = vunpack.c.h.b16 %v236
        %v588 = vunpack.c.l.b16 %v237
        %v589 = vunpack.c.h.b16 %v237
        %v590 = vunpack.c.l.b16 %v238
        %v591 = vunpack.c.h.b16 %v238
        %v592 = vunpack.c.l.b16 %v239
        %v593 = vunpack.c.l.b16 %v240
        %v594 = vunpack.c.h.b16 %v240
        %v595 = vunpack.c.l.b16 %v241
        %v596 = vunpack.c.h.b16 %v241
        %v597 = vunpack.c.l.b16 %v242
        %v598 = vunpack.c.h.b16 %v242
        %v599 = vunpack.c.l.b16 %v243
        %v600 = vunpack.c.l.b16 %v244
        %v601 = vunpack.c.h.b16 %v244
        %v602 = vunpack.c.l.b16 %v245
        %v603 = vunpack.c.h.b16 %v245
        %v604 = vunpack.c.l.b16 %v246
        %v605 = vunpack.c.h.b16 %v246
        %v606 = vunpack.c.l.b16 %v247
        %v607 = vunpack.c.l.b16 %v248
        %v608 = vunpack.c.h.b16 %v248
        %v609 = vunpack.c.l.b16 %v249
        %v610 = vunpack.c.h.b16 %v249
        %v611 = vunpack.c.l.b16 %v250
        %v612 = vunpack.c.h.b16 %v250
        %v613 = vunpack.c.l.b16 %v251
        %v614 = vunpack.c.l.b16 %v252
        %v615 = vunpack.c.h.b16 %v252
        %v616 = vunpack.c.l.b16 %v253
        %v617 = vunpack.c.h.b16 %v253
        %v618 = vunpack.c.l.b16 %v254
        %v619 = vunpack.c.h.b16 %v254
        %v620 = vunpack.c.l.b16 %v255
        %v621 = vunpack.c.l.b16 %v256
        %v622 = vunpack.c.h.b16 %v256
        %v623 = vunpack.c.l.b16 %v257
        %v624 = vunpack.c.h.b16 %v257
        %v625 = vunpack.c.l.b16 %v258
        %v626 = vunpack.c.h.b16 %v258
        %v627 = vunpack.c.l.b16 %v259
        %v628 = vunpack.c.l.b16 %v260
        %v629 = vunpack.c.h.b16 %v260
        %v630 = vunpack.c.l.b16 %v261
        %v631 = vunpack.c.h.b16 %v261
        %v632 = vunpack.c.l.b16 %v262
        %v633 = vunpack.c.h.b16 %v262
        %v634 = vunpack.c.l.b16 %v263
        %v635 = vunpack.c.l.b16 %v264
        %v636 = vunpack.c.h.b16 %v264
        %v637 = vunpack.c.l.b16 %v265
        %v638 = vunpack.c.h.b16 %v265
        %v639 = vunpack.c.l.b16 %v266
        %v640 = vunpack.c.h.b16 %v266
        %v641 = vunpack.c.l.b16 %v267
        %v642 = vunpack.c.l.b16 %v268
        %v643 = vunpack.c.h.b16 %v268
        %v644 = vunpack.c.l.b16 %v269
        %v645 = vunpack.c.h.b16 %v269
        %v646 = vunpack.c.l.b16 %v270
        %v647 = vunpack.c.h.b16 %v270
        %v648 = vunpack.c.l.b16 %v271
        %v649 = vunpack.c.l.b16 %v272
        %v650 = vunpack.c.h.b16 %v272
        %v651 = vunpack.c.l.b16 %v273
        %v652 = vunpack.c.h.b16 %v273
        %v653 = vunpack.c.l.b16 %v274
        %v654 = vunpack.c.h.b16 %v274
        %v655 = vunpack.c.l.b16 %v275
        %v656 = vunpack.c.l.b16 %v276
        %v657 = vunpack.c.h.b16 %v276
        %v658 = vunpack.c.l.b16 %v277
        %v659 = vunpack.c.h.b16 %v277
        %v660 = vunpack.c.l.b16 %v278
        %v661 = vunpack.c.h.b16 %v278
        %v662 = vunpack.c.l.b16 %v279
        %v663 = vunpack.c.l.b16 %v280
        %v664 = vunpack.c.h.b16 %v280
        %v665 = vunpack.c.l.b16 %v281
        %v666 = vunpack.c.h.b16 %v281
        %v667 = vunpack.c.l.b16 %v282
        %v668 = vunpack.c.h.b16 %v282
        %v669 = vunpack.c.l.b16 %v283
        %v670 = vunpack.c.l.b16 %v284
        %v671 = vunpack.c.h.b16 %v284
        %v672 = vunpack.c.l.b16 %v285
        %v673 = vunpack.c.h.b16 %v285
        %v674 = vunpack.c.l.b16 %v286
        %v675 = vunpack.c.h.b16 %v286
        %v676 = vunpack.c.l.b16 %v287
        %v677 = vunpack.c.l.b16 %v288
        %v678 = vunpack.c.h.b16 %v288
        %v679 = vunpack.c.l.b16 %v289
        %v680 = vunpack.c.h.b16 %v289
        %v681 = vunpack.c.l.b16 %v290
        %v682 = vunpack.c.h.b16 %v290
        %v683 = vunpack.c.l.b16 %v291
        %v684 = vpack.c.b16 %v579, %v572
        %v685 = vpack.c.b16 %v580, %v573
        %v686 = vpack.c.b16 %v581, %v574
        %v687 = vpack.c.b16 %v582, %v575
        %v688 = vpack.c.b16 %v583, %v576
        %v689 = vpack.c.b16 %v584, %v577
        %v690 = vpack.c.b16 %v585, %v578
        %v691 = vpack.c.b16 %v593, %v586
        %v692 = vpack.c.b16 %v594, %v587
        %v693 = vpack.c.b16 %v595, %v588
        %v694 = vpack.c.b16 %v596, %v589
        %v695 = vpack.c.b16 %v597, %v590
        %v696 = vpack.c.b16 %v598, %v591
        %v697 = vpack.c.b16 %v599, %v592
        %v698 = vpack.c.b16 %v607, %v600
        %v699 = vpack.c.b16 %v608, %v601
        %v700 = vpack.c.b16 %v609, %v602
        %v701 = vpack.c.b16 %v610, %v603
        %v702 = vpack.c.b16 %v611, %v604
        %v703 = vpack.c.b16 %v612, %v605
        %v704 = vpack.c.b16 %v613, %v606
        %v705 = vpack.c.b16 %v621, %v614
        %v706 = vpack.c.b16 %v622, %v615
        %v707 = vpack.c.b16 %v623, %v616
        %v708 = vpack.c.b16 %v624, %v617
        %v709 = vpack.c.b16 %v625, %v618
        %v710 = vpack.c.b16 %v626, %v619
        %v711 = vpack.c.b16 %v627, %v620
        %v712 = vpack.c.b16 %v635, %v628
        %v713 = vpack.c.b16 %v636, %v629
        %v714 = vpack.c.b16 %v637, %v630
        %v715 = vpack.c.b16 %v638, %v631
        %v716 = vpack.c.b16 %v639, %v632
        %v717 = vpack.c.b16 %v640, %v633
        %v718 = vpack.c.b16 %v641, %v634
        %v719 = vpack.c.b16 %v649, %v642
        %v720 = vpack.c.b16 %v650, %v643
        %v721 = vpack.c.b16 %v651, %v644
        %v722 = vpack.c.b16 %v652, %v645
        %v723 = vpack.c.b16 %v653, %v646
        %v724 = vpack.c.b16 %v654, %v647
        %v725 = vpack.c.b16 %v655, %v648
        %v726 = vpack.c.b16 %v663, %v656
        %v727 = vpack.c.b16 %v664, %v657
        %v728 = vpack.c.b16 %v665, %v658
        %v729 = vpack.c.b16 %v666, %v659
        %v730 = vpack.c.b16 %v667, %v660
        %v731 = vpack.c.b16 %v668, %v661
        %v732 = vpack.c.b16 %v669, %v662
        %v733 = vpack.c.b16 %v677, %v670
        %v734 = vpack.c.b16 %v678, %v671
        %v735 = vpack.c.b16 %v679, %v672
        %v736 = vpack.c.b16 %v680, %v673
        %v737 = vpack.c.b16 %v681, %v674
        %v738 = vpack.c.b16 %v682, %v675
        %v739 = vpack.c.b16 %v683, %v676
        %v1004 = vunpack.c.l.b16 %v292
        %v1005 = vunpack.c.h.b16 %v292
        %v1006 = vunpack.c.l.b16 %v293
        %v1007 = vunpack.c.h.b16 %v293
        %v1008 = vunpack.c.l.b16 %v294
        %v1009 = vunpack.c.h.b16 %v294
        %v1010 = vunpack.c.l.b16 %v295
        %v1011 = vunpack.c.h.b16 %v295
        %v1012 = vunpack.c.l.b16 %v296
        %v1013 = vunpack.c.h.b16 %v296
        %v1014 = vunpack.c.l.b16 %v297
        %v1015 = vunpack.c.h.b16 %v297
        %v1016 = vunpack.c.l.b16 %v298
        %v1017 = vunpack.c.h.b16 %v298
        %v1018 = vunpack.c.l.b16 %v299
        %v1019 = vunpack.c.h.b16 %v299
        %v1020 = vunpack.c.l.b16 %v300
        %v1021 = vunpack.c.h.b16 %v300
        %v1022 = vunpack.c.l.b16 %v301
        %v1023 = vunpack.c.h.b16 %v301
        %v1024 = vunpack.c.l.b16 %v302
        %v1025 = vunpack.c.h.b16 %v302
        %v1026 = vunpack.c.l.b16 %v303
        %v1027 = vunpack.c.h.b16 %v303
        %v1028 = vunpack.c.l.b16 %v304
        %v1029 = vunpack.c.h.b16 %v304
        %v1030 = vunpack.c.l.b16 %v305
        %v1031 = vunpack.c.h.b16 %v305
        %v1032 = vunpack.c.l.b16 %v306
        %v1033 = vunpack.c.h.b16 %v306
        %v1034 = vunpack.c.l.b16 %v307
        %v1035 = vunpack.c.h.b16 %v307
        %v1036 = vunpack.c.l.b16 %v308
        %v1037 = vunpack.c.h.b16 %v308
        %v1038 = vunpack.c.l.b16 %v309
        %v1039 = vunpack.c.h.b16 %v309
        %v1040 = vunpack.c.l.b16 %v310
        %v1041 = vunpack.c.h.b16 %v310
        %v1042 = vunpack.c.l.b16 %v311
        %v1043 = vunpack.c.h.b16 %v311
        %v1044 = vunpack.c.l.b16 %v312
        %v1045 = vunpack.c.h.b16 %v312
        %v1046 = vunpack.c.l.b16 %v313
        %v1047 = vunpack.c.h.b16 %v313
        %v1048 = vunpack.c.l.b16 %v314
        %v1049 = vunpack.c.h.b16 %v314
        %v1050 = vunpack.c.l.b16 %v315
        %v1051 = vunpack.c.h.b16 %v315
        %v1052 = vunpack.c.l.b16 %v316
        %v1053 = vunpack.c.h.b16 %v316
        %v1054 = vunpack.c.l.b16 %v317
        %v1055 = vunpack.c.h.b16 %v317
        %v1056 = vunpack.c.l.b16 %v318
        %v1057 = vunpack.c.h.b16 %v318
        %v1058 = vunpack.c.l.b16 %v319
        %v1059 = vunpack.c.h.b16 %v319
        %v1060 = vunpack.c.l.b16 %v320
        %v1061 = vunpack.c.h.b16 %v320
        %v1062 = vunpack.c.l.b16 %v321
        %v1063 = vunpack.c.h.b16 %v321
        %v1064 = vunpack.c.l.b16 %v322
        %v1065 = vunpack.c.h.b16 %v322
        %v1066 = vunpack.c.l.b16 %v323
        %v1067 = vunpack.c.h.b16 %v323
        %v1068 = vunpack.c.l.b16 %v324
        %v1069 = vunpack.c.h.b16 %v324
        %v1070 = vunpack.c.l.b16 %v325
        %v1071 = vunpack.c.h.b16 %v325
        %v1072 = vunpack.c.l.b16 %v326
        %v1073 = vunpack.c.h.b16 %v326
        %v1074 = vunpack.c.l.b16 %v327
        %v1075 = vunpack.c.h.b16 %v327
        %v1076 = vunpack.c.l.b16 %v328
        %v1077 = vunpack.c.h.b16 %v328
        %v1078 = vunpack.c.l.b16 %v329
        %v1079 = vunpack.c.h.b16 %v329
        %v1080 = vunpack.c.l.b16 %v330
        %v1081 = vunpack.c.h.b16 %v330
        %v1082 = vunpack.c.l.b16 %v331
        %v1083 = vunpack.c.h.b16 %v331
        %v1084 = vunpack.c.l.b16 %v332
        %v1085 = vunpack.c.h.b16 %v332
        %v1086 = vunpack.c.l.b16 %v333
        %v1087 = vunpack.c.h.b16 %v333
        %v1088 = vunpack.c.l.b16 %v334
        %v1089 = vunpack.c.h.b16 %v334
        %v1090 = vunpack.c.l.b16 %v335
        %v1091 = vunpack.c.h.b16 %v335
        %v1092 = vunpack.c.l.b16 %v336
        %v1093 = vunpack.c.h.b16 %v336
        %v1094 = vunpack.c.l.b16 %v337
        %v1095 = vunpack.c.h.b16 %v337
        %v1096 = vunpack.c.l.b16 %v338
        %v1097 = vunpack.c.h.b16 %v338
        %v1098 = vunpack.c.l.b16 %v339
        %v1099 = vunpack.c.h.b16 %v339
        %v1100 = vunpack.c.l.b16 %v340
        %v1101 = vunpack.c.h.b16 %v340
        %v1102 = vunpack.c.l.b16 %v341
        %v1103 = vunpack.c.h.b16 %v341
        %v1104 = vunpack.c.l.b16 %v342
        %v1105 = vunpack.c.h.b16 %v342
        %v1106 = vunpack.c.l.b16 %v343
        %v1107 = vunpack.c.h.b16 %v343
        %v1108 = vunpack.c.l.b16 %v344
        %v1109 = vunpack.c.h.b16 %v344
        %v1110 = vunpack.c.l.b16 %v345
        %v1111 = vunpack.c.h.b16 %v345
        %v1112 = vunpack.c.l.b16 %v346
        %v1113 = vunpack.c.h.b16 %v346
        %v1114 = vunpack.c.l.b16 %v347
        %v1115 = vunpack.c.h.b16 %v347
        %v1116 = vunpack.c.l.b16 %v348
        %v1117 = vunpack.c.h.b16 %v348
        %v1118 = vunpack.c.l.b16 %v349
        %v1119 = vunpack.c.h.b16 %v349
        %v1120 = vunpack.c.l.b16 %v350
        %v1121 = vunpack.c.h.b16 %v350
        %v1122 = vunpack.c.l.b16 %v351
        %v1123 = vunpack.c.h.b16 %v351
        %v1124 = vunpack.c.l.b16 %v352
        %v1125 = vunpack.c.h.b16 %v352
        %v1126 = vunpack.c.l.b16 %v353
        %v1127 = vunpack.c.h.b16 %v353
        %v1128 = vunpack.c.l.b16 %v354
        %v1129 = vunpack.c.h.b16 %v354
        %v1130 = vunpack.c.l.b16 %v355
        %v1131 = vunpack.c.h.b16 %v355
        %v1132 = vunpack.c.l.b16 %v356
        %v1133 = vunpack.c.h.b16 %v356
        %v1134 = vunpack.c.l.b16 %v357
        %v1135 = vunpack.c.h.b16 %v357
        %v1136 = vunpack.c.l.b16 %v358
        %v1137 = vunpack.c.h.b16 %v358
        %v1138 = vunpack.c.l.b16 %v359
        %v1139 = vunpack.c.h.b16 %v359
        %v1140 = vunpack.c.l.b16 %v360
        %v1141 = vunpack.c.h.b16 %v360
        %v1142 = vunpack.c.l.b16 %v361
        %v1143 = vunpack.c.h.b16 %v361
        %v1144 = vunpack.c.l.b16 %v362
        %v1145 = vunpack.c.h.b16 %v362
        %v1146 = vunpack.c.l.b16 %v363
        %v1147 = vunpack.c.h.b16 %v363
        %v1148 = vunpack.c.l.b16 %v364
        %v1149 = vunpack.c.h.b16 %v364
        %v1150 = vunpack.c.l.b16 %v365
        %v1151 = vunpack.c.h.b16 %v365
        %v1152 = vunpack.c.l.b16 %v366
        %v1153 = vunpack.c.h.b16 %v366
        %v1154 = vunpack.c.l.b16 %v367
        %v1155 = vunpack.c.h.b16 %v367
        %v1156 = vunpack.c.l.b16 %v368
        %v1157 = vunpack.c.h.b16 %v368
        %v1158 = vunpack.c.l.b16 %v369
        %v1159 = vunpack.c.h.b16 %v369
        %v1160 = vunpack.c.l.b16 %v370
        %v1161 = vunpack.c.h.b16 %v370
        %v1162 = vunpack.c.l.b16 %v371
        %v1163 = vunpack.c.h.b16 %v371
        %v1164 = vunpack.c.l.b16 %v372
        %v1165 = vunpack.c.h.b16 %v372
        %v1166 = vunpack.c.l.b16 %v373
        %v1167 = vunpack.c.h.b16 %v373
        %v1168 = vunpack.c.l.b16 %v374
        %v1169 = vunpack.c.h.b16 %v374
        %v1170 = vunpack.c.l.b16 %v375
        %v1171 = vunpack.c.h.b16 %v375
        %v1172 = vunpack.c.l.b16 %v376
        %v1173 = vunpack.c.h.b16 %v376
        %v1174 = vunpack.c.l.b16 %v377
        %v1175 = vunpack.c.h.b16 %v377
        %v1176 = vunpack.c.l.b16 %v378
        %v1177 = vunpack.c.h.b16 %v378
        %v1178 = vunpack.c.l.b16 %v379
        %v1179 = vunpack.c.h.b16 %v379
        %v1180 = vunpack.c.l.b16 %v380
        %v1181 = vunpack.c.h.b16 %v380
        %v1182 = vunpack.c.l.b16 %v381
        %v1183 = vunpack.c.h.b16 %v381
        %v1184 = vunpack.c.l.b16 %v382
        %v1185 = vunpack.c.h.b16 %v382
        %v1186 = vunpack.c.l.b16 %v383
        %v1187 = vunpack.c.h.b16 %v383
        %v1188 = vunpack.c.l.b16 %v384
        %v1189 = vunpack.c.h.b16 %v384
        %v1190 = vunpack.c.l.b16 %v385
        %v1191 = vunpack.c.h.b16 %v385
        %v1192 = vunpack.c.l.b16 %v386
        %v1193 = vunpack.c.h.b16 %v386
        %v1194 = vunpack.c.l.b16 %v387
        %v1195 = vunpack.c.h.b16 %v387
        %v1196 = vunpack.c.l.b16 %v388
        %v1197 = vunpack.c.h.b16 %v388
        %v1198 = vunpack.c.l.b16 %v389
        %v1199 = vunpack.c.h.b16 %v389
        %v1200 = vunpack.c.l.b16 %v390
        %v1201 = vunpack.c.h.b16 %v390
        %v1202 = vunpack.c.l.b16 %v391
        %v1203 = vunpack.c.h.b16 %v391
        %v1204 = vunpack.c.l.b16 %v392
        %v1205 = vunpack.c.h.b16 %v392
        %v1206 = vunpack.c.l.b16 %v393
        %v1207 = vunpack.c.h.b16 %v393
        %v1208 = vunpack.c.l.b16 %v394
        %v1209 = vunpack.c.h.b16 %v394
        %v1210 = vunpack.c.l.b16 %v395
        %v1211 = vunpack.c.h.b16 %v395
        %v1212 = vunpack.c.l.b16 %v396
        %v1213 = vunpack.c.h.b16 %v396
        %v1214 = vunpack.c.l.b16 %v397
        %v1215 = vunpack.c.h.b16 %v397
        %v1216 = vunpack.c.l.b16 %v398
        %v1217 = vunpack.c.h.b16 %v398
        %v1218 = vunpack.c.l.b16 %v399
        %v1219 = vunpack.c.h.b16 %v399
        %v1220 = vunpack.c.l.b16 %v400
        %v1221 = vunpack.c.h.b16 %v400
        %v1222 = vunpack.c.l.b16 %v401
        %v1223 = vunpack.c.h.b16 %v401
        %v1224 = vunpack.c.l.b16 %v402
        %v1225 = vunpack.c.h.b16 %v402
        %v1226 = vunpack.c.l.b16 %v403
        %v1227 = vunpack.c.h.b16 %v403
        %v1228 = vunpack.c.l.b16 %v404
        %v1229 = vunpack.c.h.b16 %v404
        %v1230 = vunpack.c.l.b16 %v405
        %v1231 = vunpack.c.h.b16 %v405
        %v1232 = vunpack.c.l.b16 %v406
        %v1233 = vunpack.c.h.b16 %v406
        %v1234 = vunpack.c.l.b16 %v407
        %v1235 = vunpack.c.h.b16 %v407
        %v1236 = vunpack.c.l.b16 %v408
        %v1237 = vunpack.c.h.b16 %v408
        %v1238 = vunpack.c.l.b16 %v409
        %v1239 = vunpack.c.h.b16 %v409
        %v1240 = vunpack.c.l.b16 %v410
        %v1241 = vunpack.c.h.b16 %v410
        %v1242 = vunpack.c.l.b16 %v411
        %v1243 = vunpack.c.h.b16 %v411
        %v1244 = vunpack.c.l.b16 %v412
        %v1245 = vunpack.c.h.b16 %v412
        %v1246 = vunpack.c.l.b16 %v413
        %v1247 = vunpack.c.h.b16 %v413
        %v1248 = vunpack.c.l.b16 %v414
        %v1249 = vunpack.c.h.b16 %v414
        %v1250 = vunpack.c.l.b16 %v415
        %v1251 = vunpack.c.h.b16 %v415
        %v1252 = vunpack.c.l.b16 %v416
        %v1253 = vunpack.c.h.b16 %v416
        %v1254 = vunpack.c.l.b16 %v417
        %v1255 = vunpack.c.h.b16 %v417
        %v1256 = vunpack.c.l.b16 %v418
        %v1257 = vunpack.c.h.b16 %v418
        %v1258 = vunpack.c.l.b16 %v419
        %v1259 = vunpack.c.h.b16 %v419
        %v1260 = vunpack.c.l.b16 %v420
        %v1261 = vunpack.c.h.b16 %v420
        %v1262 = vunpack.c.l.b16 %v421
        %v1263 = vunpack.c.h.b16 %v421
        %v1264 = vunpack.c.l.b16 %v422
        %v1265 = vunpack.c.h.b16 %v422
        %v1266 = vunpack.c.l.b16 %v423
        %v1267 = vunpack.c.h.b16 %v423
        %v1268 = vunpack.c.l.b16 %v424
        %v1269 = vunpack.c.h.b16 %v424
        %v1270 = vunpack.c.l.b16 %v425
        %v1271 = vunpack.c.h.b16 %v425
        %v1272 = vunpack.c.l.b16 %v426
        %v1273 = vunpack.c.h.b16 %v426
        %v1274 = vunpack.c.l.b16 %v427
        %v1275 = vunpack.c.h.b16 %v427
        %v1276 = vunpack.c.l.b16 %v428
        %v1277 = vunpack.c.h.b16 %v428
        %v1278 = vunpack.c.l.b16 %v429
        %v1279 = vunpack.c.h.b16 %v429
        %v1280 = vunpack.c.l.b16 %v430
        %v1281 = vunpack.c.h.b16 %v430
        %v1282 = vunpack.c.l.b16 %v431
        %v1283 = vunpack.c.h.b16 %v431
        %v1284 = vunpack.c.l.b16 %v432
        %v1285 = vunpack.c.h.b16 %v432
        %v1286 = vunpack.c.l.b16 %v433
        %v1287 = vunpack.c.h.b16 %v433
        %v1288 = vunpack.c.l.b16 %v434
        %v1289 = vunpack.c.h.b16 %v434
        %v1290 = vunpack.c.l.b16 %v435
        %v1291 = vunpack.c.h.b16 %v435
        %v1292 = vunpack.c.l.b16 %v436
        %v1293 = vunpack.c.h.b16 %v436
        %v1294 = vunpack.c.l.b16 %v437
        %v1295 = vunpack.c.h.b16 %v437
        %v1296 = vunpack.c.l.b16 %v438
        %v1297 = vunpack.c.h.b16 %v438
        %v1298 = vunpack.c.l.b16 %v439
        %v1299 = vunpack.c.h.b16 %v439
        %v1300 = vunpack.c.l.b16 %v440
        %v1301 = vunpack.c.h.b16 %v440
        %v1302 = vunpack.c.l.b16 %v441
        %v1303 = vunpack.c.h.b16 %v441
        %v1304 = vunpack.c.l.b16 %v442
        %v1305 = vunpack.c.h.b16 %v442
        %v1306 = vunpack.c.l.b16 %v443
        %v1307 = vunpack.c.h.b16 %v443
        %v1308 = vunpack.c.l.b16 %v444
        %v1309 = vunpack.c.h.b16 %v444
        %v1310 = vunpack.c.l.b16 %v445
        %v1311 = vunpack.c.h.b16 %v445
        %v1312 = vunpack.c.l.b16 %v446
        %v1313 = vunpack.c.h.b16 %v446
        %v1314 = vunpack.c.l.b16 %v447
        %v1315 = vunpack.c.h.b16 %v447
        %v1316 = vunpack.c.l.b16 %v448
        %v1317 = vunpack.c.h.b16 %v448
        %v1318 = vunpack.c.l.b16 %v449
        %v1319 = vunpack.c.h.b16 %v449
        %v1320 = vunpack.c.l.b16 %v450
        %v1321 = vunpack.c.h.b16 %v450
        %v1322 = vunpack.c.l.b16 %v451
        %v1323 = vunpack.c.h.b16 %v451
        %v1324 = vunpack.c.l.b16 %v452
        %v1325 = vunpack.c.h.b16 %v452
        %v1326 = vunpack.c.l.b16 %v453
        %v1327 = vunpack.c.h.b16 %v453
        %v1328 = vunpack.c.l.b16 %v454
        %v1329 = vunpack.c.h.b16 %v454
        %v1330 = vunpack.c.l.b16 %v455
        %v1331 = vunpack.c.h.b16 %v455
        %v1332 = vunpack.c.l.b16 %v456
        %v1333 = vunpack.c.h.b16 %v456
        %v1334 = vunpack.c.l.b16 %v457
        %v1335 = vunpack.c.h.b16 %v457
        %v1336 = vunpack.c.l.b16 %v458
        %v1337 = vunpack.c.h.b16 %v458
        %v1338 = vunpack.c.l.b16 %v459
        %v1339 = vunpack.c.h.b16 %v459
        %v1340 = vunpack.c.l.b16 %v460
        %v1341 = vunpack.c.h.b16 %v460
        %v1342 = vunpack.c.l.b16 %v461
        %v1343 = vunpack.c.h.b16 %v461
        %v1344 = vunpack.c.l.b16 %v462
        %v1345 = vunpack.c.h.b16 %v462
        %v1346 = vunpack.c.l.b16 %v463
        %v1347 = vunpack.c.h.b16 %v463
        %v1348 = vunpack.c.l.b16 %v464
        %v1349 = vunpack.c.h.b16 %v464
        %v1350 = vunpack.c.l.b16 %v465
        %v1351 = vunpack.c.h.b16 %v465
        %v1352 = vunpack.c.l.b16 %v466
        %v1353 = vunpack.c.h.b16 %v466
        %v1354 = vunpack.c.l.b16 %v467
        %v1355 = vunpack.c.h.b16 %v467
        %v1356 = vunpack.c.l.b16 %v468
        %v1357 = vunpack.c.h.b16 %v468
        %v1358 = vunpack.c.l.b16 %v469
        %v1359 = vunpack.c.h.b16 %v469
        %v1360 = vunpack.c.l.b16 %v470
        %v1361 = vunpack.c.h.b16 %v470
        %v1362 = vunpack.c.l.b16 %v471
        %v1363 = vunpack.c.h.b16 %v471
        %v1364 = vunpack.c.l.b16 %v472
        %v1365 = vunpack.c.h.b16 %v472
        %v1366 = vunpack.c.l.b16 %v473
        %v1367 = vunpack.c.h.b16 %v473
        %v1368 = vunpack.c.l.b16 %v474
        %v1369 = vunpack.c.h.b16 %v474
        %v1370 = vunpack.c.l.b16 %v475
        %v1371 = vunpack.c.h.b16 %v475
        %v1372 = vunpack.c.l.b16 %v476
        %v1373 = vunpack.c.h.b16 %v476
        %v1374 = vunpack.c.l.b16 %v477
        %v1375 = vunpack.c.h.b16 %v477
        %v1376 = vunpack.c.l.b16 %v478
        %v1377 = vunpack.c.h.b16 %v478
        %v1378 = vunpack.c.l.b16 %v479
        %v1379 = vunpack.c.h.b16 %v479
        %v1380 = vunpack.c.l.b16 %v480
        %v1381 = vunpack.c.h.b16 %v480
        %v1382 = vunpack.c.l.b16 %v481
        %v1383 = vunpack.c.h.b16 %v481
        %v1384 = vunpack.c.l.b16 %v482
        %v1385 = vunpack.c.h.b16 %v482
        %v1386 = vunpack.c.l.b16 %v483
        %v1387 = vunpack.c.h.b16 %v483
        %v1388 = vunpack.c.l.b16 %v484
        %v1389 = vunpack.c.h.b16 %v484
        %v1390 = vunpack.c.l.b16 %v485
        %v1391 = vunpack.c.h.b16 %v485
        %v1392 = vunpack.c.l.b16 %v486
        %v1393 = vunpack.c.h.b16 %v486
        %v1394 = vunpack.c.l.b16 %v487
        %v1395 = vunpack.c.h.b16 %v487
        %v1396 = vunpack.c.l.b16 %v488
        %v1397 = vunpack.c.h.b16 %v488
        %v1398 = vunpack.c.l.b16 %v489
        %v1399 = vunpack.c.h.b16 %v489
        %v1400 = vunpack.c.l.b16 %v490
        %v1401 = vunpack.c.h.b16 %v490
        %v1402 = vunpack.c.l.b16 %v491
        %v1403 = vunpack.c.h.b16 %v491
        %v1404 = vunpack.c.l.b16 %v492
        %v1405 = vunpack.c.h.b16 %v492
        %v1406 = vunpack.c.l.b16 %v493
        %v1407 = vunpack.c.h.b16 %v493
        %v1408 = vunpack.c.l.b16 %v494
        %v1409 = vunpack.c.h.b16 %v494
        %v1410 = vunpack.c.l.b16 %v495
        %v1411 = vunpack.c.h.b16 %v495
        %v1412 = vunpack.c.l.b16 %v496
        %v1413 = vunpack.c.h.b16 %v496
        %v1414 = vunpack.c.l.b16 %v497
        %v1415 = vunpack.c.h.b16 %v497
        %v1416 = vunpack.c.l.b16 %v498
        %v1417 = vunpack.c.h.b16 %v498
        %v1418 = vunpack.c.l.b16 %v499
        %v1419 = vunpack.c.h.b16 %v499
        %v1420 = vunpack.c.l.b16 %v500
        %v1421 = vunpack.c.h.b16 %v500
        %v1422 = vunpack.c.l.b16 %v501
        %v1423 = vunpack.c.h.b16 %v501
        %v1424 = vunpack.c.l.b16 %v502
        %v1425 = vunpack.c.h.b16 %v502
        %v1426 = vunpack.c.l.b16 %v503
        %v1427 = vunpack.c.h.b16 %v503
        %v1428 = vunpack.c.l.b16 %v504
        %v1429 = vunpack.c.h.b16 %v504
        %v1430 = vunpack.c.l.b16 %v505
        %v1431 = vunpack.c.h.b16 %v505
        %v1432 = vunpack.c.l.b16 %v506
        %v1433 = vunpack.c.h.b16 %v506
        %v1434 = vunpack.c.l.b16 %v507
        %v1435 = vunpack.c.h.b16 %v507
        %v1436 = vpack.c.b16 %v1008, %v1004
        %v1437 = vpack.c.b16 %v1009, %v1005
        %v1438 = vpack.c.b16 %v1010, %v1006
        %v1439 = vpack.c.b16 %v1011, %v1007
        %v1440 = vpack.c.b16 %v1016, %v1012
        %v1441 = vpack.c.b16 %v1017, %v1013
        %v1442 = vpack.c.b16 %v1018, %v1014
        %v1443 = vpack.c.b16 %v1019, %v1015
        %v1444 = vpack.c.b16 %v1024, %v1020
        %v1445 = vpack.c.b16 %v1025, %v1021
        %v1446 = vpack.c.b16 %v1026, %v1022
        %v1447 = vpack.c.b16 %v1027, %v1023
        %v1448 = vpack.c.b16 %v1032, %v1028
        %v1449 = vpack.c.b16 %v1033, %v1029
        %v1450 = vpack.c.b16 %v1034, %v1030
        %v1451 = vpack.c.b16 %v1035, %v1031
        %v1452 = vpack.c.b16 %v1040, %v1036
        %v1453 = vpack.c.b16 %v1041, %v1037
        %v1454 = vpack.c.b16 %v1042, %v1038
        %v1455 = vpack.c.b16 %v1043, %v1039
        %v1456 = vpack.c.b16 %v1048, %v1044
        %v1457 = vpack.c.b16 %v1049, %v1045
        %v1458 = vpack.c.b16 %v1050, %v1046
        %v1459 = vpack.c.b16 %v1051, %v1047
        %v1460 = vpack.c.b16 %v1056, %v1052
        %v1461 = vpack.c.b16 %v1057, %v1053
        %v1462 = vpack.c.b16 %v1058, %v1054
        %v1463 = vpack.c.b16 %v1059, %v1055
        %v1464 = vpack.c.b16 %v1064, %v1060
        %v1465 = vpack.c.b16 %v1065, %v1061
        %v1466 = vpack.c.b16 %v1066, %v1062
        %v1467 = vpack.c.b16 %v1067, %v1063
        %v1468 = vpack.c.b16 %v1072, %v1068
        %v1469 = vpack.c.b16 %v1073, %v1069
        %v1470 = vpack.c.b16 %v1074, %v1070
        %v1471 = vpack.c.b16 %v1075, %v1071
        %v1472 = vpack.c.b16 %v1080, %v1076
        %v1473 = vpack.c.b16 %v1081, %v1077
        %v1474 = vpack.c.b16 %v1082, %v1078
        %v1475 = vpack.c.b16 %v1083, %v1079
        %v1476 = vpack.c.b16 %v1088, %v1084
        %v1477 = vpack.c.b16 %v1089, %v1085
        %v1478 = vpack.c.b16 %v1090, %v1086
        %v1479 = vpack.c.b16 %v1091, %v1087
        %v1480 = vpack.c.b16 %v1096, %v1092
        %v1481 = vpack.c.b16 %v1097, %v1093
        %v1482 = vpack.c.b16 %v1098, %v1094
        %v1483 = vpack.c.b16 %v1099, %v1095
        %v1484 = vpack.c.b16 %v1104, %v1100
        %v1485 = vpack.c.b16 %v1105, %v1101
        %v1486 = vpack.c.b16 %v1106, %v1102
        %v1487 = vpack.c.b16 %v1107, %v1103
        %v1488 = vpack.c.b16 %v1112, %v1108
        %v1489 = vpack.c.b16 %v1113, %v1109
        %v1490 = vpack.c.b16 %v1114, %v1110
        %v1491 = vpack.c.b16 %v1115, %v1111
        %v1492 = vpack.c.b16 %v1120, %v1116
        %v1493 = vpack.c.b16 %v1121, %v1117
        %v1494 = vpack.c.b16 %v1122, %v1118
        %v1495 = vpack.c.b16 %v1123, %v1119
        %v1496 = vpack.c.b16 %v1128, %v1124
        %v1497 = vpack.c.b16 %v1129, %v1125
        %v1498 = vpack.c.b16 %v1130, %v1126
        %v1499 = vpack.c.b16 %v1131, %v1127
        %v1500 = vpack.c.b16 %v1136, %v1132
        %v1501 = vpack.c.b16 %v1137, %v1133
        %v1502 = vpack.c.b16 %v1138, %v1134
        %v1503 = vpack.c.b16 %v1139, %v1135
        %v1504 = vpack.c.b16 %v1144, %v1140
        %v1505 = vpack.c.b16 %v1145, %v1141
        %v1506 = vpack.c.b16 %v1146, %v1142
        %v1507 = vpack.c.b16 %v1147, %v1143
        %v1508 = vpack.c.b16 %v1152, %v1148
        %v1509 = vpack.c.b16 %v1153, %v1149
        %v1510 = vpack.c.b16 %v1154, %v1150
        %v1511 = vpack.c.b16 %v1155, %v1151
        %v1512 = vpack.c.b16 %v1160, %v1156
        %v1513 = vpack.c.b16 %v1161, %v1157
        %v1514 = vpack.c.b16 %v1162, %v1158
        %v1515 = vpack.c.b16 %v1163, %v1159
        %v1516 = vpack.c.b16 %v1168, %v1164
        %v1517 = vpack.c.b16 %v1169, %v1165
        %v1518 = vpack.c.b16 %v1170, %v1166
        %v1519 = vpack.c.b16 %v1171, %v1167
        %v1520 = vpack.c.b16 %v1176, %v1172
        %v1521 = vpack.c.b16 %v1177, %v1173
        %v1522 = vpack.c.b16 %v1178, %v1174
        %v1523 = vpack.c.b16 %v1179, %v1175
        %v1524 = vpack.c.b16 %v1184, %v1180
        %v1525 = vpack.c.b16 %v1185, %v1181
        %v1526 = vpack.c.b16 %v1186, %v1182
        %v1527 = vpack.c.b16 %v1187, %v1183
        %v1528 = vpack.c.b16 %v1192, %v1188
        %v1529 = vpack.c.b16 %v1193, %v1189
        %v1530 = vpack.c.b16 %v1194, %v1190
        %v1531 = vpack.c.b16 %v1195, %v1191
        %v1532 = vpack.c.b16 %v1200, %v1196
        %v1533 = vpack.c.b16 %v1201, %v1197
        %v1534 = vpack.c.b16 %v1202, %v1198
        %v1535 = vpack.c.b16 %v1203, %v1199
        %v1536 = vpack.c.b16 %v1208, %v1204
        %v1537 = vpack.c.b16 %v1209, %v1205
        %v1538 = vpack.c.b16 %v1210, %v1206
        %v1539 = vpack.c.b16 %v1211, %v1207
        %v1540 = vpack.c.b16 %v1216, %v1212
        %v1541 = vpack.c.b16 %v1217, %v1213
        %v1542 = vpack.c.b16 %v1218, %v1214
        %v1543 = vpack.c.b16 %v1219, %v1215
        %v1544 = vpack.c.b16 %v1224, %v1220
        %v1545 = vpack.c.b16 %v1225, %v1221
        %v1546 = vpack.c.b16 %v1226, %v1222
        %v1547 = vpack.c.b16 %v1227, %v1223
        %v1548 = vpack.c.b16 %v1232, %v1228
        %v1549 = vpack.c.b16 %v1233, %v1229
        %v1550 = vpack.c.b16 %v1234, %v1230
        %v1551 = vpack.c.b16 %v1235, %v1231
        %v1552 = vpack.c.b16 %v1240, %v1236
        %v1553 = vpack.c.b16 %v1241, %v1237
        %v1554 = vpack.c.b16 %v1242, %v1238
        %v1555 = vpack.c.b16 %v1243, %v1239
        %v1556 = vpack.c.b16 %v1248, %v1244
        %v1557 = vpack.c.b16 %v1249, %v1245
        %v1558 = vpack.c.b16 %v1250, %v1246
        %v1559 = vpack.c.b16 %v1251, %v1247
        %v1560 = vpack.c.b16 %v1256, %v1252
        %v1561 = vpack.c.b16 %v1257, %v1253
        %v1562 = vpack.c.b16 %v1258, %v1254
        %v1563 = vpack.c.b16 %v1259, %v1255
        %v1564 = vpack.c.b16 %v1264, %v1260
        %v1565 = vpack.c.b16 %v1265, %v1261
        %v1566 = vpack.c.b16 %v1266, %v1262
        %v1567 = vpack.c.b16 %v1267, %v1263
        %v1568 = vpack.c.b16 %v1272, %v1268
        %v1569 = vpack.c.b16 %v1273, %v1269
        %v1570 = vpack.c.b16 %v1274, %v1270
        %v1571 = vpack.c.b16 %v1275, %v1271
        %v1572 = vpack.c.b16 %v1280, %v1276
        %v1573 = vpack.c.b16 %v1281, %v1277
        %v1574 = vpack.c.b16 %v1282, %v1278
        %v1575 = vpack.c.b16 %v1283, %v1279
        %v1576 = vpack.c.b16 %v1288, %v1284
        %v1577 = vpack.c.b16 %v1289, %v1285
        %v1578 = vpack.c.b16 %v1290, %v1286
        %v1579 = vpack.c.b16 %v1291, %v1287
        %v1580 = vpack.c.b16 %v1296, %v1292
        %v1581 = vpack.c.b16 %v1297, %v1293
        %v1582 = vpack.c.b16 %v1298, %v1294
        %v1583 = vpack.c.b16 %v1299, %v1295
        %v1584 = vpack.c.b16 %v1304, %v1300
        %v1585 = vpack.c.b16 %v1305, %v1301
        %v1586 = vpack.c.b16 %v1306, %v1302
        %v1587 = vpack.c.b16 %v1307, %v1303
        %v1588 = vpack.c.b16 %v1312, %v1308
        %v1589 = vpack.c.b16 %v1313, %v1309
        %v1590 = vpack.c.b16 %v1314, %v1310
        %v1591 = vpack.c.b16 %v1315, %v1311
        %v1592 = vpack.c.b16 %v1320, %v1316
        %v1593 = vpack.c.b16 %v1321, %v1317
        %v1594 = vpack.c.b16 %v1322, %v1318
        %v1595 = vpack.c.b16 %v1323, %v1319
        %v1596 = vpack.c.b16 %v1328, %v1324
        %v1597 = vpack.c.b16 %v1329, %v1325
        %v1598 = vpack.c.b16 %v1330, %v1326
        %v1599 = vpack.c.b16 %v1331, %v1327
        %v1600 = vpack.c.b16 %v1336, %v1332
        %v1601 = vpack.c.b16 %v1337, %v1333
        %v1602 = vpack.c.b16 %v1338, %v1334
        %v1603 = vpack.c.b16 %v1339, %v1335
        %v1604 = vpack.c.b16 %v1344, %v1340
        %v1605 = vpack.c.b16 %v1345, %v1341
        %v1606 = vpack.c.b16 %v1346, %v1342
        %v1607 = vpack.c.b16 %v1347, %v1343
        %v1608 = vpack.c.b16 %v1352, %v1348
        %v1609 = vpack.c.b16 %v1353, %v1349
        %v1610 = vpack.c.b16 %v1354, %v1350
        %v1611 = vpack.c.b16 %v1355, %v1351
        %v1612 = vpack.c.b16 %v1360, %v1356
        %v1613 = vpack.c.b16 %v1361, %v1357
        %v1614 = vpack.c.b16 %v1362, %v1358
        %v1615 = vpack.c.b16 %v1363, %v1359
        %v1616 = vpack.c.b16 %v1368, %v1364
        %v1617 = vpack.c.b16 %v1369, %v1365
        %v1618 = vpack.c.b16 %v1370, %v1366
        %v1619 = vpack.c.b16 %v1371, %v1367
        %v1620 = vpack.c.b16 %v1376, %v1372
        %v1621 = vpack.c.b16 %v1377, %v1373
        %v1622 = vpack.c.b16 %v1378, %v1374
        %v1623 = vpack.c.b16 %v1379, %v1375
        %v1624 = vpack.c.b16 %v1384, %v1380
        %v1625 = vpack.c.b16 %v1385, %v1381
        %v1626 = vpack.c.b16 %v1386, %v1382
        %v1627 = vpack.c.b16 %v1387, %v1383
        %v1628 = vpack.c.b16 %v1392, %v1388
        %v1629 = vpack.c.b16 %v1393, %v1389
        %v1630 = vpack.c.b16 %v1394, %v1390
        %v1631 = vpack.c.b16 %v1395, %v1391
        %v1632 = vpack.c.b16 %v1400, %v1396
        %v1633 = vpack.c.b16 %v1401, %v1397
        %v1634 = vpack.c.b16 %v1402, %v1398
        %v1635 = vpack.c.b16 %v1403, %v1399
        %v1636 = vpack.c.b16 %v1408, %v1404
        %v1637 = vpack.c.b16 %v1409, %v1405
        %v1638 = vpack.c.b16 %v1410, %v1406
        %v1639 = vpack.c.b16 %v1411, %v1407
        %v1640 = vpack.c.b16 %v1416, %v1412
        %v1641 = vpack.c.b16 %v1417, %v1413
        %v1642 = vpack.c.b16 %v1418, %v1414
        %v1643 = vpack.c.b16 %v1419, %v1415
        %v1644 = vpack.c.b16 %v1424, %v1420
        %v1645 = vpack.c.b16 %v1425, %v1421
        %v1646 = vpack.c.b16 %v1426, %v1422
        %v1647 = vpack.c.b16 %v1427, %v1423
        %v1648 = vpack.c.b16 %v1432, %v1428
        %v1649 = vpack.c.b16 %v1433, %v1429
        %v1650 = vpack.c.b16 %v1434, %v1430
        %v1651 = vpack.c.b16 %v1435, %v1431
        %vm1868 = vcmask 785408
        %v1870 = vsel %vm1868, %v690, 0
        %v1873 = vsel %vm1868, %v697, 0
        %v1876 = vsel %vm1868, %v704, 0
        %v1879 = vsel %vm1868, %v711, 0
        %v1882 = vsel %vm1868, %v718, 0
        %v1885 = vsel %vm1868, %v725, 0
        %v1888 = vsel %vm1868, %v732, 0
        %v1891 = vsel %vm1868, %v739, 0
        %1893 = vmatprep.subr.bf16.mxu0 %v1437
        %1894 = vmatpush1.bf16.msra.mxu0 %v1436
        %1895 = vmatprep.subr.bf16.mxu0 %v1441
        %1896 = vmatpush1.bf16.msra.mxu0 %v1440
        %1897 = vmatprep.subr.bf16.mxu0 %v1445
        %1898 = vmatpush1.bf16.msra.mxu0 %v1444
        %1899 = vmatprep.subr.bf16.mxu0 %v1449
        %1900 = vmatpush1.bf16.msra.mxu0 %v1448
        %1901 = vmatprep.subr.bf16.mxu0 %v1453
        %1902 = vmatpush1.bf16.msra.mxu0 %v1452
        %1903 = vmatprep.subr.bf16.mxu0 %v1457
        %1904 = vmatpush1.bf16.msra.mxu0 %v1456
        %1905 = vmatprep.subr.bf16.mxu0 %v1461
        %1906 = vmatpush1.bf16.msra.mxu0 %v1460
        %1907 = vmatprep.subr.bf16.mxu0 %v1465
        %1908 = vmatpush1.bf16.msra.mxu0 %v1464
        %1909 = vmatprep.subr.bf16.mxu0 %v1469
        %1910 = vmatpush1.bf16.msra.mxu0 %v1468
        %1911 = vmatprep.subr.bf16.mxu0 %v1473
        %1912 = vmatpush1.bf16.msra.mxu0 %v1472
        %1913 = vmatprep.subr.bf16.mxu0 %v1477
        %1914 = vmatpush1.bf16.msra.mxu0 %v1476
        %1915 = vmatprep.subr.bf16.mxu0 %v1481
        %1916 = vmatpush1.bf16.msra.mxu0 %v1480
        %1917 = vmatprep.subr.bf16.mxu0 %v1485
        %1918 = vmatpush1.bf16.msra.mxu0 %v1484
        %1919 = vmatprep.subr.bf16.mxu0 %v1489
        %1920 = vmatpush1.bf16.msra.mxu0 %v1488
        %1921 = vmatprep.subr.bf16.mxu0 %v1493
        %1922 = vmatpush1.bf16.msra.mxu0 %v1492
        %1923 = vmatprep.subr.bf16.mxu0 %v1497
        %1924 = vmatpush1.bf16.msra.mxu0 %v1496
        %1925 = vmatprep.mubr.bf16.mxu0 %v685
        %1926 = vmatmul.mubr.bf16.gmra.mrb[0].mxu0 %v684
        %v1927 = vpop.f32.mrb[0].mxu0
        %v1928 = vadd.f32 0.0, %v1927
        %v1929 = vpop.f32.mrb[0].mxu0
        %v1930 = vadd.f32 0.0, %v1929
        %v1931 = vpop.f32.mrb[0].mxu0
        %v1932 = vadd.f32 0.0, %v1931
        %v1933 = vpop.f32.mrb[0].mxu0
        %v1934 = vadd.f32 0.0, %v1933
        %1935 = vmatprep.mubr.bf16.mxu0 %v692
        %1936 = vmatmul.mubr.bf16.gmra.mrb[0].mxu0 %v691
        %v1937 = vpop.f32.mrb[0].mxu0
        %v1938 = vadd.f32 0.0, %v1937
        %v1939 = vpop.f32.mrb[0].mxu0
        %v1940 = vadd.f32 0.0, %v1939
        %v1941 = vpop.f32.mrb[0].mxu0
        %v1942 = vadd.f32 0.0, %v1941
        %v1943 = vpop.f32.mrb[0].mxu0
        %v1944 = vadd.f32 0.0, %v1943
        %1945 = vmatprep.mubr.bf16.mxu0 %v699
        %1946 = vmatmul.mubr.bf16.gmra.mrb[0].mxu0 %v698
        %v1947 = vpop.f32.mrb[0].mxu0
        %v1948 = vadd.f32 0.0, %v1947
        %v1949 = vpop.f32.mrb[0].mxu0
        %v1950 = vadd.f32 0.0, %v1949
        %v1951 = vpop.f32.mrb[0].mxu0
        %v1952 = vadd.f32 0.0, %v1951
        %v1953 = vpop.f32.mrb[0].mxu0
        %v1954 = vadd.f32 0.0, %v1953
        %1955 = vmatprep.mubr.bf16.mxu0 %v706
        %1956 = vmatmul.mubr.bf16.gmra.mrb[0].mxu0 %v705
        %v1957 = vpop.f32.mrb[0].mxu0
        %v1958 = vadd.f32 0.0, %v1957
        %v1959 = vpop.f32.mrb[0].mxu0
        %v1960 = vadd.f32 0.0, %v1959
        %v1961 = vpop.f32.mrb[0].mxu0
        %v1962 = vadd.f32 0.0, %v1961
        %v1963 = vpop.f32.mrb[0].mxu0
        %v1964 = vadd.f32 0.0, %v1963
        %1965 = vmatprep.mubr.bf16.mxu0 %v713
        %1966 = vmatmul.mubr.bf16.gmra.mrb[0].mxu0 %v712
        %v1967 = vpop.f32.mrb[0].mxu0
        %v1968 = vadd.f32 0.0, %v1967
        %v1969 = vpop.f32.mrb[0].mxu0
        %v1970 = vadd.f32 0.0, %v1969
        %v1971 = vpop.f32.mrb[0].mxu0
        %v1972 = vadd.f32 0.0, %v1971
        %v1973 = vpop.f32.mrb[0].mxu0
        %v1974 = vadd.f32 0.0, %v1973
        %1975 = vmatprep.mubr.bf16.mxu0 %v720
        %1976 = vmatmul.mubr.bf16.gmra.mrb[0].mxu0 %v719
        %v1977 = vpop.f32.mrb[0].mxu0
        %v1978 = vadd.f32 0.0, %v1977
        %v1979 = vpop.f32.mrb[0].mxu0
        %v1980 = vadd.f32 0.0, %v1979
        %v1981 = vpop.f32.mrb[0].mxu0
        %v1982 = vadd.f32 0.0, %v1981
        %v1983 = vpop.f32.mrb[0].mxu0
        %v1984 = vadd.f32 0.0, %v1983
        %1985 = vmatprep.mubr.bf16.mxu0 %v727
        %1986 = vmatmul.mubr.bf16.gmra.mrb[0].mxu0 %v726
        %v1987 = vpop.f32.mrb[0].mxu0
        %v1988 = vadd.f32 0.0, %v1987
        %v1989 = vpop.f32.mrb[0].mxu0
        %v1990 = vadd.f32 0.0, %v1989
        %v1991 = vpop.f32.mrb[0].mxu0
        %v1992 = vadd.f32 0.0, %v1991
        %v1993 = vpop.f32.mrb[0].mxu0
        %v1994 = vadd.f32 0.0, %v1993
        %1995 = vmatprep.mubr.bf16.mxu0 %v734
        %1996 = vmatmul.mubr.bf16.gmra.mrb[0].mxu0 %v733
        %v1997 = vpop.f32.mrb[0].mxu0
        %v1998 = vadd.f32 0.0, %v1997
        %v1999 = vpop.f32.mrb[0].mxu0
        %v2000 = vadd.f32 0.0, %v1999
        %v2001 = vpop.f32.mrb[0].mxu0
        %v2002 = vadd.f32 0.0, %v2001
        %v2003 = vpop.f32.mrb[0].mxu0
        %v2004 = vadd.f32 0.0, %v2003
        %2005 = vdwg.mxu0
        %2006 = vmatprep.subr.bf16.mxu0 %v1501
        %2007 = vmatpush1.bf16.msra.mxu0 %v1500
        %2008 = vmatprep.subr.bf16.mxu0 %v1505
        %2009 = vmatpush1.bf16.msra.mxu0 %v1504
        %2010 = vmatprep.subr.bf16.mxu0 %v1509
        %2011 = vmatpush1.bf16.msra.mxu0 %v1508
        %2012 = vmatprep.subr.bf16.mxu0 %v1513
        %2013 = vmatpush1.bf16.msra.mxu0 %v1512
        %2014 = vmatprep.subr.bf16.mxu0 %v1517
        %2015 = vmatpush1.bf16.msra.mxu0 %v1516
        %2016 = vmatprep.subr.bf16.mxu0 %v1521
        %2017 = vmatpush1.bf16.msra.mxu0 %v1520
        %2018 = vmatprep.subr.bf16.mxu0 %v1525
        %2019 = vmatpush1.bf16.msra.mxu0 %v1524
        %2020 = vmatprep.subr.bf16.mxu0 %v1529
        %2021 = vmatpush1.bf16.msra.mxu0 %v1528
        %2022 = vmatprep.subr.bf16.mxu0 %v1533
        %2023 = vmatpush1.bf16.msra.mxu0 %v1532
        %2024 = vmatprep.subr.bf16.mxu0 %v1537
        %2025 = vmatpush1.bf16.msra.mxu0 %v1536
        %2026 = vmatprep.subr.bf16.mxu0 %v1541
        %2027 = vmatpush1.bf16.msra.mxu0 %v1540
        %2028 = vmatprep.subr.bf16.mxu0 %v1545
        %2029 = vmatpush1.bf16.msra.mxu0 %v1544
        %2030 = vmatprep.subr.bf16.mxu0 %v1549
        %2031 = vmatpush1.bf16.msra.mxu0 %v1548
        %2032 = vmatprep.subr.bf16.mxu0 %v1553
        %2033 = vmatpush1.bf16.msra.mxu0 %v1552
        %2034 = vmatprep.subr.bf16.mxu0 %v1557
        %2035 = vmatpush1.bf16.msra.mxu0 %v1556
        %2036 = vmatprep.subr.bf16.mxu0 %v1561
        %2037 = vmatpush1.bf16.msra.mxu0 %v1560
        %2038 = vmatprep.mubr.bf16.mxu0 %v687
        %2039 = vmatmul.mubr.bf16.gmra.mrb[0].mxu0 %v686
        %v2040 = vpop.f32.mrb[0].mxu0
        %v2041 = vadd.f32 %v1928, %v2040
        %v2042 = vpop.f32.mrb[0].mxu0
        %v2043 = vadd.f32 %v1930, %v2042
        %v2044 = vpop.f32.mrb[0].mxu0
        %v2045 = vadd.f32 %v1932, %v2044
        %v2046 = vpop.f32.mrb[0].mxu0
        %v2047 = vadd.f32 %v1934, %v2046
        %2048 = vmatprep.mubr.bf16.mxu0 %v694
        %2049 = vmatmul.mubr.bf16.gmra.mrb[0].mxu0 %v693
        %v2050 = vpop.f32.mrb[0].mxu0
        %v2051 = vadd.f32 %v1938, %v2050
        %v2052 = vpop.f32.mrb[0].mxu0
        %v2053 = vadd.f32 %v1940, %v2052
        %v2054 = vpop.f32.mrb[0].mxu0
        %v2055 = vadd.f32 %v1942, %v2054
        %v2056 = vpop.f32.mrb[0].mxu0
        %v2057 = vadd.f32 %v1944, %v2056
        %2058 = vmatprep.mubr.bf16.mxu0 %v701
        %2059 = vmatmul.mubr.bf16.gmra.mrb[0].mxu0 %v700
        %v2060 = vpop.f32.mrb[0].mxu0
        %v2061 = vadd.f32 %v1948, %v2060
        %v2062 = vpop.f32.mrb[0].mxu0
        %v2063 = vadd.f32 %v1950, %v2062
        %v2064 = vpop.f32.mrb[0].mxu0
        %v2065 = vadd.f32 %v1952, %v2064
        %v2066 = vpop.f32.mrb[0].mxu0
        %v2067 = vadd.f32 %v1954, %v2066
        %2068 = vmatprep.mubr.bf16.mxu0 %v708
        %2069 = vmatmul.mubr.bf16.gmra.mrb[0].mxu0 %v707
        %v2070 = vpop.f32.mrb[0].mxu0
        %v2071 = vadd.f32 %v1958, %v2070
        %v2072 = vpop.f32.mrb[0].mxu0
        %v2073 = vadd.f32 %v1960, %v2072
        %v2074 = vpop.f32.mrb[0].mxu0
        %v2075 = vadd.f32 %v1962, %v2074
        %v2076 = vpop.f32.mrb[0].mxu0
        %v2077 = vadd.f32 %v1964, %v2076
        %2078 = vmatprep.mubr.bf16.mxu0 %v715
        %2079 = vmatmul.mubr.bf16.gmra.mrb[0].mxu0 %v714
        %v2080 = vpop.f32.mrb[0].mxu0
        %v2081 = vadd.f32 %v1968, %v2080
        %v2082 = vpop.f32.mrb[0].mxu0
        %v2083 = vadd.f32 %v1970, %v2082
        %v2084 = vpop.f32.mrb[0].mxu0
        %v2085 = vadd.f32 %v1972, %v2084
        %v2086 = vpop.f32.mrb[0].mxu0
        %v2087 = vadd.f32 %v1974, %v2086
        %2088 = vmatprep.mubr.bf16.mxu0 %v722
        %2089 = vmatmul.mubr.bf16.gmra.mrb[0].mxu0 %v721
        %v2090 = vpop.f32.mrb[0].mxu0
        %v2091 = vadd.f32 %v1978, %v2090
        %v2092 = vpop.f32.mrb[0].mxu0
        %v2093 = vadd.f32 %v1980, %v2092
        %v2094 = vpop.f32.mrb[0].mxu0
        %v2095 = vadd.f32 %v1982, %v2094
        %v2096 = vpop.f32.mrb[0].mxu0
        %v2097 = vadd.f32 %v1984, %v2096
        %2098 = vmatprep.mubr.bf16.mxu0 %v729
        %2099 = vmatmul.mubr.bf16.gmra.mrb[0].mxu0 %v728
        %v2100 = vpop.f32.mrb[0].mxu0
        %v2101 = vadd.f32 %v1988, %v2100
        %v2102 = vpop.f32.mrb[0].mxu0
        %v2103 = vadd.f32 %v1990, %v2102
        %v2104 = vpop.f32.mrb[0].mxu0
        %v2105 = vadd.f32 %v1992, %v2104
        %v2106 = vpop.f32.mrb[0].mxu0
        %v2107 = vadd.f32 %v1994, %v2106
        %2108 = vmatprep.mubr.bf16.mxu0 %v736
        %2109 = vmatmul.mubr.bf16.gmra.mrb[0].mxu0 %v735
        %v2110 = vpop.f32.mrb[0].mxu0
        %v2111 = vadd.f32 %v1998, %v2110
        %v2112 = vpop.f32.mrb[0].mxu0
        %v2113 = vadd.f32 %v2000, %v2112
        %v2114 = vpop.f32.mrb[0].mxu0
        %v2115 = vadd.f32 %v2002, %v2114
        %v2116 = vpop.f32.mrb[0].mxu0
        %v2117 = vadd.f32 %v2004, %v2116
        %2118 = vdwg.mxu0
        %2119 = vmatprep.subr.bf16.mxu0 %v1565
        %2120 = vmatpush1.bf16.msra.mxu0 %v1564
        %2121 = vmatprep.subr.bf16.mxu0 %v1569
        %2122 = vmatpush1.bf16.msra.mxu0 %v1568
        %2123 = vmatprep.subr.bf16.mxu0 %v1573
        %2124 = vmatpush1.bf16.msra.mxu0 %v1572
        %2125 = vmatprep.subr.bf16.mxu0 %v1577
        %2126 = vmatpush1.bf16.msra.mxu0 %v1576
        %2127 = vmatprep.subr.bf16.mxu0 %v1581
        %2128 = vmatpush1.bf16.msra.mxu0 %v1580
        %2129 = vmatprep.subr.bf16.mxu0 %v1585
        %2130 = vmatpush1.bf16.msra.mxu0 %v1584
        %2131 = vmatprep.subr.bf16.mxu0 %v1589
        %2132 = vmatpush1.bf16.msra.mxu0 %v1588
        %2133 = vmatprep.subr.bf16.mxu0 %v1593
        %2134 = vmatpush1.bf16.msra.mxu0 %v1592
        %2135 = vmatprep.subr.bf16.mxu0 %v1597
        %2136 = vmatpush1.bf16.msra.mxu0 %v1596
        %2137 = vmatprep.subr.bf16.mxu0 %v1601
        %2138 = vmatpush1.bf16.msra.mxu0 %v1600
        %2139 = vmatprep.subr.bf16.mxu0 %v1605
        %2140 = vmatpush1.bf16.msra.mxu0 %v1604
        %2141 = vmatprep.subr.bf16.mxu0 %v1609
        %2142 = vmatpush1.bf16.msra.mxu0 %v1608
        %2143 = vmatprep.subr.bf16.mxu0 %v1613
        %2144 = vmatpush1.bf16.msra.mxu0 %v1612
        %2145 = vmatprep.subr.bf16.mxu0 %v1617
        %2146 = vmatpush1.bf16.msra.mxu0 %v1616
        %2147 = vmatprep.subr.bf16.mxu0 %v1621
        %2148 = vmatpush1.bf16.msra.mxu0 %v1620
        %2149 = vmatprep.subr.bf16.mxu0 %v1625
        %2150 = vmatpush1.bf16.msra.mxu0 %v1624
        %2151 = vmatprep.mubr.bf16.mxu0 %v689
        %2152 = vmatmul.mubr.bf16.gmra.mrb[0].mxu0 %v688
        %v2153 = vpop.f32.mrb[0].mxu0
        %v2154 = vadd.f32 %v2041, %v2153
        %v2155 = vpop.f32.mrb[0].mxu0
        %v2156 = vadd.f32 %v2043, %v2155
        %v2157 = vpop.f32.mrb[0].mxu0
        %v2158 = vadd.f32 %v2045, %v2157
        %v2159 = vpop.f32.mrb[0].mxu0
        %v2160 = vadd.f32 %v2047, %v2159
        %2161 = vmatprep.mubr.bf16.mxu0 %v696
        %2162 = vmatmul.mubr.bf16.gmra.mrb[0].mxu0 %v695
        %v2163 = vpop.f32.mrb[0].mxu0
        %v2164 = vadd.f32 %v2051, %v2163
        %v2165 = vpop.f32.mrb[0].mxu0
        %v2166 = vadd.f32 %v2053, %v2165
        %v2167 = vpop.f32.mrb[0].mxu0
        %v2168 = vadd.f32 %v2055, %v2167
        %v2169 = vpop.f32.mrb[0].mxu0
        %v2170 = vadd.f32 %v2057, %v2169
        %2171 = vmatprep.mubr.bf16.mxu0 %v703
        %2172 = vmatmul.mubr.bf16.gmra.mrb[0].mxu0 %v702
        %v2173 = vpop.f32.mrb[0].mxu0
        %v2174 = vadd.f32 %v2061, %v2173
        %v2175 = vpop.f32.mrb[0].mxu0
        %v2176 = vadd.f32 %v2063, %v2175
        %v2177 = vpop.f32.mrb[0].mxu0
        %v2178 = vadd.f32 %v2065, %v2177
        %v2179 = vpop.f32.mrb[0].mxu0
        %v2180 = vadd.f32 %v2067, %v2179
        %2181 = vmatprep.mubr.bf16.mxu0 %v710
        %2182 = vmatmul.mubr.bf16.gmra.mrb[0].mxu0 %v709
        %v2183 = vpop.f32.mrb[0].mxu0
        %v2184 = vadd.f32 %v2071, %v2183
        %v2185 = vpop.f32.mrb[0].mxu0
        %v2186 = vadd.f32 %v2073, %v2185
        %v2187 = vpop.f32.mrb[0].mxu0
        %v2188 = vadd.f32 %v2075, %v2187
        %v2189 = vpop.f32.mrb[0].mxu0
        %v2190 = vadd.f32 %v2077, %v2189
        %2191 = vmatprep.mubr.bf16.mxu0 %v717
        %2192 = vmatmul.mubr.bf16.gmra.mrb[0].mxu0 %v716
        %v2193 = vpop.f32.mrb[0].mxu0
        %v2194 = vadd.f32 %v2081, %v2193
        %v2195 = vpop.f32.mrb[0].mxu0
        %v2196 = vadd.f32 %v2083, %v2195
        %v2197 = vpop.f32.mrb[0].mxu0
        %v2198 = vadd.f32 %v2085, %v2197
        %v2199 = vpop.f32.mrb[0].mxu0
        %v2200 = vadd.f32 %v2087, %v2199
        %2201 = vmatprep.mubr.bf16.mxu0 %v724
        %2202 = vmatmul.mubr.bf16.gmra.mrb[0].mxu0 %v723
        %v2203 = vpop.f32.mrb[0].mxu0
        %v2204 = vadd.f32 %v2091, %v2203
        %v2205 = vpop.f32.mrb[0].mxu0
        %v2206 = vadd.f32 %v2093, %v2205
        %v2207 = vpop.f32.mrb[0].mxu0
        %v2208 = vadd.f32 %v2095, %v2207
        %v2209 = vpop.f32.mrb[0].mxu0
        %v2210 = vadd.f32 %v2097, %v2209
        %2211 = vmatprep.mubr.bf16.mxu0 %v731
        %2212 = vmatmul.mubr.bf16.gmra.mrb[0].mxu0 %v730
        %v2213 = vpop.f32.mrb[0].mxu0
        %v2214 = vadd.f32 %v2101, %v2213
        %v2215 = vpop.f32.mrb[0].mxu0
        %v2216 = vadd.f32 %v2103, %v2215
        %v2217 = vpop.f32.mrb[0].mxu0
        %v2218 = vadd.f32 %v2105, %v2217
        %v2219 = vpop.f32.mrb[0].mxu0
        %v2220 = vadd.f32 %v2107, %v2219
        %2221 = vmatprep.mubr.bf16.mxu0 %v738
        %2222 = vmatmul.mubr.bf16.gmra.mrb[0].mxu0 %v737
        %v2223 = vpop.f32.mrb[0].mxu0
        %v2224 = vadd.f32 %v2111, %v2223
        %v2225 = vpop.f32.mrb[0].mxu0
        %v2226 = vadd.f32 %v2113, %v2225
        %v2227 = vpop.f32.mrb[0].mxu0
        %v2228 = vadd.f32 %v2115, %v2227
        %v2229 = vpop.f32.mrb[0].mxu0
        %v2230 = vadd.f32 %v2117, %v2229
        %2231 = vdwg.mxu0
        %2232 = vmatprep.subr.bf16.mxu0 %v1629
        %2233 = vmatpush1.bf16.msra.mxu0 %v1628
        %2234 = vmatprep.subr.bf16.mxu0 %v1633
        %2235 = vmatpush1.bf16.msra.mxu0 %v1632
        %2236 = vmatprep.subr.bf16.mxu0 %v1637
        %2237 = vmatpush1.bf16.msra.mxu0 %v1636
        %2238 = vmatprep.subr.bf16.mxu0 %v1641
        %2239 = vmatpush1.bf16.msra.mxu0 %v1640
        %2240 = vmatprep.subr.bf16.mxu0 %v1645
        %2241 = vmatpush1.bf16.msra.mxu0 %v1644
        %2242 = vmatprep.subr.bf16.mxu0 %v1649
        %2243 = vmatpush1.bf16.msra.mxu0 %v1648
        %2244 = vmatprep.subr.bf16.mxu0 0
        %2245 = vmatpush1.bf16.msra.mxu0 0
        %2246 = vmatprep.subr.bf16.mxu0 0
        %2247 = vmatpush1.bf16.msra.mxu0 0
        %2248 = vmatprep.subr.bf16.mxu0 0
        %2249 = vmatpush1.bf16.msra.mxu0 0
        %2250 = vmatprep.subr.bf16.mxu0 0
        %2251 = vmatpush1.bf16.msra.mxu0 0
        %2252 = vmatprep.subr.bf16.mxu0 0
        %2253 = vmatpush1.bf16.msra.mxu0 0
        %2254 = vmatprep.subr.bf16.mxu0 0
        %2255 = vmatpush1.bf16.msra.mxu0 0
        %2256 = vmatprep.subr.bf16.mxu0 0
        %2257 = vmatpush1.bf16.msra.mxu0 0
        %2258 = vmatprep.subr.bf16.mxu0 0
        %2259 = vmatpush1.bf16.msra.mxu0 0
        %2260 = vmatprep.subr.bf16.mxu0 0
        %2261 = vmatpush1.bf16.msra.mxu0 0
        %2262 = vmatprep.subr.bf16.mxu0 0
        %2263 = vmatpush1.bf16.msra.mxu0 0
        %2264 = vmatprep.mubr.bf16.mxu0 0
        %2265 = vmatmul.mubr.bf16.gmra.mrb[0].mxu0 %v1870
        %v2266 = vpop.f32.mrb[0].mxu0
        %v2267 = vadd.f32 %v2154, %v2266
        %v2268 = vpop.f32.mrb[0].mxu0
        %v2269 = vadd.f32 %v2156, %v2268
        %v2270 = vpop.f32.mrb[0].mxu0
        %v2271 = vadd.f32 %v2158, %v2270
        %v2272 = vpop.f32.mrb[0].mxu0
        %v2273 = vadd.f32 %v2160, %v2272
        %2274 = vmatprep.mubr.bf16.mxu0 0
        %2275 = vmatmul.mubr.bf16.gmra.mrb[0].mxu0 %v1873
        %v2276 = vpop.f32.mrb[0].mxu0
        %v2277 = vadd.f32 %v2164, %v2276
        %v2278 = vpop.f32.mrb[0].mxu0
        %v2279 = vadd.f32 %v2166, %v2278
        %v2280 = vpop.f32.mrb[0].mxu0
        %v2281 = vadd.f32 %v2168, %v2280
        %v2282 = vpop.f32.mrb[0].mxu0
        %v2283 = vadd.f32 %v2170, %v2282
        %2284 = vmatprep.mubr.bf16.mxu0 0
        %2285 = vmatmul.mubr.bf16.gmra.mrb[0].mxu0 %v1876
        %v2286 = vpop.f32.mrb[0].mxu0
        %v2287 = vadd.f32 %v2174, %v2286
        %v2288 = vpop.f32.mrb[0].mxu0
        %v2289 = vadd.f32 %v2176, %v2288
        %v2290 = vpop.f32.mrb[0].mxu0
        %v2291 = vadd.f32 %v2178, %v2290
        %v2292 = vpop.f32.mrb[0].mxu0
        %v2293 = vadd.f32 %v2180, %v2292
        %2294 = vmatprep.mubr.bf16.mxu0 0
        %2295 = vmatmul.mubr.bf16.gmra.mrb[0].mxu0 %v1879
        %v2296 = vpop.f32.mrb[0].mxu0
        %v2297 = vadd.f32 %v2184, %v2296
        %v2298 = vpop.f32.mrb[0].mxu0
        %v2299 = vadd.f32 %v2186, %v2298
        %v2300 = vpop.f32.mrb[0].mxu0
        %v2301 = vadd.f32 %v2188, %v2300
        %v2302 = vpop.f32.mrb[0].mxu0
        %v2303 = vadd.f32 %v2190, %v2302
        %2304 = vmatprep.mubr.bf16.mxu0 0
        %2305 = vmatmul.mubr.bf16.gmra.mrb[0].mxu0 %v1882
        %v2306 = vpop.f32.mrb[0].mxu0
        %v2307 = vadd.f32 %v2194, %v2306
        %v2308 = vpop.f32.mrb[0].mxu0
        %v2309 = vadd.f32 %v2196, %v2308
        %v2310 = vpop.f32.mrb[0].mxu0
        %v2311 = vadd.f32 %v2198, %v2310
        %v2312 = vpop.f32.mrb[0].mxu0
        %v2313 = vadd.f32 %v2200, %v2312
        %2314 = vmatprep.mubr.bf16.mxu0 0
        %2315 = vmatmul.mubr.bf16.gmra.mrb[0].mxu0 %v1885
        %v2316 = vpop.f32.mrb[0].mxu0
        %v2317 = vadd.f32 %v2204, %v2316
        %v2318 = vpop.f32.mrb[0].mxu0
        %v2319 = vadd.f32 %v2206, %v2318
        %v2320 = vpop.f32.mrb[0].mxu0
        %v2321 = vadd.f32 %v2208, %v2320
        %v2322 = vpop.f32.mrb[0].mxu0
        %v2323 = vadd.f32 %v2210, %v2322
        %2324 = vmatprep.mubr.bf16.mxu0 0
        %2325 = vmatmul.mubr.bf16.gmra.mrb[0].mxu0 %v1888
        %v2326 = vpop.f32.mrb[0].mxu0
        %v2327 = vadd.f32 %v2214, %v2326
        %v2328 = vpop.f32.mrb[0].mxu0
        %v2329 = vadd.f32 %v2216, %v2328
        %v2330 = vpop.f32.mrb[0].mxu0
        %v2331 = vadd.f32 %v2218, %v2330
        %v2332 = vpop.f32.mrb[0].mxu0
        %v2333 = vadd.f32 %v2220, %v2332
        %2334 = vmatprep.mubr.bf16.mxu0 0
        %2335 = vmatmul.mubr.bf16.gmra.mrb[0].mxu0 %v1891
        %v2336 = vpop.f32.mrb[0].mxu0
        %v2337 = vadd.f32 %v2224, %v2336
        %v2338 = vpop.f32.mrb[0].mxu0
        %v2339 = vadd.f32 %v2226, %v2338
        %v2340 = vpop.f32.mrb[0].mxu0
        %v2341 = vadd.f32 %v2228, %v2340
        %v2342 = vpop.f32.mrb[0].mxu0
        %v2343 = vadd.f32 %v2230, %v2342
        %2344 = vdwg.mxu0
        %2345 = vmatprep.subr.bf16.mxu0 %v1439
        %2346 = vmatpush1.bf16.msra.mxu0 %v1438
        %2347 = vmatprep.subr.bf16.mxu0 %v1443
        %2348 = vmatpush1.bf16.msra.mxu0 %v1442
        %2349 = vmatprep.subr.bf16.mxu0 %v1447
        %2350 = vmatpush1.bf16.msra.mxu0 %v1446
        %2351 = vmatprep.subr.bf16.mxu0 %v1451
        %2352 = vmatpush1.bf16.msra.mxu0 %v1450
        %2353 = vmatprep.subr.bf16.mxu0 %v1455
        %2354 = vmatpush1.bf16.msra.mxu0 %v1454
        %2355 = vmatprep.subr.bf16.mxu0 %v1459
        %2356 = vmatpush1.bf16.msra.mxu0 %v1458
        %2357 = vmatprep.subr.bf16.mxu0 %v1463
        %2358 = vmatpush1.bf16.msra.mxu0 %v1462
        %2359 = vmatprep.subr.bf16.mxu0 %v1467
        %2360 = vmatpush1.bf16.msra.mxu0 %v1466
        %2361 = vmatprep.subr.bf16.mxu0 %v1471
        %2362 = vmatpush1.bf16.msra.mxu0 %v1470
        %2363 = vmatprep.subr.bf16.mxu0 %v1475
        %2364 = vmatpush1.bf16.msra.mxu0 %v1474
        %2365 = vmatprep.subr.bf16.mxu0 %v1479
        %2366 = vmatpush1.bf16.msra.mxu0 %v1478
        %2367 = vmatprep.subr.bf16.mxu0 %v1483
        %2368 = vmatpush1.bf16.msra.mxu0 %v1482
        %2369 = vmatprep.subr.bf16.mxu0 %v1487
        %2370 = vmatpush1.bf16.msra.mxu0 %v1486
        %2371 = vmatprep.subr.bf16.mxu0 %v1491
        %2372 = vmatpush1.bf16.msra.mxu0 %v1490
        %2373 = vmatprep.subr.bf16.mxu0 %v1495
        %2374 = vmatpush1.bf16.msra.mxu0 %v1494
        %2375 = vmatprep.subr.bf16.mxu0 %v1499
        %2376 = vmatpush1.bf16.msra.mxu0 %v1498
        %2377 = vmatprep.mubr.bf16.mxu0 %v685
        %2378 = vmatmul.mubr.bf16.gmra.mrb[0].mxu0 %v684
        %v2379 = vpop.f32.mrb[0].mxu0
        %v2380 = vadd.f32 0.0, %v2379
        %v2381 = vpop.f32.mrb[0].mxu0
        %v2382 = vadd.f32 0.0, %v2381
        %v2383 = vpop.f32.mrb[0].mxu0
        %v2384 = vadd.f32 0.0, %v2383
        %v2385 = vpop.f32.mrb[0].mxu0
        %v2386 = vadd.f32 0.0, %v2385
        %2387 = vmatprep.mubr.bf16.mxu0 %v692
        %2388 = vmatmul.mubr.bf16.gmra.mrb[0].mxu0 %v691
        %v2389 = vpop.f32.mrb[0].mxu0
        %v2390 = vadd.f32 0.0, %v2389
        %v2391 = vpop.f32.mrb[0].mxu0
        %v2392 = vadd.f32 0.0, %v2391
        %v2393 = vpop.f32.mrb[0].mxu0
        %v2394 = vadd.f32 0.0, %v2393
        %v2395 = vpop.f32.mrb[0].mxu0
        %v2396 = vadd.f32 0.0, %v2395
        %2397 = vmatprep.mubr.bf16.mxu0 %v699
        %2398 = vmatmul.mubr.bf16.gmra.mrb[0].mxu0 %v698
        %v2399 = vpop.f32.mrb[0].mxu0
        %v2400 = vadd.f32 0.0, %v2399
        %v2401 = vpop.f32.mrb[0].mxu0
        %v2402 = vadd.f32 0.0, %v2401
        %v2403 = vpop.f32.mrb[0].mxu0
        %v2404 = vadd.f32 0.0, %v2403
        %v2405 = vpop.f32.mrb[0].mxu0
        %v2406 = vadd.f32 0.0, %v2405
        %2407 = vmatprep.mubr.bf16.mxu0 %v706
        %2408 = vmatmul.mubr.bf16.gmra.mrb[0].mxu0 %v705
        %v2409 = vpop.f32.mrb[0].mxu0
        %v2410 = vadd.f32 0.0, %v2409
        %v2411 = vpop.f32.mrb[0].mxu0
        %v2412 = vadd.f32 0.0, %v2411
        %v2413 = vpop.f32.mrb[0].mxu0
        %v2414 = vadd.f32 0.0, %v2413
        %v2415 = vpop.f32.mrb[0].mxu0
        %v2416 = vadd.f32 0.0, %v2415
        %2417 = vmatprep.mubr.bf16.mxu0 %v713
        %2418 = vmatmul.mubr.bf16.gmra.mrb[0].mxu0 %v712
        %v2419 = vpop.f32.mrb[0].mxu0
        %v2420 = vadd.f32 0.0, %v2419
        %v2421 = vpop.f32.mrb[0].mxu0
        %v2422 = vadd.f32 0.0, %v2421
        %v2423 = vpop.f32.mrb[0].mxu0
        %v2424 = vadd.f32 0.0, %v2423
        %v2425 = vpop.f32.mrb[0].mxu0
        %v2426 = vadd.f32 0.0, %v2425
        %2427 = vmatprep.mubr.bf16.mxu0 %v720
        %2428 = vmatmul.mubr.bf16.gmra.mrb[0].mxu0 %v719
        %v2429 = vpop.f32.mrb[0].mxu0
        %v2430 = vadd.f32 0.0, %v2429
        %v2431 = vpop.f32.mrb[0].mxu0
        %v2432 = vadd.f32 0.0, %v2431
        %v2433 = vpop.f32.mrb[0].mxu0
        %v2434 = vadd.f32 0.0, %v2433
        %v2435 = vpop.f32.mrb[0].mxu0
        %v2436 = vadd.f32 0.0, %v2435
        %2437 = vmatprep.mubr.bf16.mxu0 %v727
        %2438 = vmatmul.mubr.bf16.gmra.mrb[0].mxu0 %v726
        %v2439 = vpop.f32.mrb[0].mxu0
        %v2440 = vadd.f32 0.0, %v2439
        %v2441 = vpop.f32.mrb[0].mxu0
        %v2442 = vadd.f32 0.0, %v2441
        %v2443 = vpop.f32.mrb[0].mxu0
        %v2444 = vadd.f32 0.0, %v2443
        %v2445 = vpop.f32.mrb[0].mxu0
        %v2446 = vadd.f32 0.0, %v2445
        %2447 = vmatprep.mubr.bf16.mxu0 %v734
        %2448 = vmatmul.mubr.bf16.gmra.mrb[0].mxu0 %v733
        %v2449 = vpop.f32.mrb[0].mxu0
        %v2450 = vadd.f32 0.0, %v2449
        %v2451 = vpop.f32.mrb[0].mxu0
        %v2452 = vadd.f32 0.0, %v2451
        %v2453 = vpop.f32.mrb[0].mxu0
        %v2454 = vadd.f32 0.0, %v2453
        %v2455 = vpop.f32.mrb[0].mxu0
        %v2456 = vadd.f32 0.0, %v2455
        %2457 = vdwg.mxu0
        %2458 = vmatprep.subr.bf16.mxu0 %v1503
        %2459 = vmatpush1.bf16.msra.mxu0 %v1502
        %2460 = vmatprep.subr.bf16.mxu0 %v1507
        %2461 = vmatpush1.bf16.msra.mxu0 %v1506
        %2462 = vmatprep.subr.bf16.mxu0 %v1511
        %2463 = vmatpush1.bf16.msra.mxu0 %v1510
        %2464 = vmatprep.subr.bf16.mxu0 %v1515
        %2465 = vmatpush1.bf16.msra.mxu0 %v1514
        %2466 = vmatprep.subr.bf16.mxu0 %v1519
        %2467 = vmatpush1.bf16.msra.mxu0 %v1518
        %2468 = vmatprep.subr.bf16.mxu0 %v1523
        %2469 = vmatpush1.bf16.msra.mxu0 %v1522
        %2470 = vmatprep.subr.bf16.mxu0 %v1527
        %2471 = vmatpush1.bf16.msra.mxu0 %v1526
        %2472 = vmatprep.subr.bf16.mxu0 %v1531
        %2473 = vmatpush1.bf16.msra.mxu0 %v1530
        %2474 = vmatprep.subr.bf16.mxu0 %v1535
        %2475 = vmatpush1.bf16.msra.mxu0 %v1534
        %2476 = vmatprep.subr.bf16.mxu0 %v1539
        %2477 = vmatpush1.bf16.msra.mxu0 %v1538
        %2478 = vmatprep.subr.bf16.mxu0 %v1543
        %2479 = vmatpush1.bf16.msra.mxu0 %v1542
        %2480 = vmatprep.subr.bf16.mxu0 %v1547
        %2481 = vmatpush1.bf16.msra.mxu0 %v1546
        %2482 = vmatprep.subr.bf16.mxu0 %v1551
        %2483 = vmatpush1.bf16.msra.mxu0 %v1550
        %2484 = vmatprep.subr.bf16.mxu0 %v1555
        %2485 = vmatpush1.bf16.msra.mxu0 %v1554
        %2486 = vmatprep.subr.bf16.mxu0 %v1559
        %2487 = vmatpush1.bf16.msra.mxu0 %v1558
        %2488 = vmatprep.subr.bf16.mxu0 %v1563
        %2489 = vmatpush1.bf16.msra.mxu0 %v1562
        %2490 = vmatprep.mubr.bf16.mxu0 %v687
        %2491 = vmatmul.mubr.bf16.gmra.mrb[0].mxu0 %v686
        %v2492 = vpop.f32.mrb[0].mxu0
        %v2493 = vadd.f32 %v2380, %v2492
        %v2494 = vpop.f32.mrb[0].mxu0
        %v2495 = vadd.f32 %v2382, %v2494
        %v2496 = vpop.f32.mrb[0].mxu0
        %v2497 = vadd.f32 %v2384, %v2496
        %v2498 = vpop.f32.mrb[0].mxu0
        %v2499 = vadd.f32 %v2386, %v2498
        %2500 = vmatprep.mubr.bf16.mxu0 %v694
        %2501 = vmatmul.mubr.bf16.gmra.mrb[0].mxu0 %v693
        %v2502 = vpop.f32.mrb[0].mxu0
        %v2503 = vadd.f32 %v2390, %v2502
        %v2504 = vpop.f32.mrb[0].mxu0
        %v2505 = vadd.f32 %v2392, %v2504
        %v2506 = vpop.f32.mrb[0].mxu0
        %v2507 = vadd.f32 %v2394, %v2506
        %v2508 = vpop.f32.mrb[0].mxu0
        %v2509 = vadd.f32 %v2396, %v2508
        %2510 = vmatprep.mubr.bf16.mxu0 %v701
        %2511 = vmatmul.mubr.bf16.gmra.mrb[0].mxu0 %v700
        %v2512 = vpop.f32.mrb[0].mxu0
        %v2513 = vadd.f32 %v2400, %v2512
        %v2514 = vpop.f32.mrb[0].mxu0
        %v2515 = vadd.f32 %v2402, %v2514
        %v2516 = vpop.f32.mrb[0].mxu0
        %v2517 = vadd.f32 %v2404, %v2516
        %v2518 = vpop.f32.mrb[0].mxu0
        %v2519 = vadd.f32 %v2406, %v2518
        %2520 = vmatprep.mubr.bf16.mxu0 %v708
        %2521 = vmatmul.mubr.bf16.gmra.mrb[0].mxu0 %v707
        %v2522 = vpop.f32.mrb[0].mxu0
        %v2523 = vadd.f32 %v2410, %v2522
        %v2524 = vpop.f32.mrb[0].mxu0
        %v2525 = vadd.f32 %v2412, %v2524
        %v2526 = vpop.f32.mrb[0].mxu0
        %v2527 = vadd.f32 %v2414, %v2526
        %v2528 = vpop.f32.mrb[0].mxu0
        %v2529 = vadd.f32 %v2416, %v2528
        %2530 = vmatprep.mubr.bf16.mxu0 %v715
        %2531 = vmatmul.mubr.bf16.gmra.mrb[0].mxu0 %v714
        %v2532 = vpop.f32.mrb[0].mxu0
        %v2533 = vadd.f32 %v2420, %v2532
        %v2534 = vpop.f32.mrb[0].mxu0
        %v2535 = vadd.f32 %v2422, %v2534
        %v2536 = vpop.f32.mrb[0].mxu0
        %v2537 = vadd.f32 %v2424, %v2536
        %v2538 = vpop.f32.mrb[0].mxu0
        %v2539 = vadd.f32 %v2426, %v2538
        %2540 = vmatprep.mubr.bf16.mxu0 %v722
        %2541 = vmatmul.mubr.bf16.gmra.mrb[0].mxu0 %v721
        %v2542 = vpop.f32.mrb[0].mxu0
        %v2543 = vadd.f32 %v2430, %v2542
        %v2544 = vpop.f32.mrb[0].mxu0
        %v2545 = vadd.f32 %v2432, %v2544
        %v2546 = vpop.f32.mrb[0].mxu0
        %v2547 = vadd.f32 %v2434, %v2546
        %v2548 = vpop.f32.mrb[0].mxu0
        %v2549 = vadd.f32 %v2436, %v2548
        %2550 = vmatprep.mubr.bf16.mxu0 %v729
        %2551 = vmatmul.mubr.bf16.gmra.mrb[0].mxu0 %v728
        %v2552 = vpop.f32.mrb[0].mxu0
        %v2553 = vadd.f32 %v2440, %v2552
        %v2554 = vpop.f32.mrb[0].mxu0
        %v2555 = vadd.f32 %v2442, %v2554
        %v2556 = vpop.f32.mrb[0].mxu0
        %v2557 = vadd.f32 %v2444, %v2556
        %v2558 = vpop.f32.mrb[0].mxu0
        %v2559 = vadd.f32 %v2446, %v2558
        %2560 = vmatprep.mubr.bf16.mxu0 %v736
        %2561 = vmatmul.mubr.bf16.gmra.mrb[0].mxu0 %v735
        %v2562 = vpop.f32.mrb[0].mxu0
        %v2563 = vadd.f32 %v2450, %v2562
        %v2564 = vpop.f32.mrb[0].mxu0
        %v2565 = vadd.f32 %v2452, %v2564
        %v2566 = vpop.f32.mrb[0].mxu0
        %v2567 = vadd.f32 %v2454, %v2566
        %v2568 = vpop.f32.mrb[0].mxu0
        %v2569 = vadd.f32 %v2456, %v2568
        %2570 = vdwg.mxu0
        %2571 = vmatprep.subr.bf16.mxu0 %v1567
        %2572 = vmatpush1.bf16.msra.mxu0 %v1566
        %2573 = vmatprep.subr.bf16.mxu0 %v1571
        %2574 = vmatpush1.bf16.msra.mxu0 %v1570
        %2575 = vmatprep.subr.bf16.mxu0 %v1575
        %2576 = vmatpush1.bf16.msra.mxu0 %v1574
        %2577 = vmatprep.subr.bf16.mxu0 %v1579
        %2578 = vmatpush1.bf16.msra.mxu0 %v1578
        %2579 = vmatprep.subr.bf16.mxu0 %v1583
        %2580 = vmatpush1.bf16.msra.mxu0 %v1582
        %2581 = vmatprep.subr.bf16.mxu0 %v1587
        %2582 = vmatpush1.bf16.msra.mxu0 %v1586
        %2583 = vmatprep.subr.bf16.mxu0 %v1591
        %2584 = vmatpush1.bf16.msra.mxu0 %v1590
        %2585 = vmatprep.subr.bf16.mxu0 %v1595
        %2586 = vmatpush1.bf16.msra.mxu0 %v1594
        %2587 = vmatprep.subr.bf16.mxu0 %v1599
        %2588 = vmatpush1.bf16.msra.mxu0 %v1598
        %2589 = vmatprep.subr.bf16.mxu0 %v1603
        %2590 = vmatpush1.bf16.msra.mxu0 %v1602
        %2591 = vmatprep.subr.bf16.mxu0 %v1607
        %2592 = vmatpush1.bf16.msra.mxu0 %v1606
        %2593 = vmatprep.subr.bf16.mxu0 %v1611
        %2594 = vmatpush1.bf16.msra.mxu0 %v1610
        %2595 = vmatprep.subr.bf16.mxu0 %v1615
        %2596 = vmatpush1.bf16.msra.mxu0 %v1614
        %2597 = vmatprep.subr.bf16.mxu0 %v1619
        %2598 = vmatpush1.bf16.msra.mxu0 %v1618
        %2599 = vmatprep.subr.bf16.mxu0 %v1623
        %2600 = vmatpush1.bf16.msra.mxu0 %v1622
        %2601 = vmatprep.subr.bf16.mxu0 %v1627
        %2602 = vmatpush1.bf16.msra.mxu0 %v1626
        %2603 = vmatprep.mubr.bf16.mxu0 %v689
        %2604 = vmatmul.mubr.bf16.gmra.mrb[0].mxu0 %v688
        %v2605 = vpop.f32.mrb[0].mxu0
        %v2606 = vadd.f32 %v2493, %v2605
        %v2607 = vpop.f32.mrb[0].mxu0
        %v2608 = vadd.f32 %v2495, %v2607
        %v2609 = vpop.f32.mrb[0].mxu0
        %v2610 = vadd.f32 %v2497, %v2609
        %v2611 = vpop.f32.mrb[0].mxu0
        %v2612 = vadd.f32 %v2499, %v2611
        %2613 = vmatprep.mubr.bf16.mxu0 %v696
        %2614 = vmatmul.mubr.bf16.gmra.mrb[0].mxu0 %v695
        %v2615 = vpop.f32.mrb[0].mxu0
        %v2616 = vadd.f32 %v2503, %v2615
        %v2617 = vpop.f32.mrb[0].mxu0
        %v2618 = vadd.f32 %v2505, %v2617
        %v2619 = vpop.f32.mrb[0].mxu0
        %v2620 = vadd.f32 %v2507, %v2619
        %v2621 = vpop.f32.mrb[0].mxu0
        %v2622 = vadd.f32 %v2509, %v2621
        %2623 = vmatprep.mubr.bf16.mxu0 %v703
        %2624 = vmatmul.mubr.bf16.gmra.mrb[0].mxu0 %v702
        %v2625 = vpop.f32.mrb[0].mxu0
        %v2626 = vadd.f32 %v2513, %v2625
        %v2627 = vpop.f32.mrb[0].mxu0
        %v2628 = vadd.f32 %v2515, %v2627
        %v2629 = vpop.f32.mrb[0].mxu0
        %v2630 = vadd.f32 %v2517, %v2629
        %v2631 = vpop.f32.mrb[0].mxu0
        %v2632 = vadd.f32 %v2519, %v2631
        %2633 = vmatprep.mubr.bf16.mxu0 %v710
        %2634 = vmatmul.mubr.bf16.gmra.mrb[0].mxu0 %v709
        %v2635 = vpop.f32.mrb[0].mxu0
        %v2636 = vadd.f32 %v2523, %v2635
        %v2637 = vpop.f32.mrb[0].mxu0
        %v2638 = vadd.f32 %v2525, %v2637
        %v2639 = vpop.f32.mrb[0].mxu0
        %v2640 = vadd.f32 %v2527, %v2639
        %v2641 = vpop.f32.mrb[0].mxu0
        %v2642 = vadd.f32 %v2529, %v2641
        %2643 = vmatprep.mubr.bf16.mxu0 %v717
        %2644 = vmatmul.mubr.bf16.gmra.mrb[0].mxu0 %v716
        %v2645 = vpop.f32.mrb[0].mxu0
        %v2646 = vadd.f32 %v2533, %v2645
        %v2647 = vpop.f32.mrb[0].mxu0
        %v2648 = vadd.f32 %v2535, %v2647
        %v2649 = vpop.f32.mrb[0].mxu0
        %v2650 = vadd.f32 %v2537, %v2649
        %v2651 = vpop.f32.mrb[0].mxu0
        %v2652 = vadd.f32 %v2539, %v2651
        %2653 = vmatprep.mubr.bf16.mxu0 %v724
        %2654 = vmatmul.mubr.bf16.gmra.mrb[0].mxu0 %v723
        %v2655 = vpop.f32.mrb[0].mxu0
        %v2656 = vadd.f32 %v2543, %v2655
        %v2657 = vpop.f32.mrb[0].mxu0
        %v2658 = vadd.f32 %v2545, %v2657
        %v2659 = vpop.f32.mrb[0].mxu0
        %v2660 = vadd.f32 %v2547, %v2659
        %v2661 = vpop.f32.mrb[0].mxu0
        %v2662 = vadd.f32 %v2549, %v2661
        %2663 = vmatprep.mubr.bf16.mxu0 %v731
        %2664 = vmatmul.mubr.bf16.gmra.mrb[0].mxu0 %v730
        %v2665 = vpop.f32.mrb[0].mxu0
        %v2666 = vadd.f32 %v2553, %v2665
        %v2667 = vpop.f32.mrb[0].mxu0
        %v2668 = vadd.f32 %v2555, %v2667
        %v2669 = vpop.f32.mrb[0].mxu0
        %v2670 = vadd.f32 %v2557, %v2669
        %v2671 = vpop.f32.mrb[0].mxu0
        %v2672 = vadd.f32 %v2559, %v2671
        %2673 = vmatprep.mubr.bf16.mxu0 %v738
        %2674 = vmatmul.mubr.bf16.gmra.mrb[0].mxu0 %v737
        %v2675 = vpop.f32.mrb[0].mxu0
        %v2676 = vadd.f32 %v2563, %v2675
        %v2677 = vpop.f32.mrb[0].mxu0
        %v2678 = vadd.f32 %v2565, %v2677
        %v2679 = vpop.f32.mrb[0].mxu0
        %v2680 = vadd.f32 %v2567, %v2679
        %v2681 = vpop.f32.mrb[0].mxu0
        %v2682 = vadd.f32 %v2569, %v2681
        %2683 = vdwg.mxu0
        %2684 = vmatprep.subr.bf16.mxu0 %v1631
        %2685 = vmatpush1.bf16.msra.mxu0 %v1630
        %2686 = vmatprep.subr.bf16.mxu0 %v1635
        %2687 = vmatpush1.bf16.msra.mxu0 %v1634
        %2688 = vmatprep.subr.bf16.mxu0 %v1639
        %2689 = vmatpush1.bf16.msra.mxu0 %v1638
        %2690 = vmatprep.subr.bf16.mxu0 %v1643
        %2691 = vmatpush1.bf16.msra.mxu0 %v1642
        %2692 = vmatprep.subr.bf16.mxu0 %v1647
        %2693 = vmatpush1.bf16.msra.mxu0 %v1646
        %2694 = vmatprep.subr.bf16.mxu0 %v1651
        %2695 = vmatpush1.bf16.msra.mxu0 %v1650
        %2696 = vmatprep.subr.bf16.mxu0 0
        %2697 = vmatpush1.bf16.msra.mxu0 0
        %2698 = vmatprep.subr.bf16.mxu0 0
        %2699 = vmatpush1.bf16.msra.mxu0 0
        %2700 = vmatprep.subr.bf16.mxu0 0
        %2701 = vmatpush1.bf16.msra.mxu0 0
        %2702 = vmatprep.subr.bf16.mxu0 0
        %2703 = vmatpush1.bf16.msra.mxu0 0
        %2704 = vmatprep.subr.bf16.mxu0 0
        %2705 = vmatpush1.bf16.msra.mxu0 0
        %2706 = vmatprep.subr.bf16.mxu0 0
        %2707 = vmatpush1.bf16.msra.mxu0 0
        %2708 = vmatprep.subr.bf16.mxu0 0
        %2709 = vmatpush1.bf16.msra.mxu0 0
        %2710 = vmatprep.subr.bf16.mxu0 0
        %2711 = vmatpush1.bf16.msra.mxu0 0
        %2712 = vmatprep.subr.bf16.mxu0 0
        %2713 = vmatpush1.bf16.msra.mxu0 0
        %2714 = vmatprep.subr.bf16.mxu0 0
        %2715 = vmatpush1.bf16.msra.mxu0 0
        %2716 = vmatprep.mubr.bf16.mxu0 0
        %2717 = vmatmul.mubr.bf16.gmra.mrb[0].mxu0 %v1870
        %v2718 = vpop.f32.mrb[0].mxu0
        %v2719 = vadd.f32 %v2606, %v2718
        %v2720 = vpop.f32.mrb[0].mxu0
        %v2721 = vadd.f32 %v2608, %v2720
        %v2722 = vpop.f32.mrb[0].mxu0
        %v2723 = vadd.f32 %v2610, %v2722
        %v2724 = vpop.f32.mrb[0].mxu0
        %v2725 = vadd.f32 %v2612, %v2724
        %2726 = vmatprep.mubr.bf16.mxu0 0
        %2727 = vmatmul.mubr.bf16.gmra.mrb[0].mxu0 %v1873
        %v2728 = vpop.f32.mrb[0].mxu0
        %v2729 = vadd.f32 %v2616, %v2728
        %v2730 = vpop.f32.mrb[0].mxu0
        %v2731 = vadd.f32 %v2618, %v2730
        %v2732 = vpop.f32.mrb[0].mxu0
        %v2733 = vadd.f32 %v2620, %v2732
        %v2734 = vpop.f32.mrb[0].mxu0
        %v2735 = vadd.f32 %v2622, %v2734
        %2736 = vmatprep.mubr.bf16.mxu0 0
        %2737 = vmatmul.mubr.bf16.gmra.mrb[0].mxu0 %v1876
        %v2738 = vpop.f32.mrb[0].mxu0
        %v2739 = vadd.f32 %v2626, %v2738
        %v2740 = vpop.f32.mrb[0].mxu0
        %v2741 = vadd.f32 %v2628, %v2740
        %v2742 = vpop.f32.mrb[0].mxu0
        %v2743 = vadd.f32 %v2630, %v2742
        %v2744 = vpop.f32.mrb[0].mxu0
        %v2745 = vadd.f32 %v2632, %v2744
        %2746 = vmatprep.mubr.bf16.mxu0 0
        %2747 = vmatmul.mubr.bf16.gmra.mrb[0].mxu0 %v1879
        %v2748 = vpop.f32.mrb[0].mxu0
        %v2749 = vadd.f32 %v2636, %v2748
        %v2750 = vpop.f32.mrb[0].mxu0
        %v2751 = vadd.f32 %v2638, %v2750
        %v2752 = vpop.f32.mrb[0].mxu0
        %v2753 = vadd.f32 %v2640, %v2752
        %v2754 = vpop.f32.mrb[0].mxu0
        %v2755 = vadd.f32 %v2642, %v2754
        %2756 = vmatprep.mubr.bf16.mxu0 0
        %2757 = vmatmul.mubr.bf16.gmra.mrb[0].mxu0 %v1882
        %v2758 = vpop.f32.mrb[0].mxu0
        %v2759 = vadd.f32 %v2646, %v2758
        %v2760 = vpop.f32.mrb[0].mxu0
        %v2761 = vadd.f32 %v2648, %v2760
        %v2762 = vpop.f32.mrb[0].mxu0
        %v2763 = vadd.f32 %v2650, %v2762
        %v2764 = vpop.f32.mrb[0].mxu0
        %v2765 = vadd.f32 %v2652, %v2764
        %2766 = vmatprep.mubr.bf16.mxu0 0
        %2767 = vmatmul.mubr.bf16.gmra.mrb[0].mxu0 %v1885
        %v2768 = vpop.f32.mrb[0].mxu0
        %v2769 = vadd.f32 %v2656, %v2768
        %v2770 = vpop.f32.mrb[0].mxu0
        %v2771 = vadd.f32 %v2658, %v2770
        %v2772 = vpop.f32.mrb[0].mxu0
        %v2773 = vadd.f32 %v2660, %v2772
        %v2774 = vpop.f32.mrb[0].mxu0
        %v2775 = vadd.f32 %v2662, %v2774
        %2776 = vmatprep.mubr.bf16.mxu0 0
        %2777 = vmatmul.mubr.bf16.gmra.mrb[0].mxu0 %v1888
        %v2778 = vpop.f32.mrb[0].mxu0
        %v2779 = vadd.f32 %v2666, %v2778
        %v2780 = vpop.f32.mrb[0].mxu0
        %v2781 = vadd.f32 %v2668, %v2780
        %v2782 = vpop.f32.mrb[0].mxu0
        %v2783 = vadd.f32 %v2670, %v2782
        %v2784 = vpop.f32.mrb[0].mxu0
        %v2785 = vadd.f32 %v2672, %v2784
        %2786 = vmatprep.mubr.bf16.mxu0 0
        %2787 = vmatmul.mubr.bf16.gmra.mrb[0].mxu0 %v1891
        %v2788 = vpop.f32.mrb[0].mxu0
        %v2789 = vadd.f32 %v2676, %v2788
        %v2790 = vpop.f32.mrb[0].mxu0
        %v2791 = vadd.f32 %v2678, %v2790
        %v2792 = vpop.f32.mrb[0].mxu0
        %v2793 = vadd.f32 %v2680, %v2792
        %v2794 = vpop.f32.mrb[0].mxu0
        %v2795 = vadd.f32 %v2682, %v2794
        %2796 = vdwg.mxu0
        %v2797 = vld [vmem:[%s2] sm:$0xf]
        %v2799 = vlaneseq
        %v2800 = vshrl.u32 %v2799, 7
        %v2801 = vsub.s32 0, %v2800
        %v2802 = vrot.slane %v2797, %v2801
        %v2803 = vlaneseq
        %v2804 = vshrl.u32 %v2803, 7
        %v2805 = vsub.s32 1, %v2804
        %v2806 = vrot.slane %v2797, %v2805
        %v2807 = vlaneseq
        %v2808 = vshrl.u32 %v2807, 7
        %v2809 = vsub.s32 2, %v2808
        %v2810 = vrot.slane %v2797, %v2809
        %v2811 = vlaneseq
        %v2812 = vshrl.u32 %v2811, 7
        %v2813 = vsub.s32 3, %v2812
        %v2814 = vrot.slane %v2797, %v2813
        %v2819 = vmul.f32 %v2267, %v2802
        %v2820 = vmul.f32 %v2269, %v2806
        %v2821 = vmul.f32 %v2719, %v2810
        %v2822 = vmul.f32 %v2721, %v2814
        %v2823 = vmul.f32 %v2271, %v2802
        %v2824 = vmul.f32 %v2273, %v2806
        %v2825 = vmul.f32 %v2723, %v2810
        %v2826 = vmul.f32 %v2725, %v2814
        %v2827 = vmul.f32 %v2277, %v2802
        %v2828 = vmul.f32 %v2279, %v2806
        %v2829 = vmul.f32 %v2729, %v2810
        %v2830 = vmul.f32 %v2731, %v2814
        %v2831 = vmul.f32 %v2281, %v2802
        %v2832 = vmul.f32 %v2283, %v2806
        %v2833 = vmul.f32 %v2733, %v2810
        %v2834 = vmul.f32 %v2735, %v2814
        %v2835 = vmul.f32 %v2287, %v2802
        %v2836 = vmul.f32 %v2289, %v2806
        %v2837 = vmul.f32 %v2739, %v2810
        %v2838 = vmul.f32 %v2741, %v2814
        %v2839 = vmul.f32 %v2291, %v2802
        %v2840 = vmul.f32 %v2293, %v2806
        %v2841 = vmul.f32 %v2743, %v2810
        %v2842 = vmul.f32 %v2745, %v2814
        %v2843 = vmul.f32 %v2297, %v2802
        %v2844 = vmul.f32 %v2299, %v2806
        %v2845 = vmul.f32 %v2749, %v2810
        %v2846 = vmul.f32 %v2751, %v2814
        %v2847 = vmul.f32 %v2301, %v2802
        %v2848 = vmul.f32 %v2303, %v2806
        %v2849 = vmul.f32 %v2753, %v2810
        %v2850 = vmul.f32 %v2755, %v2814
        %v2851 = vmul.f32 %v2307, %v2802
        %v2852 = vmul.f32 %v2309, %v2806
        %v2853 = vmul.f32 %v2759, %v2810
        %v2854 = vmul.f32 %v2761, %v2814
        %v2855 = vmul.f32 %v2311, %v2802
        %v2856 = vmul.f32 %v2313, %v2806
        %v2857 = vmul.f32 %v2763, %v2810
        %v2858 = vmul.f32 %v2765, %v2814
        %v2859 = vmul.f32 %v2317, %v2802
        %v2860 = vmul.f32 %v2319, %v2806
        %v2861 = vmul.f32 %v2769, %v2810
        %v2862 = vmul.f32 %v2771, %v2814
        %v2863 = vmul.f32 %v2321, %v2802
        %v2864 = vmul.f32 %v2323, %v2806
        %v2865 = vmul.f32 %v2773, %v2810
        %v2866 = vmul.f32 %v2775, %v2814
        %v2867 = vmul.f32 %v2327, %v2802
        %v2868 = vmul.f32 %v2329, %v2806
        %v2869 = vmul.f32 %v2779, %v2810
        %v2870 = vmul.f32 %v2781, %v2814
        %v2871 = vmul.f32 %v2331, %v2802
        %v2872 = vmul.f32 %v2333, %v2806
        %v2873 = vmul.f32 %v2783, %v2810
        %v2874 = vmul.f32 %v2785, %v2814
        %v2875 = vmul.f32 %v2337, %v2802
        %v2876 = vmul.f32 %v2339, %v2806
        %v2877 = vmul.f32 %v2789, %v2810
        %v2878 = vmul.f32 %v2791, %v2814
        %v2879 = vmul.f32 %v2341, %v2802
        %v2880 = vmul.f32 %v2343, %v2806
        %v2881 = vmul.f32 %v2793, %v2810
        %v2882 = vmul.f32 %v2795, %v2814
        %v2883 = vld [vmem:[%s3] sm:$0xf]
        %v2885 = vlaneseq
        %v2886 = vshrl.u32 %v2885, 7
        %v2887 = vsub.s32 0, %v2886
        %v2888 = vrot.slane %v2883, %v2887
        %v2889 = vlaneseq
        %v2890 = vshrl.u32 %v2889, 7
        %v2891 = vsub.s32 1, %v2890
        %v2892 = vrot.slane %v2883, %v2891
        %v2893 = vlaneseq
        %v2894 = vshrl.u32 %v2893, 7
        %v2895 = vsub.s32 2, %v2894
        %v2896 = vrot.slane %v2883, %v2895
        %v2897 = vlaneseq
        %v2898 = vshrl.u32 %v2897, 7
        %v2899 = vsub.s32 3, %v2898
        %v2900 = vrot.slane %v2883, %v2899
        %v2905 = vadd.f32 %v2819, %v2888
        %v2906 = vadd.f32 %v2820, %v2892
        %v2907 = vadd.f32 %v2821, %v2896
        %v2908 = vadd.f32 %v2822, %v2900
        %v2909 = vadd.f32 %v2823, %v2888
        %v2910 = vadd.f32 %v2824, %v2892
        %v2911 = vadd.f32 %v2825, %v2896
        %v2912 = vadd.f32 %v2826, %v2900
        %v2913 = vadd.f32 %v2827, %v2888
        %v2914 = vadd.f32 %v2828, %v2892
        %v2915 = vadd.f32 %v2829, %v2896
        %v2916 = vadd.f32 %v2830, %v2900
        %v2917 = vadd.f32 %v2831, %v2888
        %v2918 = vadd.f32 %v2832, %v2892
        %v2919 = vadd.f32 %v2833, %v2896
        %v2920 = vadd.f32 %v2834, %v2900
        %v2921 = vadd.f32 %v2835, %v2888
        %v2922 = vadd.f32 %v2836, %v2892
        %v2923 = vadd.f32 %v2837, %v2896
        %v2924 = vadd.f32 %v2838, %v2900
        %v2925 = vadd.f32 %v2839, %v2888
        %v2926 = vadd.f32 %v2840, %v2892
        %v2927 = vadd.f32 %v2841, %v2896
        %v2928 = vadd.f32 %v2842, %v2900
        %v2929 = vadd.f32 %v2843, %v2888
        %v2930 = vadd.f32 %v2844, %v2892
        %v2931 = vadd.f32 %v2845, %v2896
        %v2932 = vadd.f32 %v2846, %v2900
        %v2933 = vadd.f32 %v2847, %v2888
        %v2934 = vadd.f32 %v2848, %v2892
        %v2935 = vadd.f32 %v2849, %v2896
        %v2936 = vadd.f32 %v2850, %v2900
        %v2937 = vadd.f32 %v2851, %v2888
        %v2938 = vadd.f32 %v2852, %v2892
        %v2939 = vadd.f32 %v2853, %v2896
        %v2940 = vadd.f32 %v2854, %v2900
        %v2941 = vadd.f32 %v2855, %v2888
        %v2942 = vadd.f32 %v2856, %v2892
        %v2943 = vadd.f32 %v2857, %v2896
        %v2944 = vadd.f32 %v2858, %v2900
        %v2945 = vadd.f32 %v2859, %v2888
        %v2946 = vadd.f32 %v2860, %v2892
        %v2947 = vadd.f32 %v2861, %v2896
        %v2948 = vadd.f32 %v2862, %v2900
        %v2949 = vadd.f32 %v2863, %v2888
        %v2950 = vadd.f32 %v2864, %v2892
        %v2951 = vadd.f32 %v2865, %v2896
        %v2952 = vadd.f32 %v2866, %v2900
        %v2953 = vadd.f32 %v2867, %v2888
        %v2954 = vadd.f32 %v2868, %v2892
        %v2955 = vadd.f32 %v2869, %v2896
        %v2956 = vadd.f32 %v2870, %v2900
        %v2957 = vadd.f32 %v2871, %v2888
        %v2958 = vadd.f32 %v2872, %v2892
        %v2959 = vadd.f32 %v2873, %v2896
        %v2960 = vadd.f32 %v2874, %v2900
        %v2961 = vadd.f32 %v2875, %v2888
        %v2962 = vadd.f32 %v2876, %v2892
        %v2963 = vadd.f32 %v2877, %v2896
        %v2964 = vadd.f32 %v2878, %v2900
        %v2965 = vadd.f32 %v2879, %v2888
        %v2966 = vadd.f32 %v2880, %v2892
        %v2967 = vadd.f32 %v2881, %v2896
        %v2968 = vadd.f32 %v2882, %v2900
        %v2969 = vmax.f32 %v2905, 0.0
        %v2970 = vmax.f32 %v2906, 0.0
        %v2971 = vmax.f32 %v2907, 0.0
        %v2972 = vmax.f32 %v2908, 0.0
        %v2973 = vmax.f32 %v2909, 0.0
        %v2974 = vmax.f32 %v2910, 0.0
        %v2975 = vmax.f32 %v2911, 0.0
        %v2976 = vmax.f32 %v2912, 0.0
        %v2977 = vmax.f32 %v2913, 0.0
        %v2978 = vmax.f32 %v2914, 0.0
        %v2979 = vmax.f32 %v2915, 0.0
        %v2980 = vmax.f32 %v2916, 0.0
        %v2981 = vmax.f32 %v2917, 0.0
        %v2982 = vmax.f32 %v2918, 0.0
        %v2983 = vmax.f32 %v2919, 0.0
        %v2984 = vmax.f32 %v2920, 0.0
        %v2985 = vmax.f32 %v2921, 0.0
        %v2986 = vmax.f32 %v2922, 0.0
        %v2987 = vmax.f32 %v2923, 0.0
        %v2988 = vmax.f32 %v2924, 0.0
        %v2989 = vmax.f32 %v2925, 0.0
        %v2990 = vmax.f32 %v2926, 0.0
        %v2991 = vmax.f32 %v2927, 0.0
        %v2992 = vmax.f32 %v2928, 0.0
        %v2993 = vmax.f32 %v2929, 0.0
        %v2994 = vmax.f32 %v2930, 0.0
        %v2995 = vmax.f32 %v2931, 0.0
        %v2996 = vmax.f32 %v2932, 0.0
        %v2997 = vmax.f32 %v2933, 0.0
        %v2998 = vmax.f32 %v2934, 0.0
        %v2999 = vmax.f32 %v2935, 0.0
        %v3000 = vmax.f32 %v2936, 0.0
        %v3001 = vmax.f32 %v2937, 0.0
        %v3002 = vmax.f32 %v2938, 0.0
        %v3003 = vmax.f32 %v2939, 0.0
        %v3004 = vmax.f32 %v2940, 0.0
        %v3005 = vmax.f32 %v2941, 0.0
        %v3006 = vmax.f32 %v2942, 0.0
        %v3007 = vmax.f32 %v2943, 0.0
        %v3008 = vmax.f32 %v2944, 0.0
        %v3009 = vmax.f32 %v2945, 0.0
        %v3010 = vmax.f32 %v2946, 0.0
        %v3011 = vmax.f32 %v2947, 0.0
        %v3012 = vmax.f32 %v2948, 0.0
        %v3013 = vmax.f32 %v2949, 0.0
        %v3014 = vmax.f32 %v2950, 0.0
        %v3015 = vmax.f32 %v2951, 0.0
        %v3016 = vmax.f32 %v2952, 0.0
        %v3017 = vmax.f32 %v2953, 0.0
        %v3018 = vmax.f32 %v2954, 0.0
        %v3019 = vmax.f32 %v2955, 0.0
        %v3020 = vmax.f32 %v2956, 0.0
        %v3021 = vmax.f32 %v2957, 0.0
        %v3022 = vmax.f32 %v2958, 0.0
        %v3023 = vmax.f32 %v2959, 0.0
        %v3024 = vmax.f32 %v2960, 0.0
        %v3025 = vmax.f32 %v2961, 0.0
        %v3026 = vmax.f32 %v2962, 0.0
        %v3027 = vmax.f32 %v2963, 0.0
        %v3028 = vmax.f32 %v2964, 0.0
        %v3029 = vmax.f32 %v2965, 0.0
        %v3030 = vmax.f32 %v2966, 0.0
        %v3031 = vmax.f32 %v2967, 0.0
        %v3032 = vmax.f32 %v2968, 0.0
        %v3033 = vmax.f32 %v2969, %v2970
        %v3034 = vmax.f32 %v2973, %v2974
        %v3035 = vmax.f32 %v2977, %v2978
        %v3036 = vmax.f32 %v2981, %v2982
        %v3037 = vmax.f32 %v2985, %v2986
        %v3038 = vmax.f32 %v2989, %v2990
        %v3039 = vmax.f32 %v2993, %v2994
        %v3040 = vmax.f32 %v2997, %v2998
        %v3041 = vmax.f32 %v3001, %v3002
        %v3042 = vmax.f32 %v3005, %v3006
        %v3043 = vmax.f32 %v3009, %v3010
        %v3044 = vmax.f32 %v3013, %v3014
        %v3045 = vmax.f32 %v3017, %v3018
        %v3046 = vmax.f32 %v3021, %v3022
        %v3047 = vmax.f32 %v3025, %v3026
        %v3048 = vmax.f32 %v3029, %v3030
        %v3049 = vmax.f32 %v2971, %v2972
        %v3050 = vmax.f32 %v2975, %v2976
        %v3051 = vmax.f32 %v2979, %v2980
        %v3052 = vmax.f32 %v2983, %v2984
        %v3053 = vmax.f32 %v2987, %v2988
        %v3054 = vmax.f32 %v2991, %v2992
        %v3055 = vmax.f32 %v2995, %v2996
        %v3056 = vmax.f32 %v2999, %v3000
        %v3057 = vmax.f32 %v3003, %v3004
        %v3058 = vmax.f32 %v3007, %v3008
        %v3059 = vmax.f32 %v3011, %v3012
        %v3060 = vmax.f32 %v3015, %v3016
        %v3061 = vmax.f32 %v3019, %v3020
        %v3062 = vmax.f32 %v3023, %v3024
        %v3063 = vmax.f32 %v3027, %v3028
        %v3064 = vmax.f32 %v3031, %v3032
        %v3065 = vmax.f32 %v3033, %v3049
        %v3066 = vmax.f32 %v3034, %v3050
        %v3067 = vmax.f32 %v3035, %v3051
        %v3068 = vmax.f32 %v3036, %v3052
        %v3069 = vmax.f32 %v3037, %v3053
        %v3070 = vmax.f32 %v3038, %v3054
        %v3071 = vmax.f32 %v3039, %v3055
        %v3072 = vmax.f32 %v3040, %v3056
        %v3073 = vmax.f32 %v3041, %v3057
        %v3074 = vmax.f32 %v3042, %v3058
        %v3075 = vmax.f32 %v3043, %v3059
        %v3076 = vmax.f32 %v3044, %v3060
        %v3077 = vmax.f32 %v3045, %v3061
        %v3078 = vmax.f32 %v3046, %v3062
        %v3079 = vmax.f32 %v3047, %v3063
        %v3080 = vmax.f32 %v3048, %v3064
        %v3081 = vpack.c.bf16 %v3066, %v3065
        %v3082 = vpack.c.bf16 %v3068, %v3067
        %v3083 = vpack.c.bf16 %v3070, %v3069
        %v3084 = vpack.c.bf16 %v3072, %v3071
        %v3085 = vpack.c.bf16 %v3074, %v3073
        %v3086 = vpack.c.bf16 %v3076, %v3075
        %v3087 = vpack.c.bf16 %v3078, %v3077
        %v3088 = vpack.c.bf16 %v3080, %v3079
        %v3097 = vunpack.c.l.b16 %v3081
        %v3098 = vunpack.c.h.b16 %v3081
        %v3099 = vunpack.c.l.b16 %v3082
        %v3100 = vunpack.c.h.b16 %v3082
        %v3101 = vunpack.c.l.b16 %v3083
        %v3102 = vunpack.c.h.b16 %v3083
        %v3103 = vunpack.c.l.b16 %v3084
        %v3104 = vunpack.c.h.b16 %v3084
        %v3105 = vunpack.c.l.b16 %v3085
        %v3106 = vunpack.c.h.b16 %v3085
        %v3107 = vunpack.c.l.b16 %v3086
        %v3108 = vunpack.c.h.b16 %v3086
        %v3109 = vunpack.c.l.b16 %v3087
        %v3110 = vunpack.c.h.b16 %v3087
        %v3111 = vunpack.c.l.b16 %v3088
        %v3112 = vunpack.c.h.b16 %v3088
        %v3113 = vpack.c.b16 %v3097, %v3097
        %v3114 = vpack.c.b16 %v3098, %v3098
        %v3115 = vpack.c.b16 %v3099, %v3099
        %v3116 = vpack.c.b16 %v3100, %v3100
        %v3117 = vpack.c.b16 %v3101, %v3101
        %v3118 = vpack.c.b16 %v3102, %v3102
        %v3119 = vpack.c.b16 %v3103, %v3103
        %v3120 = vpack.c.b16 %v3104, %v3104
        %v3121 = vpack.c.b16 %v3105, %v3105
        %v3122 = vpack.c.b16 %v3106, %v3106
        %v3123 = vpack.c.b16 %v3107, %v3107
        %v3124 = vpack.c.b16 %v3108, %v3108
        %v3125 = vpack.c.b16 %v3109, %v3109
        %v3126 = vpack.c.b16 %v3110, %v3110
        %v3127 = vpack.c.b16 %v3111, %v3111
        %v3128 = vpack.c.b16 %v3112, %v3112
        %3145 = vst [vmem:[%s204] sm:$0xf] %v3113
        %3146 = vst [vmem:[%s204 + $0x4] sm:$0xf] %v3114
        %3147 = vst [vmem:[%s204 + $0x8] sm:$0xf] %v3115
        %3148 = vst [vmem:[%s204 + $0xc] sm:$0xf] %v3116
        %3149 = vst [vmem:[%s204 + $0x10] sm:$0xf] %v3117
        %3150 = vst [vmem:[%s204 + $0x14] sm:$0xf] %v3118
        %3151 = vst [vmem:[%s204 + $0x18] sm:$0xf] %v3119
        %3152 = vst [vmem:[%s204 + $0x1c] sm:$0xf] %v3120
        %3153 = vst [vmem:[%s204 + $0x20] sm:$0xf] %v3121
        %3154 = vst [vmem:[%s204 + $0x24] sm:$0xf] %v3122
        %3155 = vst [vmem:[%s204 + $0x28] sm:$0xf] %v3123
        %3156 = vst [vmem:[%s204 + $0x2c] sm:$0xf] %v3124
        %3157 = vst [vmem:[%s204 + $0x30] sm:$0xf] %v3125
        %3158 = vst [vmem:[%s204 + $0x34] sm:$0xf] %v3126
        %3159 = vst [vmem:[%s204 + $0x38] sm:$0xf] %v3127
        %3160 = vst [vmem:[%s204 + $0x3c] sm:$0xf] %v3128
        %s3161 = sand.u32 %s112, 1
        %s3162 = sand.u32 %s112, 1
        %s3163 = smul.addr %s3162, 64
        %s3164 = scalar_lea.vmem [#allocation2], %s3163
        // Predicated region
        $region37: #{_lambda_.3} parent=35 // pred_check
          %p3165 = pneg %p122
        $region38: #{_lambda_.3} parent=35 // pred_check_branch
          %3167 = sbr.rel (%p3165) target = $region40
        $region39: #{_lambda_.3} parent=35 // pred_region
          %s3168 = smul.u32 16, %s15
          %s3169 = ssub.s32 95, %s3168
          %p3170 = scmp.lt.s32.totalorder %s3169, 16
          %s3171 = scalar_select %p3170, %s3169, 16
          %s3172 = smul.u32 64, %s3171
          %p3173 = scmp.ne.s32.totalorder 0, %s3172
          %s3174 = smul.addr %s3168, 4
          %s3175 = scalar_lea.vmem %s4, %s3174
          // Predicated region
          $region41: #{_lambda_.3} parent=39 // pred_check
            %p3176 = pneg %p3173
          $region42: #{_lambda_.3} parent=39 // pred_check_branch
            %3178 = sbr.rel (%p3176) target = $region44
          $region43: #{_lambda_.3} parent=39 // pred_region
            // Predicated region
            $region45: #{_lambda_.3} parent=43 // pred_check
              _
            $region46: #{_lambda_.3} parent=43 // pred_check_branch
              %3180 = sbr.rel target = $region48
            $region47: #{_lambda_.3} parent=43 // pred_region
              // Predicated region
              $region67: #{_lambda_.3} parent=47 // pred_check
                _
              $region68: #{_lambda_.3} parent=47 // pred_check_branch
                %3259 = sbr.rel (0) target = $region70
              $region69: #{_lambda_.3} parent=47 // pred_region
                %s3261 = sshrl.u32 %s3171, 4
                // While loop
                $region71: #{_lambda_.3} parent=69 // loop_pre_header
                  _
                $region72: #{_lambda_.3} parent=69 // loop_header
                  %s3263 = sphi 0, %s3265
                  %p3264 = scmp.ge.s32.totalorder %s3263, %s3261
                  %s3268 = sphi 0, %s3305
                  %s3269 = sphi %s3164, %s3308
                  %s3270 = sphi %s3175, %s3309
                $region73: #{_lambda_.3} parent=69 // loop_header_branch
                  %3267 = sbr.rel (%p3264) target = $region77
                $region74: #{_lambda_.3} parent=69 // loop_body
                  %v3271 = vld [vmem:[%s3269] sm:$0xf]
                  %3272 = vst [vmem:[%s3270] sm:$0xf] %v3271
                  %v3273 = vld [vmem:[%s3269 + $0x4] sm:$0xf]
                  %3274 = vst [vmem:[%s3270 + $0x4] sm:$0xf] %v3273
                  %v3275 = vld [vmem:[%s3269 + $0x8] sm:$0xf]
                  %3276 = vst [vmem:[%s3270 + $0x8] sm:$0xf] %v3275
                  %v3277 = vld [vmem:[%s3269 + $0xc] sm:$0xf]
                  %3278 = vst [vmem:[%s3270 + $0xc] sm:$0xf] %v3277
                  %v3279 = vld [vmem:[%s3269 + $0x10] sm:$0xf]
                  %3280 = vst [vmem:[%s3270 + $0x10] sm:$0xf] %v3279
                  %v3281 = vld [vmem:[%s3269 + $0x14] sm:$0xf]
                  %3282 = vst [vmem:[%s3270 + $0x14] sm:$0xf] %v3281
                  %v3283 = vld [vmem:[%s3269 + $0x18] sm:$0xf]
                  %3284 = vst [vmem:[%s3270 + $0x18] sm:$0xf] %v3283
                  %v3285 = vld [vmem:[%s3269 + $0x1c] sm:$0xf]
                  %3286 = vst [vmem:[%s3270 + $0x1c] sm:$0xf] %v3285
                  %v3287 = vld [vmem:[%s3269 + $0x20] sm:$0xf]
                  %3288 = vst [vmem:[%s3270 + $0x20] sm:$0xf] %v3287
                  %v3289 = vld [vmem:[%s3269 + $0x24] sm:$0xf]
                  %3290 = vst [vmem:[%s3270 + $0x24] sm:$0xf] %v3289
                  %v3291 = vld [vmem:[%s3269 + $0x28] sm:$0xf]
                  %3292 = vst [vmem:[%s3270 + $0x28] sm:$0xf] %v3291
                  %v3293 = vld [vmem:[%s3269 + $0x2c] sm:$0xf]
                  %3294 = vst [vmem:[%s3270 + $0x2c] sm:$0xf] %v3293
                  %v3295 = vld [vmem:[%s3269 + $0x30] sm:$0xf]
                  %3296 = vst [vmem:[%s3270 + $0x30] sm:$0xf] %v3295
                  %v3297 = vld [vmem:[%s3269 + $0x34] sm:$0xf]
                  %3298 = vst [vmem:[%s3270 + $0x34] sm:$0xf] %v3297
                  %v3299 = vld [vmem:[%s3269 + $0x38] sm:$0xf]
                  %3300 = vst [vmem:[%s3270 + $0x38] sm:$0xf] %v3299
                  %v3301 = vld [vmem:[%s3269 + $0x3c] sm:$0xf]
                  %3302 = vst [vmem:[%s3270 + $0x3c] sm:$0xf] %v3301
                  %s3303 = sadd.s32 1, %s3268
                  %p3304 = scmp.ge.s32.totalorder %s3303, %s3261
                  %s3305 = scalar_select %p3304, 0, %s3303
                  %s3306 = smul.u32 %s3305, 64
                  %s3307 = smul.u32 %s3305, 64
                  %s3308 = scalar_lea.vmem %s3164, %s3306 [#allocation2]
                  %s3309 = scalar_lea.vmem %s3175, %s3307
                $region75: #{_lambda_.3} parent=69 // loop_footer
                  %s3265 = sadd.s32 %s3263, 1
                $region76: #{_lambda_.3} parent=69 // loop_footer_branch
                  %3262 = sbr.rel target = $region72
                $region77: #{_lambda_.3} parent=69 // loop_exit
                  _
                %s3310 = sshrl.u32 %s3171, 4
                %s3311 = sand.u32 %s3171, 15
                %s3312 = smul.u32 %s3310, 16
                %s3313 = smul.u32 4, %s3312
                %s3314 = scalar_lea.vmem %s3164, %s3313 [#allocation2]
                %s3315 = smul.u32 4, %s3312
                %s3316 = scalar_lea.vmem %s3175, %s3315
                // While loop
                $region78: #{_lambda_.3} parent=69 // loop_pre_header
                  _
                $region79: #{_lambda_.3} parent=69 // loop_header
                  %s3318 = sphi 0, %s3320
                  %p3319 = scmp.ge.s32.totalorder %s3318, %s3311
                  %s3323 = sphi 0, %s3330
                  %s3324 = sphi %s3314, %s3333
                  %s3325 = sphi %s3316, %s3334
                $region80: #{_lambda_.3} parent=69 // loop_header_branch
                  %3322 = sbr.rel (%p3319) target = $region84
                $region81: #{_lambda_.3} parent=69 // loop_body
                  %v3326 = vld [vmem:[%s3324] sm:$0xf]
                  %3327 = vst [vmem:[%s3325] sm:$0xf] %v3326
                  %s3328 = sadd.s32 1, %s3323
                  %p3329 = scmp.ge.s32.totalorder %s3328, %s3311
                  %s3330 = scalar_select %p3329, 0, %s3328
                  %s3331 = smul.u32 %s3330, 4
                  %s3332 = smul.u32 %s3330, 4
                  %s3333 = scalar_lea.vmem %s3314, %s3331 [#allocation2]
                  %s3334 = scalar_lea.vmem %s3316, %s3332
                $region82: #{_lambda_.3} parent=69 // loop_footer
                  %s3320 = sadd.s32 %s3318, 1
                $region83: #{_lambda_.3} parent=69 // loop_footer_branch
                  %3317 = sbr.rel target = $region79
                $region84: #{_lambda_.3} parent=69 // loop_exit
                  _
              $region70: #{_lambda_.3} parent=47 // pred_fallthru
                _
            $region48: #{_lambda_.3} parent=43 // pred_fallthru
              _
            // Predicated region
            $region49: #{_lambda_.3} parent=43 // pred_check
              _
            $region50: #{_lambda_.3} parent=43 // pred_check_branch
              %3182 = sbr.rel (0) target = $region52
            $region51: #{_lambda_.3} parent=43 // pred_region
              %s3184 = sshrl.u32 %s3171, 4
              // While loop
              $region53: #{_lambda_.3} parent=51 // loop_pre_header
                _
              $region54: #{_lambda_.3} parent=51 // loop_header
                %s3186 = sphi 0, %s3188
                %p3187 = scmp.ge.s32.totalorder %s3186, %s3184
                %s3191 = sphi 0, %s3228
                %s3192 = sphi %s3164, %s3231
                %s3193 = sphi %s3175, %s3232
              $region55: #{_lambda_.3} parent=51 // loop_header_branch
                %3190 = sbr.rel (%p3187) target = $region59
              $region56: #{_lambda_.3} parent=51 // loop_body
                %v3194 = vld [vmem:[%s3192] sm:$0xf]
                %3195 = vst [vmem:[%s3193] sm:$0xf] %v3194
                %v3196 = vld [vmem:[%s3192 + $0x4] sm:$0xf]
                %3197 = vst [vmem:[%s3193 + $0x4] sm:$0xf] %v3196
                %v3198 = vld [vmem:[%s3192 + $0x8] sm:$0xf]
                %3199 = vst [vmem:[%s3193 + $0x8] sm:$0xf] %v3198
                %v3200 = vld [vmem:[%s3192 + $0xc] sm:$0xf]
                %3201 = vst [vmem:[%s3193 + $0xc] sm:$0xf] %v3200
                %v3202 = vld [vmem:[%s3192 + $0x10] sm:$0xf]
                %3203 = vst [vmem:[%s3193 + $0x10] sm:$0xf] %v3202
                %v3204 = vld [vmem:[%s3192 + $0x14] sm:$0xf]
                %3205 = vst [vmem:[%s3193 + $0x14] sm:$0xf] %v3204
                %v3206 = vld [vmem:[%s3192 + $0x18] sm:$0xf]
                %3207 = vst [vmem:[%s3193 + $0x18] sm:$0xf] %v3206
                %v3208 = vld [vmem:[%s3192 + $0x1c] sm:$0xf]
                %3209 = vst [vmem:[%s3193 + $0x1c] sm:$0xf] %v3208
                %v3210 = vld [vmem:[%s3192 + $0x20] sm:$0xf]
                %3211 = vst [vmem:[%s3193 + $0x20] sm:$0xf] %v3210
                %v3212 = vld [vmem:[%s3192 + $0x24] sm:$0xf]
                %3213 = vst [vmem:[%s3193 + $0x24] sm:$0xf] %v3212
                %v3214 = vld [vmem:[%s3192 + $0x28] sm:$0xf]
                %3215 = vst [vmem:[%s3193 + $0x28] sm:$0xf] %v3214
                %v3216 = vld [vmem:[%s3192 + $0x2c] sm:$0xf]
                %3217 = vst [vmem:[%s3193 + $0x2c] sm:$0xf] %v3216
                %v3218 = vld [vmem:[%s3192 + $0x30] sm:$0xf]
                %3219 = vst [vmem:[%s3193 + $0x30] sm:$0xf] %v3218
                %v3220 = vld [vmem:[%s3192 + $0x34] sm:$0xf]
                %3221 = vst [vmem:[%s3193 + $0x34] sm:$0xf] %v3220
                %v3222 = vld [vmem:[%s3192 + $0x38] sm:$0xf]
                %3223 = vst [vmem:[%s3193 + $0x38] sm:$0xf] %v3222
                %v3224 = vld [vmem:[%s3192 + $0x3c] sm:$0xf]
                %3225 = vst [vmem:[%s3193 + $0x3c] sm:$0xf] %v3224
                %s3226 = sadd.s32 1, %s3191
                %p3227 = scmp.ge.s32.totalorder %s3226, %s3184
                %s3228 = scalar_select %p3227, 0, %s3226
                %s3229 = smul.u32 %s3228, 64
                %s3230 = smul.u32 %s3228, 64
                %s3231 = scalar_lea.vmem %s3164, %s3229 [#allocation2]
                %s3232 = scalar_lea.vmem %s3175, %s3230
              $region57: #{_lambda_.3} parent=51 // loop_footer
                %s3188 = sadd.s32 %s3186, 1
              $region58: #{_lambda_.3} parent=51 // loop_footer_branch
                %3185 = sbr.rel target = $region54
              $region59: #{_lambda_.3} parent=51 // loop_exit
                _
              %s3233 = sshrl.u32 %s3171, 4
              %s3234 = sand.u32 %s3171, 15
              %s3235 = smul.u32 %s3233, 16
              %s3236 = smul.u32 4, %s3235
              %s3237 = scalar_lea.vmem %s3164, %s3236 [#allocation2]
              %s3238 = smul.u32 4, %s3235
              %s3239 = scalar_lea.vmem %s3175, %s3238
              // While loop
              $region60: #{_lambda_.3} parent=51 // loop_pre_header
                _
              $region61: #{_lambda_.3} parent=51 // loop_header
                %s3241 = sphi 0, %s3243
                %p3242 = scmp.ge.s32.totalorder %s3241, %s3234
                %s3246 = sphi 0, %s3253
                %s3247 = sphi %s3237, %s3256
                %s3248 = sphi %s3239, %s3257
              $region62: #{_lambda_.3} parent=51 // loop_header_branch
                %3245 = sbr.rel (%p3242) target = $region66
              $region63: #{_lambda_.3} parent=51 // loop_body
                %v3249 = vld [vmem:[%s3247] sm:$0xf]
                %3250 = vst [vmem:[%s3248] sm:$0xf] %v3249
                %s3251 = sadd.s32 1, %s3246
                %p3252 = scmp.ge.s32.totalorder %s3251, %s3234
                %s3253 = scalar_select %p3252, 0, %s3251
                %s3254 = smul.u32 %s3253, 4
                %s3255 = smul.u32 %s3253, 4
                %s3256 = scalar_lea.vmem %s3237, %s3254 [#allocation2]
                %s3257 = scalar_lea.vmem %s3239, %s3255
              $region64: #{_lambda_.3} parent=51 // loop_footer
                %s3243 = sadd.s32 %s3241, 1
              $region65: #{_lambda_.3} parent=51 // loop_footer_branch
                %3240 = sbr.rel target = $region61
              $region66: #{_lambda_.3} parent=51 // loop_exit
                _
            $region52: #{_lambda_.3} parent=43 // pred_fallthru
              _
          $region44: #{_lambda_.3} parent=39 // pred_fallthru
            _
          %3335 = vnop
        $region40: #{_lambda_.3} parent=35 // pred_fallthru
          _
      $region36: #{_lambda_.3} parent=5 // pred_fallthru
        _
      %p3336 = scmp.le.s32.totalorder 2, %s10
      // Predicated region
      $region85: #{_lambda_.3} parent=5 // pred_check
        %p3337 = pneg %p3336
      $region86: #{_lambda_.3} parent=5 // pred_check_branch
        %3339 = sbr.rel (%p3337) target = $region88
      $region87: #{_lambda_.3} parent=5 // pred_region
        %s3340 = ssub.s32 %s10, 2
        // Predicated region
        $region89: #{_lambda_.3} parent=87 // pred_check
          %p3341 = pneg %p128
        $region90: #{_lambda_.3} parent=87 // pred_check_branch
          %3343 = sbr.rel (%p3341) target = $region92
        $region91: #{_lambda_.3} parent=87 // pred_region
          %s3344 = sand.u32 %s113, 1
          %s3345 = sand.u32 %s113, 1
          %s3346 = smul.addr %s3345, 64
          %s3347 = scalar_lea.vmem [#allocation2], %s3346
        $region92: #{_lambda_.3} parent=87 // pred_fallthru
          _
      $region88: #{_lambda_.3} parent=5 // pred_fallthru
        _
    $region6: #{_lambda_.3} parent=1 // loop_footer
      %s14 = sadd.s32 1, %s10
    $region7: #{_lambda_.3} parent=1 // loop_footer_branch
      %9 = sbr.rel target = $region3
    $region8: #{_lambda_.3} parent=1 // loop_exit
      _

// kernel: _lambda_.4
$region0: #{_lambda_.4}
  #allocation0 [shape = 'u32[]', space=smem, size = 0x4, offset = 0x4, fixed_abs, tag = 'smem constant byte address 0x4 - core index']
  #allocation1 [shape = 'u32[144,128]{1,0:T(1,128)}', space=vmem, size = 0x12000, scoped, tag = 'internal scratch']
  %s0 = inlined_call_operand.vmem [shape: bf16[85,2304], index: 0, kind: input, shape index: {}]
  %s1 = inlined_call_operand.vmem [shape: bf16[2304,512], index: 1, kind: input, shape index: {}]
  %s2 = inlined_call_operand.vmem [shape: f32[1,512], index: 2, kind: input, shape index: {}]
  %s3 = inlined_call_operand.vmem [shape: f32[1,512], index: 3, kind: input, shape index: {}]
  %s4 = inlined_call_operand.vmem [shape: bf16[85,128], index: 4, kind: output, shape index: {}]
  %s5 = sld [smem:[#allocation0]]
  $region26: #{_lambda_.4} parent=0
    _
  %s7 = ssub.s32 1, %s5
  %s8 = scalar_select 0, %s7, %s5
  // Predicated region
  $region2: #{_lambda_.4} parent=0 // pred_check
    _
  $region3: #{_lambda_.4} parent=0 // pred_check_branch
    %10 = sbr.rel (0) target = $region5
  $region4: #{_lambda_.4} parent=0 // pred_region
    _
  $region5: #{_lambda_.4} parent=0 // pred_fallthru
    _
  // Predicated region
  $region6: #{_lambda_.4} parent=0 // pred_check
    _
  $region7: #{_lambda_.4} parent=0 // pred_check_branch
    %12 = sbr.rel (0) target = $region9
  $region8: #{_lambda_.4} parent=0 // pred_region
    _
  $region9: #{_lambda_.4} parent=0 // pred_fallthru
    _
  // Predicated region
  $region10: #{_lambda_.4} parent=0 // pred_check
    _
  $region11: #{_lambda_.4} parent=0 // pred_check_branch
    %14 = sbr.rel (0) target = $region13
  $region12: #{_lambda_.4} parent=0 // pred_region
    _
  $region13: #{_lambda_.4} parent=0 // pred_fallthru
    _
  // Predicated region
  $region14: #{_lambda_.4} parent=0 // pred_check
    _
  $region15: #{_lambda_.4} parent=0 // pred_check_branch
    %16 = sbr.rel (0) target = $region17
  $region16: #{_lambda_.4} parent=0 // pred_region
    _
  $region17: #{_lambda_.4} parent=0 // pred_fallthru
    _
  %v17 = vld [vmem:[%s0] sm:$0xff]
  %v18 = vld [vmem:[%s0 + $0x8] sm:$0xff]
  %v19 = vld [vmem:[%s0 + $0x10] sm:$0xff]
  %v20 = vld [vmem:[%s0 + $0x18] sm:$0xff]
  %v21 = vld [vmem:[%s0 + $0x20] sm:$0xff]
  %v22 = vld [vmem:[%s0 + $0x28] sm:$0xff]
  %v23 = vld [vmem:[%s0 + $0x30] sm:$0xff]
  %v24 = vld [vmem:[%s0 + $0x38] sm:$0xff]
  %v25 = vld [vmem:[%s0 + $0x40] sm:$0xff]
  %v26 = vld [vmem:[%s0 + $0x48] sm:$0xff]
  %v27 = vld [vmem:[%s0 + $0x50] sm:$0xff]
  %v28 = vld [vmem:[%s0 + $0x58] sm:$0xff]
  %v29 = vld [vmem:[%s0 + $0x60] sm:$0xff]
  %v30 = vld [vmem:[%s0 + $0x68] sm:$0xff]
  %v31 = vld [vmem:[%s0 + $0x70] sm:$0xff]
  %v32 = vld [vmem:[%s0 + $0x78] sm:$0xff]
  %v33 = vld [vmem:[%s0 + $0x80] sm:$0xff]
  %v34 = vld [vmem:[%s0 + $0x88] sm:$0xff]
  %v35 = vld [vmem:[%s0 + $0x90] sm:$0xff]
  %v36 = vld [vmem:[%s0 + $0x98] sm:$0xff]
  %v37 = vld [vmem:[%s0 + $0xa0] sm:$0xff]
  %v38 = vld [vmem:[%s0 + $0xa8] sm:$0xff]
  %v39 = vld [vmem:[%s0 + $0xb0] sm:$0xff]
  %v40 = vld [vmem:[%s0 + $0xb8] sm:$0xff]
  %v41 = vld [vmem:[%s0 + $0xc0] sm:$0xff]
  %v42 = vld [vmem:[%s0 + $0xc8] sm:$0xff]
  %v43 = vld [vmem:[%s0 + $0xd0] sm:$0xff]
  %v44 = vld [vmem:[%s0 + $0xd8] sm:$0xff]
  %v45 = vld [vmem:[%s0 + $0xe0] sm:$0xff]
  %v46 = vld [vmem:[%s0 + $0xe8] sm:$0xff]
  %v47 = vld [vmem:[%s0 + $0xf0] sm:$0xff]
  %v48 = vld [vmem:[%s0 + $0xf8] sm:$0xff]
  %v49 = vld [vmem:[%s0 + $0x100] sm:$0xff]
  %v50 = vld [vmem:[%s0 + $0x108] sm:$0xff]
  %v51 = vld [vmem:[%s0 + $0x110] sm:$0xff]
  %v52 = vld [vmem:[%s0 + $0x118] sm:$0xff]
  %v53 = vld [vmem:[%s0 + $0x120] sm:$0xff]
  %v54 = vld [vmem:[%s0 + $0x128] sm:$0xff]
  %v55 = vld [vmem:[%s0 + $0x130] sm:$0xff]
  %v56 = vld [vmem:[%s0 + $0x138] sm:$0xff]
  %v57 = vld [vmem:[%s0 + $0x140] sm:$0xff]
  %v58 = vld [vmem:[%s0 + $0x148] sm:$0xff]
  %v59 = vld [vmem:[%s0 + $0x150] sm:$0xff]
  %v60 = vld [vmem:[%s0 + $0x158] sm:$0xff]
  %v61 = vld [vmem:[%s0 + $0x160] sm:$0xff]
  %v62 = vld [vmem:[%s0 + $0x168] sm:$0xff]
  %v63 = vld [vmem:[%s0 + $0x170] sm:$0xff]
  %v64 = vld [vmem:[%s0 + $0x178] sm:$0xff]
  %v65 = vld [vmem:[%s0 + $0x180] sm:$0xff]
  %v66 = vld [vmem:[%s0 + $0x188] sm:$0xff]
  %v67 = vld [vmem:[%s0 + $0x190] sm:$0xff]
  %v68 = vld [vmem:[%s0 + $0x198] sm:$0xff]
  %v69 = vld [vmem:[%s0 + $0x1a0] sm:$0xff]
  %v70 = vld [vmem:[%s0 + $0x1a8] sm:$0xff]
  %v71 = vld [vmem:[%s0 + $0x1b0] sm:$0xff]
  %v72 = vld [vmem:[%s0 + $0x1b8] sm:$0xff]
  %v73 = vld [vmem:[%s0 + $0x1c0] sm:$0xff]
  %v74 = vld [vmem:[%s0 + $0x1c8] sm:$0xff]
  %v75 = vld [vmem:[%s0 + $0x1d0] sm:$0xff]
  %v76 = vld [vmem:[%s0 + $0x1d8] sm:$0xff]
  %v77 = vld [vmem:[%s0 + $0x1e0] sm:$0xff]
  %v78 = vld [vmem:[%s0 + $0x1e8] sm:$0xff]
  %v79 = vld [vmem:[%s0 + $0x1f0] sm:$0xff]
  %v80 = vld [vmem:[%s0 + $0x1f8] sm:$0xff]
  %v81 = vld [vmem:[%s0 + $0x200] sm:$0xff]
  %v82 = vld [vmem:[%s0 + $0x208] sm:$0xff]
  %v83 = vld [vmem:[%s0 + $0x210] sm:$0xff]
  %v84 = vld [vmem:[%s0 + $0x218] sm:$0xff]
  %v85 = vld [vmem:[%s0 + $0x220] sm:$0xff]
  %v86 = vld [vmem:[%s0 + $0x228] sm:$0xff]
  %v87 = vld [vmem:[%s0 + $0x230] sm:$0xff]
  %v88 = vld [vmem:[%s0 + $0x238] sm:$0xff]
  %v89 = vld [vmem:[%s0 + $0x240] sm:$0xff]
  %v90 = vld [vmem:[%s0 + $0x248] sm:$0xff]
  %v91 = vld [vmem:[%s0 + $0x250] sm:$0xff]
  %v92 = vld [vmem:[%s0 + $0x258] sm:$0xff]
  %v93 = vld [vmem:[%s0 + $0x260] sm:$0xff]
  %v94 = vld [vmem:[%s0 + $0x268] sm:$0xff]
  %v95 = vld [vmem:[%s0 + $0x270] sm:$0xff]
  %v96 = vld [vmem:[%s0 + $0x278] sm:$0xff]
  %v97 = vld [vmem:[%s0 + $0x280] sm:$0xff]
  %v98 = vld [vmem:[%s0 + $0x288] sm:$0xff]
  %v99 = vld [vmem:[%s0 + $0x290] sm:$0xff]
  %v100 = vld [vmem:[%s0 + $0x298] sm:$0xff]
  %v101 = vld [vmem:[%s0 + $0x2a0] sm:$0xff]
  %v102 = vld [vmem:[%s0 + $0x2a8] sm:$0xff]
  %v103 = vld [vmem:[%s0 + $0x2b0] sm:$0xff]
  %v104 = vld [vmem:[%s0 + $0x2b8] sm:$0xff]
  %v105 = vld [vmem:[%s0 + $0x2c0] sm:$0xff]
  %v106 = vld [vmem:[%s0 + $0x2c8] sm:$0xff]
  %v107 = vld [vmem:[%s0 + $0x2d0] sm:$0x77]
  %v108 = vld [vmem:[%s0 + $0x2d8] sm:$0x77]
  %v109 = vld [vmem:[%s0 + $0x2e0] sm:$0x77]
  %v110 = vld [vmem:[%s0 + $0x2e8] sm:$0x77]
  %v111 = vld [vmem:[%s0 + $0x2f0] sm:$0x77]
  %v112 = vld [vmem:[%s0 + $0x2f8] sm:$0x77]
  %v113 = vld [vmem:[%s0 + $0x300] sm:$0x77]
  %v114 = vld [vmem:[%s0 + $0x308] sm:$0x77]
  %v115 = vld [vmem:[%s0 + $0x310] sm:$0x77]
  %v116 = vld [vmem:[%s1] sm:$0xff]
  %v117 = vld [vmem:[%s1 + $0x8] sm:$0xff]
  %v118 = vld [vmem:[%s1 + $0x10] sm:$0xff]
  %v119 = vld [vmem:[%s1 + $0x18] sm:$0xff]
  %v120 = vld [vmem:[%s1 + $0x20] sm:$0xff]
  %v121 = vld [vmem:[%s1 + $0x28] sm:$0xff]
  %v122 = vld [vmem:[%s1 + $0x30] sm:$0xff]
  %v123 = vld [vmem:[%s1 + $0x38] sm:$0xff]
  %v124 = vld [vmem:[%s1 + $0x40] sm:$0xff]
  %v125 = vld [vmem:[%s1 + $0x48] sm:$0xff]
  %v126 = vld [vmem:[%s1 + $0x50] sm:$0xff]
  %v127 = vld [vmem:[%s1 + $0x58] sm:$0xff]
  %v128 = vld [vmem:[%s1 + $0x60] sm:$0xff]
  %v129 = vld [vmem:[%s1 + $0x68] sm:$0xff]
  %v130 = vld [vmem:[%s1 + $0x70] sm:$0xff]
  %v131 = vld [vmem:[%s1 + $0x78] sm:$0xff]
  %v132 = vld [vmem:[%s1 + $0x80] sm:$0xff]
  %v133 = vld [vmem:[%s1 + $0x88] sm:$0xff]
  %v134 = vld [vmem:[%s1 + $0x90] sm:$0xff]
  %v135 = vld [vmem:[%s1 + $0x98] sm:$0xff]
  %v136 = vld [vmem:[%s1 + $0xa0] sm:$0xff]
  %v137 = vld [vmem:[%s1 + $0xa8] sm:$0xff]
  %v138 = vld [vmem:[%s1 + $0xb0] sm:$0xff]
  %v139 = vld [vmem:[%s1 + $0xb8] sm:$0xff]
  %v140 = vld [vmem:[%s1 + $0xc0] sm:$0xff]
  %v141 = vld [vmem:[%s1 + $0xc8] sm:$0xff]
  %v142 = vld [vmem:[%s1 + $0xd0] sm:$0xff]
  %v143 = vld [vmem:[%s1 + $0xd8] sm:$0xff]
  %v144 = vld [vmem:[%s1 + $0xe0] sm:$0xff]
  %v145 = vld [vmem:[%s1 + $0xe8] sm:$0xff]
  %v146 = vld [vmem:[%s1 + $0xf0] sm:$0xff]
  %v147 = vld [vmem:[%s1 + $0xf8] sm:$0xff]
  %v148 = vld [vmem:[%s1 + $0x100] sm:$0xff]
  %v149 = vld [vmem:[%s1 + $0x108] sm:$0xff]
  %v150 = vld [vmem:[%s1 + $0x110] sm:$0xff]
  %v151 = vld [vmem:[%s1 + $0x118] sm:$0xff]
  %v152 = vld [vmem:[%s1 + $0x120] sm:$0xff]
  %v153 = vld [vmem:[%s1 + $0x128] sm:$0xff]
  %v154 = vld [vmem:[%s1 + $0x130] sm:$0xff]
  %v155 = vld [vmem:[%s1 + $0x138] sm:$0xff]
  %v156 = vld [vmem:[%s1 + $0x140] sm:$0xff]
  %v157 = vld [vmem:[%s1 + $0x148] sm:$0xff]
  %v158 = vld [vmem:[%s1 + $0x150] sm:$0xff]
  %v159 = vld [vmem:[%s1 + $0x158] sm:$0xff]
  %v160 = vld [vmem:[%s1 + $0x160] sm:$0xff]
  %v161 = vld [vmem:[%s1 + $0x168] sm:$0xff]
  %v162 = vld [vmem:[%s1 + $0x170] sm:$0xff]
  %v163 = vld [vmem:[%s1 + $0x178] sm:$0xff]
  %v164 = vld [vmem:[%s1 + $0x180] sm:$0xff]
  %v165 = vld [vmem:[%s1 + $0x188] sm:$0xff]
  %v166 = vld [vmem:[%s1 + $0x190] sm:$0xff]
  %v167 = vld [vmem:[%s1 + $0x198] sm:$0xff]
  %v168 = vld [vmem:[%s1 + $0x1a0] sm:$0xff]
  %v169 = vld [vmem:[%s1 + $0x1a8] sm:$0xff]
  %v170 = vld [vmem:[%s1 + $0x1b0] sm:$0xff]
  %v171 = vld [vmem:[%s1 + $0x1b8] sm:$0xff]
  %v172 = vld [vmem:[%s1 + $0x1c0] sm:$0xff]
  %v173 = vld [vmem:[%s1 + $0x1c8] sm:$0xff]
  %v174 = vld [vmem:[%s1 + $0x1d0] sm:$0xff]
  %v175 = vld [vmem:[%s1 + $0x1d8] sm:$0xff]
  %v176 = vld [vmem:[%s1 + $0x1e0] sm:$0xff]
  %v177 = vld [vmem:[%s1 + $0x1e8] sm:$0xff]
  %v178 = vld [vmem:[%s1 + $0x1f0] sm:$0xff]
  %v179 = vld [vmem:[%s1 + $0x1f8] sm:$0xff]
  %v180 = vld [vmem:[%s1 + $0x200] sm:$0xff]
  %v181 = vld [vmem:[%s1 + $0x208] sm:$0xff]
  %v182 = vld [vmem:[%s1 + $0x210] sm:$0xff]
  %v183 = vld [vmem:[%s1 + $0x218] sm:$0xff]
  %v184 = vld [vmem:[%s1 + $0x220] sm:$0xff]
  %v185 = vld [vmem:[%s1 + $0x228] sm:$0xff]
  %v186 = vld [vmem:[%s1 + $0x230] sm:$0xff]
  %v187 = vld [vmem:[%s1 + $0x238] sm:$0xff]
  %v188 = vld [vmem:[%s1 + $0x240] sm:$0xff]
  %v189 = vld [vmem:[%s1 + $0x248] sm:$0xff]
  %v190 = vld [vmem:[%s1 + $0x250] sm:$0xff]
  %v191 = vld [vmem:[%s1 + $0x258] sm:$0xff]
  %v192 = vld [vmem:[%s1 + $0x260] sm:$0xff]
  %v193 = vld [vmem:[%s1 + $0x268] sm:$0xff]
  %v194 = vld [vmem:[%s1 + $0x270] sm:$0xff]
  %v195 = vld [vmem:[%s1 + $0x278] sm:$0xff]
  %v196 = vld [vmem:[%s1 + $0x280] sm:$0xff]
  %v197 = vld [vmem:[%s1 + $0x288] sm:$0xff]
  %v198 = vld [vmem:[%s1 + $0x290] sm:$0xff]
  %v199 = vld [vmem:[%s1 + $0x298] sm:$0xff]
  %v200 = vld [vmem:[%s1 + $0x2a0] sm:$0xff]
  %v201 = vld [vmem:[%s1 + $0x2a8] sm:$0xff]
  %v202 = vld [vmem:[%s1 + $0x2b0] sm:$0xff]
  %v203 = vld [vmem:[%s1 + $0x2b8] sm:$0xff]
  %v204 = vld [vmem:[%s1 + $0x2c0] sm:$0xff]
  %v205 = vld [vmem:[%s1 + $0x2c8] sm:$0xff]
  %v206 = vld [vmem:[%s1 + $0x2d0] sm:$0xff]
  %v207 = vld [vmem:[%s1 + $0x2d8] sm:$0xff]
  %v208 = vld [vmem:[%s1 + $0x2e0] sm:$0xff]
  %v209 = vld [vmem:[%s1 + $0x2e8] sm:$0xff]
  %v210 = vld [vmem:[%s1 + $0x2f0] sm:$0xff]
  %v211 = vld [vmem:[%s1 + $0x2f8] sm:$0xff]
  %v212 = vld [vmem:[%s1 + $0x300] sm:$0xff]
  %v213 = vld [vmem:[%s1 + $0x308] sm:$0xff]
  %v214 = vld [vmem:[%s1 + $0x310] sm:$0xff]
  %v215 = vld [vmem:[%s1 + $0x318] sm:$0xff]
  %v216 = vld [vmem:[%s1 + $0x320] sm:$0xff]
  %v217 = vld [vmem:[%s1 + $0x328] sm:$0xff]
  %v218 = vld [vmem:[%s1 + $0x330] sm:$0xff]
  %v219 = vld [vmem:[%s1 + $0x338] sm:$0xff]
  %v220 = vld [vmem:[%s1 + $0x340] sm:$0xff]
  %v221 = vld [vmem:[%s1 + $0x348] sm:$0xff]
  %v222 = vld [vmem:[%s1 + $0x350] sm:$0xff]
  %v223 = vld [vmem:[%s1 + $0x358] sm:$0xff]
  %v224 = vld [vmem:[%s1 + $0x360] sm:$0xff]
  %v225 = vld [vmem:[%s1 + $0x368] sm:$0xff]
  %v226 = vld [vmem:[%s1 + $0x370] sm:$0xff]
  %v227 = vld [vmem:[%s1 + $0x378] sm:$0xff]
  %v228 = vld [vmem:[%s1 + $0x380] sm:$0xff]
  %v229 = vld [vmem:[%s1 + $0x388] sm:$0xff]
  %v230 = vld [vmem:[%s1 + $0x390] sm:$0xff]
  %v231 = vld [vmem:[%s1 + $0x398] sm:$0xff]
  %v232 = vld [vmem:[%s1 + $0x3a0] sm:$0xff]
  %v233 = vld [vmem:[%s1 + $0x3a8] sm:$0xff]
  %v234 = vld [vmem:[%s1 + $0x3b0] sm:$0xff]
  %v235 = vld [vmem:[%s1 + $0x3b8] sm:$0xff]
  %v236 = vld [vmem:[%s1 + $0x3c0] sm:$0xff]
  %v237 = vld [vmem:[%s1 + $0x3c8] sm:$0xff]
  %v238 = vld [vmem:[%s1 + $0x3d0] sm:$0xff]
  %v239 = vld [vmem:[%s1 + $0x3d8] sm:$0xff]
  %v240 = vld [vmem:[%s1 + $0x3e0] sm:$0xff]
  %v241 = vld [vmem:[%s1 + $0x3e8] sm:$0xff]
  %v242 = vld [vmem:[%s1 + $0x3f0] sm:$0xff]
  %v243 = vld [vmem:[%s1 + $0x3f8] sm:$0xff]
  %v244 = vld [vmem:[%s1 + $0x400] sm:$0xff]
  %v245 = vld [vmem:[%s1 + $0x408] sm:$0xff]
  %v246 = vld [vmem:[%s1 + $0x410] sm:$0xff]
  %v247 = vld [vmem:[%s1 + $0x418] sm:$0xff]
  %v248 = vld [vmem:[%s1 + $0x420] sm:$0xff]
  %v249 = vld [vmem:[%s1 + $0x428] sm:$0xff]
  %v250 = vld [vmem:[%s1 + $0x430] sm:$0xff]
  %v251 = vld [vmem:[%s1 + $0x438] sm:$0xff]
  %v252 = vld [vmem:[%s1 + $0x440] sm:$0xff]
  %v253 = vld [vmem:[%s1 + $0x448] sm:$0xff]
  %v254 = vld [vmem:[%s1 + $0x450] sm:$0xff]
  %v255 = vld [vmem:[%s1 + $0x458] sm:$0xff]
  %v256 = vld [vmem:[%s1 + $0x460] sm:$0xff]
  %v257 = vld [vmem:[%s1 + $0x468] sm:$0xff]
  %v258 = vld [vmem:[%s1 + $0x470] sm:$0xff]
  %v259 = vld [vmem:[%s1 + $0x478] sm:$0xff]
  %v260 = vld [vmem:[%s1 + $0x480] sm:$0xff]
  %v261 = vld [vmem:[%s1 + $0x488] sm:$0xff]
  %v262 = vld [vmem:[%s1 + $0x490] sm:$0xff]
  %v263 = vld [vmem:[%s1 + $0x498] sm:$0xff]
  %v264 = vld [vmem:[%s1 + $0x4a0] sm:$0xff]
  %v265 = vld [vmem:[%s1 + $0x4a8] sm:$0xff]
  %v266 = vld [vmem:[%s1 + $0x4b0] sm:$0xff]
  %v267 = vld [vmem:[%s1 + $0x4b8] sm:$0xff]
  %v268 = vld [vmem:[%s1 + $0x4c0] sm:$0xff]
  %v269 = vld [vmem:[%s1 + $0x4c8] sm:$0xff]
  %v270 = vld [vmem:[%s1 + $0x4d0] sm:$0xff]
  %v271 = vld [vmem:[%s1 + $0x4d8] sm:$0xff]
  %v272 = vld [vmem:[%s1 + $0x4e0] sm:$0xff]
  %v273 = vld [vmem:[%s1 + $0x4e8] sm:$0xff]
  %v274 = vld [vmem:[%s1 + $0x4f0] sm:$0xff]
  %v275 = vld [vmem:[%s1 + $0x4f8] sm:$0xff]
  %v276 = vld [vmem:[%s1 + $0x500] sm:$0xff]
  %v277 = vld [vmem:[%s1 + $0x508] sm:$0xff]
  %v278 = vld [vmem:[%s1 + $0x510] sm:$0xff]
  %v279 = vld [vmem:[%s1 + $0x518] sm:$0xff]
  %v280 = vld [vmem:[%s1 + $0x520] sm:$0xff]
  %v281 = vld [vmem:[%s1 + $0x528] sm:$0xff]
  %v282 = vld [vmem:[%s1 + $0x530] sm:$0xff]
  %v283 = vld [vmem:[%s1 + $0x538] sm:$0xff]
  %v284 = vld [vmem:[%s1 + $0x540] sm:$0xff]
  %v285 = vld [vmem:[%s1 + $0x548] sm:$0xff]
  %v286 = vld [vmem:[%s1 + $0x550] sm:$0xff]
  %v287 = vld [vmem:[%s1 + $0x558] sm:$0xff]
  %v288 = vld [vmem:[%s1 + $0x560] sm:$0xff]
  %v289 = vld [vmem:[%s1 + $0x568] sm:$0xff]
  %v290 = vld [vmem:[%s1 + $0x570] sm:$0xff]
  %v291 = vld [vmem:[%s1 + $0x578] sm:$0xff]
  %v292 = vld [vmem:[%s1 + $0x580] sm:$0xff]
  %v293 = vld [vmem:[%s1 + $0x588] sm:$0xff]
  %v294 = vld [vmem:[%s1 + $0x590] sm:$0xff]
  %v295 = vld [vmem:[%s1 + $0x598] sm:$0xff]
  %v296 = vld [vmem:[%s1 + $0x5a0] sm:$0xff]
  %v297 = vld [vmem:[%s1 + $0x5a8] sm:$0xff]
  %v298 = vld [vmem:[%s1 + $0x5b0] sm:$0xff]
  %v299 = vld [vmem:[%s1 + $0x5b8] sm:$0xff]
  %v300 = vld [vmem:[%s1 + $0x5c0] sm:$0xff]
  %v301 = vld [vmem:[%s1 + $0x5c8] sm:$0xff]
  %v302 = vld [vmem:[%s1 + $0x5d0] sm:$0xff]
  %v303 = vld [vmem:[%s1 + $0x5d8] sm:$0xff]
  %v304 = vld [vmem:[%s1 + $0x5e0] sm:$0xff]
  %v305 = vld [vmem:[%s1 + $0x5e8] sm:$0xff]
  %v306 = vld [vmem:[%s1 + $0x5f0] sm:$0xff]
  %v307 = vld [vmem:[%s1 + $0x5f8] sm:$0xff]
  %v308 = vld [vmem:[%s1 + $0x600] sm:$0xff]
  %v309 = vld [vmem:[%s1 + $0x608] sm:$0xff]
  %v310 = vld [vmem:[%s1 + $0x610] sm:$0xff]
  %v311 = vld [vmem:[%s1 + $0x618] sm:$0xff]
  %v312 = vld [vmem:[%s1 + $0x620] sm:$0xff]
  %v313 = vld [vmem:[%s1 + $0x628] sm:$0xff]
  %v314 = vld [vmem:[%s1 + $0x630] sm:$0xff]
  %v315 = vld [vmem:[%s1 + $0x638] sm:$0xff]
  %v316 = vld [vmem:[%s1 + $0x640] sm:$0xff]
  %v317 = vld [vmem:[%s1 + $0x648] sm:$0xff]
  %v318 = vld [vmem:[%s1 + $0x650] sm:$0xff]
  %v319 = vld [vmem:[%s1 + $0x658] sm:$0xff]
  %v320 = vld [vmem:[%s1 + $0x660] sm:$0xff]
  %v321 = vld [vmem:[%s1 + $0x668] sm:$0xff]
  %v322 = vld [vmem:[%s1 + $0x670] sm:$0xff]
  %v323 = vld [vmem:[%s1 + $0x678] sm:$0xff]
  %v324 = vld [vmem:[%s1 + $0x680] sm:$0xff]
  %v325 = vld [vmem:[%s1 + $0x688] sm:$0xff]
  %v326 = vld [vmem:[%s1 + $0x690] sm:$0xff]
  %v327 = vld [vmem:[%s1 + $0x698] sm:$0xff]
  %v328 = vld [vmem:[%s1 + $0x6a0] sm:$0xff]
  %v329 = vld [vmem:[%s1 + $0x6a8] sm:$0xff]
  %v330 = vld [vmem:[%s1 + $0x6b0] sm:$0xff]
  %v331 = vld [vmem:[%s1 + $0x6b8] sm:$0xff]
  %v332 = vld [vmem:[%s1 + $0x6c0] sm:$0xff]
  %v333 = vld [vmem:[%s1 + $0x6c8] sm:$0xff]
  %v334 = vld [vmem:[%s1 + $0x6d0] sm:$0xff]
  %v335 = vld [vmem:[%s1 + $0x6d8] sm:$0xff]
  %v336 = vld [vmem:[%s1 + $0x6e0] sm:$0xff]
  %v337 = vld [vmem:[%s1 + $0x6e8] sm:$0xff]
  %v338 = vld [vmem:[%s1 + $0x6f0] sm:$0xff]
  %v339 = vld [vmem:[%s1 + $0x6f8] sm:$0xff]
  %v340 = vld [vmem:[%s1 + $0x700] sm:$0xff]
  %v341 = vld [vmem:[%s1 + $0x708] sm:$0xff]
  %v342 = vld [vmem:[%s1 + $0x710] sm:$0xff]
  %v343 = vld [vmem:[%s1 + $0x718] sm:$0xff]
  %v344 = vld [vmem:[%s1 + $0x720] sm:$0xff]
  %v345 = vld [vmem:[%s1 + $0x728] sm:$0xff]
  %v346 = vld [vmem:[%s1 + $0x730] sm:$0xff]
  %v347 = vld [vmem:[%s1 + $0x738] sm:$0xff]
  %v348 = vld [vmem:[%s1 + $0x740] sm:$0xff]
  %v349 = vld [vmem:[%s1 + $0x748] sm:$0xff]
  %v350 = vld [vmem:[%s1 + $0x750] sm:$0xff]
  %v351 = vld [vmem:[%s1 + $0x758] sm:$0xff]
  %v352 = vld [vmem:[%s1 + $0x760] sm:$0xff]
  %v353 = vld [vmem:[%s1 + $0x768] sm:$0xff]
  %v354 = vld [vmem:[%s1 + $0x770] sm:$0xff]
  %v355 = vld [vmem:[%s1 + $0x778] sm:$0xff]
  %v356 = vld [vmem:[%s1 + $0x780] sm:$0xff]
  %v357 = vld [vmem:[%s1 + $0x788] sm:$0xff]
  %v358 = vld [vmem:[%s1 + $0x790] sm:$0xff]
  %v359 = vld [vmem:[%s1 + $0x798] sm:$0xff]
  %v360 = vld [vmem:[%s1 + $0x7a0] sm:$0xff]
  %v361 = vld [vmem:[%s1 + $0x7a8] sm:$0xff]
  %v362 = vld [vmem:[%s1 + $0x7b0] sm:$0xff]
  %v363 = vld [vmem:[%s1 + $0x7b8] sm:$0xff]
  %v364 = vld [vmem:[%s1 + $0x7c0] sm:$0xff]
  %v365 = vld [vmem:[%s1 + $0x7c8] sm:$0xff]
  %v366 = vld [vmem:[%s1 + $0x7d0] sm:$0xff]
  %v367 = vld [vmem:[%s1 + $0x7d8] sm:$0xff]
  %v368 = vld [vmem:[%s1 + $0x7e0] sm:$0xff]
  %v369 = vld [vmem:[%s1 + $0x7e8] sm:$0xff]
  %v370 = vld [vmem:[%s1 + $0x7f0] sm:$0xff]
  %v371 = vld [vmem:[%s1 + $0x7f8] sm:$0xff]
  %v372 = vld [vmem:[%s1 + $0x800] sm:$0xff]
  %v373 = vld [vmem:[%s1 + $0x808] sm:$0xff]
  %v374 = vld [vmem:[%s1 + $0x810] sm:$0xff]
  %v375 = vld [vmem:[%s1 + $0x818] sm:$0xff]
  %v376 = vld [vmem:[%s1 + $0x820] sm:$0xff]
  %v377 = vld [vmem:[%s1 + $0x828] sm:$0xff]
  %v378 = vld [vmem:[%s1 + $0x830] sm:$0xff]
  %v379 = vld [vmem:[%s1 + $0x838] sm:$0xff]
  %v380 = vld [vmem:[%s1 + $0x840] sm:$0xff]
  %v381 = vld [vmem:[%s1 + $0x848] sm:$0xff]
  %v382 = vld [vmem:[%s1 + $0x850] sm:$0xff]
  %v383 = vld [vmem:[%s1 + $0x858] sm:$0xff]
  %v384 = vld [vmem:[%s1 + $0x860] sm:$0xff]
  %v385 = vld [vmem:[%s1 + $0x868] sm:$0xff]
  %v386 = vld [vmem:[%s1 + $0x870] sm:$0xff]
  %v387 = vld [vmem:[%s1 + $0x878] sm:$0xff]
  %v388 = vld [vmem:[%s1 + $0x880] sm:$0xff]
  %v389 = vld [vmem:[%s1 + $0x888] sm:$0xff]
  %v390 = vld [vmem:[%s1 + $0x890] sm:$0xff]
  %v391 = vld [vmem:[%s1 + $0x898] sm:$0xff]
  %v392 = vld [vmem:[%s1 + $0x8a0] sm:$0xff]
  %v393 = vld [vmem:[%s1 + $0x8a8] sm:$0xff]
  %v394 = vld [vmem:[%s1 + $0x8b0] sm:$0xff]
  %v395 = vld [vmem:[%s1 + $0x8b8] sm:$0xff]
  %v396 = vld [vmem:[%s1 + $0x8c0] sm:$0xff]
  %v397 = vld [vmem:[%s1 + $0x8c8] sm:$0xff]
  %v398 = vld [vmem:[%s1 + $0x8d0] sm:$0xff]
  %v399 = vld [vmem:[%s1 + $0x8d8] sm:$0xff]
  %v400 = vld [vmem:[%s1 + $0x8e0] sm:$0xff]
  %v401 = vld [vmem:[%s1 + $0x8e8] sm:$0xff]
  %v402 = vld [vmem:[%s1 + $0x8f0] sm:$0xff]
  %v403 = vld [vmem:[%s1 + $0x8f8] sm:$0xff]
  %v404 = vld [vmem:[%s1 + $0x900] sm:$0xff]
  %v405 = vld [vmem:[%s1 + $0x908] sm:$0xff]
  %v406 = vld [vmem:[%s1 + $0x910] sm:$0xff]
  %v407 = vld [vmem:[%s1 + $0x918] sm:$0xff]
  %v408 = vld [vmem:[%s1 + $0x920] sm:$0xff]
  %v409 = vld [vmem:[%s1 + $0x928] sm:$0xff]
  %v410 = vld [vmem:[%s1 + $0x930] sm:$0xff]
  %v411 = vld [vmem:[%s1 + $0x938] sm:$0xff]
  %v412 = vld [vmem:[%s1 + $0x940] sm:$0xff]
  %v413 = vld [vmem:[%s1 + $0x948] sm:$0xff]
  %v414 = vld [vmem:[%s1 + $0x950] sm:$0xff]
  %v415 = vld [vmem:[%s1 + $0x958] sm:$0xff]
  %v416 = vld [vmem:[%s1 + $0x960] sm:$0xff]
  %v417 = vld [vmem:[%s1 + $0x968] sm:$0xff]
  %v418 = vld [vmem:[%s1 + $0x970] sm:$0xff]
  %v419 = vld [vmem:[%s1 + $0x978] sm:$0xff]
  %v420 = vld [vmem:[%s1 + $0x980] sm:$0xff]
  %v421 = vld [vmem:[%s1 + $0x988] sm:$0xff]
  %v422 = vld [vmem:[%s1 + $0x990] sm:$0xff]
  %v423 = vld [vmem:[%s1 + $0x998] sm:$0xff]
  %v424 = vld [vmem:[%s1 + $0x9a0] sm:$0xff]
  %v425 = vld [vmem:[%s1 + $0x9a8] sm:$0xff]
  %v426 = vld [vmem:[%s1 + $0x9b0] sm:$0xff]
  %v427 = vld [vmem:[%s1 + $0x9b8] sm:$0xff]
  %v428 = vld [vmem:[%s1 + $0x9c0] sm:$0xff]
  %v429 = vld [vmem:[%s1 + $0x9c8] sm:$0xff]
  %v430 = vld [vmem:[%s1 + $0x9d0] sm:$0xff]
  %v431 = vld [vmem:[%s1 + $0x9d8] sm:$0xff]
  %v432 = vld [vmem:[%s1 + $0x9e0] sm:$0xff]
  %v433 = vld [vmem:[%s1 + $0x9e8] sm:$0xff]
  %v434 = vld [vmem:[%s1 + $0x9f0] sm:$0xff]
  %v435 = vld [vmem:[%s1 + $0x9f8] sm:$0xff]
  %v436 = vld [vmem:[%s1 + $0xa00] sm:$0xff]
  %v437 = vld [vmem:[%s1 + $0xa08] sm:$0xff]
  %v438 = vld [vmem:[%s1 + $0xa10] sm:$0xff]
  %v439 = vld [vmem:[%s1 + $0xa18] sm:$0xff]
  %v440 = vld [vmem:[%s1 + $0xa20] sm:$0xff]
  %v441 = vld [vmem:[%s1 + $0xa28] sm:$0xff]
  %v442 = vld [vmem:[%s1 + $0xa30] sm:$0xff]
  %v443 = vld [vmem:[%s1 + $0xa38] sm:$0xff]
  %v444 = vld [vmem:[%s1 + $0xa40] sm:$0xff]
  %v445 = vld [vmem:[%s1 + $0xa48] sm:$0xff]
  %v446 = vld [vmem:[%s1 + $0xa50] sm:$0xff]
  %v447 = vld [vmem:[%s1 + $0xa58] sm:$0xff]
  %v448 = vld [vmem:[%s1 + $0xa60] sm:$0xff]
  %v449 = vld [vmem:[%s1 + $0xa68] sm:$0xff]
  %v450 = vld [vmem:[%s1 + $0xa70] sm:$0xff]
  %v451 = vld [vmem:[%s1 + $0xa78] sm:$0xff]
  %v452 = vld [vmem:[%s1 + $0xa80] sm:$0xff]
  %v453 = vld [vmem:[%s1 + $0xa88] sm:$0xff]
  %v454 = vld [vmem:[%s1 + $0xa90] sm:$0xff]
  %v455 = vld [vmem:[%s1 + $0xa98] sm:$0xff]
  %v456 = vld [vmem:[%s1 + $0xaa0] sm:$0xff]
  %v457 = vld [vmem:[%s1 + $0xaa8] sm:$0xff]
  %v458 = vld [vmem:[%s1 + $0xab0] sm:$0xff]
  %v459 = vld [vmem:[%s1 + $0xab8] sm:$0xff]
  %v460 = vld [vmem:[%s1 + $0xac0] sm:$0xff]
  %v461 = vld [vmem:[%s1 + $0xac8] sm:$0xff]
  %v462 = vld [vmem:[%s1 + $0xad0] sm:$0xff]
  %v463 = vld [vmem:[%s1 + $0xad8] sm:$0xff]
  %v464 = vld [vmem:[%s1 + $0xae0] sm:$0xff]
  %v465 = vld [vmem:[%s1 + $0xae8] sm:$0xff]
  %v466 = vld [vmem:[%s1 + $0xaf0] sm:$0xff]
  %v467 = vld [vmem:[%s1 + $0xaf8] sm:$0xff]
  %v468 = vld [vmem:[%s1 + $0xb00] sm:$0xff]
  %v469 = vld [vmem:[%s1 + $0xb08] sm:$0xff]
  %v470 = vld [vmem:[%s1 + $0xb10] sm:$0xff]
  %v471 = vld [vmem:[%s1 + $0xb18] sm:$0xff]
  %v472 = vld [vmem:[%s1 + $0xb20] sm:$0xff]
  %v473 = vld [vmem:[%s1 + $0xb28] sm:$0xff]
  %v474 = vld [vmem:[%s1 + $0xb30] sm:$0xff]
  %v475 = vld [vmem:[%s1 + $0xb38] sm:$0xff]
  %v476 = vld [vmem:[%s1 + $0xb40] sm:$0xff]
  %v477 = vld [vmem:[%s1 + $0xb48] sm:$0xff]
  %v478 = vld [vmem:[%s1 + $0xb50] sm:$0xff]
  %v479 = vld [vmem:[%s1 + $0xb58] sm:$0xff]
  %v480 = vld [vmem:[%s1 + $0xb60] sm:$0xff]
  %v481 = vld [vmem:[%s1 + $0xb68] sm:$0xff]
  %v482 = vld [vmem:[%s1 + $0xb70] sm:$0xff]
  %v483 = vld [vmem:[%s1 + $0xb78] sm:$0xff]
  %v484 = vld [vmem:[%s1 + $0xb80] sm:$0xff]
  %v485 = vld [vmem:[%s1 + $0xb88] sm:$0xff]
  %v486 = vld [vmem:[%s1 + $0xb90] sm:$0xff]
  %v487 = vld [vmem:[%s1 + $0xb98] sm:$0xff]
  %v488 = vld [vmem:[%s1 + $0xba0] sm:$0xff]
  %v489 = vld [vmem:[%s1 + $0xba8] sm:$0xff]
  %v490 = vld [vmem:[%s1 + $0xbb0] sm:$0xff]
  %v491 = vld [vmem:[%s1 + $0xbb8] sm:$0xff]
  %v492 = vld [vmem:[%s1 + $0xbc0] sm:$0xff]
  %v493 = vld [vmem:[%s1 + $0xbc8] sm:$0xff]
  %v494 = vld [vmem:[%s1 + $0xbd0] sm:$0xff]
  %v495 = vld [vmem:[%s1 + $0xbd8] sm:$0xff]
  %v496 = vld [vmem:[%s1 + $0xbe0] sm:$0xff]
  %v497 = vld [vmem:[%s1 + $0xbe8] sm:$0xff]
  %v498 = vld [vmem:[%s1 + $0xbf0] sm:$0xff]
  %v499 = vld [vmem:[%s1 + $0xbf8] sm:$0xff]
  %v500 = vld [vmem:[%s1 + $0xc00] sm:$0xff]
  %v501 = vld [vmem:[%s1 + $0xc08] sm:$0xff]
  %v502 = vld [vmem:[%s1 + $0xc10] sm:$0xff]
  %v503 = vld [vmem:[%s1 + $0xc18] sm:$0xff]
  %v504 = vld [vmem:[%s1 + $0xc20] sm:$0xff]
  %v505 = vld [vmem:[%s1 + $0xc28] sm:$0xff]
  %v506 = vld [vmem:[%s1 + $0xc30] sm:$0xff]
  %v507 = vld [vmem:[%s1 + $0xc38] sm:$0xff]
  %v508 = vld [vmem:[%s1 + $0xc40] sm:$0xff]
  %v509 = vld [vmem:[%s1 + $0xc48] sm:$0xff]
  %v510 = vld [vmem:[%s1 + $0xc50] sm:$0xff]
  %v511 = vld [vmem:[%s1 + $0xc58] sm:$0xff]
  %v512 = vld [vmem:[%s1 + $0xc60] sm:$0xff]
  %v513 = vld [vmem:[%s1 + $0xc68] sm:$0xff]
  %v514 = vld [vmem:[%s1 + $0xc70] sm:$0xff]
  %v515 = vld [vmem:[%s1 + $0xc78] sm:$0xff]
  %v516 = vld [vmem:[%s1 + $0xc80] sm:$0xff]
  %v517 = vld [vmem:[%s1 + $0xc88] sm:$0xff]
  %v518 = vld [vmem:[%s1 + $0xc90] sm:$0xff]
  %v519 = vld [vmem:[%s1 + $0xc98] sm:$0xff]
  %v520 = vld [vmem:[%s1 + $0xca0] sm:$0xff]
  %v521 = vld [vmem:[%s1 + $0xca8] sm:$0xff]
  %v522 = vld [vmem:[%s1 + $0xcb0] sm:$0xff]
  %v523 = vld [vmem:[%s1 + $0xcb8] sm:$0xff]
  %v524 = vld [vmem:[%s1 + $0xcc0] sm:$0xff]
  %v525 = vld [vmem:[%s1 + $0xcc8] sm:$0xff]
  %v526 = vld [vmem:[%s1 + $0xcd0] sm:$0xff]
  %v527 = vld [vmem:[%s1 + $0xcd8] sm:$0xff]
  %v528 = vld [vmem:[%s1 + $0xce0] sm:$0xff]
  %v529 = vld [vmem:[%s1 + $0xce8] sm:$0xff]
  %v530 = vld [vmem:[%s1 + $0xcf0] sm:$0xff]
  %v531 = vld [vmem:[%s1 + $0xcf8] sm:$0xff]
  %v532 = vld [vmem:[%s1 + $0xd00] sm:$0xff]
  %v533 = vld [vmem:[%s1 + $0xd08] sm:$0xff]
  %v534 = vld [vmem:[%s1 + $0xd10] sm:$0xff]
  %v535 = vld [vmem:[%s1 + $0xd18] sm:$0xff]
  %v536 = vld [vmem:[%s1 + $0xd20] sm:$0xff]
  %v537 = vld [vmem:[%s1 + $0xd28] sm:$0xff]
  %v538 = vld [vmem:[%s1 + $0xd30] sm:$0xff]
  %v539 = vld [vmem:[%s1 + $0xd38] sm:$0xff]
  %v540 = vld [vmem:[%s1 + $0xd40] sm:$0xff]
  %v541 = vld [vmem:[%s1 + $0xd48] sm:$0xff]
  %v542 = vld [vmem:[%s1 + $0xd50] sm:$0xff]
  %v543 = vld [vmem:[%s1 + $0xd58] sm:$0xff]
  %v544 = vld [vmem:[%s1 + $0xd60] sm:$0xff]
  %v545 = vld [vmem:[%s1 + $0xd68] sm:$0xff]
  %v546 = vld [vmem:[%s1 + $0xd70] sm:$0xff]
  %v547 = vld [vmem:[%s1 + $0xd78] sm:$0xff]
  %v548 = vld [vmem:[%s1 + $0xd80] sm:$0xff]
  %v549 = vld [vmem:[%s1 + $0xd88] sm:$0xff]
  %v550 = vld [vmem:[%s1 + $0xd90] sm:$0xff]
  %v551 = vld [vmem:[%s1 + $0xd98] sm:$0xff]
  %v552 = vld [vmem:[%s1 + $0xda0] sm:$0xff]
  %v553 = vld [vmem:[%s1 + $0xda8] sm:$0xff]
  %v554 = vld [vmem:[%s1 + $0xdb0] sm:$0xff]
  %v555 = vld [vmem:[%s1 + $0xdb8] sm:$0xff]
  %v556 = vld [vmem:[%s1 + $0xdc0] sm:$0xff]
  %v557 = vld [vmem:[%s1 + $0xdc8] sm:$0xff]
  %v558 = vld [vmem:[%s1 + $0xdd0] sm:$0xff]
  %v559 = vld [vmem:[%s1 + $0xdd8] sm:$0xff]
  %v560 = vld [vmem:[%s1 + $0xde0] sm:$0xff]
  %v561 = vld [vmem:[%s1 + $0xde8] sm:$0xff]
  %v562 = vld [vmem:[%s1 + $0xdf0] sm:$0xff]
  %v563 = vld [vmem:[%s1 + $0xdf8] sm:$0xff]
  %v564 = vld [vmem:[%s1 + $0xe00] sm:$0xff]
  %v565 = vld [vmem:[%s1 + $0xe08] sm:$0xff]
  %v566 = vld [vmem:[%s1 + $0xe10] sm:$0xff]
  %v567 = vld [vmem:[%s1 + $0xe18] sm:$0xff]
  %v568 = vld [vmem:[%s1 + $0xe20] sm:$0xff]
  %v569 = vld [vmem:[%s1 + $0xe28] sm:$0xff]
  %v570 = vld [vmem:[%s1 + $0xe30] sm:$0xff]
  %v571 = vld [vmem:[%s1 + $0xe38] sm:$0xff]
  %v572 = vld [vmem:[%s1 + $0xe40] sm:$0xff]
  %v573 = vld [vmem:[%s1 + $0xe48] sm:$0xff]
  %v574 = vld [vmem:[%s1 + $0xe50] sm:$0xff]
  %v575 = vld [vmem:[%s1 + $0xe58] sm:$0xff]
  %v576 = vld [vmem:[%s1 + $0xe60] sm:$0xff]
  %v577 = vld [vmem:[%s1 + $0xe68] sm:$0xff]
  %v578 = vld [vmem:[%s1 + $0xe70] sm:$0xff]
  %v579 = vld [vmem:[%s1 + $0xe78] sm:$0xff]
  %v580 = vld [vmem:[%s1 + $0xe80] sm:$0xff]
  %v581 = vld [vmem:[%s1 + $0xe88] sm:$0xff]
  %v582 = vld [vmem:[%s1 + $0xe90] sm:$0xff]
  %v583 = vld [vmem:[%s1 + $0xe98] sm:$0xff]
  %v584 = vld [vmem:[%s1 + $0xea0] sm:$0xff]
  %v585 = vld [vmem:[%s1 + $0xea8] sm:$0xff]
  %v586 = vld [vmem:[%s1 + $0xeb0] sm:$0xff]
  %v587 = vld [vmem:[%s1 + $0xeb8] sm:$0xff]
  %v588 = vld [vmem:[%s1 + $0xec0] sm:$0xff]
  %v589 = vld [vmem:[%s1 + $0xec8] sm:$0xff]
  %v590 = vld [vmem:[%s1 + $0xed0] sm:$0xff]
  %v591 = vld [vmem:[%s1 + $0xed8] sm:$0xff]
  %v592 = vld [vmem:[%s1 + $0xee0] sm:$0xff]
  %v593 = vld [vmem:[%s1 + $0xee8] sm:$0xff]
  %v594 = vld [vmem:[%s1 + $0xef0] sm:$0xff]
  %v595 = vld [vmem:[%s1 + $0xef8] sm:$0xff]
  %v596 = vld [vmem:[%s1 + $0xf00] sm:$0xff]
  %v597 = vld [vmem:[%s1 + $0xf08] sm:$0xff]
  %v598 = vld [vmem:[%s1 + $0xf10] sm:$0xff]
  %v599 = vld [vmem:[%s1 + $0xf18] sm:$0xff]
  %v600 = vld [vmem:[%s1 + $0xf20] sm:$0xff]
  %v601 = vld [vmem:[%s1 + $0xf28] sm:$0xff]
  %v602 = vld [vmem:[%s1 + $0xf30] sm:$0xff]
  %v603 = vld [vmem:[%s1 + $0xf38] sm:$0xff]
  %v604 = vld [vmem:[%s1 + $0xf40] sm:$0xff]
  %v605 = vld [vmem:[%s1 + $0xf48] sm:$0xff]
  %v606 = vld [vmem:[%s1 + $0xf50] sm:$0xff]
  %v607 = vld [vmem:[%s1 + $0xf58] sm:$0xff]
  %v608 = vld [vmem:[%s1 + $0xf60] sm:$0xff]
  %v609 = vld [vmem:[%s1 + $0xf68] sm:$0xff]
  %v610 = vld [vmem:[%s1 + $0xf70] sm:$0xff]
  %v611 = vld [vmem:[%s1 + $0xf78] sm:$0xff]
  %v612 = vld [vmem:[%s1 + $0xf80] sm:$0xff]
  %v613 = vld [vmem:[%s1 + $0xf88] sm:$0xff]
  %v614 = vld [vmem:[%s1 + $0xf90] sm:$0xff]
  %v615 = vld [vmem:[%s1 + $0xf98] sm:$0xff]
  %v616 = vld [vmem:[%s1 + $0xfa0] sm:$0xff]
  %v617 = vld [vmem:[%s1 + $0xfa8] sm:$0xff]
  %v618 = vld [vmem:[%s1 + $0xfb0] sm:$0xff]
  %v619 = vld [vmem:[%s1 + $0xfb8] sm:$0xff]
  %v620 = vld [vmem:[%s1 + $0xfc0] sm:$0xff]
  %v621 = vld [vmem:[%s1 + $0xfc8] sm:$0xff]
  %v622 = vld [vmem:[%s1 + $0xfd0] sm:$0xff]
  %v623 = vld [vmem:[%s1 + $0xfd8] sm:$0xff]
  %v624 = vld [vmem:[%s1 + $0xfe0] sm:$0xff]
  %v625 = vld [vmem:[%s1 + $0xfe8] sm:$0xff]
  %v626 = vld [vmem:[%s1 + $0xff0] sm:$0xff]
  %v627 = vld [vmem:[%s1 + $0xff8] sm:$0xff]
  %v628 = vld [vmem:[%s1 + $0x1000] sm:$0xff]
  %v629 = vld [vmem:[%s1 + $0x1008] sm:$0xff]
  %v630 = vld [vmem:[%s1 + $0x1010] sm:$0xff]
  %v631 = vld [vmem:[%s1 + $0x1018] sm:$0xff]
  %v632 = vld [vmem:[%s1 + $0x1020] sm:$0xff]
  %v633 = vld [vmem:[%s1 + $0x1028] sm:$0xff]
  %v634 = vld [vmem:[%s1 + $0x1030] sm:$0xff]
  %v635 = vld [vmem:[%s1 + $0x1038] sm:$0xff]
  %v636 = vld [vmem:[%s1 + $0x1040] sm:$0xff]
  %v637 = vld [vmem:[%s1 + $0x1048] sm:$0xff]
  %v638 = vld [vmem:[%s1 + $0x1050] sm:$0xff]
  %v639 = vld [vmem:[%s1 + $0x1058] sm:$0xff]
  %v640 = vld [vmem:[%s1 + $0x1060] sm:$0xff]
  %v641 = vld [vmem:[%s1 + $0x1068] sm:$0xff]
  %v642 = vld [vmem:[%s1 + $0x1070] sm:$0xff]
  %v643 = vld [vmem:[%s1 + $0x1078] sm:$0xff]
  %v644 = vld [vmem:[%s1 + $0x1080] sm:$0xff]
  %v645 = vld [vmem:[%s1 + $0x1088] sm:$0xff]
  %v646 = vld [vmem:[%s1 + $0x1090] sm:$0xff]
  %v647 = vld [vmem:[%s1 + $0x1098] sm:$0xff]
  %v648 = vld [vmem:[%s1 + $0x10a0] sm:$0xff]
  %v649 = vld [vmem:[%s1 + $0x10a8] sm:$0xff]
  %v650 = vld [vmem:[%s1 + $0x10b0] sm:$0xff]
  %v651 = vld [vmem:[%s1 + $0x10b8] sm:$0xff]
  %v652 = vld [vmem:[%s1 + $0x10c0] sm:$0xff]
  %v653 = vld [vmem:[%s1 + $0x10c8] sm:$0xff]
  %v654 = vld [vmem:[%s1 + $0x10d0] sm:$0xff]
  %v655 = vld [vmem:[%s1 + $0x10d8] sm:$0xff]
  %v656 = vld [vmem:[%s1 + $0x10e0] sm:$0xff]
  %v657 = vld [vmem:[%s1 + $0x10e8] sm:$0xff]
  %v658 = vld [vmem:[%s1 + $0x10f0] sm:$0xff]
  %v659 = vld [vmem:[%s1 + $0x10f8] sm:$0xff]
  %v660 = vld [vmem:[%s1 + $0x1100] sm:$0xff]
  %v661 = vld [vmem:[%s1 + $0x1108] sm:$0xff]
  %v662 = vld [vmem:[%s1 + $0x1110] sm:$0xff]
  %v663 = vld [vmem:[%s1 + $0x1118] sm:$0xff]
  %v664 = vld [vmem:[%s1 + $0x1120] sm:$0xff]
  %v665 = vld [vmem:[%s1 + $0x1128] sm:$0xff]
  %v666 = vld [vmem:[%s1 + $0x1130] sm:$0xff]
  %v667 = vld [vmem:[%s1 + $0x1138] sm:$0xff]
  %v668 = vld [vmem:[%s1 + $0x1140] sm:$0xff]
  %v669 = vld [vmem:[%s1 + $0x1148] sm:$0xff]
  %v670 = vld [vmem:[%s1 + $0x1150] sm:$0xff]
  %v671 = vld [vmem:[%s1 + $0x1158] sm:$0xff]
  %v672 = vld [vmem:[%s1 + $0x1160] sm:$0xff]
  %v673 = vld [vmem:[%s1 + $0x1168] sm:$0xff]
  %v674 = vld [vmem:[%s1 + $0x1170] sm:$0xff]
  %v675 = vld [vmem:[%s1 + $0x1178] sm:$0xff]
  %v676 = vld [vmem:[%s1 + $0x1180] sm:$0xff]
  %v677 = vld [vmem:[%s1 + $0x1188] sm:$0xff]
  %v678 = vld [vmem:[%s1 + $0x1190] sm:$0xff]
  %v679 = vld [vmem:[%s1 + $0x1198] sm:$0xff]
  %v680 = vld [vmem:[%s1 + $0x11a0] sm:$0xff]
  %v681 = vld [vmem:[%s1 + $0x11a8] sm:$0xff]
  %v682 = vld [vmem:[%s1 + $0x11b0] sm:$0xff]
  %v683 = vld [vmem:[%s1 + $0x11b8] sm:$0xff]
  %v684 = vld [vmem:[%s1 + $0x11c0] sm:$0xff]
  %v685 = vld [vmem:[%s1 + $0x11c8] sm:$0xff]
  %v686 = vld [vmem:[%s1 + $0x11d0] sm:$0xff]
  %v687 = vld [vmem:[%s1 + $0x11d8] sm:$0xff]
  %v688 = vld [vmem:[%s1 + $0x11e0] sm:$0xff]
  %v689 = vld [vmem:[%s1 + $0x11e8] sm:$0xff]
  %v690 = vld [vmem:[%s1 + $0x11f0] sm:$0xff]
  %v691 = vld [vmem:[%s1 + $0x11f8] sm:$0xff]
  %v791 = vunpack.c.l.b16 %v17
  %v792 = vunpack.c.h.b16 %v17
  %v793 = vunpack.c.l.b16 %v18
  %v794 = vunpack.c.h.b16 %v18
  %v795 = vunpack.c.l.b16 %v19
  %v796 = vunpack.c.h.b16 %v19
  %v797 = vunpack.c.l.b16 %v20
  %v798 = vunpack.c.h.b16 %v20
  %v799 = vunpack.c.l.b16 %v21
  %v800 = vunpack.c.h.b16 %v21
  %v801 = vunpack.c.l.b16 %v22
  %v802 = vunpack.c.h.b16 %v22
  %v803 = vunpack.c.l.b16 %v23
  %v804 = vunpack.c.h.b16 %v23
  %v805 = vunpack.c.l.b16 %v24
  %v806 = vunpack.c.h.b16 %v24
  %v807 = vunpack.c.l.b16 %v25
  %v808 = vunpack.c.h.b16 %v25
  %v809 = vunpack.c.l.b16 %v26
  %v810 = vunpack.c.h.b16 %v26
  %v811 = vunpack.c.l.b16 %v27
  %v812 = vunpack.c.h.b16 %v27
  %v813 = vunpack.c.l.b16 %v28
  %v814 = vunpack.c.h.b16 %v28
  %v815 = vunpack.c.l.b16 %v29
  %v816 = vunpack.c.h.b16 %v29
  %v817 = vunpack.c.l.b16 %v30
  %v818 = vunpack.c.h.b16 %v30
  %v819 = vunpack.c.l.b16 %v31
  %v820 = vunpack.c.h.b16 %v31
  %v821 = vunpack.c.l.b16 %v32
  %v822 = vunpack.c.h.b16 %v32
  %v823 = vunpack.c.l.b16 %v33
  %v824 = vunpack.c.h.b16 %v33
  %v825 = vunpack.c.l.b16 %v34
  %v826 = vunpack.c.h.b16 %v34
  %v827 = vunpack.c.l.b16 %v35
  %v828 = vunpack.c.h.b16 %v35
  %v829 = vunpack.c.l.b16 %v36
  %v830 = vunpack.c.h.b16 %v36
  %v831 = vunpack.c.l.b16 %v37
  %v832 = vunpack.c.h.b16 %v37
  %v833 = vunpack.c.l.b16 %v38
  %v834 = vunpack.c.h.b16 %v38
  %v835 = vunpack.c.l.b16 %v39
  %v836 = vunpack.c.h.b16 %v39
  %v837 = vunpack.c.l.b16 %v40
  %v838 = vunpack.c.h.b16 %v40
  %v839 = vunpack.c.l.b16 %v41
  %v840 = vunpack.c.h.b16 %v41
  %v841 = vunpack.c.l.b16 %v42
  %v842 = vunpack.c.h.b16 %v42
  %v843 = vunpack.c.l.b16 %v43
  %v844 = vunpack.c.h.b16 %v43
  %v845 = vunpack.c.l.b16 %v44
  %v846 = vunpack.c.h.b16 %v44
  %v847 = vunpack.c.l.b16 %v45
  %v848 = vunpack.c.h.b16 %v45
  %v849 = vunpack.c.l.b16 %v46
  %v850 = vunpack.c.h.b16 %v46
  %v851 = vunpack.c.l.b16 %v47
  %v852 = vunpack.c.h.b16 %v47
  %v853 = vunpack.c.l.b16 %v48
  %v854 = vunpack.c.h.b16 %v48
  %v855 = vunpack.c.l.b16 %v49
  %v856 = vunpack.c.h.b16 %v49
  %v857 = vunpack.c.l.b16 %v50
  %v858 = vunpack.c.h.b16 %v50
  %v859 = vunpack.c.l.b16 %v51
  %v860 = vunpack.c.h.b16 %v51
  %v861 = vunpack.c.l.b16 %v52
  %v862 = vunpack.c.h.b16 %v52
  %v863 = vunpack.c.l.b16 %v53
  %v864 = vunpack.c.h.b16 %v53
  %v865 = vunpack.c.l.b16 %v54
  %v866 = vunpack.c.h.b16 %v54
  %v867 = vunpack.c.l.b16 %v55
  %v868 = vunpack.c.h.b16 %v55
  %v869 = vunpack.c.l.b16 %v56
  %v870 = vunpack.c.h.b16 %v56
  %v871 = vunpack.c.l.b16 %v57
  %v872 = vunpack.c.h.b16 %v57
  %v873 = vunpack.c.l.b16 %v58
  %v874 = vunpack.c.h.b16 %v58
  %v875 = vunpack.c.l.b16 %v59
  %v876 = vunpack.c.h.b16 %v59
  %v877 = vunpack.c.l.b16 %v60
  %v878 = vunpack.c.h.b16 %v60
  %v879 = vunpack.c.l.b16 %v61
  %v880 = vunpack.c.h.b16 %v61
  %v881 = vunpack.c.l.b16 %v62
  %v882 = vunpack.c.h.b16 %v62
  %v883 = vunpack.c.l.b16 %v63
  %v884 = vunpack.c.h.b16 %v63
  %v885 = vunpack.c.l.b16 %v64
  %v886 = vunpack.c.h.b16 %v64
  %v887 = vunpack.c.l.b16 %v65
  %v888 = vunpack.c.h.b16 %v65
  %v889 = vunpack.c.l.b16 %v66
  %v890 = vunpack.c.h.b16 %v66
  %v891 = vunpack.c.l.b16 %v67
  %v892 = vunpack.c.h.b16 %v67
  %v893 = vunpack.c.l.b16 %v68
  %v894 = vunpack.c.h.b16 %v68
  %v895 = vunpack.c.l.b16 %v69
  %v896 = vunpack.c.h.b16 %v69
  %v897 = vunpack.c.l.b16 %v70
  %v898 = vunpack.c.h.b16 %v70
  %v899 = vunpack.c.l.b16 %v71
  %v900 = vunpack.c.h.b16 %v71
  %v901 = vunpack.c.l.b16 %v72
  %v902 = vunpack.c.h.b16 %v72
  %v903 = vunpack.c.l.b16 %v73
  %v904 = vunpack.c.h.b16 %v73
  %v905 = vunpack.c.l.b16 %v74
  %v906 = vunpack.c.h.b16 %v74
  %v907 = vunpack.c.l.b16 %v75
  %v908 = vunpack.c.h.b16 %v75
  %v909 = vunpack.c.l.b16 %v76
  %v910 = vunpack.c.h.b16 %v76
  %v911 = vunpack.c.l.b16 %v77
  %v912 = vunpack.c.h.b16 %v77
  %v913 = vunpack.c.l.b16 %v78
  %v914 = vunpack.c.h.b16 %v78
  %v915 = vunpack.c.l.b16 %v79
  %v916 = vunpack.c.h.b16 %v79
  %v917 = vunpack.c.l.b16 %v80
  %v918 = vunpack.c.h.b16 %v80
  %v919 = vunpack.c.l.b16 %v81
  %v920 = vunpack.c.h.b16 %v81
  %v921 = vunpack.c.l.b16 %v82
  %v922 = vunpack.c.h.b16 %v82
  %v923 = vunpack.c.l.b16 %v83
  %v924 = vunpack.c.h.b16 %v83
  %v925 = vunpack.c.l.b16 %v84
  %v926 = vunpack.c.h.b16 %v84
  %v927 = vunpack.c.l.b16 %v85
  %v928 = vunpack.c.h.b16 %v85
  %v929 = vunpack.c.l.b16 %v86
  %v930 = vunpack.c.h.b16 %v86
  %v931 = vunpack.c.l.b16 %v87
  %v932 = vunpack.c.h.b16 %v87
  %v933 = vunpack.c.l.b16 %v88
  %v934 = vunpack.c.h.b16 %v88
  %v935 = vunpack.c.l.b16 %v89
  %v936 = vunpack.c.h.b16 %v89
  %v937 = vunpack.c.l.b16 %v90
  %v938 = vunpack.c.h.b16 %v90
  %v939 = vunpack.c.l.b16 %v91
  %v940 = vunpack.c.h.b16 %v91
  %v941 = vunpack.c.l.b16 %v92
  %v942 = vunpack.c.h.b16 %v92
  %v943 = vunpack.c.l.b16 %v93
  %v944 = vunpack.c.h.b16 %v93
  %v945 = vunpack.c.l.b16 %v94
  %v946 = vunpack.c.h.b16 %v94
  %v947 = vunpack.c.l.b16 %v95
  %v948 = vunpack.c.h.b16 %v95
  %v949 = vunpack.c.l.b16 %v96
  %v950 = vunpack.c.h.b16 %v96
  %v951 = vunpack.c.l.b16 %v97
  %v952 = vunpack.c.h.b16 %v97
  %v953 = vunpack.c.l.b16 %v98
  %v954 = vunpack.c.h.b16 %v98
  %v955 = vunpack.c.l.b16 %v99
  %v956 = vunpack.c.h.b16 %v99
  %v957 = vunpack.c.l.b16 %v100
  %v958 = vunpack.c.h.b16 %v100
  %v959 = vunpack.c.l.b16 %v101
  %v960 = vunpack.c.h.b16 %v101
  %v961 = vunpack.c.l.b16 %v102
  %v962 = vunpack.c.h.b16 %v102
  %v963 = vunpack.c.l.b16 %v103
  %v964 = vunpack.c.h.b16 %v103
  %v965 = vunpack.c.l.b16 %v104
  %v966 = vunpack.c.h.b16 %v104
  %v967 = vunpack.c.l.b16 %v105
  %v968 = vunpack.c.h.b16 %v105
  %v969 = vunpack.c.l.b16 %v106
  %v970 = vunpack.c.h.b16 %v106
  %v971 = vunpack.c.l.b16 %v107
  %v972 = vunpack.c.h.b16 %v107
  %v973 = vunpack.c.l.b16 %v108
  %v974 = vunpack.c.h.b16 %v108
  %v975 = vunpack.c.l.b16 %v109
  %v976 = vunpack.c.h.b16 %v109
  %v977 = vunpack.c.l.b16 %v110
  %v978 = vunpack.c.h.b16 %v110
  %v979 = vunpack.c.l.b16 %v111
  %v980 = vunpack.c.h.b16 %v111
  %v981 = vunpack.c.l.b16 %v112
  %v982 = vunpack.c.h.b16 %v112
  %v983 = vunpack.c.l.b16 %v113
  %v984 = vunpack.c.h.b16 %v113
  %v985 = vunpack.c.l.b16 %v114
  %v986 = vunpack.c.h.b16 %v114
  %v987 = vunpack.c.l.b16 %v115
  %v988 = vunpack.c.h.b16 %v115
  %v989 = vpack.c.b16 %v809, %v791
  %v990 = vpack.c.b16 %v810, %v792
  %v991 = vpack.c.b16 %v811, %v793
  %v992 = vpack.c.b16 %v812, %v794
  %v993 = vpack.c.b16 %v813, %v795
  %v994 = vpack.c.b16 %v814, %v796
  %v995 = vpack.c.b16 %v815, %v797
  %v996 = vpack.c.b16 %v816, %v798
  %v997 = vpack.c.b16 %v817, %v799
  %v998 = vpack.c.b16 %v818, %v800
  %v999 = vpack.c.b16 %v819, %v801
  %v1000 = vpack.c.b16 %v820, %v802
  %v1001 = vpack.c.b16 %v821, %v803
  %v1002 = vpack.c.b16 %v822, %v804
  %v1003 = vpack.c.b16 %v823, %v805
  %v1004 = vpack.c.b16 %v824, %v806
  %v1005 = vpack.c.b16 %v825, %v807
  %v1006 = vpack.c.b16 %v826, %v808
  %v1007 = vpack.c.b16 %v845, %v827
  %v1008 = vpack.c.b16 %v846, %v828
  %v1009 = vpack.c.b16 %v847, %v829
  %v1010 = vpack.c.b16 %v848, %v830
  %v1011 = vpack.c.b16 %v849, %v831
  %v1012 = vpack.c.b16 %v850, %v832
  %v1013 = vpack.c.b16 %v851, %v833
  %v1014 = vpack.c.b16 %v852, %v834
  %v1015 = vpack.c.b16 %v853, %v835
  %v1016 = vpack.c.b16 %v854, %v836
  %v1017 = vpack.c.b16 %v855, %v837
  %v1018 = vpack.c.b16 %v856, %v838
  %v1019 = vpack.c.b16 %v857, %v839
  %v1020 = vpack.c.b16 %v858, %v840
  %v1021 = vpack.c.b16 %v859, %v841
  %v1022 = vpack.c.b16 %v860, %v842
  %v1023 = vpack.c.b16 %v861, %v843
  %v1024 = vpack.c.b16 %v862, %v844
  %v1025 = vpack.c.b16 %v881, %v863
  %v1026 = vpack.c.b16 %v882, %v864
  %v1027 = vpack.c.b16 %v883, %v865
  %v1028 = vpack.c.b16 %v884, %v866
  %v1029 = vpack.c.b16 %v885, %v867
  %v1030 = vpack.c.b16 %v886, %v868
  %v1031 = vpack.c.b16 %v887, %v869
  %v1032 = vpack.c.b16 %v888, %v870
  %v1033 = vpack.c.b16 %v889, %v871
  %v1034 = vpack.c.b16 %v890, %v872
  %v1035 = vpack.c.b16 %v891, %v873
  %v1036 = vpack.c.b16 %v892, %v874
  %v1037 = vpack.c.b16 %v893, %v875
  %v1038 = vpack.c.b16 %v894, %v876
  %v1039 = vpack.c.b16 %v895, %v877
  %v1040 = vpack.c.b16 %v896, %v878
  %v1041 = vpack.c.b16 %v897, %v879
  %v1042 = vpack.c.b16 %v898, %v880
  %v1043 = vpack.c.b16 %v917, %v899
  %v1044 = vpack.c.b16 %v918, %v900
  %v1045 = vpack.c.b16 %v919, %v901
  %v1046 = vpack.c.b16 %v920, %v902
  %v1047 = vpack.c.b16 %v921, %v903
  %v1048 = vpack.c.b16 %v922, %v904
  %v1049 = vpack.c.b16 %v923, %v905
  %v1050 = vpack.c.b16 %v924, %v906
  %v1051 = vpack.c.b16 %v925, %v907
  %v1052 = vpack.c.b16 %v926, %v908
  %v1053 = vpack.c.b16 %v927, %v909
  %v1054 = vpack.c.b16 %v928, %v910
  %v1055 = vpack.c.b16 %v929, %v911
  %v1056 = vpack.c.b16 %v930, %v912
  %v1057 = vpack.c.b16 %v931, %v913
  %v1058 = vpack.c.b16 %v932, %v914
  %v1059 = vpack.c.b16 %v933, %v915
  %v1060 = vpack.c.b16 %v934, %v916
  %v1061 = vpack.c.b16 %v953, %v935
  %v1062 = vpack.c.b16 %v954, %v936
  %v1063 = vpack.c.b16 %v955, %v937
  %v1064 = vpack.c.b16 %v956, %v938
  %v1065 = vpack.c.b16 %v957, %v939
  %v1066 = vpack.c.b16 %v958, %v940
  %v1067 = vpack.c.b16 %v959, %v941
  %v1068 = vpack.c.b16 %v960, %v942
  %v1069 = vpack.c.b16 %v961, %v943
  %v1070 = vpack.c.b16 %v962, %v944
  %v1071 = vpack.c.b16 %v963, %v945
  %v1072 = vpack.c.b16 %v964, %v946
  %v1073 = vpack.c.b16 %v965, %v947
  %v1074 = vpack.c.b16 %v966, %v948
  %v1075 = vpack.c.b16 %v967, %v949
  %v1076 = vpack.c.b16 %v968, %v950
  %v1077 = vpack.c.b16 %v969, %v951
  %v1078 = vpack.c.b16 %v970, %v952
  %v1079 = vpack.c.b16 %v971, %v971
  %v1080 = vpack.c.b16 %v972, %v972
  %v1081 = vpack.c.b16 %v973, %v973
  %v1082 = vpack.c.b16 %v974, %v974
  %v1083 = vpack.c.b16 %v975, %v975
  %v1084 = vpack.c.b16 %v976, %v976
  %v1085 = vpack.c.b16 %v977, %v977
  %v1086 = vpack.c.b16 %v978, %v978
  %v1087 = vpack.c.b16 %v979, %v979
  %v1088 = vpack.c.b16 %v980, %v980
  %v1089 = vpack.c.b16 %v981, %v981
  %v1090 = vpack.c.b16 %v982, %v982
  %v1091 = vpack.c.b16 %v983, %v983
  %v1092 = vpack.c.b16 %v984, %v984
  %v1093 = vpack.c.b16 %v985, %v985
  %v1094 = vpack.c.b16 %v986, %v986
  %v1095 = vpack.c.b16 %v987, %v987
  %v1096 = vpack.c.b16 %v988, %v988
  %v1781 = vunpack.c.l.b16 %v116
  %v1782 = vunpack.c.h.b16 %v116
  %v1783 = vunpack.c.l.b16 %v117
  %v1784 = vunpack.c.h.b16 %v117
  %v1785 = vunpack.c.l.b16 %v118
  %v1786 = vunpack.c.h.b16 %v118
  %v1787 = vunpack.c.l.b16 %v119
  %v1788 = vunpack.c.h.b16 %v119
  %v1789 = vunpack.c.l.b16 %v120
  %v1790 = vunpack.c.h.b16 %v120
  %v1791 = vunpack.c.l.b16 %v121
  %v1792 = vunpack.c.h.b16 %v121
  %v1793 = vunpack.c.l.b16 %v122
  %v1794 = vunpack.c.h.b16 %v122
  %v1795 = vunpack.c.l.b16 %v123
  %v1796 = vunpack.c.h.b16 %v123
  %v1797 = vunpack.c.l.b16 %v124
  %v1798 = vunpack.c.h.b16 %v124
  %v1799 = vunpack.c.l.b16 %v125
  %v1800 = vunpack.c.h.b16 %v125
  %v1801 = vunpack.c.l.b16 %v126
  %v1802 = vunpack.c.h.b16 %v126
  %v1803 = vunpack.c.l.b16 %v127
  %v1804 = vunpack.c.h.b16 %v127
  %v1805 = vunpack.c.l.b16 %v128
  %v1806 = vunpack.c.h.b16 %v128
  %v1807 = vunpack.c.l.b16 %v129
  %v1808 = vunpack.c.h.b16 %v129
  %v1809 = vunpack.c.l.b16 %v130
  %v1810 = vunpack.c.h.b16 %v130
  %v1811 = vunpack.c.l.b16 %v131
  %v1812 = vunpack.c.h.b16 %v131
  %v1813 = vunpack.c.l.b16 %v132
  %v1814 = vunpack.c.h.b16 %v132
  %v1815 = vunpack.c.l.b16 %v133
  %v1816 = vunpack.c.h.b16 %v133
  %v1817 = vunpack.c.l.b16 %v134
  %v1818 = vunpack.c.h.b16 %v134
  %v1819 = vunpack.c.l.b16 %v135
  %v1820 = vunpack.c.h.b16 %v135
  %v1821 = vunpack.c.l.b16 %v136
  %v1822 = vunpack.c.h.b16 %v136
  %v1823 = vunpack.c.l.b16 %v137
  %v1824 = vunpack.c.h.b16 %v137
  %v1825 = vunpack.c.l.b16 %v138
  %v1826 = vunpack.c.h.b16 %v138
  %v1827 = vunpack.c.l.b16 %v139
  %v1828 = vunpack.c.h.b16 %v139
  %v1829 = vunpack.c.l.b16 %v140
  %v1830 = vunpack.c.h.b16 %v140
  %v1831 = vunpack.c.l.b16 %v141
  %v1832 = vunpack.c.h.b16 %v141
  %v1833 = vunpack.c.l.b16 %v142
  %v1834 = vunpack.c.h.b16 %v142
  %v1835 = vunpack.c.l.b16 %v143
  %v1836 = vunpack.c.h.b16 %v143
  %v1837 = vunpack.c.l.b16 %v144
  %v1838 = vunpack.c.h.b16 %v144
  %v1839 = vunpack.c.l.b16 %v145
  %v1840 = vunpack.c.h.b16 %v145
  %v1841 = vunpack.c.l.b16 %v146
  %v1842 = vunpack.c.h.b16 %v146
  %v1843 = vunpack.c.l.b16 %v147
  %v1844 = vunpack.c.h.b16 %v147
  %v1845 = vunpack.c.l.b16 %v148
  %v1846 = vunpack.c.h.b16 %v148
  %v1847 = vunpack.c.l.b16 %v149
  %v1848 = vunpack.c.h.b16 %v149
  %v1849 = vunpack.c.l.b16 %v150
  %v1850 = vunpack.c.h.b16 %v150
  %v1851 = vunpack.c.l.b16 %v151
  %v1852 = vunpack.c.h.b16 %v151
  %v1853 = vunpack.c.l.b16 %v152
  %v1854 = vunpack.c.h.b16 %v152
  %v1855 = vunpack.c.l.b16 %v153
  %v1856 = vunpack.c.h.b16 %v153
  %v1857 = vunpack.c.l.b16 %v154
  %v1858 = vunpack.c.h.b16 %v154
  %v1859 = vunpack.c.l.b16 %v155
  %v1860 = vunpack.c.h.b16 %v155
  %v1861 = vunpack.c.l.b16 %v156
  %v1862 = vunpack.c.h.b16 %v156
  %v1863 = vunpack.c.l.b16 %v157
  %v1864 = vunpack.c.h.b16 %v157
  %v1865 = vunpack.c.l.b16 %v158
  %v1866 = vunpack.c.h.b16 %v158
  %v1867 = vunpack.c.l.b16 %v159
  %v1868 = vunpack.c.h.b16 %v159
  %v1869 = vunpack.c.l.b16 %v160
  %v1870 = vunpack.c.h.b16 %v160
  %v1871 = vunpack.c.l.b16 %v161
  %v1872 = vunpack.c.h.b16 %v161
  %v1873 = vunpack.c.l.b16 %v162
  %v1874 = vunpack.c.h.b16 %v162
  %v1875 = vunpack.c.l.b16 %v163
  %v1876 = vunpack.c.h.b16 %v163
  %v1877 = vunpack.c.l.b16 %v164
  %v1878 = vunpack.c.h.b16 %v164
  %v1879 = vunpack.c.l.b16 %v165
  %v1880 = vunpack.c.h.b16 %v165
  %v1881 = vunpack.c.l.b16 %v166
  %v1882 = vunpack.c.h.b16 %v166
  %v1883 = vunpack.c.l.b16 %v167
  %v1884 = vunpack.c.h.b16 %v167
  %v1885 = vunpack.c.l.b16 %v168
  %v1886 = vunpack.c.h.b16 %v168
  %v1887 = vunpack.c.l.b16 %v169
  %v1888 = vunpack.c.h.b16 %v169
  %v1889 = vunpack.c.l.b16 %v170
  %v1890 = vunpack.c.h.b16 %v170
  %v1891 = vunpack.c.l.b16 %v171
  %v1892 = vunpack.c.h.b16 %v171
  %v1893 = vunpack.c.l.b16 %v172
  %v1894 = vunpack.c.h.b16 %v172
  %v1895 = vunpack.c.l.b16 %v173
  %v1896 = vunpack.c.h.b16 %v173
  %v1897 = vunpack.c.l.b16 %v174
  %v1898 = vunpack.c.h.b16 %v174
  %v1899 = vunpack.c.l.b16 %v175
  %v1900 = vunpack.c.h.b16 %v175
  %v1901 = vunpack.c.l.b16 %v176
  %v1902 = vunpack.c.h.b16 %v176
  %v1903 = vunpack.c.l.b16 %v177
  %v1904 = vunpack.c.h.b16 %v177
  %v1905 = vunpack.c.l.b16 %v178
  %v1906 = vunpack.c.h.b16 %v178
  %v1907 = vunpack.c.l.b16 %v179
  %v1908 = vunpack.c.h.b16 %v179
  %v1909 = vunpack.c.l.b16 %v180
  %v1910 = vunpack.c.h.b16 %v180
  %v1911 = vunpack.c.l.b16 %v181
  %v1912 = vunpack.c.h.b16 %v181
  %v1913 = vunpack.c.l.b16 %v182
  %v1914 = vunpack.c.h.b16 %v182
  %v1915 = vunpack.c.l.b16 %v183
  %v1916 = vunpack.c.h.b16 %v183
  %v1917 = vunpack.c.l.b16 %v184
  %v1918 = vunpack.c.h.b16 %v184
  %v1919 = vunpack.c.l.b16 %v185
  %v1920 = vunpack.c.h.b16 %v185
  %v1921 = vunpack.c.l.b16 %v186
  %v1922 = vunpack.c.h.b16 %v186
  %v1923 = vunpack.c.l.b16 %v187
  %v1924 = vunpack.c.h.b16 %v187
  %v1925 = vunpack.c.l.b16 %v188
  %v1926 = vunpack.c.h.b16 %v188
  %v1927 = vunpack.c.l.b16 %v189
  %v1928 = vunpack.c.h.b16 %v189
  %v1929 = vunpack.c.l.b16 %v190
  %v1930 = vunpack.c.h.b16 %v190
  %v1931 = vunpack.c.l.b16 %v191
  %v1932 = vunpack.c.h.b16 %v191
  %v1933 = vunpack.c.l.b16 %v192
  %v1934 = vunpack.c.h.b16 %v192
  %v1935 = vunpack.c.l.b16 %v193
  %v1936 = vunpack.c.h.b16 %v193
  %v1937 = vunpack.c.l.b16 %v194
  %v1938 = vunpack.c.h.b16 %v194
  %v1939 = vunpack.c.l.b16 %v195
  %v1940 = vunpack.c.h.b16 %v195
  %v1941 = vunpack.c.l.b16 %v196
  %v1942 = vunpack.c.h.b16 %v196
  %v1943 = vunpack.c.l.b16 %v197
  %v1944 = vunpack.c.h.b16 %v197
  %v1945 = vunpack.c.l.b16 %v198
  %v1946 = vunpack.c.h.b16 %v198
  %v1947 = vunpack.c.l.b16 %v199
  %v1948 = vunpack.c.h.b16 %v199
  %v1949 = vunpack.c.l.b16 %v200
  %v1950 = vunpack.c.h.b16 %v200
  %v1951 = vunpack.c.l.b16 %v201
  %v1952 = vunpack.c.h.b16 %v201
  %v1953 = vunpack.c.l.b16 %v202
  %v1954 = vunpack.c.h.b16 %v202
  %v1955 = vunpack.c.l.b16 %v203
  %v1956 = vunpack.c.h.b16 %v203
  %v1957 = vunpack.c.l.b16 %v204
  %v1958 = vunpack.c.h.b16 %v204
  %v1959 = vunpack.c.l.b16 %v205
  %v1960 = vunpack.c.h.b16 %v205
  %v1961 = vunpack.c.l.b16 %v206
  %v1962 = vunpack.c.h.b16 %v206
  %v1963 = vunpack.c.l.b16 %v207
  %v1964 = vunpack.c.h.b16 %v207
  %v1965 = vunpack.c.l.b16 %v208
  %v1966 = vunpack.c.h.b16 %v208
  %v1967 = vunpack.c.l.b16 %v209
  %v1968 = vunpack.c.h.b16 %v209
  %v1969 = vunpack.c.l.b16 %v210
  %v1970 = vunpack.c.h.b16 %v210
  %v1971 = vunpack.c.l.b16 %v211
  %v1972 = vunpack.c.h.b16 %v211
  %v1973 = vunpack.c.l.b16 %v212
  %v1974 = vunpack.c.h.b16 %v212
  %v1975 = vunpack.c.l.b16 %v213
  %v1976 = vunpack.c.h.b16 %v213
  %v1977 = vunpack.c.l.b16 %v214
  %v1978 = vunpack.c.h.b16 %v214
  %v1979 = vunpack.c.l.b16 %v215
  %v1980 = vunpack.c.h.b16 %v215
  %v1981 = vunpack.c.l.b16 %v216
  %v1982 = vunpack.c.h.b16 %v216
  %v1983 = vunpack.c.l.b16 %v217
  %v1984 = vunpack.c.h.b16 %v217
  %v1985 = vunpack.c.l.b16 %v218
  %v1986 = vunpack.c.h.b16 %v218
  %v1987 = vunpack.c.l.b16 %v219
  %v1988 = vunpack.c.h.b16 %v219
  %v1989 = vunpack.c.l.b16 %v220
  %v1990 = vunpack.c.h.b16 %v220
  %v1991 = vunpack.c.l.b16 %v221
  %v1992 = vunpack.c.h.b16 %v221
  %v1993 = vunpack.c.l.b16 %v222
  %v1994 = vunpack.c.h.b16 %v222
  %v1995 = vunpack.c.l.b16 %v223
  %v1996 = vunpack.c.h.b16 %v223
  %v1997 = vunpack.c.l.b16 %v224
  %v1998 = vunpack.c.h.b16 %v224
  %v1999 = vunpack.c.l.b16 %v225
  %v2000 = vunpack.c.h.b16 %v225
  %v2001 = vunpack.c.l.b16 %v226
  %v2002 = vunpack.c.h.b16 %v226
  %v2003 = vunpack.c.l.b16 %v227
  %v2004 = vunpack.c.h.b16 %v227
  %v2005 = vunpack.c.l.b16 %v228
  %v2006 = vunpack.c.h.b16 %v228
  %v2007 = vunpack.c.l.b16 %v229
  %v2008 = vunpack.c.h.b16 %v229
  %v2009 = vunpack.c.l.b16 %v230
  %v2010 = vunpack.c.h.b16 %v230
  %v2011 = vunpack.c.l.b16 %v231
  %v2012 = vunpack.c.h.b16 %v231
  %v2013 = vunpack.c.l.b16 %v232
  %v2014 = vunpack.c.h.b16 %v232
  %v2015 = vunpack.c.l.b16 %v233
  %v2016 = vunpack.c.h.b16 %v233
  %v2017 = vunpack.c.l.b16 %v234
  %v2018 = vunpack.c.h.b16 %v234
  %v2019 = vunpack.c.l.b16 %v235
  %v2020 = vunpack.c.h.b16 %v235
  %v2021 = vunpack.c.l.b16 %v236
  %v2022 = vunpack.c.h.b16 %v236
  %v2023 = vunpack.c.l.b16 %v237
  %v2024 = vunpack.c.h.b16 %v237
  %v2025 = vunpack.c.l.b16 %v238
  %v2026 = vunpack.c.h.b16 %v238
  %v2027 = vunpack.c.l.b16 %v239
  %v2028 = vunpack.c.h.b16 %v239
  %v2029 = vunpack.c.l.b16 %v240
  %v2030 = vunpack.c.h.b16 %v240
  %v2031 = vunpack.c.l.b16 %v241
  %v2032 = vunpack.c.h.b16 %v241
  %v2033 = vunpack.c.l.b16 %v242
  %v2034 = vunpack.c.h.b16 %v242
  %v2035 = vunpack.c.l.b16 %v243
  %v2036 = vunpack.c.h.b16 %v243
  %v2037 = vunpack.c.l.b16 %v244
  %v2038 = vunpack.c.h.b16 %v244
  %v2039 = vunpack.c.l.b16 %v245
  %v2040 = vunpack.c.h.b16 %v245
  %v2041 = vunpack.c.l.b16 %v246
  %v2042 = vunpack.c.h.b16 %v246
  %v2043 = vunpack.c.l.b16 %v247
  %v2044 = vunpack.c.h.b16 %v247
  %v2045 = vunpack.c.l.b16 %v248
  %v2046 = vunpack.c.h.b16 %v248
  %v2047 = vunpack.c.l.b16 %v249
  %v2048 = vunpack.c.h.b16 %v249
  %v2049 = vunpack.c.l.b16 %v250
  %v2050 = vunpack.c.h.b16 %v250
  %v2051 = vunpack.c.l.b16 %v251
  %v2052 = vunpack.c.h.b16 %v251
  %v2053 = vunpack.c.l.b16 %v252
  %v2054 = vunpack.c.h.b16 %v252
  %v2055 = vunpack.c.l.b16 %v253
  %v2056 = vunpack.c.h.b16 %v253
  %v2057 = vunpack.c.l.b16 %v254
  %v2058 = vunpack.c.h.b16 %v254
  %v2059 = vunpack.c.l.b16 %v255
  %v2060 = vunpack.c.h.b16 %v255
  %v2061 = vunpack.c.l.b16 %v256
  %v2062 = vunpack.c.h.b16 %v256
  %v2063 = vunpack.c.l.b16 %v257
  %v2064 = vunpack.c.h.b16 %v257
  %v2065 = vunpack.c.l.b16 %v258
  %v2066 = vunpack.c.h.b16 %v258
  %v2067 = vunpack.c.l.b16 %v259
  %v2068 = vunpack.c.h.b16 %v259
  %v2069 = vunpack.c.l.b16 %v260
  %v2070 = vunpack.c.h.b16 %v260
  %v2071 = vunpack.c.l.b16 %v261
  %v2072 = vunpack.c.h.b16 %v261
  %v2073 = vunpack.c.l.b16 %v262
  %v2074 = vunpack.c.h.b16 %v262
  %v2075 = vunpack.c.l.b16 %v263
  %v2076 = vunpack.c.h.b16 %v263
  %v2077 = vunpack.c.l.b16 %v264
  %v2078 = vunpack.c.h.b16 %v264
  %v2079 = vunpack.c.l.b16 %v265
  %v2080 = vunpack.c.h.b16 %v265
  %v2081 = vunpack.c.l.b16 %v266
  %v2082 = vunpack.c.h.b16 %v266
  %v2083 = vunpack.c.l.b16 %v267
  %v2084 = vunpack.c.h.b16 %v267
  %v2085 = vunpack.c.l.b16 %v268
  %v2086 = vunpack.c.h.b16 %v268
  %v2087 = vunpack.c.l.b16 %v269
  %v2088 = vunpack.c.h.b16 %v269
  %v2089 = vunpack.c.l.b16 %v270
  %v2090 = vunpack.c.h.b16 %v270
  %v2091 = vunpack.c.l.b16 %v271
  %v2092 = vunpack.c.h.b16 %v271
  %v2093 = vunpack.c.l.b16 %v272
  %v2094 = vunpack.c.h.b16 %v272
  %v2095 = vunpack.c.l.b16 %v273
  %v2096 = vunpack.c.h.b16 %v273
  %v2097 = vunpack.c.l.b16 %v274
  %v2098 = vunpack.c.h.b16 %v274
  %v2099 = vunpack.c.l.b16 %v275
  %v2100 = vunpack.c.h.b16 %v275
  %v2101 = vunpack.c.l.b16 %v276
  %v2102 = vunpack.c.h.b16 %v276
  %v2103 = vunpack.c.l.b16 %v277
  %v2104 = vunpack.c.h.b16 %v277
  %v2105 = vunpack.c.l.b16 %v278
  %v2106 = vunpack.c.h.b16 %v278
  %v2107 = vunpack.c.l.b16 %v279
  %v2108 = vunpack.c.h.b16 %v279
  %v2109 = vunpack.c.l.b16 %v280
  %v2110 = vunpack.c.h.b16 %v280
  %v2111 = vunpack.c.l.b16 %v281
  %v2112 = vunpack.c.h.b16 %v281
  %v2113 = vunpack.c.l.b16 %v282
  %v2114 = vunpack.c.h.b16 %v282
  %v2115 = vunpack.c.l.b16 %v283
  %v2116 = vunpack.c.h.b16 %v283
  %v2117 = vunpack.c.l.b16 %v284
  %v2118 = vunpack.c.h.b16 %v284
  %v2119 = vunpack.c.l.b16 %v285
  %v2120 = vunpack.c.h.b16 %v285
  %v2121 = vunpack.c.l.b16 %v286
  %v2122 = vunpack.c.h.b16 %v286
  %v2123 = vunpack.c.l.b16 %v287
  %v2124 = vunpack.c.h.b16 %v287
  %v2125 = vunpack.c.l.b16 %v288
  %v2126 = vunpack.c.h.b16 %v288
  %v2127 = vunpack.c.l.b16 %v289
  %v2128 = vunpack.c.h.b16 %v289
  %v2129 = vunpack.c.l.b16 %v290
  %v2130 = vunpack.c.h.b16 %v290
  %v2131 = vunpack.c.l.b16 %v291
  %v2132 = vunpack.c.h.b16 %v291
  %v2133 = vunpack.c.l.b16 %v292
  %v2134 = vunpack.c.h.b16 %v292
  %v2135 = vunpack.c.l.b16 %v293
  %v2136 = vunpack.c.h.b16 %v293
  %v2137 = vunpack.c.l.b16 %v294
  %v2138 = vunpack.c.h.b16 %v294
  %v2139 = vunpack.c.l.b16 %v295
  %v2140 = vunpack.c.h.b16 %v295
  %v2141 = vunpack.c.l.b16 %v296
  %v2142 = vunpack.c.h.b16 %v296
  %v2143 = vunpack.c.l.b16 %v297
  %v2144 = vunpack.c.h.b16 %v297
  %v2145 = vunpack.c.l.b16 %v298
  %v2146 = vunpack.c.h.b16 %v298
  %v2147 = vunpack.c.l.b16 %v299
  %v2148 = vunpack.c.h.b16 %v299
  %v2149 = vunpack.c.l.b16 %v300
  %v2150 = vunpack.c.h.b16 %v300
  %v2151 = vunpack.c.l.b16 %v301
  %v2152 = vunpack.c.h.b16 %v301
  %v2153 = vunpack.c.l.b16 %v302
  %v2154 = vunpack.c.h.b16 %v302
  %v2155 = vunpack.c.l.b16 %v303
  %v2156 = vunpack.c.h.b16 %v303
  %v2157 = vunpack.c.l.b16 %v304
  %v2158 = vunpack.c.h.b16 %v304
  %v2159 = vunpack.c.l.b16 %v305
  %v2160 = vunpack.c.h.b16 %v305
  %v2161 = vunpack.c.l.b16 %v306
  %v2162 = vunpack.c.h.b16 %v306
  %v2163 = vunpack.c.l.b16 %v307
  %v2164 = vunpack.c.h.b16 %v307
  %v2165 = vunpack.c.l.b16 %v308
  %v2166 = vunpack.c.h.b16 %v308
  %v2167 = vunpack.c.l.b16 %v309
  %v2168 = vunpack.c.h.b16 %v309
  %v2169 = vunpack.c.l.b16 %v310
  %v2170 = vunpack.c.h.b16 %v310
  %v2171 = vunpack.c.l.b16 %v311
  %v2172 = vunpack.c.h.b16 %v311
  %v2173 = vunpack.c.l.b16 %v312
  %v2174 = vunpack.c.h.b16 %v312
  %v2175 = vunpack.c.l.b16 %v313
  %v2176 = vunpack.c.h.b16 %v313
  %v2177 = vunpack.c.l.b16 %v314
  %v2178 = vunpack.c.h.b16 %v314
  %v2179 = vunpack.c.l.b16 %v315
  %v2180 = vunpack.c.h.b16 %v315
  %v2181 = vunpack.c.l.b16 %v316
  %v2182 = vunpack.c.h.b16 %v316
  %v2183 = vunpack.c.l.b16 %v317
  %v2184 = vunpack.c.h.b16 %v317
  %v2185 = vunpack.c.l.b16 %v318
  %v2186 = vunpack.c.h.b16 %v318
  %v2187 = vunpack.c.l.b16 %v319
  %v2188 = vunpack.c.h.b16 %v319
  %v2189 = vunpack.c.l.b16 %v320
  %v2190 = vunpack.c.h.b16 %v320
  %v2191 = vunpack.c.l.b16 %v321
  %v2192 = vunpack.c.h.b16 %v321
  %v2193 = vunpack.c.l.b16 %v322
  %v2194 = vunpack.c.h.b16 %v322
  %v2195 = vunpack.c.l.b16 %v323
  %v2196 = vunpack.c.h.b16 %v323
  %v2197 = vunpack.c.l.b16 %v324
  %v2198 = vunpack.c.h.b16 %v324
  %v2199 = vunpack.c.l.b16 %v325
  %v2200 = vunpack.c.h.b16 %v325
  %v2201 = vunpack.c.l.b16 %v326
  %v2202 = vunpack.c.h.b16 %v326
  %v2203 = vunpack.c.l.b16 %v327
  %v2204 = vunpack.c.h.b16 %v327
  %v2205 = vunpack.c.l.b16 %v328
  %v2206 = vunpack.c.h.b16 %v328
  %v2207 = vunpack.c.l.b16 %v329
  %v2208 = vunpack.c.h.b16 %v329
  %v2209 = vunpack.c.l.b16 %v330
  %v2210 = vunpack.c.h.b16 %v330
  %v2211 = vunpack.c.l.b16 %v331
  %v2212 = vunpack.c.h.b16 %v331
  %v2213 = vunpack.c.l.b16 %v332
  %v2214 = vunpack.c.h.b16 %v332
  %v2215 = vunpack.c.l.b16 %v333
  %v2216 = vunpack.c.h.b16 %v333
  %v2217 = vunpack.c.l.b16 %v334
  %v2218 = vunpack.c.h.b16 %v334
  %v2219 = vunpack.c.l.b16 %v335
  %v2220 = vunpack.c.h.b16 %v335
  %v2221 = vunpack.c.l.b16 %v336
  %v2222 = vunpack.c.h.b16 %v336
  %v2223 = vunpack.c.l.b16 %v337
  %v2224 = vunpack.c.h.b16 %v337
  %v2225 = vunpack.c.l.b16 %v338
  %v2226 = vunpack.c.h.b16 %v338
  %v2227 = vunpack.c.l.b16 %v339
  %v2228 = vunpack.c.h.b16 %v339
  %v2229 = vunpack.c.l.b16 %v340
  %v2230 = vunpack.c.h.b16 %v340
  %v2231 = vunpack.c.l.b16 %v341
  %v2232 = vunpack.c.h.b16 %v341
  %v2233 = vunpack.c.l.b16 %v342
  %v2234 = vunpack.c.h.b16 %v342
  %v2235 = vunpack.c.l.b16 %v343
  %v2236 = vunpack.c.h.b16 %v343
  %v2237 = vunpack.c.l.b16 %v344
  %v2238 = vunpack.c.h.b16 %v344
  %v2239 = vunpack.c.l.b16 %v345
  %v2240 = vunpack.c.h.b16 %v345
  %v2241 = vunpack.c.l.b16 %v346
  %v2242 = vunpack.c.h.b16 %v346
  %v2243 = vunpack.c.l.b16 %v347
  %v2244 = vunpack.c.h.b16 %v347
  %v2245 = vunpack.c.l.b16 %v348
  %v2246 = vunpack.c.h.b16 %v348
  %v2247 = vunpack.c.l.b16 %v349
  %v2248 = vunpack.c.h.b16 %v349
  %v2249 = vunpack.c.l.b16 %v350
  %v2250 = vunpack.c.h.b16 %v350
  %v2251 = vunpack.c.l.b16 %v351
  %v2252 = vunpack.c.h.b16 %v351
  %v2253 = vunpack.c.l.b16 %v352
  %v2254 = vunpack.c.h.b16 %v352
  %v2255 = vunpack.c.l.b16 %v353
  %v2256 = vunpack.c.h.b16 %v353
  %v2257 = vunpack.c.l.b16 %v354
  %v2258 = vunpack.c.h.b16 %v354
  %v2259 = vunpack.c.l.b16 %v355
  %v2260 = vunpack.c.h.b16 %v355
  %v2261 = vunpack.c.l.b16 %v356
  %v2262 = vunpack.c.h.b16 %v356
  %v2263 = vunpack.c.l.b16 %v357
  %v2264 = vunpack.c.h.b16 %v357
  %v2265 = vunpack.c.l.b16 %v358
  %v2266 = vunpack.c.h.b16 %v358
  %v2267 = vunpack.c.l.b16 %v359
  %v2268 = vunpack.c.h.b16 %v359
  %v2269 = vunpack.c.l.b16 %v360
  %v2270 = vunpack.c.h.b16 %v360
  %v2271 = vunpack.c.l.b16 %v361
  %v2272 = vunpack.c.h.b16 %v361
  %v2273 = vunpack.c.l.b16 %v362
  %v2274 = vunpack.c.h.b16 %v362
  %v2275 = vunpack.c.l.b16 %v363
  %v2276 = vunpack.c.h.b16 %v363
  %v2277 = vunpack.c.l.b16 %v364
  %v2278 = vunpack.c.h.b16 %v364
  %v2279 = vunpack.c.l.b16 %v365
  %v2280 = vunpack.c.h.b16 %v365
  %v2281 = vunpack.c.l.b16 %v366
  %v2282 = vunpack.c.h.b16 %v366
  %v2283 = vunpack.c.l.b16 %v367
  %v2284 = vunpack.c.h.b16 %v367
  %v2285 = vunpack.c.l.b16 %v368
  %v2286 = vunpack.c.h.b16 %v368
  %v2287 = vunpack.c.l.b16 %v369
  %v2288 = vunpack.c.h.b16 %v369
  %v2289 = vunpack.c.l.b16 %v370
  %v2290 = vunpack.c.h.b16 %v370
  %v2291 = vunpack.c.l.b16 %v371
  %v2292 = vunpack.c.h.b16 %v371
  %v2293 = vunpack.c.l.b16 %v372
  %v2294 = vunpack.c.h.b16 %v372
  %v2295 = vunpack.c.l.b16 %v373
  %v2296 = vunpack.c.h.b16 %v373
  %v2297 = vunpack.c.l.b16 %v374
  %v2298 = vunpack.c.h.b16 %v374
  %v2299 = vunpack.c.l.b16 %v375
  %v2300 = vunpack.c.h.b16 %v375
  %v2301 = vunpack.c.l.b16 %v376
  %v2302 = vunpack.c.h.b16 %v376
  %v2303 = vunpack.c.l.b16 %v377
  %v2304 = vunpack.c.h.b16 %v377
  %v2305 = vunpack.c.l.b16 %v378
  %v2306 = vunpack.c.h.b16 %v378
  %v2307 = vunpack.c.l.b16 %v379
  %v2308 = vunpack.c.h.b16 %v379
  %v2309 = vunpack.c.l.b16 %v380
  %v2310 = vunpack.c.h.b16 %v380
  %v2311 = vunpack.c.l.b16 %v381
  %v2312 = vunpack.c.h.b16 %v381
  %v2313 = vunpack.c.l.b16 %v382
  %v2314 = vunpack.c.h.b16 %v382
  %v2315 = vunpack.c.l.b16 %v383
  %v2316 = vunpack.c.h.b16 %v383
  %v2317 = vunpack.c.l.b16 %v384
  %v2318 = vunpack.c.h.b16 %v384
  %v2319 = vunpack.c.l.b16 %v385
  %v2320 = vunpack.c.h.b16 %v385
  %v2321 = vunpack.c.l.b16 %v386
  %v2322 = vunpack.c.h.b16 %v386
  %v2323 = vunpack.c.l.b16 %v387
  %v2324 = vunpack.c.h.b16 %v387
  %v2325 = vunpack.c.l.b16 %v388
  %v2326 = vunpack.c.h.b16 %v388
  %v2327 = vunpack.c.l.b16 %v389
  %v2328 = vunpack.c.h.b16 %v389
  %v2329 = vunpack.c.l.b16 %v390
  %v2330 = vunpack.c.h.b16 %v390
  %v2331 = vunpack.c.l.b16 %v391
  %v2332 = vunpack.c.h.b16 %v391
  %v2333 = vunpack.c.l.b16 %v392
  %v2334 = vunpack.c.h.b16 %v392
  %v2335 = vunpack.c.l.b16 %v393
  %v2336 = vunpack.c.h.b16 %v393
  %v2337 = vunpack.c.l.b16 %v394
  %v2338 = vunpack.c.h.b16 %v394
  %v2339 = vunpack.c.l.b16 %v395
  %v2340 = vunpack.c.h.b16 %v395
  %v2341 = vunpack.c.l.b16 %v396
  %v2342 = vunpack.c.h.b16 %v396
  %v2343 = vunpack.c.l.b16 %v397
  %v2344 = vunpack.c.h.b16 %v397
  %v2345 = vunpack.c.l.b16 %v398
  %v2346 = vunpack.c.h.b16 %v398
  %v2347 = vunpack.c.l.b16 %v399
  %v2348 = vunpack.c.h.b16 %v399
  %v2349 = vunpack.c.l.b16 %v400
  %v2350 = vunpack.c.h.b16 %v400
  %v2351 = vunpack.c.l.b16 %v401
  %v2352 = vunpack.c.h.b16 %v401
  %v2353 = vunpack.c.l.b16 %v402
  %v2354 = vunpack.c.h.b16 %v402
  %v2355 = vunpack.c.l.b16 %v403
  %v2356 = vunpack.c.h.b16 %v403
  %v2357 = vunpack.c.l.b16 %v404
  %v2358 = vunpack.c.h.b16 %v404
  %v2359 = vunpack.c.l.b16 %v405
  %v2360 = vunpack.c.h.b16 %v405
  %v2361 = vunpack.c.l.b16 %v406
  %v2362 = vunpack.c.h.b16 %v406
  %v2363 = vunpack.c.l.b16 %v407
  %v2364 = vunpack.c.h.b16 %v407
  %v2365 = vunpack.c.l.b16 %v408
  %v2366 = vunpack.c.h.b16 %v408
  %v2367 = vunpack.c.l.b16 %v409
  %v2368 = vunpack.c.h.b16 %v409
  %v2369 = vunpack.c.l.b16 %v410
  %v2370 = vunpack.c.h.b16 %v410
  %v2371 = vunpack.c.l.b16 %v411
  %v2372 = vunpack.c.h.b16 %v411
  %v2373 = vunpack.c.l.b16 %v412
  %v2374 = vunpack.c.h.b16 %v412
  %v2375 = vunpack.c.l.b16 %v413
  %v2376 = vunpack.c.h.b16 %v413
  %v2377 = vunpack.c.l.b16 %v414
  %v2378 = vunpack.c.h.b16 %v414
  %v2379 = vunpack.c.l.b16 %v415
  %v2380 = vunpack.c.h.b16 %v415
  %v2381 = vunpack.c.l.b16 %v416
  %v2382 = vunpack.c.h.b16 %v416
  %v2383 = vunpack.c.l.b16 %v417
  %v2384 = vunpack.c.h.b16 %v417
  %v2385 = vunpack.c.l.b16 %v418
  %v2386 = vunpack.c.h.b16 %v418
  %v2387 = vunpack.c.l.b16 %v419
  %v2388 = vunpack.c.h.b16 %v419
  %v2389 = vunpack.c.l.b16 %v420
  %v2390 = vunpack.c.h.b16 %v420
  %v2391 = vunpack.c.l.b16 %v421
  %v2392 = vunpack.c.h.b16 %v421
  %v2393 = vunpack.c.l.b16 %v422
  %v2394 = vunpack.c.h.b16 %v422
  %v2395 = vunpack.c.l.b16 %v423
  %v2396 = vunpack.c.h.b16 %v423
  %v2397 = vunpack.c.l.b16 %v424
  %v2398 = vunpack.c.h.b16 %v424
  %v2399 = vunpack.c.l.b16 %v425
  %v2400 = vunpack.c.h.b16 %v425
  %v2401 = vunpack.c.l.b16 %v426
  %v2402 = vunpack.c.h.b16 %v426
  %v2403 = vunpack.c.l.b16 %v427
  %v2404 = vunpack.c.h.b16 %v427
  %v2405 = vunpack.c.l.b16 %v428
  %v2406 = vunpack.c.h.b16 %v428
  %v2407 = vunpack.c.l.b16 %v429
  %v2408 = vunpack.c.h.b16 %v429
  %v2409 = vunpack.c.l.b16 %v430
  %v2410 = vunpack.c.h.b16 %v430
  %v2411 = vunpack.c.l.b16 %v431
  %v2412 = vunpack.c.h.b16 %v431
  %v2413 = vunpack.c.l.b16 %v432
  %v2414 = vunpack.c.h.b16 %v432
  %v2415 = vunpack.c.l.b16 %v433
  %v2416 = vunpack.c.h.b16 %v433
  %v2417 = vunpack.c.l.b16 %v434
  %v2418 = vunpack.c.h.b16 %v434
  %v2419 = vunpack.c.l.b16 %v435
  %v2420 = vunpack.c.h.b16 %v435
  %v2421 = vunpack.c.l.b16 %v436
  %v2422 = vunpack.c.h.b16 %v436
  %v2423 = vunpack.c.l.b16 %v437
  %v2424 = vunpack.c.h.b16 %v437
  %v2425 = vunpack.c.l.b16 %v438
  %v2426 = vunpack.c.h.b16 %v438
  %v2427 = vunpack.c.l.b16 %v439
  %v2428 = vunpack.c.h.b16 %v439
  %v2429 = vunpack.c.l.b16 %v440
  %v2430 = vunpack.c.h.b16 %v440
  %v2431 = vunpack.c.l.b16 %v441
  %v2432 = vunpack.c.h.b16 %v441
  %v2433 = vunpack.c.l.b16 %v442
  %v2434 = vunpack.c.h.b16 %v442
  %v2435 = vunpack.c.l.b16 %v443
  %v2436 = vunpack.c.h.b16 %v443
  %v2437 = vunpack.c.l.b16 %v444
  %v2438 = vunpack.c.h.b16 %v444
  %v2439 = vunpack.c.l.b16 %v445
  %v2440 = vunpack.c.h.b16 %v445
  %v2441 = vunpack.c.l.b16 %v446
  %v2442 = vunpack.c.h.b16 %v446
  %v2443 = vunpack.c.l.b16 %v447
  %v2444 = vunpack.c.h.b16 %v447
  %v2445 = vunpack.c.l.b16 %v448
  %v2446 = vunpack.c.h.b16 %v448
  %v2447 = vunpack.c.l.b16 %v449
  %v2448 = vunpack.c.h.b16 %v449
  %v2449 = vunpack.c.l.b16 %v450
  %v2450 = vunpack.c.h.b16 %v450
  %v2451 = vunpack.c.l.b16 %v451
  %v2452 = vunpack.c.h.b16 %v451
  %v2453 = vunpack.c.l.b16 %v452
  %v2454 = vunpack.c.h.b16 %v452
  %v2455 = vunpack.c.l.b16 %v453
  %v2456 = vunpack.c.h.b16 %v453
  %v2457 = vunpack.c.l.b16 %v454
  %v2458 = vunpack.c.h.b16 %v454
  %v2459 = vunpack.c.l.b16 %v455
  %v2460 = vunpack.c.h.b16 %v455
  %v2461 = vunpack.c.l.b16 %v456
  %v2462 = vunpack.c.h.b16 %v456
  %v2463 = vunpack.c.l.b16 %v457
  %v2464 = vunpack.c.h.b16 %v457
  %v2465 = vunpack.c.l.b16 %v458
  %v2466 = vunpack.c.h.b16 %v458
  %v2467 = vunpack.c.l.b16 %v459
  %v2468 = vunpack.c.h.b16 %v459
  %v2469 = vunpack.c.l.b16 %v460
  %v2470 = vunpack.c.h.b16 %v460
  %v2471 = vunpack.c.l.b16 %v461
  %v2472 = vunpack.c.h.b16 %v461
  %v2473 = vunpack.c.l.b16 %v462
  %v2474 = vunpack.c.h.b16 %v462
  %v2475 = vunpack.c.l.b16 %v463
  %v2476 = vunpack.c.h.b16 %v463
  %v2477 = vunpack.c.l.b16 %v464
  %v2478 = vunpack.c.h.b16 %v464
  %v2479 = vunpack.c.l.b16 %v465
  %v2480 = vunpack.c.h.b16 %v465
  %v2481 = vunpack.c.l.b16 %v466
  %v2482 = vunpack.c.h.b16 %v466
  %v2483 = vunpack.c.l.b16 %v467
  %v2484 = vunpack.c.h.b16 %v467
  %v2485 = vunpack.c.l.b16 %v468
  %v2486 = vunpack.c.h.b16 %v468
  %v2487 = vunpack.c.l.b16 %v469
  %v2488 = vunpack.c.h.b16 %v469
  %v2489 = vunpack.c.l.b16 %v470
  %v2490 = vunpack.c.h.b16 %v470
  %v2491 = vunpack.c.l.b16 %v471
  %v2492 = vunpack.c.h.b16 %v471
  %v2493 = vunpack.c.l.b16 %v472
  %v2494 = vunpack.c.h.b16 %v472
  %v2495 = vunpack.c.l.b16 %v473
  %v2496 = vunpack.c.h.b16 %v473
  %v2497 = vunpack.c.l.b16 %v474
  %v2498 = vunpack.c.h.b16 %v474
  %v2499 = vunpack.c.l.b16 %v475
  %v2500 = vunpack.c.h.b16 %v475
  %v2501 = vunpack.c.l.b16 %v476
  %v2502 = vunpack.c.h.b16 %v476
  %v2503 = vunpack.c.l.b16 %v477
  %v2504 = vunpack.c.h.b16 %v477
  %v2505 = vunpack.c.l.b16 %v478
  %v2506 = vunpack.c.h.b16 %v478
  %v2507 = vunpack.c.l.b16 %v479
  %v2508 = vunpack.c.h.b16 %v479
  %v2509 = vunpack.c.l.b16 %v480
  %v2510 = vunpack.c.h.b16 %v480
  %v2511 = vunpack.c.l.b16 %v481
  %v2512 = vunpack.c.h.b16 %v481
  %v2513 = vunpack.c.l.b16 %v482
  %v2514 = vunpack.c.h.b16 %v482
  %v2515 = vunpack.c.l.b16 %v483
  %v2516 = vunpack.c.h.b16 %v483
  %v2517 = vunpack.c.l.b16 %v484
  %v2518 = vunpack.c.h.b16 %v484
  %v2519 = vunpack.c.l.b16 %v485
  %v2520 = vunpack.c.h.b16 %v485
  %v2521 = vunpack.c.l.b16 %v486
  %v2522 = vunpack.c.h.b16 %v486
  %v2523 = vunpack.c.l.b16 %v487
  %v2524 = vunpack.c.h.b16 %v487
  %v2525 = vunpack.c.l.b16 %v488
  %v2526 = vunpack.c.h.b16 %v488
  %v2527 = vunpack.c.l.b16 %v489
  %v2528 = vunpack.c.h.b16 %v489
  %v2529 = vunpack.c.l.b16 %v490
  %v2530 = vunpack.c.h.b16 %v490
  %v2531 = vunpack.c.l.b16 %v491
  %v2532 = vunpack.c.h.b16 %v491
  %v2533 = vunpack.c.l.b16 %v492
  %v2534 = vunpack.c.h.b16 %v492
  %v2535 = vunpack.c.l.b16 %v493
  %v2536 = vunpack.c.h.b16 %v493
  %v2537 = vunpack.c.l.b16 %v494
  %v2538 = vunpack.c.h.b16 %v494
  %v2539 = vunpack.c.l.b16 %v495
  %v2540 = vunpack.c.h.b16 %v495
  %v2541 = vunpack.c.l.b16 %v496
  %v2542 = vunpack.c.h.b16 %v496
  %v2543 = vunpack.c.l.b16 %v497
  %v2544 = vunpack.c.h.b16 %v497
  %v2545 = vunpack.c.l.b16 %v498
  %v2546 = vunpack.c.h.b16 %v498
  %v2547 = vunpack.c.l.b16 %v499
  %v2548 = vunpack.c.h.b16 %v499
  %v2549 = vunpack.c.l.b16 %v500
  %v2550 = vunpack.c.h.b16 %v500
  %v2551 = vunpack.c.l.b16 %v501
  %v2552 = vunpack.c.h.b16 %v501
  %v2553 = vunpack.c.l.b16 %v502
  %v2554 = vunpack.c.h.b16 %v502
  %v2555 = vunpack.c.l.b16 %v503
  %v2556 = vunpack.c.h.b16 %v503
  %v2557 = vunpack.c.l.b16 %v504
  %v2558 = vunpack.c.h.b16 %v504
  %v2559 = vunpack.c.l.b16 %v505
  %v2560 = vunpack.c.h.b16 %v505
  %v2561 = vunpack.c.l.b16 %v506
  %v2562 = vunpack.c.h.b16 %v506
  %v2563 = vunpack.c.l.b16 %v507
  %v2564 = vunpack.c.h.b16 %v507
  %v2565 = vunpack.c.l.b16 %v508
  %v2566 = vunpack.c.h.b16 %v508
  %v2567 = vunpack.c.l.b16 %v509
  %v2568 = vunpack.c.h.b16 %v509
  %v2569 = vunpack.c.l.b16 %v510
  %v2570 = vunpack.c.h.b16 %v510
  %v2571 = vunpack.c.l.b16 %v511
  %v2572 = vunpack.c.h.b16 %v511
  %v2573 = vunpack.c.l.b16 %v512
  %v2574 = vunpack.c.h.b16 %v512
  %v2575 = vunpack.c.l.b16 %v513
  %v2576 = vunpack.c.h.b16 %v513
  %v2577 = vunpack.c.l.b16 %v514
  %v2578 = vunpack.c.h.b16 %v514
  %v2579 = vunpack.c.l.b16 %v515
  %v2580 = vunpack.c.h.b16 %v515
  %v2581 = vunpack.c.l.b16 %v516
  %v2582 = vunpack.c.h.b16 %v516
  %v2583 = vunpack.c.l.b16 %v517
  %v2584 = vunpack.c.h.b16 %v517
  %v2585 = vunpack.c.l.b16 %v518
  %v2586 = vunpack.c.h.b16 %v518
  %v2587 = vunpack.c.l.b16 %v519
  %v2588 = vunpack.c.h.b16 %v519
  %v2589 = vunpack.c.l.b16 %v520
  %v2590 = vunpack.c.h.b16 %v520
  %v2591 = vunpack.c.l.b16 %v521
  %v2592 = vunpack.c.h.b16 %v521
  %v2593 = vunpack.c.l.b16 %v522
  %v2594 = vunpack.c.h.b16 %v522
  %v2595 = vunpack.c.l.b16 %v523
  %v2596 = vunpack.c.h.b16 %v523
  %v2597 = vunpack.c.l.b16 %v524
  %v2598 = vunpack.c.h.b16 %v524
  %v2599 = vunpack.c.l.b16 %v525
  %v2600 = vunpack.c.h.b16 %v525
  %v2601 = vunpack.c.l.b16 %v526
  %v2602 = vunpack.c.h.b16 %v526
  %v2603 = vunpack.c.l.b16 %v527
  %v2604 = vunpack.c.h.b16 %v527
  %v2605 = vunpack.c.l.b16 %v528
  %v2606 = vunpack.c.h.b16 %v528
  %v2607 = vunpack.c.l.b16 %v529
  %v2608 = vunpack.c.h.b16 %v529
  %v2609 = vunpack.c.l.b16 %v530
  %v2610 = vunpack.c.h.b16 %v530
  %v2611 = vunpack.c.l.b16 %v531
  %v2612 = vunpack.c.h.b16 %v531
  %v2613 = vunpack.c.l.b16 %v532
  %v2614 = vunpack.c.h.b16 %v532
  %v2615 = vunpack.c.l.b16 %v533
  %v2616 = vunpack.c.h.b16 %v533
  %v2617 = vunpack.c.l.b16 %v534
  %v2618 = vunpack.c.h.b16 %v534
  %v2619 = vunpack.c.l.b16 %v535
  %v2620 = vunpack.c.h.b16 %v535
  %v2621 = vunpack.c.l.b16 %v536
  %v2622 = vunpack.c.h.b16 %v536
  %v2623 = vunpack.c.l.b16 %v537
  %v2624 = vunpack.c.h.b16 %v537
  %v2625 = vunpack.c.l.b16 %v538
  %v2626 = vunpack.c.h.b16 %v538
  %v2627 = vunpack.c.l.b16 %v539
  %v2628 = vunpack.c.h.b16 %v539
  %v2629 = vunpack.c.l.b16 %v540
  %v2630 = vunpack.c.h.b16 %v540
  %v2631 = vunpack.c.l.b16 %v541
  %v2632 = vunpack.c.h.b16 %v541
  %v2633 = vunpack.c.l.b16 %v542
  %v2634 = vunpack.c.h.b16 %v542
  %v2635 = vunpack.c.l.b16 %v543
  %v2636 = vunpack.c.h.b16 %v543
  %v2637 = vunpack.c.l.b16 %v544
  %v2638 = vunpack.c.h.b16 %v544
  %v2639 = vunpack.c.l.b16 %v545
  %v2640 = vunpack.c.h.b16 %v545
  %v2641 = vunpack.c.l.b16 %v546
  %v2642 = vunpack.c.h.b16 %v546
  %v2643 = vunpack.c.l.b16 %v547
  %v2644 = vunpack.c.h.b16 %v547
  %v2645 = vunpack.c.l.b16 %v548
  %v2646 = vunpack.c.h.b16 %v548
  %v2647 = vunpack.c.l.b16 %v549
  %v2648 = vunpack.c.h.b16 %v549
  %v2649 = vunpack.c.l.b16 %v550
  %v2650 = vunpack.c.h.b16 %v550
  %v2651 = vunpack.c.l.b16 %v551
  %v2652 = vunpack.c.h.b16 %v551
  %v2653 = vunpack.c.l.b16 %v552
  %v2654 = vunpack.c.h.b16 %v552
  %v2655 = vunpack.c.l.b16 %v553
  %v2656 = vunpack.c.h.b16 %v553
  %v2657 = vunpack.c.l.b16 %v554
  %v2658 = vunpack.c.h.b16 %v554
  %v2659 = vunpack.c.l.b16 %v555
  %v2660 = vunpack.c.h.b16 %v555
  %v2661 = vunpack.c.l.b16 %v556
  %v2662 = vunpack.c.h.b16 %v556
  %v2663 = vunpack.c.l.b16 %v557
  %v2664 = vunpack.c.h.b16 %v557
  %v2665 = vunpack.c.l.b16 %v558
  %v2666 = vunpack.c.h.b16 %v558
  %v2667 = vunpack.c.l.b16 %v559
  %v2668 = vunpack.c.h.b16 %v559
  %v2669 = vunpack.c.l.b16 %v560
  %v2670 = vunpack.c.h.b16 %v560
  %v2671 = vunpack.c.l.b16 %v561
  %v2672 = vunpack.c.h.b16 %v561
  %v2673 = vunpack.c.l.b16 %v562
  %v2674 = vunpack.c.h.b16 %v562
  %v2675 = vunpack.c.l.b16 %v563
  %v2676 = vunpack.c.h.b16 %v563
  %v2677 = vunpack.c.l.b16 %v564
  %v2678 = vunpack.c.h.b16 %v564
  %v2679 = vunpack.c.l.b16 %v565
  %v2680 = vunpack.c.h.b16 %v565
  %v2681 = vunpack.c.l.b16 %v566
  %v2682 = vunpack.c.h.b16 %v566
  %v2683 = vunpack.c.l.b16 %v567
  %v2684 = vunpack.c.h.b16 %v567
  %v2685 = vunpack.c.l.b16 %v568
  %v2686 = vunpack.c.h.b16 %v568
  %v2687 = vunpack.c.l.b16 %v569
  %v2688 = vunpack.c.h.b16 %v569
  %v2689 = vunpack.c.l.b16 %v570
  %v2690 = vunpack.c.h.b16 %v570
  %v2691 = vunpack.c.l.b16 %v571
  %v2692 = vunpack.c.h.b16 %v571
  %v2693 = vunpack.c.l.b16 %v572
  %v2694 = vunpack.c.h.b16 %v572
  %v2695 = vunpack.c.l.b16 %v573
  %v2696 = vunpack.c.h.b16 %v573
  %v2697 = vunpack.c.l.b16 %v574
  %v2698 = vunpack.c.h.b16 %v574
  %v2699 = vunpack.c.l.b16 %v575
  %v2700 = vunpack.c.h.b16 %v575
  %v2701 = vunpack.c.l.b16 %v576
  %v2702 = vunpack.c.h.b16 %v576
  %v2703 = vunpack.c.l.b16 %v577
  %v2704 = vunpack.c.h.b16 %v577
  %v2705 = vunpack.c.l.b16 %v578
  %v2706 = vunpack.c.h.b16 %v578
  %v2707 = vunpack.c.l.b16 %v579
  %v2708 = vunpack.c.h.b16 %v579
  %v2709 = vunpack.c.l.b16 %v580
  %v2710 = vunpack.c.h.b16 %v580
  %v2711 = vunpack.c.l.b16 %v581
  %v2712 = vunpack.c.h.b16 %v581
  %v2713 = vunpack.c.l.b16 %v582
  %v2714 = vunpack.c.h.b16 %v582
  %v2715 = vunpack.c.l.b16 %v583
  %v2716 = vunpack.c.h.b16 %v583
  %v2717 = vunpack.c.l.b16 %v584
  %v2718 = vunpack.c.h.b16 %v584
  %v2719 = vunpack.c.l.b16 %v585
  %v2720 = vunpack.c.h.b16 %v585
  %v2721 = vunpack.c.l.b16 %v586
  %v2722 = vunpack.c.h.b16 %v586
  %v2723 = vunpack.c.l.b16 %v587
  %v2724 = vunpack.c.h.b16 %v587
  %v2725 = vunpack.c.l.b16 %v588
  %v2726 = vunpack.c.h.b16 %v588
  %v2727 = vunpack.c.l.b16 %v589
  %v2728 = vunpack.c.h.b16 %v589
  %v2729 = vunpack.c.l.b16 %v590
  %v2730 = vunpack.c.h.b16 %v590
  %v2731 = vunpack.c.l.b16 %v591
  %v2732 = vunpack.c.h.b16 %v591
  %v2733 = vunpack.c.l.b16 %v592
  %v2734 = vunpack.c.h.b16 %v592
  %v2735 = vunpack.c.l.b16 %v593
  %v2736 = vunpack.c.h.b16 %v593
  %v2737 = vunpack.c.l.b16 %v594
  %v2738 = vunpack.c.h.b16 %v594
  %v2739 = vunpack.c.l.b16 %v595
  %v2740 = vunpack.c.h.b16 %v595
  %v2741 = vunpack.c.l.b16 %v596
  %v2742 = vunpack.c.h.b16 %v596
  %v2743 = vunpack.c.l.b16 %v597
  %v2744 = vunpack.c.h.b16 %v597
  %v2745 = vunpack.c.l.b16 %v598
  %v2746 = vunpack.c.h.b16 %v598
  %v2747 = vunpack.c.l.b16 %v599
  %v2748 = vunpack.c.h.b16 %v599
  %v2749 = vunpack.c.l.b16 %v600
  %v2750 = vunpack.c.h.b16 %v600
  %v2751 = vunpack.c.l.b16 %v601
  %v2752 = vunpack.c.h.b16 %v601
  %v2753 = vunpack.c.l.b16 %v602
  %v2754 = vunpack.c.h.b16 %v602
  %v2755 = vunpack.c.l.b16 %v603
  %v2756 = vunpack.c.h.b16 %v603
  %v2757 = vunpack.c.l.b16 %v604
  %v2758 = vunpack.c.h.b16 %v604
  %v2759 = vunpack.c.l.b16 %v605
  %v2760 = vunpack.c.h.b16 %v605
  %v2761 = vunpack.c.l.b16 %v606
  %v2762 = vunpack.c.h.b16 %v606
  %v2763 = vunpack.c.l.b16 %v607
  %v2764 = vunpack.c.h.b16 %v607
  %v2765 = vunpack.c.l.b16 %v608
  %v2766 = vunpack.c.h.b16 %v608
  %v2767 = vunpack.c.l.b16 %v609
  %v2768 = vunpack.c.h.b16 %v609
  %v2769 = vunpack.c.l.b16 %v610
  %v2770 = vunpack.c.h.b16 %v610
  %v2771 = vunpack.c.l.b16 %v611
  %v2772 = vunpack.c.h.b16 %v611
  %v2773 = vunpack.c.l.b16 %v612
  %v2774 = vunpack.c.h.b16 %v612
  %v2775 = vunpack.c.l.b16 %v613
  %v2776 = vunpack.c.h.b16 %v613
  %v2777 = vunpack.c.l.b16 %v614
  %v2778 = vunpack.c.h.b16 %v614
  %v2779 = vunpack.c.l.b16 %v615
  %v2780 = vunpack.c.h.b16 %v615
  %v2781 = vunpack.c.l.b16 %v616
  %v2782 = vunpack.c.h.b16 %v616
  %v2783 = vunpack.c.l.b16 %v617
  %v2784 = vunpack.c.h.b16 %v617
  %v2785 = vunpack.c.l.b16 %v618
  %v2786 = vunpack.c.h.b16 %v618
  %v2787 = vunpack.c.l.b16 %v619
  %v2788 = vunpack.c.h.b16 %v619
  %v2789 = vunpack.c.l.b16 %v620
  %v2790 = vunpack.c.h.b16 %v620
  %v2791 = vunpack.c.l.b16 %v621
  %v2792 = vunpack.c.h.b16 %v621
  %v2793 = vunpack.c.l.b16 %v622
  %v2794 = vunpack.c.h.b16 %v622
  %v2795 = vunpack.c.l.b16 %v623
  %v2796 = vunpack.c.h.b16 %v623
  %v2797 = vunpack.c.l.b16 %v624
  %v2798 = vunpack.c.h.b16 %v624
  %v2799 = vunpack.c.l.b16 %v625
  %v2800 = vunpack.c.h.b16 %v625
  %v2801 = vunpack.c.l.b16 %v626
  %v2802 = vunpack.c.h.b16 %v626
  %v2803 = vunpack.c.l.b16 %v627
  %v2804 = vunpack.c.h.b16 %v627
  %v2805 = vunpack.c.l.b16 %v628
  %v2806 = vunpack.c.h.b16 %v628
  %v2807 = vunpack.c.l.b16 %v629
  %v2808 = vunpack.c.h.b16 %v629
  %v2809 = vunpack.c.l.b16 %v630
  %v2810 = vunpack.c.h.b16 %v630
  %v2811 = vunpack.c.l.b16 %v631
  %v2812 = vunpack.c.h.b16 %v631
  %v2813 = vunpack.c.l.b16 %v632
  %v2814 = vunpack.c.h.b16 %v632
  %v2815 = vunpack.c.l.b16 %v633
  %v2816 = vunpack.c.h.b16 %v633
  %v2817 = vunpack.c.l.b16 %v634
  %v2818 = vunpack.c.h.b16 %v634
  %v2819 = vunpack.c.l.b16 %v635
  %v2820 = vunpack.c.h.b16 %v635
  %v2821 = vunpack.c.l.b16 %v636
  %v2822 = vunpack.c.h.b16 %v636
  %v2823 = vunpack.c.l.b16 %v637
  %v2824 = vunpack.c.h.b16 %v637
  %v2825 = vunpack.c.l.b16 %v638
  %v2826 = vunpack.c.h.b16 %v638
  %v2827 = vunpack.c.l.b16 %v639
  %v2828 = vunpack.c.h.b16 %v639
  %v2829 = vunpack.c.l.b16 %v640
  %v2830 = vunpack.c.h.b16 %v640
  %v2831 = vunpack.c.l.b16 %v641
  %v2832 = vunpack.c.h.b16 %v641
  %v2833 = vunpack.c.l.b16 %v642
  %v2834 = vunpack.c.h.b16 %v642
  %v2835 = vunpack.c.l.b16 %v643
  %v2836 = vunpack.c.h.b16 %v643
  %v2837 = vunpack.c.l.b16 %v644
  %v2838 = vunpack.c.h.b16 %v644
  %v2839 = vunpack.c.l.b16 %v645
  %v2840 = vunpack.c.h.b16 %v645
  %v2841 = vunpack.c.l.b16 %v646
  %v2842 = vunpack.c.h.b16 %v646
  %v2843 = vunpack.c.l.b16 %v647
  %v2844 = vunpack.c.h.b16 %v647
  %v2845 = vunpack.c.l.b16 %v648
  %v2846 = vunpack.c.h.b16 %v648
  %v2847 = vunpack.c.l.b16 %v649
  %v2848 = vunpack.c.h.b16 %v649
  %v2849 = vunpack.c.l.b16 %v650
  %v2850 = vunpack.c.h.b16 %v650
  %v2851 = vunpack.c.l.b16 %v651
  %v2852 = vunpack.c.h.b16 %v651
  %v2853 = vunpack.c.l.b16 %v652
  %v2854 = vunpack.c.h.b16 %v652
  %v2855 = vunpack.c.l.b16 %v653
  %v2856 = vunpack.c.h.b16 %v653
  %v2857 = vunpack.c.l.b16 %v654
  %v2858 = vunpack.c.h.b16 %v654
  %v2859 = vunpack.c.l.b16 %v655
  %v2860 = vunpack.c.h.b16 %v655
  %v2861 = vunpack.c.l.b16 %v656
  %v2862 = vunpack.c.h.b16 %v656
  %v2863 = vunpack.c.l.b16 %v657
  %v2864 = vunpack.c.h.b16 %v657
  %v2865 = vunpack.c.l.b16 %v658
  %v2866 = vunpack.c.h.b16 %v658
  %v2867 = vunpack.c.l.b16 %v659
  %v2868 = vunpack.c.h.b16 %v659
  %v2869 = vunpack.c.l.b16 %v660
  %v2870 = vunpack.c.h.b16 %v660
  %v2871 = vunpack.c.l.b16 %v661
  %v2872 = vunpack.c.h.b16 %v661
  %v2873 = vunpack.c.l.b16 %v662
  %v2874 = vunpack.c.h.b16 %v662
  %v2875 = vunpack.c.l.b16 %v663
  %v2876 = vunpack.c.h.b16 %v663
  %v2877 = vunpack.c.l.b16 %v664
  %v2878 = vunpack.c.h.b16 %v664
  %v2879 = vunpack.c.l.b16 %v665
  %v2880 = vunpack.c.h.b16 %v665
  %v2881 = vunpack.c.l.b16 %v666
  %v2882 = vunpack.c.h.b16 %v666
  %v2883 = vunpack.c.l.b16 %v667
  %v2884 = vunpack.c.h.b16 %v667
  %v2885 = vunpack.c.l.b16 %v668
  %v2886 = vunpack.c.h.b16 %v668
  %v2887 = vunpack.c.l.b16 %v669
  %v2888 = vunpack.c.h.b16 %v669
  %v2889 = vunpack.c.l.b16 %v670
  %v2890 = vunpack.c.h.b16 %v670
  %v2891 = vunpack.c.l.b16 %v671
  %v2892 = vunpack.c.h.b16 %v671
  %v2893 = vunpack.c.l.b16 %v672
  %v2894 = vunpack.c.h.b16 %v672
  %v2895 = vunpack.c.l.b16 %v673
  %v2896 = vunpack.c.h.b16 %v673
  %v2897 = vunpack.c.l.b16 %v674
  %v2898 = vunpack.c.h.b16 %v674
  %v2899 = vunpack.c.l.b16 %v675
  %v2900 = vunpack.c.h.b16 %v675
  %v2901 = vunpack.c.l.b16 %v676
  %v2902 = vunpack.c.h.b16 %v676
  %v2903 = vunpack.c.l.b16 %v677
  %v2904 = vunpack.c.h.b16 %v677
  %v2905 = vunpack.c.l.b16 %v678
  %v2906 = vunpack.c.h.b16 %v678
  %v2907 = vunpack.c.l.b16 %v679
  %v2908 = vunpack.c.h.b16 %v679
  %v2909 = vunpack.c.l.b16 %v680
  %v2910 = vunpack.c.h.b16 %v680
  %v2911 = vunpack.c.l.b16 %v681
  %v2912 = vunpack.c.h.b16 %v681
  %v2913 = vunpack.c.l.b16 %v682
  %v2914 = vunpack.c.h.b16 %v682
  %v2915 = vunpack.c.l.b16 %v683
  %v2916 = vunpack.c.h.b16 %v683
  %v2917 = vunpack.c.l.b16 %v684
  %v2918 = vunpack.c.h.b16 %v684
  %v2919 = vunpack.c.l.b16 %v685
  %v2920 = vunpack.c.h.b16 %v685
  %v2921 = vunpack.c.l.b16 %v686
  %v2922 = vunpack.c.h.b16 %v686
  %v2923 = vunpack.c.l.b16 %v687
  %v2924 = vunpack.c.h.b16 %v687
  %v2925 = vunpack.c.l.b16 %v688
  %v2926 = vunpack.c.h.b16 %v688
  %v2927 = vunpack.c.l.b16 %v689
  %v2928 = vunpack.c.h.b16 %v689
  %v2929 = vunpack.c.l.b16 %v690
  %v2930 = vunpack.c.h.b16 %v690
  %v2931 = vunpack.c.l.b16 %v691
  %v2932 = vunpack.c.h.b16 %v691
  %v2933 = vpack.c.b16 %v1785, %v1781
  %v2934 = vpack.c.b16 %v1786, %v1782
  %v2935 = vpack.c.b16 %v1787, %v1783
  %v2936 = vpack.c.b16 %v1788, %v1784
  %v2937 = vpack.c.b16 %v1793, %v1789
  %v2938 = vpack.c.b16 %v1794, %v1790
  %v2939 = vpack.c.b16 %v1795, %v1791
  %v2940 = vpack.c.b16 %v1796, %v1792
  %v2941 = vpack.c.b16 %v1801, %v1797
  %v2942 = vpack.c.b16 %v1802, %v1798
  %v2943 = vpack.c.b16 %v1803, %v1799
  %v2944 = vpack.c.b16 %v1804, %v1800
  %v2945 = vpack.c.b16 %v1809, %v1805
  %v2946 = vpack.c.b16 %v1810, %v1806
  %v2947 = vpack.c.b16 %v1811, %v1807
  %v2948 = vpack.c.b16 %v1812, %v1808
  %v2949 = vpack.c.b16 %v1817, %v1813
  %v2950 = vpack.c.b16 %v1818, %v1814
  %v2951 = vpack.c.b16 %v1819, %v1815
  %v2952 = vpack.c.b16 %v1820, %v1816
  %v2953 = vpack.c.b16 %v1825, %v1821
  %v2954 = vpack.c.b16 %v1826, %v1822
  %v2955 = vpack.c.b16 %v1827, %v1823
  %v2956 = vpack.c.b16 %v1828, %v1824
  %v2957 = vpack.c.b16 %v1833, %v1829
  %v2958 = vpack.c.b16 %v1834, %v1830
  %v2959 = vpack.c.b16 %v1835, %v1831
  %v2960 = vpack.c.b16 %v1836, %v1832
  %v2961 = vpack.c.b16 %v1841, %v1837
  %v2962 = vpack.c.b16 %v1842, %v1838
  %v2963 = vpack.c.b16 %v1843, %v1839
  %v2964 = vpack.c.b16 %v1844, %v1840
  %v2965 = vpack.c.b16 %v1849, %v1845
  %v2966 = vpack.c.b16 %v1850, %v1846
  %v2967 = vpack.c.b16 %v1851, %v1847
  %v2968 = vpack.c.b16 %v1852, %v1848
  %v2969 = vpack.c.b16 %v1857, %v1853
  %v2970 = vpack.c.b16 %v1858, %v1854
  %v2971 = vpack.c.b16 %v1859, %v1855
  %v2972 = vpack.c.b16 %v1860, %v1856
  %v2973 = vpack.c.b16 %v1865, %v1861
  %v2974 = vpack.c.b16 %v1866, %v1862
  %v2975 = vpack.c.b16 %v1867, %v1863
  %v2976 = vpack.c.b16 %v1868, %v1864
  %v2977 = vpack.c.b16 %v1873, %v1869
  %v2978 = vpack.c.b16 %v1874, %v1870
  %v2979 = vpack.c.b16 %v1875, %v1871
  %v2980 = vpack.c.b16 %v1876, %v1872
  %v2981 = vpack.c.b16 %v1881, %v1877
  %v2982 = vpack.c.b16 %v1882, %v1878
  %v2983 = vpack.c.b16 %v1883, %v1879
  %v2984 = vpack.c.b16 %v1884, %v1880
  %v2985 = vpack.c.b16 %v1889, %v1885
  %v2986 = vpack.c.b16 %v1890, %v1886
  %v2987 = vpack.c.b16 %v1891, %v1887
  %v2988 = vpack.c.b16 %v1892, %v1888
  %v2989 = vpack.c.b16 %v1897, %v1893
  %v2990 = vpack.c.b16 %v1898, %v1894
  %v2991 = vpack.c.b16 %v1899, %v1895
  %v2992 = vpack.c.b16 %v1900, %v1896
  %v2993 = vpack.c.b16 %v1905, %v1901
  %v2994 = vpack.c.b16 %v1906, %v1902
  %v2995 = vpack.c.b16 %v1907, %v1903
  %v2996 = vpack.c.b16 %v1908, %v1904
  %v2997 = vpack.c.b16 %v1913, %v1909
  %v2998 = vpack.c.b16 %v1914, %v1910
  %v2999 = vpack.c.b16 %v1915, %v1911
  %v3000 = vpack.c.b16 %v1916, %v1912
  %v3001 = vpack.c.b16 %v1921, %v1917
  %v3002 = vpack.c.b16 %v1922, %v1918
  %v3003 = vpack.c.b16 %v1923, %v1919
  %v3004 = vpack.c.b16 %v1924, %v1920
  %v3005 = vpack.c.b16 %v1929, %v1925
  %v3006 = vpack.c.b16 %v1930, %v1926
  %v3007 = vpack.c.b16 %v1931, %v1927
  %v3008 = vpack.c.b16 %v1932, %v1928
  %v3009 = vpack.c.b16 %v1937, %v1933
  %v3010 = vpack.c.b16 %v1938, %v1934
  %v3011 = vpack.c.b16 %v1939, %v1935
  %v3012 = vpack.c.b16 %v1940, %v1936
  %v3013 = vpack.c.b16 %v1945, %v1941
  %v3014 = vpack.c.b16 %v1946, %v1942
  %v3015 = vpack.c.b16 %v1947, %v1943
  %v3016 = vpack.c.b16 %v1948, %v1944
  %v3017 = vpack.c.b16 %v1953, %v1949
  %v3018 = vpack.c.b16 %v1954, %v1950
  %v3019 = vpack.c.b16 %v1955, %v1951
  %v3020 = vpack.c.b16 %v1956, %v1952
  %v3021 = vpack.c.b16 %v1961, %v1957
  %v3022 = vpack.c.b16 %v1962, %v1958
  %v3023 = vpack.c.b16 %v1963, %v1959
  %v3024 = vpack.c.b16 %v1964, %v1960
  %v3025 = vpack.c.b16 %v1969, %v1965
  %v3026 = vpack.c.b16 %v1970, %v1966
  %v3027 = vpack.c.b16 %v1971, %v1967
  %v3028 = vpack.c.b16 %v1972, %v1968
  %v3029 = vpack.c.b16 %v1977, %v1973
  %v3030 = vpack.c.b16 %v1978, %v1974
  %v3031 = vpack.c.b16 %v1979, %v1975
  %v3032 = vpack.c.b16 %v1980, %v1976
  %v3033 = vpack.c.b16 %v1985, %v1981
  %v3034 = vpack.c.b16 %v1986, %v1982
  %v3035 = vpack.c.b16 %v1987, %v1983
  %v3036 = vpack.c.b16 %v1988, %v1984
  %v3037 = vpack.c.b16 %v1993, %v1989
  %v3038 = vpack.c.b16 %v1994, %v1990
  %v3039 = vpack.c.b16 %v1995, %v1991
  %v3040 = vpack.c.b16 %v1996, %v1992
  %v3041 = vpack.c.b16 %v2001, %v1997
  %v3042 = vpack.c.b16 %v2002, %v1998
  %v3043 = vpack.c.b16 %v2003, %v1999
  %v3044 = vpack.c.b16 %v2004, %v2000
  %v3045 = vpack.c.b16 %v2009, %v2005
  %v3046 = vpack.c.b16 %v2010, %v2006
  %v3047 = vpack.c.b16 %v2011, %v2007
  %v3048 = vpack.c.b16 %v2012, %v2008
  %v3049 = vpack.c.b16 %v2017, %v2013
  %v3050 = vpack.c.b16 %v2018, %v2014
  %v3051 = vpack.c.b16 %v2019, %v2015
  %v3052 = vpack.c.b16 %v2020, %v2016
  %v3053 = vpack.c.b16 %v2025, %v2021
  %v3054 = vpack.c.b16 %v2026, %v2022
  %v3055 = vpack.c.b16 %v2027, %v2023
  %v3056 = vpack.c.b16 %v2028, %v2024
  %v3057 = vpack.c.b16 %v2033, %v2029
  %v3058 = vpack.c.b16 %v2034, %v2030
  %v3059 = vpack.c.b16 %v2035, %v2031
  %v3060 = vpack.c.b16 %v2036, %v2032
  %v3061 = vpack.c.b16 %v2041, %v2037
  %v3062 = vpack.c.b16 %v2042, %v2038
  %v3063 = vpack.c.b16 %v2043, %v2039
  %v3064 = vpack.c.b16 %v2044, %v2040
  %v3065 = vpack.c.b16 %v2049, %v2045
  %v3066 = vpack.c.b16 %v2050, %v2046
  %v3067 = vpack.c.b16 %v2051, %v2047
  %v3068 = vpack.c.b16 %v2052, %v2048
  %v3069 = vpack.c.b16 %v2057, %v2053
  %v3070 = vpack.c.b16 %v2058, %v2054
  %v3071 = vpack.c.b16 %v2059, %v2055
  %v3072 = vpack.c.b16 %v2060, %v2056
  %v3073 = vpack.c.b16 %v2065, %v2061
  %v3074 = vpack.c.b16 %v2066, %v2062
  %v3075 = vpack.c.b16 %v2067, %v2063
  %v3076 = vpack.c.b16 %v2068, %v2064
  %v3077 = vpack.c.b16 %v2073, %v2069
  %v3078 = vpack.c.b16 %v2074, %v2070
  %v3079 = vpack.c.b16 %v2075, %v2071
  %v3080 = vpack.c.b16 %v2076, %v2072
  %v3081 = vpack.c.b16 %v2081, %v2077
  %v3082 = vpack.c.b16 %v2082, %v2078
  %v3083 = vpack.c.b16 %v2083, %v2079
  %v3084 = vpack.c.b16 %v2084, %v2080
  %v3085 = vpack.c.b16 %v2089, %v2085
  %v3086 = vpack.c.b16 %v2090, %v2086
  %v3087 = vpack.c.b16 %v2091, %v2087
  %v3088 = vpack.c.b16 %v2092, %v2088
  %v3089 = vpack.c.b16 %v2097, %v2093
  %v3090 = vpack.c.b16 %v2098, %v2094
  %v3091 = vpack.c.b16 %v2099, %v2095
  %v3092 = vpack.c.b16 %v2100, %v2096
  %v3093 = vpack.c.b16 %v2105, %v2101
  %v3094 = vpack.c.b16 %v2106, %v2102
  %v3095 = vpack.c.b16 %v2107, %v2103
  %v3096 = vpack.c.b16 %v2108, %v2104
  %v3097 = vpack.c.b16 %v2113, %v2109
  %v3098 = vpack.c.b16 %v2114, %v2110
  %v3099 = vpack.c.b16 %v2115, %v2111
  %v3100 = vpack.c.b16 %v2116, %v2112
  %v3101 = vpack.c.b16 %v2121, %v2117
  %v3102 = vpack.c.b16 %v2122, %v2118
  %v3103 = vpack.c.b16 %v2123, %v2119
  %v3104 = vpack.c.b16 %v2124, %v2120
  %v3105 = vpack.c.b16 %v2129, %v2125
  %v3106 = vpack.c.b16 %v2130, %v2126
  %v3107 = vpack.c.b16 %v2131, %v2127
  %v3108 = vpack.c.b16 %v2132, %v2128
  %v3109 = vpack.c.b16 %v2137, %v2133
  %v3110 = vpack.c.b16 %v2138, %v2134
  %v3111 = vpack.c.b16 %v2139, %v2135
  %v3112 = vpack.c.b16 %v2140, %v2136
  %v3113 = vpack.c.b16 %v2145, %v2141
  %v3114 = vpack.c.b16 %v2146, %v2142
  %v3115 = vpack.c.b16 %v2147, %v2143
  %v3116 = vpack.c.b16 %v2148, %v2144
  %v3117 = vpack.c.b16 %v2153, %v2149
  %v3118 = vpack.c.b16 %v2154, %v2150
  %v3119 = vpack.c.b16 %v2155, %v2151
  %v3120 = vpack.c.b16 %v2156, %v2152
  %v3121 = vpack.c.b16 %v2161, %v2157
  %v3122 = vpack.c.b16 %v2162, %v2158
  %v3123 = vpack.c.b16 %v2163, %v2159
  %v3124 = vpack.c.b16 %v2164, %v2160
  %v3125 = vpack.c.b16 %v2169, %v2165
  %v3126 = vpack.c.b16 %v2170, %v2166
  %v3127 = vpack.c.b16 %v2171, %v2167
  %v3128 = vpack.c.b16 %v2172, %v2168
  %v3129 = vpack.c.b16 %v2177, %v2173
  %v3130 = vpack.c.b16 %v2178, %v2174
  %v3131 = vpack.c.b16 %v2179, %v2175
  %v3132 = vpack.c.b16 %v2180, %v2176
  %v3133 = vpack.c.b16 %v2185, %v2181
  %v3134 = vpack.c.b16 %v2186, %v2182
  %v3135 = vpack.c.b16 %v2187, %v2183
  %v3136 = vpack.c.b16 %v2188, %v2184
  %v3137 = vpack.c.b16 %v2193, %v2189
  %v3138 = vpack.c.b16 %v2194, %v2190
  %v3139 = vpack.c.b16 %v2195, %v2191
  %v3140 = vpack.c.b16 %v2196, %v2192
  %v3141 = vpack.c.b16 %v2201, %v2197
  %v3142 = vpack.c.b16 %v2202, %v2198
  %v3143 = vpack.c.b16 %v2203, %v2199
  %v3144 = vpack.c.b16 %v2204, %v2200
  %v3145 = vpack.c.b16 %v2209, %v2205
  %v3146 = vpack.c.b16 %v2210, %v2206
  %v3147 = vpack.c.b16 %v2211, %v2207
  %v3148 = vpack.c.b16 %v2212, %v2208
  %v3149 = vpack.c.b16 %v2217, %v2213
  %v3150 = vpack.c.b16 %v2218, %v2214
  %v3151 = vpack.c.b16 %v2219, %v2215
  %v3152 = vpack.c.b16 %v2220, %v2216
  %v3153 = vpack.c.b16 %v2225, %v2221
  %v3154 = vpack.c.b16 %v2226, %v2222
  %v3155 = vpack.c.b16 %v2227, %v2223
  %v3156 = vpack.c.b16 %v2228, %v2224
  %v3157 = vpack.c.b16 %v2233, %v2229
  %v3158 = vpack.c.b16 %v2234, %v2230
  %v3159 = vpack.c.b16 %v2235, %v2231
  %v3160 = vpack.c.b16 %v2236, %v2232
  %v3161 = vpack.c.b16 %v2241, %v2237
  %v3162 = vpack.c.b16 %v2242, %v2238
  %v3163 = vpack.c.b16 %v2243, %v2239
  %v3164 = vpack.c.b16 %v2244, %v2240
  %v3165 = vpack.c.b16 %v2249, %v2245
  %v3166 = vpack.c.b16 %v2250, %v2246
  %v3167 = vpack.c.b16 %v2251, %v2247
  %v3168 = vpack.c.b16 %v2252, %v2248
  %v3169 = vpack.c.b16 %v2257, %v2253
  %v3170 = vpack.c.b16 %v2258, %v2254
  %v3171 = vpack.c.b16 %v2259, %v2255
  %v3172 = vpack.c.b16 %v2260, %v2256
  %v3173 = vpack.c.b16 %v2265, %v2261
  %v3174 = vpack.c.b16 %v2266, %v2262
  %v3175 = vpack.c.b16 %v2267, %v2263
  %v3176 = vpack.c.b16 %v2268, %v2264
  %v3177 = vpack.c.b16 %v2273, %v2269
  %v3178 = vpack.c.b16 %v2274, %v2270
  %v3179 = vpack.c.b16 %v2275, %v2271
  %v3180 = vpack.c.b16 %v2276, %v2272
  %v3181 = vpack.c.b16 %v2281, %v2277
  %v3182 = vpack.c.b16 %v2282, %v2278
  %v3183 = vpack.c.b16 %v2283, %v2279
  %v3184 = vpack.c.b16 %v2284, %v2280
  %v3185 = vpack.c.b16 %v2289, %v2285
  %v3186 = vpack.c.b16 %v2290, %v2286
  %v3187 = vpack.c.b16 %v2291, %v2287
  %v3188 = vpack.c.b16 %v2292, %v2288
  %v3189 = vpack.c.b16 %v2297, %v2293
  %v3190 = vpack.c.b16 %v2298, %v2294
  %v3191 = vpack.c.b16 %v2299, %v2295
  %v3192 = vpack.c.b16 %v2300, %v2296
  %v3193 = vpack.c.b16 %v2305, %v2301
  %v3194 = vpack.c.b16 %v2306, %v2302
  %v3195 = vpack.c.b16 %v2307, %v2303
  %v3196 = vpack.c.b16 %v2308, %v2304
  %v3197 = vpack.c.b16 %v2313, %v2309
  %v3198 = vpack.c.b16 %v2314, %v2310
  %v3199 = vpack.c.b16 %v2315, %v2311
  %v3200 = vpack.c.b16 %v2316, %v2312
  %v3201 = vpack.c.b16 %v2321, %v2317
  %v3202 = vpack.c.b16 %v2322, %v2318
  %v3203 = vpack.c.b16 %v2323, %v2319
  %v3204 = vpack.c.b16 %v2324, %v2320
  %v3205 = vpack.c.b16 %v2329, %v2325
  %v3206 = vpack.c.b16 %v2330, %v2326
  %v3207 = vpack.c.b16 %v2331, %v2327
  %v3208 = vpack.c.b16 %v2332, %v2328
  %v3209 = vpack.c.b16 %v2337, %v2333
  %v3210 = vpack.c.b16 %v2338, %v2334
  %v3211 = vpack.c.b16 %v2339, %v2335
  %v3212 = vpack.c.b16 %v2340, %v2336
  %v3213 = vpack.c.b16 %v2345, %v2341
  %v3214 = vpack.c.b16 %v2346, %v2342
  %v3215 = vpack.c.b16 %v2347, %v2343
  %v3216 = vpack.c.b16 %v2348, %v2344
  %v3217 = vpack.c.b16 %v2353, %v2349
  %v3218 = vpack.c.b16 %v2354, %v2350
  %v3219 = vpack.c.b16 %v2355, %v2351
  %v3220 = vpack.c.b16 %v2356, %v2352
  %v3221 = vpack.c.b16 %v2361, %v2357
  %v3222 = vpack.c.b16 %v2362, %v2358
  %v3223 = vpack.c.b16 %v2363, %v2359
  %v3224 = vpack.c.b16 %v2364, %v2360
  %v3225 = vpack.c.b16 %v2369, %v2365
  %v3226 = vpack.c.b16 %v2370, %v2366
  %v3227 = vpack.c.b16 %v2371, %v2367
  %v3228 = vpack.c.b16 %v2372, %v2368
  %v3229 = vpack.c.b16 %v2377, %v2373
  %v3230 = vpack.c.b16 %v2378, %v2374
  %v3231 = vpack.c.b16 %v2379, %v2375
  %v3232 = vpack.c.b16 %v2380, %v2376
  %v3233 = vpack.c.b16 %v2385, %v2381
  %v3234 = vpack.c.b16 %v2386, %v2382
  %v3235 = vpack.c.b16 %v2387, %v2383
  %v3236 = vpack.c.b16 %v2388, %v2384
  %v3237 = vpack.c.b16 %v2393, %v2389
  %v3238 = vpack.c.b16 %v2394, %v2390
  %v3239 = vpack.c.b16 %v2395, %v2391
  %v3240 = vpack.c.b16 %v2396, %v2392
  %v3241 = vpack.c.b16 %v2401, %v2397
  %v3242 = vpack.c.b16 %v2402, %v2398
  %v3243 = vpack.c.b16 %v2403, %v2399
  %v3244 = vpack.c.b16 %v2404, %v2400
  %v3245 = vpack.c.b16 %v2409, %v2405
  %v3246 = vpack.c.b16 %v2410, %v2406
  %v3247 = vpack.c.b16 %v2411, %v2407
  %v3248 = vpack.c.b16 %v2412, %v2408
  %v3249 = vpack.c.b16 %v2417, %v2413
  %v3250 = vpack.c.b16 %v2418, %v2414
  %v3251 = vpack.c.b16 %v2419, %v2415
  %v3252 = vpack.c.b16 %v2420, %v2416
  %v3253 = vpack.c.b16 %v2425, %v2421
  %v3254 = vpack.c.b16 %v2426, %v2422
  %v3255 = vpack.c.b16 %v2427, %v2423
  %v3256 = vpack.c.b16 %v2428, %v2424
  %v3257 = vpack.c.b16 %v2433, %v2429
  %v3258 = vpack.c.b16 %v2434, %v2430
  %v3259 = vpack.c.b16 %v2435, %v2431
  %v3260 = vpack.c.b16 %v2436, %v2432
  %v3261 = vpack.c.b16 %v2441, %v2437
  %v3262 = vpack.c.b16 %v2442, %v2438
  %v3263 = vpack.c.b16 %v2443, %v2439
  %v3264 = vpack.c.b16 %v2444, %v2440
  %v3265 = vpack.c.b16 %v2449, %v2445
  %v3266 = vpack.c.b16 %v2450, %v2446
  %v3267 = vpack.c.b16 %v2451, %v2447
  %v3268 = vpack.c.b16 %v2452, %v2448
  %v3269 = vpack.c.b16 %v2457, %v2453
  %v3270 = vpack.c.b16 %v2458, %v2454
  %v3271 = vpack.c.b16 %v2459, %v2455
  %v3272 = vpack.c.b16 %v2460, %v2456
  %v3273 = vpack.c.b16 %v2465, %v2461
  %v3274 = vpack.c.b16 %v2466, %v2462
  %v3275 = vpack.c.b16 %v2467, %v2463
  %v3276 = vpack.c.b16 %v2468, %v2464
  %v3277 = vpack.c.b16 %v2473, %v2469
  %v3278 = vpack.c.b16 %v2474, %v2470
  %v3279 = vpack.c.b16 %v2475, %v2471
  %v3280 = vpack.c.b16 %v2476, %v2472
  %v3281 = vpack.c.b16 %v2481, %v2477
  %v3282 = vpack.c.b16 %v2482, %v2478
  %v3283 = vpack.c.b16 %v2483, %v2479
  %v3284 = vpack.c.b16 %v2484, %v2480
  %v3285 = vpack.c.b16 %v2489, %v2485
  %v3286 = vpack.c.b16 %v2490, %v2486
  %v3287 = vpack.c.b16 %v2491, %v2487
  %v3288 = vpack.c.b16 %v2492, %v2488
  %v3289 = vpack.c.b16 %v2497, %v2493
  %v3290 = vpack.c.b16 %v2498, %v2494
  %v3291 = vpack.c.b16 %v2499, %v2495
  %v3292 = vpack.c.b16 %v2500, %v2496
  %v3293 = vpack.c.b16 %v2505, %v2501
  %v3294 = vpack.c.b16 %v2506, %v2502
  %v3295 = vpack.c.b16 %v2507, %v2503
  %v3296 = vpack.c.b16 %v2508, %v2504
  %v3297 = vpack.c.b16 %v2513, %v2509
  %v3298 = vpack.c.b16 %v2514, %v2510
  %v3299 = vpack.c.b16 %v2515, %v2511
  %v3300 = vpack.c.b16 %v2516, %v2512
  %v3301 = vpack.c.b16 %v2521, %v2517
  %v3302 = vpack.c.b16 %v2522, %v2518
  %v3303 = vpack.c.b16 %v2523, %v2519
  %v3304 = vpack.c.b16 %v2524, %v2520
  %v3305 = vpack.c.b16 %v2529, %v2525
  %v3306 = vpack.c.b16 %v2530, %v2526
  %v3307 = vpack.c.b16 %v2531, %v2527
  %v3308 = vpack.c.b16 %v2532, %v2528
  %v3309 = vpack.c.b16 %v2537, %v2533
  %v3310 = vpack.c.b16 %v2538, %v2534
  %v3311 = vpack.c.b16 %v2539, %v2535
  %v3312 = vpack.c.b16 %v2540, %v2536
  %v3313 = vpack.c.b16 %v2545, %v2541
  %v3314 = vpack.c.b16 %v2546, %v2542
  %v3315 = vpack.c.b16 %v2547, %v2543
  %v3316 = vpack.c.b16 %v2548, %v2544
  %v3317 = vpack.c.b16 %v2553, %v2549
  %v3318 = vpack.c.b16 %v2554, %v2550
  %v3319 = vpack.c.b16 %v2555, %v2551
  %v3320 = vpack.c.b16 %v2556, %v2552
  %v3321 = vpack.c.b16 %v2561, %v2557
  %v3322 = vpack.c.b16 %v2562, %v2558
  %v3323 = vpack.c.b16 %v2563, %v2559
  %v3324 = vpack.c.b16 %v2564, %v2560
  %v3325 = vpack.c.b16 %v2569, %v2565
  %v3326 = vpack.c.b16 %v2570, %v2566
  %v3327 = vpack.c.b16 %v2571, %v2567
  %v3328 = vpack.c.b16 %v2572, %v2568
  %v3329 = vpack.c.b16 %v2577, %v2573
  %v3330 = vpack.c.b16 %v2578, %v2574
  %v3331 = vpack.c.b16 %v2579, %v2575
  %v3332 = vpack.c.b16 %v2580, %v2576
  %v3333 = vpack.c.b16 %v2585, %v2581
  %v3334 = vpack.c.b16 %v2586, %v2582
  %v3335 = vpack.c.b16 %v2587, %v2583
  %v3336 = vpack.c.b16 %v2588, %v2584
  %v3337 = vpack.c.b16 %v2593, %v2589
  %v3338 = vpack.c.b16 %v2594, %v2590
  %v3339 = vpack.c.b16 %v2595, %v2591
  %v3340 = vpack.c.b16 %v2596, %v2592
  %v3341 = vpack.c.b16 %v2601, %v2597
  %v3342 = vpack.c.b16 %v2602, %v2598
  %v3343 = vpack.c.b16 %v2603, %v2599
  %v3344 = vpack.c.b16 %v2604, %v2600
  %v3345 = vpack.c.b16 %v2609, %v2605
  %v3346 = vpack.c.b16 %v2610, %v2606
  %v3347 = vpack.c.b16 %v2611, %v2607
  %v3348 = vpack.c.b16 %v2612, %v2608
  %v3349 = vpack.c.b16 %v2617, %v2613
  %v3350 = vpack.c.b16 %v2618, %v2614
  %v3351 = vpack.c.b16 %v2619, %v2615
  %v3352 = vpack.c.b16 %v2620, %v2616
  %v3353 = vpack.c.b16 %v2625, %v2621
  %v3354 = vpack.c.b16 %v2626, %v2622
  %v3355 = vpack.c.b16 %v2627, %v2623
  %v3356 = vpack.c.b16 %v2628, %v2624
  %v3357 = vpack.c.b16 %v2633, %v2629
  %v3358 = vpack.c.b16 %v2634, %v2630
  %v3359 = vpack.c.b16 %v2635, %v2631
  %v3360 = vpack.c.b16 %v2636, %v2632
  %v3361 = vpack.c.b16 %v2641, %v2637
  %v3362 = vpack.c.b16 %v2642, %v2638
  %v3363 = vpack.c.b16 %v2643, %v2639
  %v3364 = vpack.c.b16 %v2644, %v2640
  %v3365 = vpack.c.b16 %v2649, %v2645
  %v3366 = vpack.c.b16 %v2650, %v2646
  %v3367 = vpack.c.b16 %v2651, %v2647
  %v3368 = vpack.c.b16 %v2652, %v2648
  %v3369 = vpack.c.b16 %v2657, %v2653
  %v3370 = vpack.c.b16 %v2658, %v2654
  %v3371 = vpack.c.b16 %v2659, %v2655
  %v3372 = vpack.c.b16 %v2660, %v2656
  %v3373 = vpack.c.b16 %v2665, %v2661
  %v3374 = vpack.c.b16 %v2666, %v2662
  %v3375 = vpack.c.b16 %v2667, %v2663
  %v3376 = vpack.c.b16 %v2668, %v2664
  %v3377 = vpack.c.b16 %v2673, %v2669
  %v3378 = vpack.c.b16 %v2674, %v2670
  %v3379 = vpack.c.b16 %v2675, %v2671
  %v3380 = vpack.c.b16 %v2676, %v2672
  %v3381 = vpack.c.b16 %v2681, %v2677
  %v3382 = vpack.c.b16 %v2682, %v2678
  %v3383 = vpack.c.b16 %v2683, %v2679
  %v3384 = vpack.c.b16 %v2684, %v2680
  %v3385 = vpack.c.b16 %v2689, %v2685
  %v3386 = vpack.c.b16 %v2690, %v2686
  %v3387 = vpack.c.b16 %v2691, %v2687
  %v3388 = vpack.c.b16 %v2692, %v2688
  %v3389 = vpack.c.b16 %v2697, %v2693
  %v3390 = vpack.c.b16 %v2698, %v2694
  %v3391 = vpack.c.b16 %v2699, %v2695
  %v3392 = vpack.c.b16 %v2700, %v2696
  %v3393 = vpack.c.b16 %v2705, %v2701
  %v3394 = vpack.c.b16 %v2706, %v2702
  %v3395 = vpack.c.b16 %v2707, %v2703
  %v3396 = vpack.c.b16 %v2708, %v2704
  %v3397 = vpack.c.b16 %v2713, %v2709
  %v3398 = vpack.c.b16 %v2714, %v2710
  %v3399 = vpack.c.b16 %v2715, %v2711
  %v3400 = vpack.c.b16 %v2716, %v2712
  %v3401 = vpack.c.b16 %v2721, %v2717
  %v3402 = vpack.c.b16 %v2722, %v2718
  %v3403 = vpack.c.b16 %v2723, %v2719
  %v3404 = vpack.c.b16 %v2724, %v2720
  %v3405 = vpack.c.b16 %v2729, %v2725
  %v3406 = vpack.c.b16 %v2730, %v2726
  %v3407 = vpack.c.b16 %v2731, %v2727
  %v3408 = vpack.c.b16 %v2732, %v2728
  %v3409 = vpack.c.b16 %v2737, %v2733
  %v3410 = vpack.c.b16 %v2738, %v2734
  %v3411 = vpack.c.b16 %v2739, %v2735
  %v3412 = vpack.c.b16 %v2740, %v2736
  %v3413 = vpack.c.b16 %v2745, %v2741
  %v3414 = vpack.c.b16 %v2746, %v2742
  %v3415 = vpack.c.b16 %v2747, %v2743
  %v3416 = vpack.c.b16 %v2748, %v2744
  %v3417 = vpack.c.b16 %v2753, %v2749
  %v3418 = vpack.c.b16 %v2754, %v2750
  %v3419 = vpack.c.b16 %v2755, %v2751
  %v3420 = vpack.c.b16 %v2756, %v2752
  %v3421 = vpack.c.b16 %v2761, %v2757
  %v3422 = vpack.c.b16 %v2762, %v2758
  %v3423 = vpack.c.b16 %v2763, %v2759
  %v3424 = vpack.c.b16 %v2764, %v2760
  %v3425 = vpack.c.b16 %v2769, %v2765
  %v3426 = vpack.c.b16 %v2770, %v2766
  %v3427 = vpack.c.b16 %v2771, %v2767
  %v3428 = vpack.c.b16 %v2772, %v2768
  %v3429 = vpack.c.b16 %v2777, %v2773
  %v3430 = vpack.c.b16 %v2778, %v2774
  %v3431 = vpack.c.b16 %v2779, %v2775
  %v3432 = vpack.c.b16 %v2780, %v2776
  %v3433 = vpack.c.b16 %v2785, %v2781
  %v3434 = vpack.c.b16 %v2786, %v2782
  %v3435 = vpack.c.b16 %v2787, %v2783
  %v3436 = vpack.c.b16 %v2788, %v2784
  %v3437 = vpack.c.b16 %v2793, %v2789
  %v3438 = vpack.c.b16 %v2794, %v2790
  %v3439 = vpack.c.b16 %v2795, %v2791
  %v3440 = vpack.c.b16 %v2796, %v2792
  %v3441 = vpack.c.b16 %v2801, %v2797
  %v3442 = vpack.c.b16 %v2802, %v2798
  %v3443 = vpack.c.b16 %v2803, %v2799
  %v3444 = vpack.c.b16 %v2804, %v2800
  %v3445 = vpack.c.b16 %v2809, %v2805
  %v3446 = vpack.c.b16 %v2810, %v2806
  %v3447 = vpack.c.b16 %v2811, %v2807
  %v3448 = vpack.c.b16 %v2812, %v2808
  %v3449 = vpack.c.b16 %v2817, %v2813
  %v3450 = vpack.c.b16 %v2818, %v2814
  %v3451 = vpack.c.b16 %v2819, %v2815
  %v3452 = vpack.c.b16 %v2820, %v2816
  %v3453 = vpack.c.b16 %v2825, %v2821
  %v3454 = vpack.c.b16 %v2826, %v2822
  %v3455 = vpack.c.b16 %v2827, %v2823
  %v3456 = vpack.c.b16 %v2828, %v2824
  %v3457 = vpack.c.b16 %v2833, %v2829
  %v3458 = vpack.c.b16 %v2834, %v2830
  %v3459 = vpack.c.b16 %v2835, %v2831
  %v3460 = vpack.c.b16 %v2836, %v2832
  %v3461 = vpack.c.b16 %v2841, %v2837
  %v3462 = vpack.c.b16 %v2842, %v2838
  %v3463 = vpack.c.b16 %v2843, %v2839
  %v3464 = vpack.c.b16 %v2844, %v2840
  %v3465 = vpack.c.b16 %v2849, %v2845
  %v3466 = vpack.c.b16 %v2850, %v2846
  %v3467 = vpack.c.b16 %v2851, %v2847
  %v3468 = vpack.c.b16 %v2852, %v2848
  %v3469 = vpack.c.b16 %v2857, %v2853
  %v3470 = vpack.c.b16 %v2858, %v2854
  %v3471 = vpack.c.b16 %v2859, %v2855
  %v3472 = vpack.c.b16 %v2860, %v2856
  %v3473 = vpack.c.b16 %v2865, %v2861
  %v3474 = vpack.c.b16 %v2866, %v2862
  %v3475 = vpack.c.b16 %v2867, %v2863
  %v3476 = vpack.c.b16 %v2868, %v2864
  %v3477 = vpack.c.b16 %v2873, %v2869
  %v3478 = vpack.c.b16 %v2874, %v2870
  %v3479 = vpack.c.b16 %v2875, %v2871
  %v3480 = vpack.c.b16 %v2876, %v2872
  %v3481 = vpack.c.b16 %v2881, %v2877
  %v3482 = vpack.c.b16 %v2882, %v2878
  %v3483 = vpack.c.b16 %v2883, %v2879
  %v3484 = vpack.c.b16 %v2884, %v2880
  %v3485 = vpack.c.b16 %v2889, %v2885
  %v3486 = vpack.c.b16 %v2890, %v2886
  %v3487 = vpack.c.b16 %v2891, %v2887
  %v3488 = vpack.c.b16 %v2892, %v2888
  %v3489 = vpack.c.b16 %v2897, %v2893
  %v3490 = vpack.c.b16 %v2898, %v2894
  %v3491 = vpack.c.b16 %v2899, %v2895
  %v3492 = vpack.c.b16 %v2900, %v2896
  %v3493 = vpack.c.b16 %v2905, %v2901
  %v3494 = vpack.c.b16 %v2906, %v2902
  %v3495 = vpack.c.b16 %v2907, %v2903
  %v3496 = vpack.c.b16 %v2908, %v2904
  %v3497 = vpack.c.b16 %v2913, %v2909
  %v3498 = vpack.c.b16 %v2914, %v2910
  %v3499 = vpack.c.b16 %v2915, %v2911
  %v3500 = vpack.c.b16 %v2916, %v2912
  %v3501 = vpack.c.b16 %v2921, %v2917
  %v3502 = vpack.c.b16 %v2922, %v2918
  %v3503 = vpack.c.b16 %v2923, %v2919
  %v3504 = vpack.c.b16 %v2924, %v2920
  %v3505 = vpack.c.b16 %v2929, %v2925
  %v3506 = vpack.c.b16 %v2930, %v2926
  %v3507 = vpack.c.b16 %v2931, %v2927
  %v3508 = vpack.c.b16 %v2932, %v2928
  %4085 = vmatprep.subr.bf16.mxu0 %v2934
  %4086 = vmatpush1.bf16.msra.mxu0 %v2933
  %4087 = vmatprep.subr.bf16.mxu0 %v2938
  %4088 = vmatpush1.bf16.msra.mxu0 %v2937
  %4089 = vmatprep.subr.bf16.mxu0 %v2942
  %4090 = vmatpush1.bf16.msra.mxu0 %v2941
  %4091 = vmatprep.subr.bf16.mxu0 %v2946
  %4092 = vmatpush1.bf16.msra.mxu0 %v2945
  %4093 = vmatprep.subr.bf16.mxu0 %v2950
  %4094 = vmatpush1.bf16.msra.mxu0 %v2949
  %4095 = vmatprep.subr.bf16.mxu0 %v2954
  %4096 = vmatpush1.bf16.msra.mxu0 %v2953
  %4097 = vmatprep.subr.bf16.mxu0 %v2958
  %4098 = vmatpush1.bf16.msra.mxu0 %v2957
  %4099 = vmatprep.subr.bf16.mxu0 %v2962
  %4100 = vmatpush1.bf16.msra.mxu0 %v2961
  %4101 = vmatprep.subr.bf16.mxu0 %v2966
  %4102 = vmatpush1.bf16.msra.mxu0 %v2965
  %4103 = vmatprep.subr.bf16.mxu0 %v2970
  %4104 = vmatpush1.bf16.msra.mxu0 %v2969
  %4105 = vmatprep.subr.bf16.mxu0 %v2974
  %4106 = vmatpush1.bf16.msra.mxu0 %v2973
  %4107 = vmatprep.subr.bf16.mxu0 %v2978
  %4108 = vmatpush1.bf16.msra.mxu0 %v2977
  %4109 = vmatprep.subr.bf16.mxu0 %v2982
  %4110 = vmatpush1.bf16.msra.mxu0 %v2981
  %4111 = vmatprep.subr.bf16.mxu0 %v2986
  %4112 = vmatpush1.bf16.msra.mxu0 %v2985
  %4113 = vmatprep.subr.bf16.mxu0 %v2990
  %4114 = vmatpush1.bf16.msra.mxu0 %v2989
  %4115 = vmatprep.subr.bf16.mxu0 %v2994
  %4116 = vmatpush1.bf16.msra.mxu0 %v2993
  %4117 = vmatprep.mubr.bf16.mxu0 %v990
  %4118 = vmatmul.mubr.bf16.gmra.mrb[0].mxu0 %v989
  %v4119 = vpop.f32.mrb[0].mxu0
  %v4120 = vadd.f32 0.0, %v4119
  %v4121 = vpop.f32.mrb[0].mxu0
  %v4122 = vadd.f32 0.0, %v4121
  %v4123 = vpop.f32.mrb[0].mxu0
  %v4124 = vadd.f32 0.0, %v4123
  %v4125 = vpop.f32.mrb[0].mxu0
  %v4126 = vadd.f32 0.0, %v4125
  %4127 = vmatprep.mubr.bf16.mxu0 %v1008
  %4128 = vmatmul.mubr.bf16.gmra.mrb[0].mxu0 %v1007
  %v4129 = vpop.f32.mrb[0].mxu0
  %v4130 = vadd.f32 0.0, %v4129
  %v4131 = vpop.f32.mrb[0].mxu0
  %v4132 = vadd.f32 0.0, %v4131
  %v4133 = vpop.f32.mrb[0].mxu0
  %v4134 = vadd.f32 0.0, %v4133
  %v4135 = vpop.f32.mrb[0].mxu0
  %v4136 = vadd.f32 0.0, %v4135
  %4137 = vmatprep.mubr.bf16.mxu0 %v1026
  %4138 = vmatmul.mubr.bf16.gmra.mrb[0].mxu0 %v1025
  %v4139 = vpop.f32.mrb[0].mxu0
  %v4140 = vadd.f32 0.0, %v4139
  %v4141 = vpop.f32.mrb[0].mxu0
  %v4142 = vadd.f32 0.0, %v4141
  %v4143 = vpop.f32.mrb[0].mxu0
  %v4144 = vadd.f32 0.0, %v4143
  %v4145 = vpop.f32.mrb[0].mxu0
  %v4146 = vadd.f32 0.0, %v4145
  %4147 = vmatprep.mubr.bf16.mxu0 %v1044
  %4148 = vmatmul.mubr.bf16.gmra.mrb[0].mxu0 %v1043
  %v4149 = vpop.f32.mrb[0].mxu0
  %v4150 = vadd.f32 0.0, %v4149
  %v4151 = vpop.f32.mrb[0].mxu0
  %v4152 = vadd.f32 0.0, %v4151
  %v4153 = vpop.f32.mrb[0].mxu0
  %v4154 = vadd.f32 0.0, %v4153
  %v4155 = vpop.f32.mrb[0].mxu0
  %v4156 = vadd.f32 0.0, %v4155
  %4157 = vmatprep.mubr.bf16.mxu0 %v1062
  %4158 = vmatmul.mubr.bf16.gmra.mrb[0].mxu0 %v1061
  %v4159 = vpop.f32.mrb[0].mxu0
  %v4160 = vadd.f32 0.0, %v4159
  %v4161 = vpop.f32.mrb[0].mxu0
  %v4162 = vadd.f32 0.0, %v4161
  %v4163 = vpop.f32.mrb[0].mxu0
  %v4164 = vadd.f32 0.0, %v4163
  %v4165 = vpop.f32.mrb[0].mxu0
  %v4166 = vadd.f32 0.0, %v4165
  %4167 = vmatprep.mubr.bf16.mxu0 %v1080
  %4168 = vmatmul.mubr.bf16.gmra.mrb[0].mxu0 %v1079
  %v4169 = vpop.f32.mrb[0].mxu0
  %v4170 = vadd.f32 0.0, %v4169
  %v4171 = vpop.f32.mrb[0].mxu0
  %v4172 = vadd.f32 0.0, %v4171
  %v4173 = vpop.f32.mrb[0].mxu0
  %v4174 = vpop.f32.mrb[0].mxu0
  %4175 = vdwg.mxu0
  %4176 = vmatprep.subr.bf16.mxu0 %v2998
  %4177 = vmatpush1.bf16.msra.mxu0 %v2997
  %4178 = vmatprep.subr.bf16.mxu0 %v3002
  %4179 = vmatpush1.bf16.msra.mxu0 %v3001
  %4180 = vmatprep.subr.bf16.mxu0 %v3006
  %4181 = vmatpush1.bf16.msra.mxu0 %v3005
  %4182 = vmatprep.subr.bf16.mxu0 %v3010
  %4183 = vmatpush1.bf16.msra.mxu0 %v3009
  %4184 = vmatprep.subr.bf16.mxu0 %v3014
  %4185 = vmatpush1.bf16.msra.mxu0 %v3013
  %4186 = vmatprep.subr.bf16.mxu0 %v3018
  %4187 = vmatpush1.bf16.msra.mxu0 %v3017
  %4188 = vmatprep.subr.bf16.mxu0 %v3022
  %4189 = vmatpush1.bf16.msra.mxu0 %v3021
  %4190 = vmatprep.subr.bf16.mxu0 %v3026
  %4191 = vmatpush1.bf16.msra.mxu0 %v3025
  %4192 = vmatprep.subr.bf16.mxu0 %v3030
  %4193 = vmatpush1.bf16.msra.mxu0 %v3029
  %4194 = vmatprep.subr.bf16.mxu0 %v3034
  %4195 = vmatpush1.bf16.msra.mxu0 %v3033
  %4196 = vmatprep.subr.bf16.mxu0 %v3038
  %4197 = vmatpush1.bf16.msra.mxu0 %v3037
  %4198 = vmatprep.subr.bf16.mxu0 %v3042
  %4199 = vmatpush1.bf16.msra.mxu0 %v3041
  %4200 = vmatprep.subr.bf16.mxu0 %v3046
  %4201 = vmatpush1.bf16.msra.mxu0 %v3045
  %4202 = vmatprep.subr.bf16.mxu0 %v3050
  %4203 = vmatpush1.bf16.msra.mxu0 %v3049
  %4204 = vmatprep.subr.bf16.mxu0 %v3054
  %4205 = vmatpush1.bf16.msra.mxu0 %v3053
  %4206 = vmatprep.subr.bf16.mxu0 %v3058
  %4207 = vmatpush1.bf16.msra.mxu0 %v3057
  %4208 = vmatprep.mubr.bf16.mxu0 %v992
  %4209 = vmatmul.mubr.bf16.gmra.mrb[0].mxu0 %v991
  %v4210 = vpop.f32.mrb[0].mxu0
  %v4211 = vadd.f32 %v4120, %v4210
  %v4212 = vpop.f32.mrb[0].mxu0
  %v4213 = vadd.f32 %v4122, %v4212
  %v4214 = vpop.f32.mrb[0].mxu0
  %v4215 = vadd.f32 %v4124, %v4214
  %v4216 = vpop.f32.mrb[0].mxu0
  %v4217 = vadd.f32 %v4126, %v4216
  %4218 = vmatprep.mubr.bf16.mxu0 %v1010
  %4219 = vmatmul.mubr.bf16.gmra.mrb[0].mxu0 %v1009
  %v4220 = vpop.f32.mrb[0].mxu0
  %v4221 = vadd.f32 %v4130, %v4220
  %v4222 = vpop.f32.mrb[0].mxu0
  %v4223 = vadd.f32 %v4132, %v4222
  %v4224 = vpop.f32.mrb[0].mxu0
  %v4225 = vadd.f32 %v4134, %v4224
  %v4226 = vpop.f32.mrb[0].mxu0
  %v4227 = vadd.f32 %v4136, %v4226
  %4228 = vmatprep.mubr.bf16.mxu0 %v1028
  %4229 = vmatmul.mubr.bf16.gmra.mrb[0].mxu0 %v1027
  %v4230 = vpop.f32.mrb[0].mxu0
  %v4231 = vadd.f32 %v4140, %v4230
  %v4232 = vpop.f32.mrb[0].mxu0
  %v4233 = vadd.f32 %v4142, %v4232
  %v4234 = vpop.f32.mrb[0].mxu0
  %v4235 = vadd.f32 %v4144, %v4234
  %v4236 = vpop.f32.mrb[0].mxu0
  %v4237 = vadd.f32 %v4146, %v4236
  %4238 = vmatprep.mubr.bf16.mxu0 %v1046
  %4239 = vmatmul.mubr.bf16.gmra.mrb[0].mxu0 %v1045
  %v4240 = vpop.f32.mrb[0].mxu0
  %v4241 = vadd.f32 %v4150, %v4240
  %v4242 = vpop.f32.mrb[0].mxu0
  %v4243 = vadd.f32 %v4152, %v4242
  %v4244 = vpop.f32.mrb[0].mxu0
  %v4245 = vadd.f32 %v4154, %v4244
  %v4246 = vpop.f32.mrb[0].mxu0
  %v4247 = vadd.f32 %v4156, %v4246
  %4248 = vmatprep.mubr.bf16.mxu0 %v1064
  %4249 = vmatmul.mubr.bf16.gmra.mrb[0].mxu0 %v1063
  %v4250 = vpop.f32.mrb[0].mxu0
  %v4251 = vadd.f32 %v4160, %v4250
  %v4252 = vpop.f32.mrb[0].mxu0
  %v4253 = vadd.f32 %v4162, %v4252
  %v4254 = vpop.f32.mrb[0].mxu0
  %v4255 = vadd.f32 %v4164, %v4254
  %v4256 = vpop.f32.mrb[0].mxu0
  %v4257 = vadd.f32 %v4166, %v4256
  %4258 = vmatprep.mubr.bf16.mxu0 %v1082
  %4259 = vmatmul.mubr.bf16.gmra.mrb[0].mxu0 %v1081
  %v4260 = vpop.f32.mrb[0].mxu0
  %v4261 = vadd.f32 %v4170, %v4260
  %v4262 = vpop.f32.mrb[0].mxu0
  %v4263 = vadd.f32 %v4172, %v4262
  %v4264 = vpop.f32.mrb[0].mxu0
  %v4265 = vpop.f32.mrb[0].mxu0
  %4266 = vdwg.mxu0
  %4267 = vmatprep.subr.bf16.mxu0 %v3062
  %4268 = vmatpush1.bf16.msra.mxu0 %v3061
  %4269 = vmatprep.subr.bf16.mxu0 %v3066
  %4270 = vmatpush1.bf16.msra.mxu0 %v3065
  %4271 = vmatprep.subr.bf16.mxu0 %v3070
  %4272 = vmatpush1.bf16.msra.mxu0 %v3069
  %4273 = vmatprep.subr.bf16.mxu0 %v3074
  %4274 = vmatpush1.bf16.msra.mxu0 %v3073
  %4275 = vmatprep.subr.bf16.mxu0 %v3078
  %4276 = vmatpush1.bf16.msra.mxu0 %v3077
  %4277 = vmatprep.subr.bf16.mxu0 %v3082
  %4278 = vmatpush1.bf16.msra.mxu0 %v3081
  %4279 = vmatprep.subr.bf16.mxu0 %v3086
  %4280 = vmatpush1.bf16.msra.mxu0 %v3085
  %4281 = vmatprep.subr.bf16.mxu0 %v3090
  %4282 = vmatpush1.bf16.msra.mxu0 %v3089
  %4283 = vmatprep.subr.bf16.mxu0 %v3094
  %4284 = vmatpush1.bf16.msra.mxu0 %v3093
  %4285 = vmatprep.subr.bf16.mxu0 %v3098
  %4286 = vmatpush1.bf16.msra.mxu0 %v3097
  %4287 = vmatprep.subr.bf16.mxu0 %v3102
  %4288 = vmatpush1.bf16.msra.mxu0 %v3101
  %4289 = vmatprep.subr.bf16.mxu0 %v3106
  %4290 = vmatpush1.bf16.msra.mxu0 %v3105
  %4291 = vmatprep.subr.bf16.mxu0 %v3110
  %4292 = vmatpush1.bf16.msra.mxu0 %v3109
  %4293 = vmatprep.subr.bf16.mxu0 %v3114
  %4294 = vmatpush1.bf16.msra.mxu0 %v3113
  %4295 = vmatprep.subr.bf16.mxu0 %v3118
  %4296 = vmatpush1.bf16.msra.mxu0 %v3117
  %4297 = vmatprep.subr.bf16.mxu0 %v3122
  %4298 = vmatpush1.bf16.msra.mxu0 %v3121
  %4299 = vmatprep.mubr.bf16.mxu0 %v994
  %4300 = vmatmul.mubr.bf16.gmra.mrb[0].mxu0 %v993
  %v4301 = vpop.f32.mrb[0].mxu0
  %v4302 = vadd.f32 %v4211, %v4301
  %v4303 = vpop.f32.mrb[0].mxu0
  %v4304 = vadd.f32 %v4213, %v4303
  %v4305 = vpop.f32.mrb[0].mxu0
  %v4306 = vadd.f32 %v4215, %v4305
  %v4307 = vpop.f32.mrb[0].mxu0
  %v4308 = vadd.f32 %v4217, %v4307
  %4309 = vmatprep.mubr.bf16.mxu0 %v1012
  %4310 = vmatmul.mubr.bf16.gmra.mrb[0].mxu0 %v1011
  %v4311 = vpop.f32.mrb[0].mxu0
  %v4312 = vadd.f32 %v4221, %v4311
  %v4313 = vpop.f32.mrb[0].mxu0
  %v4314 = vadd.f32 %v4223, %v4313
  %v4315 = vpop.f32.mrb[0].mxu0
  %v4316 = vadd.f32 %v4225, %v4315
  %v4317 = vpop.f32.mrb[0].mxu0
  %v4318 = vadd.f32 %v4227, %v4317
  %4319 = vmatprep.mubr.bf16.mxu0 %v1030
  %4320 = vmatmul.mubr.bf16.gmra.mrb[0].mxu0 %v1029
  %v4321 = vpop.f32.mrb[0].mxu0
  %v4322 = vadd.f32 %v4231, %v4321
  %v4323 = vpop.f32.mrb[0].mxu0
  %v4324 = vadd.f32 %v4233, %v4323
  %v4325 = vpop.f32.mrb[0].mxu0
  %v4326 = vadd.f32 %v4235, %v4325
  %v4327 = vpop.f32.mrb[0].mxu0
  %v4328 = vadd.f32 %v4237, %v4327
  %4329 = vmatprep.mubr.bf16.mxu0 %v1048
  %4330 = vmatmul.mubr.bf16.gmra.mrb[0].mxu0 %v1047
  %v4331 = vpop.f32.mrb[0].mxu0
  %v4332 = vadd.f32 %v4241, %v4331
  %v4333 = vpop.f32.mrb[0].mxu0
  %v4334 = vadd.f32 %v4243, %v4333
  %v4335 = vpop.f32.mrb[0].mxu0
  %v4336 = vadd.f32 %v4245, %v4335
  %v4337 = vpop.f32.mrb[0].mxu0
  %v4338 = vadd.f32 %v4247, %v4337
  %4339 = vmatprep.mubr.bf16.mxu0 %v1066
  %4340 = vmatmul.mubr.bf16.gmra.mrb[0].mxu0 %v1065
  %v4341 = vpop.f32.mrb[0].mxu0
  %v4342 = vadd.f32 %v4251, %v4341
  %v4343 = vpop.f32.mrb[0].mxu0
  %v4344 = vadd.f32 %v4253, %v4343
  %v4345 = vpop.f32.mrb[0].mxu0
  %v4346 = vadd.f32 %v4255, %v4345
  %v4347 = vpop.f32.mrb[0].mxu0
  %v4348 = vadd.f32 %v4257, %v4347
  %4349 = vmatprep.mubr.bf16.mxu0 %v1084
  %4350 = vmatmul.mubr.bf16.gmra.mrb[0].mxu0 %v1083
  %v4351 = vpop.f32.mrb[0].mxu0
  %v4352 = vadd.f32 %v4261, %v4351
  %v4353 = vpop.f32.mrb[0].mxu0
  %v4354 = vadd.f32 %v4263, %v4353
  %v4355 = vpop.f32.mrb[0].mxu0
  %v4356 = vpop.f32.mrb[0].mxu0
  %4357 = vdwg.mxu0
  %4358 = vmatprep.subr.bf16.mxu0 %v3126
  %4359 = vmatpush1.bf16.msra.mxu0 %v3125
  %4360 = vmatprep.subr.bf16.mxu0 %v3130
  %4361 = vmatpush1.bf16.msra.mxu0 %v3129
  %4362 = vmatprep.subr.bf16.mxu0 %v3134
  %4363 = vmatpush1.bf16.msra.mxu0 %v3133
  %4364 = vmatprep.subr.bf16.mxu0 %v3138
  %4365 = vmatpush1.bf16.msra.mxu0 %v3137
  %4366 = vmatprep.subr.bf16.mxu0 %v3142
  %4367 = vmatpush1.bf16.msra.mxu0 %v3141
  %4368 = vmatprep.subr.bf16.mxu0 %v3146
  %4369 = vmatpush1.bf16.msra.mxu0 %v3145
  %4370 = vmatprep.subr.bf16.mxu0 %v3150
  %4371 = vmatpush1.bf16.msra.mxu0 %v3149
  %4372 = vmatprep.subr.bf16.mxu0 %v3154
  %4373 = vmatpush1.bf16.msra.mxu0 %v3153
  %4374 = vmatprep.subr.bf16.mxu0 %v3158
  %4375 = vmatpush1.bf16.msra.mxu0 %v3157
  %4376 = vmatprep.subr.bf16.mxu0 %v3162
  %4377 = vmatpush1.bf16.msra.mxu0 %v3161
  %4378 = vmatprep.subr.bf16.mxu0 %v3166
  %4379 = vmatpush1.bf16.msra.mxu0 %v3165
  %4380 = vmatprep.subr.bf16.mxu0 %v3170
  %4381 = vmatpush1.bf16.msra.mxu0 %v3169
  %4382 = vmatprep.subr.bf16.mxu0 %v3174
  %4383 = vmatpush1.bf16.msra.mxu0 %v3173
  %4384 = vmatprep.subr.bf16.mxu0 %v3178
  %4385 = vmatpush1.bf16.msra.mxu0 %v3177
  %4386 = vmatprep.subr.bf16.mxu0 %v3182
  %4387 = vmatpush1.bf16.msra.mxu0 %v3181
  %4388 = vmatprep.subr.bf16.mxu0 %v3186
  %4389 = vmatpush1.bf16.msra.mxu0 %v3185
  %4390 = vmatprep.mubr.bf16.mxu0 %v996
  %4391 = vmatmul.mubr.bf16.gmra.mrb[0].mxu0 %v995
  %v4392 = vpop.f32.mrb[0].mxu0
  %v4393 = vadd.f32 %v4302, %v4392
  %v4394 = vpop.f32.mrb[0].mxu0
  %v4395 = vadd.f32 %v4304, %v4394
  %v4396 = vpop.f32.mrb[0].mxu0
  %v4397 = vadd.f32 %v4306, %v4396
  %v4398 = vpop.f32.mrb[0].mxu0
  %v4399 = vadd.f32 %v4308, %v4398
  %4400 = vmatprep.mubr.bf16.mxu0 %v1014
  %4401 = vmatmul.mubr.bf16.gmra.mrb[0].mxu0 %v1013
  %v4402 = vpop.f32.mrb[0].mxu0
  %v4403 = vadd.f32 %v4312, %v4402
  %v4404 = vpop.f32.mrb[0].mxu0
  %v4405 = vadd.f32 %v4314, %v4404
  %v4406 = vpop.f32.mrb[0].mxu0
  %v4407 = vadd.f32 %v4316, %v4406
  %v4408 = vpop.f32.mrb[0].mxu0
  %v4409 = vadd.f32 %v4318, %v4408
  %4410 = vmatprep.mubr.bf16.mxu0 %v1032
  %4411 = vmatmul.mubr.bf16.gmra.mrb[0].mxu0 %v1031
  %v4412 = vpop.f32.mrb[0].mxu0
  %v4413 = vadd.f32 %v4322, %v4412
  %v4414 = vpop.f32.mrb[0].mxu0
  %v4415 = vadd.f32 %v4324, %v4414
  %v4416 = vpop.f32.mrb[0].mxu0
  %v4417 = vadd.f32 %v4326, %v4416
  %v4418 = vpop.f32.mrb[0].mxu0
  %v4419 = vadd.f32 %v4328, %v4418
  %4420 = vmatprep.mubr.bf16.mxu0 %v1050
  %4421 = vmatmul.mubr.bf16.gmra.mrb[0].mxu0 %v1049
  %v4422 = vpop.f32.mrb[0].mxu0
  %v4423 = vadd.f32 %v4332, %v4422
  %v4424 = vpop.f32.mrb[0].mxu0
  %v4425 = vadd.f32 %v4334, %v4424
  %v4426 = vpop.f32.mrb[0].mxu0
  %v4427 = vadd.f32 %v4336, %v4426
  %v4428 = vpop.f32.mrb[0].mxu0
  %v4429 = vadd.f32 %v4338, %v4428
  %4430 = vmatprep.mubr.bf16.mxu0 %v1068
  %4431 = vmatmul.mubr.bf16.gmra.mrb[0].mxu0 %v1067
  %v4432 = vpop.f32.mrb[0].mxu0
  %v4433 = vadd.f32 %v4342, %v4432
  %v4434 = vpop.f32.mrb[0].mxu0
  %v4435 = vadd.f32 %v4344, %v4434
  %v4436 = vpop.f32.mrb[0].mxu0
  %v4437 = vadd.f32 %v4346, %v4436
  %v4438 = vpop.f32.mrb[0].mxu0
  %v4439 = vadd.f32 %v4348, %v4438
  %4440 = vmatprep.mubr.bf16.mxu0 %v1086
  %4441 = vmatmul.mubr.bf16.gmra.mrb[0].mxu0 %v1085
  %v4442 = vpop.f32.mrb[0].mxu0
  %v4443 = vadd.f32 %v4352, %v4442
  %v4444 = vpop.f32.mrb[0].mxu0
  %v4445 = vadd.f32 %v4354, %v4444
  %v4446 = vpop.f32.mrb[0].mxu0
  %v4447 = vpop.f32.mrb[0].mxu0
  %4448 = vdwg.mxu0
  %4449 = vmatprep.subr.bf16.mxu0 %v3190
  %4450 = vmatpush1.bf16.msra.mxu0 %v3189
  %4451 = vmatprep.subr.bf16.mxu0 %v3194
  %4452 = vmatpush1.bf16.msra.mxu0 %v3193
  %4453 = vmatprep.subr.bf16.mxu0 %v3198
  %4454 = vmatpush1.bf16.msra.mxu0 %v3197
  %4455 = vmatprep.subr.bf16.mxu0 %v3202
  %4456 = vmatpush1.bf16.msra.mxu0 %v3201
  %4457 = vmatprep.subr.bf16.mxu0 %v3206
  %4458 = vmatpush1.bf16.msra.mxu0 %v3205
  %4459 = vmatprep.subr.bf16.mxu0 %v3210
  %4460 = vmatpush1.bf16.msra.mxu0 %v3209
  %4461 = vmatprep.subr.bf16.mxu0 %v3214
  %4462 = vmatpush1.bf16.msra.mxu0 %v3213
  %4463 = vmatprep.subr.bf16.mxu0 %v3218
  %4464 = vmatpush1.bf16.msra.mxu0 %v3217
  %4465 = vmatprep.subr.bf16.mxu0 %v3222
  %4466 = vmatpush1.bf16.msra.mxu0 %v3221
  %4467 = vmatprep.subr.bf16.mxu0 %v3226
  %4468 = vmatpush1.bf16.msra.mxu0 %v3225
  %4469 = vmatprep.subr.bf16.mxu0 %v3230
  %4470 = vmatpush1.bf16.msra.mxu0 %v3229
  %4471 = vmatprep.subr.bf16.mxu0 %v3234
  %4472 = vmatpush1.bf16.msra.mxu0 %v3233
  %4473 = vmatprep.subr.bf16.mxu0 %v3238
  %4474 = vmatpush1.bf16.msra.mxu0 %v3237
  %4475 = vmatprep.subr.bf16.mxu0 %v3242
  %4476 = vmatpush1.bf16.msra.mxu0 %v3241
  %4477 = vmatprep.subr.bf16.mxu0 %v3246
  %4478 = vmatpush1.bf16.msra.mxu0 %v3245
  %4479 = vmatprep.subr.bf16.mxu0 %v3250
  %4480 = vmatpush1.bf16.msra.mxu0 %v3249
  %4481 = vmatprep.mubr.bf16.mxu0 %v998
  %4482 = vmatmul.mubr.bf16.gmra.mrb[0].mxu0 %v997
  %v4483 = vpop.f32.mrb[0].mxu0
  %v4484 = vadd.f32 %v4393, %v4483
  %v4485 = vpop.f32.mrb[0].mxu0
  %v4486 = vadd.f32 %v4395, %v4485
  %v4487 = vpop.f32.mrb[0].mxu0
  %v4488 = vadd.f32 %v4397, %v4487
  %v4489 = vpop.f32.mrb[0].mxu0
  %v4490 = vadd.f32 %v4399, %v4489
  %4491 = vmatprep.mubr.bf16.mxu0 %v1016
  %4492 = vmatmul.mubr.bf16.gmra.mrb[0].mxu0 %v1015
  %v4493 = vpop.f32.mrb[0].mxu0
  %v4494 = vadd.f32 %v4403, %v4493
  %v4495 = vpop.f32.mrb[0].mxu0
  %v4496 = vadd.f32 %v4405, %v4495
  %v4497 = vpop.f32.mrb[0].mxu0
  %v4498 = vadd.f32 %v4407, %v4497
  %v4499 = vpop.f32.mrb[0].mxu0
  %v4500 = vadd.f32 %v4409, %v4499
  %4501 = vmatprep.mubr.bf16.mxu0 %v1034
  %4502 = vmatmul.mubr.bf16.gmra.mrb[0].mxu0 %v1033
  %v4503 = vpop.f32.mrb[0].mxu0
  %v4504 = vadd.f32 %v4413, %v4503
  %v4505 = vpop.f32.mrb[0].mxu0
  %v4506 = vadd.f32 %v4415, %v4505
  %v4507 = vpop.f32.mrb[0].mxu0
  %v4508 = vadd.f32 %v4417, %v4507
  %v4509 = vpop.f32.mrb[0].mxu0
  %v4510 = vadd.f32 %v4419, %v4509
  %4511 = vmatprep.mubr.bf16.mxu0 %v1052
  %4512 = vmatmul.mubr.bf16.gmra.mrb[0].mxu0 %v1051
  %v4513 = vpop.f32.mrb[0].mxu0
  %v4514 = vadd.f32 %v4423, %v4513
  %v4515 = vpop.f32.mrb[0].mxu0
  %v4516 = vadd.f32 %v4425, %v4515
  %v4517 = vpop.f32.mrb[0].mxu0
  %v4518 = vadd.f32 %v4427, %v4517
  %v4519 = vpop.f32.mrb[0].mxu0
  %v4520 = vadd.f32 %v4429, %v4519
  %4521 = vmatprep.mubr.bf16.mxu0 %v1070
  %4522 = vmatmul.mubr.bf16.gmra.mrb[0].mxu0 %v1069
  %v4523 = vpop.f32.mrb[0].mxu0
  %v4524 = vadd.f32 %v4433, %v4523
  %v4525 = vpop.f32.mrb[0].mxu0
  %v4526 = vadd.f32 %v4435, %v4525
  %v4527 = vpop.f32.mrb[0].mxu0
  %v4528 = vadd.f32 %v4437, %v4527
  %v4529 = vpop.f32.mrb[0].mxu0
  %v4530 = vadd.f32 %v4439, %v4529
  %4531 = vmatprep.mubr.bf16.mxu0 %v1088
  %4532 = vmatmul.mubr.bf16.gmra.mrb[0].mxu0 %v1087
  %v4533 = vpop.f32.mrb[0].mxu0
  %v4534 = vadd.f32 %v4443, %v4533
  %v4535 = vpop.f32.mrb[0].mxu0
  %v4536 = vadd.f32 %v4445, %v4535
  %v4537 = vpop.f32.mrb[0].mxu0
  %v4538 = vpop.f32.mrb[0].mxu0
  %4539 = vdwg.mxu0
  %4540 = vmatprep.subr.bf16.mxu0 %v3254
  %4541 = vmatpush1.bf16.msra.mxu0 %v3253
  %4542 = vmatprep.subr.bf16.mxu0 %v3258
  %4543 = vmatpush1.bf16.msra.mxu0 %v3257
  %4544 = vmatprep.subr.bf16.mxu0 %v3262
  %4545 = vmatpush1.bf16.msra.mxu0 %v3261
  %4546 = vmatprep.subr.bf16.mxu0 %v3266
  %4547 = vmatpush1.bf16.msra.mxu0 %v3265
  %4548 = vmatprep.subr.bf16.mxu0 %v3270
  %4549 = vmatpush1.bf16.msra.mxu0 %v3269
  %4550 = vmatprep.subr.bf16.mxu0 %v3274
  %4551 = vmatpush1.bf16.msra.mxu0 %v3273
  %4552 = vmatprep.subr.bf16.mxu0 %v3278
  %4553 = vmatpush1.bf16.msra.mxu0 %v3277
  %4554 = vmatprep.subr.bf16.mxu0 %v3282
  %4555 = vmatpush1.bf16.msra.mxu0 %v3281
  %4556 = vmatprep.subr.bf16.mxu0 %v3286
  %4557 = vmatpush1.bf16.msra.mxu0 %v3285
  %4558 = vmatprep.subr.bf16.mxu0 %v3290
  %4559 = vmatpush1.bf16.msra.mxu0 %v3289
  %4560 = vmatprep.subr.bf16.mxu0 %v3294
  %4561 = vmatpush1.bf16.msra.mxu0 %v3293
  %4562 = vmatprep.subr.bf16.mxu0 %v3298
  %4563 = vmatpush1.bf16.msra.mxu0 %v3297
  %4564 = vmatprep.subr.bf16.mxu0 %v3302
  %4565 = vmatpush1.bf16.msra.mxu0 %v3301
  %4566 = vmatprep.subr.bf16.mxu0 %v3306
  %4567 = vmatpush1.bf16.msra.mxu0 %v3305
  %4568 = vmatprep.subr.bf16.mxu0 %v3310
  %4569 = vmatpush1.bf16.msra.mxu0 %v3309
  %4570 = vmatprep.subr.bf16.mxu0 %v3314
  %4571 = vmatpush1.bf16.msra.mxu0 %v3313
  %4572 = vmatprep.mubr.bf16.mxu0 %v1000
  %4573 = vmatmul.mubr.bf16.gmra.mrb[0].mxu0 %v999
  %v4574 = vpop.f32.mrb[0].mxu0
  %v4575 = vadd.f32 %v4484, %v4574
  %v4576 = vpop.f32.mrb[0].mxu0
  %v4577 = vadd.f32 %v4486, %v4576
  %v4578 = vpop.f32.mrb[0].mxu0
  %v4579 = vadd.f32 %v4488, %v4578
  %v4580 = vpop.f32.mrb[0].mxu0
  %v4581 = vadd.f32 %v4490, %v4580
  %4582 = vmatprep.mubr.bf16.mxu0 %v1018
  %4583 = vmatmul.mubr.bf16.gmra.mrb[0].mxu0 %v1017
  %v4584 = vpop.f32.mrb[0].mxu0
  %v4585 = vadd.f32 %v4494, %v4584
  %v4586 = vpop.f32.mrb[0].mxu0
  %v4587 = vadd.f32 %v4496, %v4586
  %v4588 = vpop.f32.mrb[0].mxu0
  %v4589 = vadd.f32 %v4498, %v4588
  %v4590 = vpop.f32.mrb[0].mxu0
  %v4591 = vadd.f32 %v4500, %v4590
  %4592 = vmatprep.mubr.bf16.mxu0 %v1036
  %4593 = vmatmul.mubr.bf16.gmra.mrb[0].mxu0 %v1035
  %v4594 = vpop.f32.mrb[0].mxu0
  %v4595 = vadd.f32 %v4504, %v4594
  %v4596 = vpop.f32.mrb[0].mxu0
  %v4597 = vadd.f32 %v4506, %v4596
  %v4598 = vpop.f32.mrb[0].mxu0
  %v4599 = vadd.f32 %v4508, %v4598
  %v4600 = vpop.f32.mrb[0].mxu0
  %v4601 = vadd.f32 %v4510, %v4600
  %4602 = vmatprep.mubr.bf16.mxu0 %v1054
  %4603 = vmatmul.mubr.bf16.gmra.mrb[0].mxu0 %v1053
  %v4604 = vpop.f32.mrb[0].mxu0
  %v4605 = vadd.f32 %v4514, %v4604
  %v4606 = vpop.f32.mrb[0].mxu0
  %v4607 = vadd.f32 %v4516, %v4606
  %v4608 = vpop.f32.mrb[0].mxu0
  %v4609 = vadd.f32 %v4518, %v4608
  %v4610 = vpop.f32.mrb[0].mxu0
  %v4611 = vadd.f32 %v4520, %v4610
  %4612 = vmatprep.mubr.bf16.mxu0 %v1072
  %4613 = vmatmul.mubr.bf16.gmra.mrb[0].mxu0 %v1071
  %v4614 = vpop.f32.mrb[0].mxu0
  %v4615 = vadd.f32 %v4524, %v4614
  %v4616 = vpop.f32.mrb[0].mxu0
  %v4617 = vadd.f32 %v4526, %v4616
  %v4618 = vpop.f32.mrb[0].mxu0
  %v4619 = vadd.f32 %v4528, %v4618
  %v4620 = vpop.f32.mrb[0].mxu0
  %v4621 = vadd.f32 %v4530, %v4620
  %4622 = vmatprep.mubr.bf16.mxu0 %v1090
  %4623 = vmatmul.mubr.bf16.gmra.mrb[0].mxu0 %v1089
  %v4624 = vpop.f32.mrb[0].mxu0
  %v4625 = vadd.f32 %v4534, %v4624
  %v4626 = vpop.f32.mrb[0].mxu0
  %v4627 = vadd.f32 %v4536, %v4626
  %v4628 = vpop.f32.mrb[0].mxu0
  %v4629 = vpop.f32.mrb[0].mxu0
  %4630 = vdwg.mxu0
  %4631 = vmatprep.subr.bf16.mxu0 %v3318
  %4632 = vmatpush1.bf16.msra.mxu0 %v3317
  %4633 = vmatprep.subr.bf16.mxu0 %v3322
  %4634 = vmatpush1.bf16.msra.mxu0 %v3321
  %4635 = vmatprep.subr.bf16.mxu0 %v3326
  %4636 = vmatpush1.bf16.msra.mxu0 %v3325
  %4637 = vmatprep.subr.bf16.mxu0 %v3330
  %4638 = vmatpush1.bf16.msra.mxu0 %v3329
  %4639 = vmatprep.subr.bf16.mxu0 %v3334
  %4640 = vmatpush1.bf16.msra.mxu0 %v3333
  %4641 = vmatprep.subr.bf16.mxu0 %v3338
  %4642 = vmatpush1.bf16.msra.mxu0 %v3337
  %4643 = vmatprep.subr.bf16.mxu0 %v3342
  %4644 = vmatpush1.bf16.msra.mxu0 %v3341
  %4645 = vmatprep.subr.bf16.mxu0 %v3346
  %4646 = vmatpush1.bf16.msra.mxu0 %v3345
  %4647 = vmatprep.subr.bf16.mxu0 %v3350
  %4648 = vmatpush1.bf16.msra.mxu0 %v3349
  %4649 = vmatprep.subr.bf16.mxu0 %v3354
  %4650 = vmatpush1.bf16.msra.mxu0 %v3353
  %4651 = vmatprep.subr.bf16.mxu0 %v3358
  %4652 = vmatpush1.bf16.msra.mxu0 %v3357
  %4653 = vmatprep.subr.bf16.mxu0 %v3362
  %4654 = vmatpush1.bf16.msra.mxu0 %v3361
  %4655 = vmatprep.subr.bf16.mxu0 %v3366
  %4656 = vmatpush1.bf16.msra.mxu0 %v3365
  %4657 = vmatprep.subr.bf16.mxu0 %v3370
  %4658 = vmatpush1.bf16.msra.mxu0 %v3369
  %4659 = vmatprep.subr.bf16.mxu0 %v3374
  %4660 = vmatpush1.bf16.msra.mxu0 %v3373
  %4661 = vmatprep.subr.bf16.mxu0 %v3378
  %4662 = vmatpush1.bf16.msra.mxu0 %v3377
  %4663 = vmatprep.mubr.bf16.mxu0 %v1002
  %4664 = vmatmul.mubr.bf16.gmra.mrb[0].mxu0 %v1001
  %v4665 = vpop.f32.mrb[0].mxu0
  %v4666 = vadd.f32 %v4575, %v4665
  %v4667 = vpop.f32.mrb[0].mxu0
  %v4668 = vadd.f32 %v4577, %v4667
  %v4669 = vpop.f32.mrb[0].mxu0
  %v4670 = vadd.f32 %v4579, %v4669
  %v4671 = vpop.f32.mrb[0].mxu0
  %v4672 = vadd.f32 %v4581, %v4671
  %4673 = vmatprep.mubr.bf16.mxu0 %v1020
  %4674 = vmatmul.mubr.bf16.gmra.mrb[0].mxu0 %v1019
  %v4675 = vpop.f32.mrb[0].mxu0
  %v4676 = vadd.f32 %v4585, %v4675
  %v4677 = vpop.f32.mrb[0].mxu0
  %v4678 = vadd.f32 %v4587, %v4677
  %v4679 = vpop.f32.mrb[0].mxu0
  %v4680 = vadd.f32 %v4589, %v4679
  %v4681 = vpop.f32.mrb[0].mxu0
  %v4682 = vadd.f32 %v4591, %v4681
  %4683 = vmatprep.mubr.bf16.mxu0 %v1038
  %4684 = vmatmul.mubr.bf16.gmra.mrb[0].mxu0 %v1037
  %v4685 = vpop.f32.mrb[0].mxu0
  %v4686 = vadd.f32 %v4595, %v4685
  %v4687 = vpop.f32.mrb[0].mxu0
  %v4688 = vadd.f32 %v4597, %v4687
  %v4689 = vpop.f32.mrb[0].mxu0
  %v4690 = vadd.f32 %v4599, %v4689
  %v4691 = vpop.f32.mrb[0].mxu0
  %v4692 = vadd.f32 %v4601, %v4691
  %4693 = vmatprep.mubr.bf16.mxu0 %v1056
  %4694 = vmatmul.mubr.bf16.gmra.mrb[0].mxu0 %v1055
  %v4695 = vpop.f32.mrb[0].mxu0
  %v4696 = vadd.f32 %v4605, %v4695
  %v4697 = vpop.f32.mrb[0].mxu0
  %v4698 = vadd.f32 %v4607, %v4697
  %v4699 = vpop.f32.mrb[0].mxu0
  %v4700 = vadd.f32 %v4609, %v4699
  %v4701 = vpop.f32.mrb[0].mxu0
  %v4702 = vadd.f32 %v4611, %v4701
  %4703 = vmatprep.mubr.bf16.mxu0 %v1074
  %4704 = vmatmul.mubr.bf16.gmra.mrb[0].mxu0 %v1073
  %v4705 = vpop.f32.mrb[0].mxu0
  %v4706 = vadd.f32 %v4615, %v4705
  %v4707 = vpop.f32.mrb[0].mxu0
  %v4708 = vadd.f32 %v4617, %v4707
  %v4709 = vpop.f32.mrb[0].mxu0
  %v4710 = vadd.f32 %v4619, %v4709
  %v4711 = vpop.f32.mrb[0].mxu0
  %v4712 = vadd.f32 %v4621, %v4711
  %4713 = vmatprep.mubr.bf16.mxu0 %v1092
  %4714 = vmatmul.mubr.bf16.gmra.mrb[0].mxu0 %v1091
  %v4715 = vpop.f32.mrb[0].mxu0
  %v4716 = vadd.f32 %v4625, %v4715
  %v4717 = vpop.f32.mrb[0].mxu0
  %v4718 = vadd.f32 %v4627, %v4717
  %v4719 = vpop.f32.mrb[0].mxu0
  %v4720 = vpop.f32.mrb[0].mxu0
  %4721 = vdwg.mxu0
  %4722 = vmatprep.subr.bf16.mxu0 %v3382
  %4723 = vmatpush1.bf16.msra.mxu0 %v3381
  %4724 = vmatprep.subr.bf16.mxu0 %v3386
  %4725 = vmatpush1.bf16.msra.mxu0 %v3385
  %4726 = vmatprep.subr.bf16.mxu0 %v3390
  %4727 = vmatpush1.bf16.msra.mxu0 %v3389
  %4728 = vmatprep.subr.bf16.mxu0 %v3394
  %4729 = vmatpush1.bf16.msra.mxu0 %v3393
  %4730 = vmatprep.subr.bf16.mxu0 %v3398
  %4731 = vmatpush1.bf16.msra.mxu0 %v3397
  %4732 = vmatprep.subr.bf16.mxu0 %v3402
  %4733 = vmatpush1.bf16.msra.mxu0 %v3401
  %4734 = vmatprep.subr.bf16.mxu0 %v3406
  %4735 = vmatpush1.bf16.msra.mxu0 %v3405
  %4736 = vmatprep.subr.bf16.mxu0 %v3410
  %4737 = vmatpush1.bf16.msra.mxu0 %v3409
  %4738 = vmatprep.subr.bf16.mxu0 %v3414
  %4739 = vmatpush1.bf16.msra.mxu0 %v3413
  %4740 = vmatprep.subr.bf16.mxu0 %v3418
  %4741 = vmatpush1.bf16.msra.mxu0 %v3417
  %4742 = vmatprep.subr.bf16.mxu0 %v3422
  %4743 = vmatpush1.bf16.msra.mxu0 %v3421
  %4744 = vmatprep.subr.bf16.mxu0 %v3426
  %4745 = vmatpush1.bf16.msra.mxu0 %v3425
  %4746 = vmatprep.subr.bf16.mxu0 %v3430
  %4747 = vmatpush1.bf16.msra.mxu0 %v3429
  %4748 = vmatprep.subr.bf16.mxu0 %v3434
  %4749 = vmatpush1.bf16.msra.mxu0 %v3433
  %4750 = vmatprep.subr.bf16.mxu0 %v3438
  %4751 = vmatpush1.bf16.msra.mxu0 %v3437
  %4752 = vmatprep.subr.bf16.mxu0 %v3442
  %4753 = vmatpush1.bf16.msra.mxu0 %v3441
  %4754 = vmatprep.mubr.bf16.mxu0 %v1004
  %4755 = vmatmul.mubr.bf16.gmra.mrb[0].mxu0 %v1003
  %v4756 = vpop.f32.mrb[0].mxu0
  %v4757 = vadd.f32 %v4666, %v4756
  %v4758 = vpop.f32.mrb[0].mxu0
  %v4759 = vadd.f32 %v4668, %v4758
  %v4760 = vpop.f32.mrb[0].mxu0
  %v4761 = vadd.f32 %v4670, %v4760
  %v4762 = vpop.f32.mrb[0].mxu0
  %v4763 = vadd.f32 %v4672, %v4762
  %4764 = vmatprep.mubr.bf16.mxu0 %v1022
  %4765 = vmatmul.mubr.bf16.gmra.mrb[0].mxu0 %v1021
  %v4766 = vpop.f32.mrb[0].mxu0
  %v4767 = vadd.f32 %v4676, %v4766
  %v4768 = vpop.f32.mrb[0].mxu0
  %v4769 = vadd.f32 %v4678, %v4768
  %v4770 = vpop.f32.mrb[0].mxu0
  %v4771 = vadd.f32 %v4680, %v4770
  %v4772 = vpop.f32.mrb[0].mxu0
  %v4773 = vadd.f32 %v4682, %v4772
  %4774 = vmatprep.mubr.bf16.mxu0 %v1040
  %4775 = vmatmul.mubr.bf16.gmra.mrb[0].mxu0 %v1039
  %v4776 = vpop.f32.mrb[0].mxu0
  %v4777 = vadd.f32 %v4686, %v4776
  %v4778 = vpop.f32.mrb[0].mxu0
  %v4779 = vadd.f32 %v4688, %v4778
  %v4780 = vpop.f32.mrb[0].mxu0
  %v4781 = vadd.f32 %v4690, %v4780
  %v4782 = vpop.f32.mrb[0].mxu0
  %v4783 = vadd.f32 %v4692, %v4782
  %4784 = vmatprep.mubr.bf16.mxu0 %v1058
  %4785 = vmatmul.mubr.bf16.gmra.mrb[0].mxu0 %v1057
  %v4786 = vpop.f32.mrb[0].mxu0
  %v4787 = vadd.f32 %v4696, %v4786
  %v4788 = vpop.f32.mrb[0].mxu0
  %v4789 = vadd.f32 %v4698, %v4788
  %v4790 = vpop.f32.mrb[0].mxu0
  %v4791 = vadd.f32 %v4700, %v4790
  %v4792 = vpop.f32.mrb[0].mxu0
  %v4793 = vadd.f32 %v4702, %v4792
  %4794 = vmatprep.mubr.bf16.mxu0 %v1076
  %4795 = vmatmul.mubr.bf16.gmra.mrb[0].mxu0 %v1075
  %v4796 = vpop.f32.mrb[0].mxu0
  %v4797 = vadd.f32 %v4706, %v4796
  %v4798 = vpop.f32.mrb[0].mxu0
  %v4799 = vadd.f32 %v4708, %v4798
  %v4800 = vpop.f32.mrb[0].mxu0
  %v4801 = vadd.f32 %v4710, %v4800
  %v4802 = vpop.f32.mrb[0].mxu0
  %v4803 = vadd.f32 %v4712, %v4802
  %4804 = vmatprep.mubr.bf16.mxu0 %v1094
  %4805 = vmatmul.mubr.bf16.gmra.mrb[0].mxu0 %v1093
  %v4806 = vpop.f32.mrb[0].mxu0
  %v4807 = vadd.f32 %v4716, %v4806
  %v4808 = vpop.f32.mrb[0].mxu0
  %v4809 = vadd.f32 %v4718, %v4808
  %v4810 = vpop.f32.mrb[0].mxu0
  %v4811 = vpop.f32.mrb[0].mxu0
  %4812 = vdwg.mxu0
  %4813 = vmatprep.subr.bf16.mxu0 %v3446
  %4814 = vmatpush1.bf16.msra.mxu0 %v3445
  %4815 = vmatprep.subr.bf16.mxu0 %v3450
  %4816 = vmatpush1.bf16.msra.mxu0 %v3449
  %4817 = vmatprep.subr.bf16.mxu0 %v3454
  %4818 = vmatpush1.bf16.msra.mxu0 %v3453
  %4819 = vmatprep.subr.bf16.mxu0 %v3458
  %4820 = vmatpush1.bf16.msra.mxu0 %v3457
  %4821 = vmatprep.subr.bf16.mxu0 %v3462
  %4822 = vmatpush1.bf16.msra.mxu0 %v3461
  %4823 = vmatprep.subr.bf16.mxu0 %v3466
  %4824 = vmatpush1.bf16.msra.mxu0 %v3465
  %4825 = vmatprep.subr.bf16.mxu0 %v3470
  %4826 = vmatpush1.bf16.msra.mxu0 %v3469
  %4827 = vmatprep.subr.bf16.mxu0 %v3474
  %4828 = vmatpush1.bf16.msra.mxu0 %v3473
  %4829 = vmatprep.subr.bf16.mxu0 %v3478
  %4830 = vmatpush1.bf16.msra.mxu0 %v3477
  %4831 = vmatprep.subr.bf16.mxu0 %v3482
  %4832 = vmatpush1.bf16.msra.mxu0 %v3481
  %4833 = vmatprep.subr.bf16.mxu0 %v3486
  %4834 = vmatpush1.bf16.msra.mxu0 %v3485
  %4835 = vmatprep.subr.bf16.mxu0 %v3490
  %4836 = vmatpush1.bf16.msra.mxu0 %v3489
  %4837 = vmatprep.subr.bf16.mxu0 %v3494
  %4838 = vmatpush1.bf16.msra.mxu0 %v3493
  %4839 = vmatprep.subr.bf16.mxu0 %v3498
  %4840 = vmatpush1.bf16.msra.mxu0 %v3497
  %4841 = vmatprep.subr.bf16.mxu0 %v3502
  %4842 = vmatpush1.bf16.msra.mxu0 %v3501
  %4843 = vmatprep.subr.bf16.mxu0 %v3506
  %4844 = vmatpush1.bf16.msra.mxu0 %v3505
  %4845 = vmatprep.mubr.bf16.mxu0 %v1006
  %4846 = vmatmul.mubr.bf16.gmra.mrb[0].mxu0 %v1005
  %v4847 = vpop.f32.mrb[0].mxu0
  %v4848 = vadd.f32 %v4757, %v4847
  %v4849 = vpop.f32.mrb[0].mxu0
  %v4850 = vadd.f32 %v4759, %v4849
  %v4851 = vpop.f32.mrb[0].mxu0
  %v4852 = vadd.f32 %v4761, %v4851
  %v4853 = vpop.f32.mrb[0].mxu0
  %v4854 = vadd.f32 %v4763, %v4853
  %4855 = vmatprep.mubr.bf16.mxu0 %v1024
  %4856 = vmatmul.mubr.bf16.gmra.mrb[0].mxu0 %v1023
  %v4857 = vpop.f32.mrb[0].mxu0
  %v4858 = vadd.f32 %v4767, %v4857
  %v4859 = vpop.f32.mrb[0].mxu0
  %v4860 = vadd.f32 %v4769, %v4859
  %v4861 = vpop.f32.mrb[0].mxu0
  %v4862 = vadd.f32 %v4771, %v4861
  %v4863 = vpop.f32.mrb[0].mxu0
  %v4864 = vadd.f32 %v4773, %v4863
  %4865 = vmatprep.mubr.bf16.mxu0 %v1042
  %4866 = vmatmul.mubr.bf16.gmra.mrb[0].mxu0 %v1041
  %v4867 = vpop.f32.mrb[0].mxu0
  %v4868 = vadd.f32 %v4777, %v4867
  %v4869 = vpop.f32.mrb[0].mxu0
  %v4870 = vadd.f32 %v4779, %v4869
  %v4871 = vpop.f32.mrb[0].mxu0
  %v4872 = vadd.f32 %v4781, %v4871
  %v4873 = vpop.f32.mrb[0].mxu0
  %v4874 = vadd.f32 %v4783, %v4873
  %4875 = vmatprep.mubr.bf16.mxu0 %v1060
  %4876 = vmatmul.mubr.bf16.gmra.mrb[0].mxu0 %v1059
  %v4877 = vpop.f32.mrb[0].mxu0
  %v4878 = vadd.f32 %v4787, %v4877
  %v4879 = vpop.f32.mrb[0].mxu0
  %v4880 = vadd.f32 %v4789, %v4879
  %v4881 = vpop.f32.mrb[0].mxu0
  %v4882 = vadd.f32 %v4791, %v4881
  %v4883 = vpop.f32.mrb[0].mxu0
  %v4884 = vadd.f32 %v4793, %v4883
  %4885 = vmatprep.mubr.bf16.mxu0 %v1078
  %4886 = vmatmul.mubr.bf16.gmra.mrb[0].mxu0 %v1077
  %v4887 = vpop.f32.mrb[0].mxu0
  %v4888 = vadd.f32 %v4797, %v4887
  %v4889 = vpop.f32.mrb[0].mxu0
  %v4890 = vadd.f32 %v4799, %v4889
  %v4891 = vpop.f32.mrb[0].mxu0
  %v4892 = vadd.f32 %v4801, %v4891
  %v4893 = vpop.f32.mrb[0].mxu0
  %v4894 = vadd.f32 %v4803, %v4893
  %4895 = vmatprep.mubr.bf16.mxu0 %v1096
  %4896 = vmatmul.mubr.bf16.gmra.mrb[0].mxu0 %v1095
  %v4897 = vpop.f32.mrb[0].mxu0
  %v4898 = vadd.f32 %v4807, %v4897
  %v4899 = vpop.f32.mrb[0].mxu0
  %v4900 = vadd.f32 %v4809, %v4899
  %v4901 = vpop.f32.mrb[0].mxu0
  %v4902 = vpop.f32.mrb[0].mxu0
  %4903 = vdwg.mxu0
  %4904 = vmatprep.subr.bf16.mxu0 %v2936
  %4905 = vmatpush1.bf16.msra.mxu0 %v2935
  %4906 = vmatprep.subr.bf16.mxu0 %v2940
  %4907 = vmatpush1.bf16.msra.mxu0 %v2939
  %4908 = vmatprep.subr.bf16.mxu0 %v2944
  %4909 = vmatpush1.bf16.msra.mxu0 %v2943
  %4910 = vmatprep.subr.bf16.mxu0 %v2948
  %4911 = vmatpush1.bf16.msra.mxu0 %v2947
  %4912 = vmatprep.subr.bf16.mxu0 %v2952
  %4913 = vmatpush1.bf16.msra.mxu0 %v2951
  %4914 = vmatprep.subr.bf16.mxu0 %v2956
  %4915 = vmatpush1.bf16.msra.mxu0 %v2955
  %4916 = vmatprep.subr.bf16.mxu0 %v2960
  %4917 = vmatpush1.bf16.msra.mxu0 %v2959
  %4918 = vmatprep.subr.bf16.mxu0 %v2964
  %4919 = vmatpush1.bf16.msra.mxu0 %v2963
  %4920 = vmatprep.subr.bf16.mxu0 %v2968
  %4921 = vmatpush1.bf16.msra.mxu0 %v2967
  %4922 = vmatprep.subr.bf16.mxu0 %v2972
  %4923 = vmatpush1.bf16.msra.mxu0 %v2971
  %4924 = vmatprep.subr.bf16.mxu0 %v2976
  %4925 = vmatpush1.bf16.msra.mxu0 %v2975
  %4926 = vmatprep.subr.bf16.mxu0 %v2980
  %4927 = vmatpush1.bf16.msra.mxu0 %v2979
  %4928 = vmatprep.subr.bf16.mxu0 %v2984
  %4929 = vmatpush1.bf16.msra.mxu0 %v2983
  %4930 = vmatprep.subr.bf16.mxu0 %v2988
  %4931 = vmatpush1.bf16.msra.mxu0 %v2987
  %4932 = vmatprep.subr.bf16.mxu0 %v2992
  %4933 = vmatpush1.bf16.msra.mxu0 %v2991
  %4934 = vmatprep.subr.bf16.mxu0 %v2996
  %4935 = vmatpush1.bf16.msra.mxu0 %v2995
  %4936 = vmatprep.mubr.bf16.mxu0 %v990
  %4937 = vmatmul.mubr.bf16.gmra.mrb[0].mxu0 %v989
  %v4938 = vpop.f32.mrb[0].mxu0
  %v4939 = vadd.f32 0.0, %v4938
  %v4940 = vpop.f32.mrb[0].mxu0
  %v4941 = vadd.f32 0.0, %v4940
  %v4942 = vpop.f32.mrb[0].mxu0
  %v4943 = vadd.f32 0.0, %v4942
  %v4944 = vpop.f32.mrb[0].mxu0
  %v4945 = vadd.f32 0.0, %v4944
  %4946 = vmatprep.mubr.bf16.mxu0 %v1008
  %4947 = vmatmul.mubr.bf16.gmra.mrb[0].mxu0 %v1007
  %v4948 = vpop.f32.mrb[0].mxu0
  %v4949 = vadd.f32 0.0, %v4948
  %v4950 = vpop.f32.mrb[0].mxu0
  %v4951 = vadd.f32 0.0, %v4950
  %v4952 = vpop.f32.mrb[0].mxu0
  %v4953 = vadd.f32 0.0, %v4952
  %v4954 = vpop.f32.mrb[0].mxu0
  %v4955 = vadd.f32 0.0, %v4954
  %4956 = vmatprep.mubr.bf16.mxu0 %v1026
  %4957 = vmatmul.mubr.bf16.gmra.mrb[0].mxu0 %v1025
  %v4958 = vpop.f32.mrb[0].mxu0
  %v4959 = vadd.f32 0.0, %v4958
  %v4960 = vpop.f32.mrb[0].mxu0
  %v4961 = vadd.f32 0.0, %v4960
  %v4962 = vpop.f32.mrb[0].mxu0
  %v4963 = vadd.f32 0.0, %v4962
  %v4964 = vpop.f32.mrb[0].mxu0
  %v4965 = vadd.f32 0.0, %v4964
  %4966 = vmatprep.mubr.bf16.mxu0 %v1044
  %4967 = vmatmul.mubr.bf16.gmra.mrb[0].mxu0 %v1043
  %v4968 = vpop.f32.mrb[0].mxu0
  %v4969 = vadd.f32 0.0, %v4968
  %v4970 = vpop.f32.mrb[0].mxu0
  %v4971 = vadd.f32 0.0, %v4970
  %v4972 = vpop.f32.mrb[0].mxu0
  %v4973 = vadd.f32 0.0, %v4972
  %v4974 = vpop.f32.mrb[0].mxu0
  %v4975 = vadd.f32 0.0, %v4974
  %4976 = vmatprep.mubr.bf16.mxu0 %v1062
  %4977 = vmatmul.mubr.bf16.gmra.mrb[0].mxu0 %v1061
  %v4978 = vpop.f32.mrb[0].mxu0
  %v4979 = vadd.f32 0.0, %v4978
  %v4980 = vpop.f32.mrb[0].mxu0
  %v4981 = vadd.f32 0.0, %v4980
  %v4982 = vpop.f32.mrb[0].mxu0
  %v4983 = vadd.f32 0.0, %v4982
  %v4984 = vpop.f32.mrb[0].mxu0
  %v4985 = vadd.f32 0.0, %v4984
  %4986 = vmatprep.mubr.bf16.mxu0 %v1080
  %4987 = vmatmul.mubr.bf16.gmra.mrb[0].mxu0 %v1079
  %v4988 = vpop.f32.mrb[0].mxu0
  %v4989 = vadd.f32 0.0, %v4988
  %v4990 = vpop.f32.mrb[0].mxu0
  %v4991 = vadd.f32 0.0, %v4990
  %v4992 = vpop.f32.mrb[0].mxu0
  %v4993 = vpop.f32.mrb[0].mxu0
  %4994 = vdwg.mxu0
  %4995 = vmatprep.subr.bf16.mxu0 %v3000
  %4996 = vmatpush1.bf16.msra.mxu0 %v2999
  %4997 = vmatprep.subr.bf16.mxu0 %v3004
  %4998 = vmatpush1.bf16.msra.mxu0 %v3003
  %4999 = vmatprep.subr.bf16.mxu0 %v3008
  %5000 = vmatpush1.bf16.msra.mxu0 %v3007
  %5001 = vmatprep.subr.bf16.mxu0 %v3012
  %5002 = vmatpush1.bf16.msra.mxu0 %v3011
  %5003 = vmatprep.subr.bf16.mxu0 %v3016
  %5004 = vmatpush1.bf16.msra.mxu0 %v3015
  %5005 = vmatprep.subr.bf16.mxu0 %v3020
  %5006 = vmatpush1.bf16.msra.mxu0 %v3019
  %5007 = vmatprep.subr.bf16.mxu0 %v3024
  %5008 = vmatpush1.bf16.msra.mxu0 %v3023
  %5009 = vmatprep.subr.bf16.mxu0 %v3028
  %5010 = vmatpush1.bf16.msra.mxu0 %v3027
  %5011 = vmatprep.subr.bf16.mxu0 %v3032
  %5012 = vmatpush1.bf16.msra.mxu0 %v3031
  %5013 = vmatprep.subr.bf16.mxu0 %v3036
  %5014 = vmatpush1.bf16.msra.mxu0 %v3035
  %5015 = vmatprep.subr.bf16.mxu0 %v3040
  %5016 = vmatpush1.bf16.msra.mxu0 %v3039
  %5017 = vmatprep.subr.bf16.mxu0 %v3044
  %5018 = vmatpush1.bf16.msra.mxu0 %v3043
  %5019 = vmatprep.subr.bf16.mxu0 %v3048
  %5020 = vmatpush1.bf16.msra.mxu0 %v3047
  %5021 = vmatprep.subr.bf16.mxu0 %v3052
  %5022 = vmatpush1.bf16.msra.mxu0 %v3051
  %5023 = vmatprep.subr.bf16.mxu0 %v3056
  %5024 = vmatpush1.bf16.msra.mxu0 %v3055
  %5025 = vmatprep.subr.bf16.mxu0 %v3060
  %5026 = vmatpush1.bf16.msra.mxu0 %v3059
  %5027 = vmatprep.mubr.bf16.mxu0 %v992
  %5028 = vmatmul.mubr.bf16.gmra.mrb[0].mxu0 %v991
  %v5029 = vpop.f32.mrb[0].mxu0
  %v5030 = vadd.f32 %v4939, %v5029
  %v5031 = vpop.f32.mrb[0].mxu0
  %v5032 = vadd.f32 %v4941, %v5031
  %v5033 = vpop.f32.mrb[0].mxu0
  %v5034 = vadd.f32 %v4943, %v5033
  %v5035 = vpop.f32.mrb[0].mxu0
  %v5036 = vadd.f32 %v4945, %v5035
  %5037 = vmatprep.mubr.bf16.mxu0 %v1010
  %5038 = vmatmul.mubr.bf16.gmra.mrb[0].mxu0 %v1009
  %v5039 = vpop.f32.mrb[0].mxu0
  %v5040 = vadd.f32 %v4949, %v5039
  %v5041 = vpop.f32.mrb[0].mxu0
  %v5042 = vadd.f32 %v4951, %v5041
  %v5043 = vpop.f32.mrb[0].mxu0
  %v5044 = vadd.f32 %v4953, %v5043
  %v5045 = vpop.f32.mrb[0].mxu0
  %v5046 = vadd.f32 %v4955, %v5045
  %5047 = vmatprep.mubr.bf16.mxu0 %v1028
  %5048 = vmatmul.mubr.bf16.gmra.mrb[0].mxu0 %v1027
  %v5049 = vpop.f32.mrb[0].mxu0
  %v5050 = vadd.f32 %v4959, %v5049
  %v5051 = vpop.f32.mrb[0].mxu0
  %v5052 = vadd.f32 %v4961, %v5051
  %v5053 = vpop.f32.mrb[0].mxu0
  %v5054 = vadd.f32 %v4963, %v5053
  %v5055 = vpop.f32.mrb[0].mxu0
  %v5056 = vadd.f32 %v4965, %v5055
  %5057 = vmatprep.mubr.bf16.mxu0 %v1046
  %5058 = vmatmul.mubr.bf16.gmra.mrb[0].mxu0 %v1045
  %v5059 = vpop.f32.mrb[0].mxu0
  %v5060 = vadd.f32 %v4969, %v5059
  %v5061 = vpop.f32.mrb[0].mxu0
  %v5062 = vadd.f32 %v4971, %v5061
  %v5063 = vpop.f32.mrb[0].mxu0
  %v5064 = vadd.f32 %v4973, %v5063
  %v5065 = vpop.f32.mrb[0].mxu0
  %v5066 = vadd.f32 %v4975, %v5065
  %5067 = vmatprep.mubr.bf16.mxu0 %v1064
  %5068 = vmatmul.mubr.bf16.gmra.mrb[0].mxu0 %v1063
  %v5069 = vpop.f32.mrb[0].mxu0
  %v5070 = vadd.f32 %v4979, %v5069
  %v5071 = vpop.f32.mrb[0].mxu0
  %v5072 = vadd.f32 %v4981, %v5071
  %v5073 = vpop.f32.mrb[0].mxu0
  %v5074 = vadd.f32 %v4983, %v5073
  %v5075 = vpop.f32.mrb[0].mxu0
  %v5076 = vadd.f32 %v4985, %v5075
  %5077 = vmatprep.mubr.bf16.mxu0 %v1082
  %5078 = vmatmul.mubr.bf16.gmra.mrb[0].mxu0 %v1081
  %v5079 = vpop.f32.mrb[0].mxu0
  %v5080 = vadd.f32 %v4989, %v5079
  %v5081 = vpop.f32.mrb[0].mxu0
  %v5082 = vadd.f32 %v4991, %v5081
  %v5083 = vpop.f32.mrb[0].mxu0
  %v5084 = vpop.f32.mrb[0].mxu0
  %5085 = vdwg.mxu0
  %5086 = vmatprep.subr.bf16.mxu0 %v3064
  %5087 = vmatpush1.bf16.msra.mxu0 %v3063
  %5088 = vmatprep.subr.bf16.mxu0 %v3068
  %5089 = vmatpush1.bf16.msra.mxu0 %v3067
  %5090 = vmatprep.subr.bf16.mxu0 %v3072
  %5091 = vmatpush1.bf16.msra.mxu0 %v3071
  %5092 = vmatprep.subr.bf16.mxu0 %v3076
  %5093 = vmatpush1.bf16.msra.mxu0 %v3075
  %5094 = vmatprep.subr.bf16.mxu0 %v3080
  %5095 = vmatpush1.bf16.msra.mxu0 %v3079
  %5096 = vmatprep.subr.bf16.mxu0 %v3084
  %5097 = vmatpush1.bf16.msra.mxu0 %v3083
  %5098 = vmatprep.subr.bf16.mxu0 %v3088
  %5099 = vmatpush1.bf16.msra.mxu0 %v3087
  %5100 = vmatprep.subr.bf16.mxu0 %v3092
  %5101 = vmatpush1.bf16.msra.mxu0 %v3091
  %5102 = vmatprep.subr.bf16.mxu0 %v3096
  %5103 = vmatpush1.bf16.msra.mxu0 %v3095
  %5104 = vmatprep.subr.bf16.mxu0 %v3100
  %5105 = vmatpush1.bf16.msra.mxu0 %v3099
  %5106 = vmatprep.subr.bf16.mxu0 %v3104
  %5107 = vmatpush1.bf16.msra.mxu0 %v3103
  %5108 = vmatprep.subr.bf16.mxu0 %v3108
  %5109 = vmatpush1.bf16.msra.mxu0 %v3107
  %5110 = vmatprep.subr.bf16.mxu0 %v3112
  %5111 = vmatpush1.bf16.msra.mxu0 %v3111
  %5112 = vmatprep.subr.bf16.mxu0 %v3116
  %5113 = vmatpush1.bf16.msra.mxu0 %v3115
  %5114 = vmatprep.subr.bf16.mxu0 %v3120
  %5115 = vmatpush1.bf16.msra.mxu0 %v3119
  %5116 = vmatprep.subr.bf16.mxu0 %v3124
  %5117 = vmatpush1.bf16.msra.mxu0 %v3123
  %5118 = vmatprep.mubr.bf16.mxu0 %v994
  %5119 = vmatmul.mubr.bf16.gmra.mrb[0].mxu0 %v993
  %v5120 = vpop.f32.mrb[0].mxu0
  %v5121 = vadd.f32 %v5030, %v5120
  %v5122 = vpop.f32.mrb[0].mxu0
  %v5123 = vadd.f32 %v5032, %v5122
  %v5124 = vpop.f32.mrb[0].mxu0
  %v5125 = vadd.f32 %v5034, %v5124
  %v5126 = vpop.f32.mrb[0].mxu0
  %v5127 = vadd.f32 %v5036, %v5126
  %5128 = vmatprep.mubr.bf16.mxu0 %v1012
  %5129 = vmatmul.mubr.bf16.gmra.mrb[0].mxu0 %v1011
  %v5130 = vpop.f32.mrb[0].mxu0
  %v5131 = vadd.f32 %v5040, %v5130
  %v5132 = vpop.f32.mrb[0].mxu0
  %v5133 = vadd.f32 %v5042, %v5132
  %v5134 = vpop.f32.mrb[0].mxu0
  %v5135 = vadd.f32 %v5044, %v5134
  %v5136 = vpop.f32.mrb[0].mxu0
  %v5137 = vadd.f32 %v5046, %v5136
  %5138 = vmatprep.mubr.bf16.mxu0 %v1030
  %5139 = vmatmul.mubr.bf16.gmra.mrb[0].mxu0 %v1029
  %v5140 = vpop.f32.mrb[0].mxu0
  %v5141 = vadd.f32 %v5050, %v5140
  %v5142 = vpop.f32.mrb[0].mxu0
  %v5143 = vadd.f32 %v5052, %v5142
  %v5144 = vpop.f32.mrb[0].mxu0
  %v5145 = vadd.f32 %v5054, %v5144
  %v5146 = vpop.f32.mrb[0].mxu0
  %v5147 = vadd.f32 %v5056, %v5146
  %5148 = vmatprep.mubr.bf16.mxu0 %v1048
  %5149 = vmatmul.mubr.bf16.gmra.mrb[0].mxu0 %v1047
  %v5150 = vpop.f32.mrb[0].mxu0
  %v5151 = vadd.f32 %v5060, %v5150
  %v5152 = vpop.f32.mrb[0].mxu0
  %v5153 = vadd.f32 %v5062, %v5152
  %v5154 = vpop.f32.mrb[0].mxu0
  %v5155 = vadd.f32 %v5064, %v5154
  %v5156 = vpop.f32.mrb[0].mxu0
  %v5157 = vadd.f32 %v5066, %v5156
  %5158 = vmatprep.mubr.bf16.mxu0 %v1066
  %5159 = vmatmul.mubr.bf16.gmra.mrb[0].mxu0 %v1065
  %v5160 = vpop.f32.mrb[0].mxu0
  %v5161 = vadd.f32 %v5070, %v5160
  %v5162 = vpop.f32.mrb[0].mxu0
  %v5163 = vadd.f32 %v5072, %v5162
  %v5164 = vpop.f32.mrb[0].mxu0
  %v5165 = vadd.f32 %v5074, %v5164
  %v5166 = vpop.f32.mrb[0].mxu0
  %v5167 = vadd.f32 %v5076, %v5166
  %5168 = vmatprep.mubr.bf16.mxu0 %v1084
  %5169 = vmatmul.mubr.bf16.gmra.mrb[0].mxu0 %v1083
  %v5170 = vpop.f32.mrb[0].mxu0
  %v5171 = vadd.f32 %v5080, %v5170
  %v5172 = vpop.f32.mrb[0].mxu0
  %v5173 = vadd.f32 %v5082, %v5172
  %v5174 = vpop.f32.mrb[0].mxu0
  %v5175 = vpop.f32.mrb[0].mxu0
  %5176 = vdwg.mxu0
  %5177 = vmatprep.subr.bf16.mxu0 %v3128
  %5178 = vmatpush1.bf16.msra.mxu0 %v3127
  %5179 = vmatprep.subr.bf16.mxu0 %v3132
  %5180 = vmatpush1.bf16.msra.mxu0 %v3131
  %5181 = vmatprep.subr.bf16.mxu0 %v3136
  %5182 = vmatpush1.bf16.msra.mxu0 %v3135
  %5183 = vmatprep.subr.bf16.mxu0 %v3140
  %5184 = vmatpush1.bf16.msra.mxu0 %v3139
  %5185 = vmatprep.subr.bf16.mxu0 %v3144
  %5186 = vmatpush1.bf16.msra.mxu0 %v3143
  %5187 = vmatprep.subr.bf16.mxu0 %v3148
  %5188 = vmatpush1.bf16.msra.mxu0 %v3147
  %5189 = vmatprep.subr.bf16.mxu0 %v3152
  %5190 = vmatpush1.bf16.msra.mxu0 %v3151
  %5191 = vmatprep.subr.bf16.mxu0 %v3156
  %5192 = vmatpush1.bf16.msra.mxu0 %v3155
  %5193 = vmatprep.subr.bf16.mxu0 %v3160
  %5194 = vmatpush1.bf16.msra.mxu0 %v3159
  %5195 = vmatprep.subr.bf16.mxu0 %v3164
  %5196 = vmatpush1.bf16.msra.mxu0 %v3163
  %5197 = vmatprep.subr.bf16.mxu0 %v3168
  %5198 = vmatpush1.bf16.msra.mxu0 %v3167
  %5199 = vmatprep.subr.bf16.mxu0 %v3172
  %5200 = vmatpush1.bf16.msra.mxu0 %v3171
  %5201 = vmatprep.subr.bf16.mxu0 %v3176
  %5202 = vmatpush1.bf16.msra.mxu0 %v3175
  %5203 = vmatprep.subr.bf16.mxu0 %v3180
  %5204 = vmatpush1.bf16.msra.mxu0 %v3179
  %5205 = vmatprep.subr.bf16.mxu0 %v3184
  %5206 = vmatpush1.bf16.msra.mxu0 %v3183
  %5207 = vmatprep.subr.bf16.mxu0 %v3188
  %5208 = vmatpush1.bf16.msra.mxu0 %v3187
  %5209 = vmatprep.mubr.bf16.mxu0 %v996
  %5210 = vmatmul.mubr.bf16.gmra.mrb[0].mxu0 %v995
  %v5211 = vpop.f32.mrb[0].mxu0
  %v5212 = vadd.f32 %v5121, %v5211
  %v5213 = vpop.f32.mrb[0].mxu0
  %v5214 = vadd.f32 %v5123, %v5213
  %v5215 = vpop.f32.mrb[0].mxu0
  %v5216 = vadd.f32 %v5125, %v5215
  %v5217 = vpop.f32.mrb[0].mxu0
  %v5218 = vadd.f32 %v5127, %v5217
  %5219 = vmatprep.mubr.bf16.mxu0 %v1014
  %5220 = vmatmul.mubr.bf16.gmra.mrb[0].mxu0 %v1013
  %v5221 = vpop.f32.mrb[0].mxu0
  %v5222 = vadd.f32 %v5131, %v5221
  %v5223 = vpop.f32.mrb[0].mxu0
  %v5224 = vadd.f32 %v5133, %v5223
  %v5225 = vpop.f32.mrb[0].mxu0
  %v5226 = vadd.f32 %v5135, %v5225
  %v5227 = vpop.f32.mrb[0].mxu0
  %v5228 = vadd.f32 %v5137, %v5227
  %5229 = vmatprep.mubr.bf16.mxu0 %v1032
  %5230 = vmatmul.mubr.bf16.gmra.mrb[0].mxu0 %v1031
  %v5231 = vpop.f32.mrb[0].mxu0
  %v5232 = vadd.f32 %v5141, %v5231
  %v5233 = vpop.f32.mrb[0].mxu0
  %v5234 = vadd.f32 %v5143, %v5233
  %v5235 = vpop.f32.mrb[0].mxu0
  %v5236 = vadd.f32 %v5145, %v5235
  %v5237 = vpop.f32.mrb[0].mxu0
  %v5238 = vadd.f32 %v5147, %v5237
  %5239 = vmatprep.mubr.bf16.mxu0 %v1050
  %5240 = vmatmul.mubr.bf16.gmra.mrb[0].mxu0 %v1049
  %v5241 = vpop.f32.mrb[0].mxu0
  %v5242 = vadd.f32 %v5151, %v5241
  %v5243 = vpop.f32.mrb[0].mxu0
  %v5244 = vadd.f32 %v5153, %v5243
  %v5245 = vpop.f32.mrb[0].mxu0
  %v5246 = vadd.f32 %v5155, %v5245
  %v5247 = vpop.f32.mrb[0].mxu0
  %v5248 = vadd.f32 %v5157, %v5247
  %5249 = vmatprep.mubr.bf16.mxu0 %v1068
  %5250 = vmatmul.mubr.bf16.gmra.mrb[0].mxu0 %v1067
  %v5251 = vpop.f32.mrb[0].mxu0
  %v5252 = vadd.f32 %v5161, %v5251
  %v5253 = vpop.f32.mrb[0].mxu0
  %v5254 = vadd.f32 %v5163, %v5253
  %v5255 = vpop.f32.mrb[0].mxu0
  %v5256 = vadd.f32 %v5165, %v5255
  %v5257 = vpop.f32.mrb[0].mxu0
  %v5258 = vadd.f32 %v5167, %v5257
  %5259 = vmatprep.mubr.bf16.mxu0 %v1086
  %5260 = vmatmul.mubr.bf16.gmra.mrb[0].mxu0 %v1085
  %v5261 = vpop.f32.mrb[0].mxu0
  %v5262 = vadd.f32 %v5171, %v5261
  %v5263 = vpop.f32.mrb[0].mxu0
  %v5264 = vadd.f32 %v5173, %v5263
  %v5265 = vpop.f32.mrb[0].mxu0
  %v5266 = vpop.f32.mrb[0].mxu0
  %5267 = vdwg.mxu0
  %5268 = vmatprep.subr.bf16.mxu0 %v3192
  %5269 = vmatpush1.bf16.msra.mxu0 %v3191
  %5270 = vmatprep.subr.bf16.mxu0 %v3196
  %5271 = vmatpush1.bf16.msra.mxu0 %v3195
  %5272 = vmatprep.subr.bf16.mxu0 %v3200
  %5273 = vmatpush1.bf16.msra.mxu0 %v3199
  %5274 = vmatprep.subr.bf16.mxu0 %v3204
  %5275 = vmatpush1.bf16.msra.mxu0 %v3203
  %5276 = vmatprep.subr.bf16.mxu0 %v3208
  %5277 = vmatpush1.bf16.msra.mxu0 %v3207
  %5278 = vmatprep.subr.bf16.mxu0 %v3212
  %5279 = vmatpush1.bf16.msra.mxu0 %v3211
  %5280 = vmatprep.subr.bf16.mxu0 %v3216
  %5281 = vmatpush1.bf16.msra.mxu0 %v3215
  %5282 = vmatprep.subr.bf16.mxu0 %v3220
  %5283 = vmatpush1.bf16.msra.mxu0 %v3219
  %5284 = vmatprep.subr.bf16.mxu0 %v3224
  %5285 = vmatpush1.bf16.msra.mxu0 %v3223
  %5286 = vmatprep.subr.bf16.mxu0 %v3228
  %5287 = vmatpush1.bf16.msra.mxu0 %v3227
  %5288 = vmatprep.subr.bf16.mxu0 %v3232
  %5289 = vmatpush1.bf16.msra.mxu0 %v3231
  %5290 = vmatprep.subr.bf16.mxu0 %v3236
  %5291 = vmatpush1.bf16.msra.mxu0 %v3235
  %5292 = vmatprep.subr.bf16.mxu0 %v3240
  %5293 = vmatpush1.bf16.msra.mxu0 %v3239
  %5294 = vmatprep.subr.bf16.mxu0 %v3244
  %5295 = vmatpush1.bf16.msra.mxu0 %v3243
  %5296 = vmatprep.subr.bf16.mxu0 %v3248
  %5297 = vmatpush1.bf16.msra.mxu0 %v3247
  %5298 = vmatprep.subr.bf16.mxu0 %v3252
  %5299 = vmatpush1.bf16.msra.mxu0 %v3251
  %5300 = vmatprep.mubr.bf16.mxu0 %v998
  %5301 = vmatmul.mubr.bf16.gmra.mrb[0].mxu0 %v997
  %v5302 = vpop.f32.mrb[0].mxu0
  %v5303 = vadd.f32 %v5212, %v5302
  %v5304 = vpop.f32.mrb[0].mxu0
  %v5305 = vadd.f32 %v5214, %v5304
  %v5306 = vpop.f32.mrb[0].mxu0
  %v5307 = vadd.f32 %v5216, %v5306
  %v5308 = vpop.f32.mrb[0].mxu0
  %v5309 = vadd.f32 %v5218, %v5308
  %5310 = vmatprep.mubr.bf16.mxu0 %v1016
  %5311 = vmatmul.mubr.bf16.gmra.mrb[0].mxu0 %v1015
  %v5312 = vpop.f32.mrb[0].mxu0
  %v5313 = vadd.f32 %v5222, %v5312
  %v5314 = vpop.f32.mrb[0].mxu0
  %v5315 = vadd.f32 %v5224, %v5314
  %v5316 = vpop.f32.mrb[0].mxu0
  %v5317 = vadd.f32 %v5226, %v5316
  %v5318 = vpop.f32.mrb[0].mxu0
  %v5319 = vadd.f32 %v5228, %v5318
  %5320 = vmatprep.mubr.bf16.mxu0 %v1034
  %5321 = vmatmul.mubr.bf16.gmra.mrb[0].mxu0 %v1033
  %v5322 = vpop.f32.mrb[0].mxu0
  %v5323 = vadd.f32 %v5232, %v5322
  %v5324 = vpop.f32.mrb[0].mxu0
  %v5325 = vadd.f32 %v5234, %v5324
  %v5326 = vpop.f32.mrb[0].mxu0
  %v5327 = vadd.f32 %v5236, %v5326
  %v5328 = vpop.f32.mrb[0].mxu0
  %v5329 = vadd.f32 %v5238, %v5328
  %5330 = vmatprep.mubr.bf16.mxu0 %v1052
  %5331 = vmatmul.mubr.bf16.gmra.mrb[0].mxu0 %v1051
  %v5332 = vpop.f32.mrb[0].mxu0
  %v5333 = vadd.f32 %v5242, %v5332
  %v5334 = vpop.f32.mrb[0].mxu0
  %v5335 = vadd.f32 %v5244, %v5334
  %v5336 = vpop.f32.mrb[0].mxu0
  %v5337 = vadd.f32 %v5246, %v5336
  %v5338 = vpop.f32.mrb[0].mxu0
  %v5339 = vadd.f32 %v5248, %v5338
  %5340 = vmatprep.mubr.bf16.mxu0 %v1070
  %5341 = vmatmul.mubr.bf16.gmra.mrb[0].mxu0 %v1069
  %v5342 = vpop.f32.mrb[0].mxu0
  %v5343 = vadd.f32 %v5252, %v5342
  %v5344 = vpop.f32.mrb[0].mxu0
  %v5345 = vadd.f32 %v5254, %v5344
  %v5346 = vpop.f32.mrb[0].mxu0
  %v5347 = vadd.f32 %v5256, %v5346
  %v5348 = vpop.f32.mrb[0].mxu0
  %v5349 = vadd.f32 %v5258, %v5348
  %5350 = vmatprep.mubr.bf16.mxu0 %v1088
  %5351 = vmatmul.mubr.bf16.gmra.mrb[0].mxu0 %v1087
  %v5352 = vpop.f32.mrb[0].mxu0
  %v5353 = vadd.f32 %v5262, %v5352
  %v5354 = vpop.f32.mrb[0].mxu0
  %v5355 = vadd.f32 %v5264, %v5354
  %v5356 = vpop.f32.mrb[0].mxu0
  %v5357 = vpop.f32.mrb[0].mxu0
  %5358 = vdwg.mxu0
  %5359 = vmatprep.subr.bf16.mxu0 %v3256
  %5360 = vmatpush1.bf16.msra.mxu0 %v3255
  %5361 = vmatprep.subr.bf16.mxu0 %v3260
  %5362 = vmatpush1.bf16.msra.mxu0 %v3259
  %5363 = vmatprep.subr.bf16.mxu0 %v3264
  %5364 = vmatpush1.bf16.msra.mxu0 %v3263
  %5365 = vmatprep.subr.bf16.mxu0 %v3268
  %5366 = vmatpush1.bf16.msra.mxu0 %v3267
  %5367 = vmatprep.subr.bf16.mxu0 %v3272
  %5368 = vmatpush1.bf16.msra.mxu0 %v3271
  %5369 = vmatprep.subr.bf16.mxu0 %v3276
  %5370 = vmatpush1.bf16.msra.mxu0 %v3275
  %5371 = vmatprep.subr.bf16.mxu0 %v3280
  %5372 = vmatpush1.bf16.msra.mxu0 %v3279
  %5373 = vmatprep.subr.bf16.mxu0 %v3284
  %5374 = vmatpush1.bf16.msra.mxu0 %v3283
  %5375 = vmatprep.subr.bf16.mxu0 %v3288
  %5376 = vmatpush1.bf16.msra.mxu0 %v3287
  %5377 = vmatprep.subr.bf16.mxu0 %v3292
  %5378 = vmatpush1.bf16.msra.mxu0 %v3291
  %5379 = vmatprep.subr.bf16.mxu0 %v3296
  %5380 = vmatpush1.bf16.msra.mxu0 %v3295
  %5381 = vmatprep.subr.bf16.mxu0 %v3300
  %5382 = vmatpush1.bf16.msra.mxu0 %v3299
  %5383 = vmatprep.subr.bf16.mxu0 %v3304
  %5384 = vmatpush1.bf16.msra.mxu0 %v3303
  %5385 = vmatprep.subr.bf16.mxu0 %v3308
  %5386 = vmatpush1.bf16.msra.mxu0 %v3307
  %5387 = vmatprep.subr.bf16.mxu0 %v3312
  %5388 = vmatpush1.bf16.msra.mxu0 %v3311
  %5389 = vmatprep.subr.bf16.mxu0 %v3316
  %5390 = vmatpush1.bf16.msra.mxu0 %v3315
  %5391 = vmatprep.mubr.bf16.mxu0 %v1000
  %5392 = vmatmul.mubr.bf16.gmra.mrb[0].mxu0 %v999
  %v5393 = vpop.f32.mrb[0].mxu0
  %v5394 = vadd.f32 %v5303, %v5393
  %v5395 = vpop.f32.mrb[0].mxu0
  %v5396 = vadd.f32 %v5305, %v5395
  %v5397 = vpop.f32.mrb[0].mxu0
  %v5398 = vadd.f32 %v5307, %v5397
  %v5399 = vpop.f32.mrb[0].mxu0
  %v5400 = vadd.f32 %v5309, %v5399
  %5401 = vmatprep.mubr.bf16.mxu0 %v1018
  %5402 = vmatmul.mubr.bf16.gmra.mrb[0].mxu0 %v1017
  %v5403 = vpop.f32.mrb[0].mxu0
  %v5404 = vadd.f32 %v5313, %v5403
  %v5405 = vpop.f32.mrb[0].mxu0
  %v5406 = vadd.f32 %v5315, %v5405
  %v5407 = vpop.f32.mrb[0].mxu0
  %v5408 = vadd.f32 %v5317, %v5407
  %v5409 = vpop.f32.mrb[0].mxu0
  %v5410 = vadd.f32 %v5319, %v5409
  %5411 = vmatprep.mubr.bf16.mxu0 %v1036
  %5412 = vmatmul.mubr.bf16.gmra.mrb[0].mxu0 %v1035
  %v5413 = vpop.f32.mrb[0].mxu0
  %v5414 = vadd.f32 %v5323, %v5413
  %v5415 = vpop.f32.mrb[0].mxu0
  %v5416 = vadd.f32 %v5325, %v5415
  %v5417 = vpop.f32.mrb[0].mxu0
  %v5418 = vadd.f32 %v5327, %v5417
  %v5419 = vpop.f32.mrb[0].mxu0
  %v5420 = vadd.f32 %v5329, %v5419
  %5421 = vmatprep.mubr.bf16.mxu0 %v1054
  %5422 = vmatmul.mubr.bf16.gmra.mrb[0].mxu0 %v1053
  %v5423 = vpop.f32.mrb[0].mxu0
  %v5424 = vadd.f32 %v5333, %v5423
  %v5425 = vpop.f32.mrb[0].mxu0
  %v5426 = vadd.f32 %v5335, %v5425
  %v5427 = vpop.f32.mrb[0].mxu0
  %v5428 = vadd.f32 %v5337, %v5427
  %v5429 = vpop.f32.mrb[0].mxu0
  %v5430 = vadd.f32 %v5339, %v5429
  %5431 = vmatprep.mubr.bf16.mxu0 %v1072
  %5432 = vmatmul.mubr.bf16.gmra.mrb[0].mxu0 %v1071
  %v5433 = vpop.f32.mrb[0].mxu0
  %v5434 = vadd.f32 %v5343, %v5433
  %v5435 = vpop.f32.mrb[0].mxu0
  %v5436 = vadd.f32 %v5345, %v5435
  %v5437 = vpop.f32.mrb[0].mxu0
  %v5438 = vadd.f32 %v5347, %v5437
  %v5439 = vpop.f32.mrb[0].mxu0
  %v5440 = vadd.f32 %v5349, %v5439
  %5441 = vmatprep.mubr.bf16.mxu0 %v1090
  %5442 = vmatmul.mubr.bf16.gmra.mrb[0].mxu0 %v1089
  %v5443 = vpop.f32.mrb[0].mxu0
  %v5444 = vadd.f32 %v5353, %v5443
  %v5445 = vpop.f32.mrb[0].mxu0
  %v5446 = vadd.f32 %v5355, %v5445
  %v5447 = vpop.f32.mrb[0].mxu0
  %v5448 = vpop.f32.mrb[0].mxu0
  %5449 = vdwg.mxu0
  %5450 = vmatprep.subr.bf16.mxu0 %v3320
  %5451 = vmatpush1.bf16.msra.mxu0 %v3319
  %5452 = vmatprep.subr.bf16.mxu0 %v3324
  %5453 = vmatpush1.bf16.msra.mxu0 %v3323
  %5454 = vmatprep.subr.bf16.mxu0 %v3328
  %5455 = vmatpush1.bf16.msra.mxu0 %v3327
  %5456 = vmatprep.subr.bf16.mxu0 %v3332
  %5457 = vmatpush1.bf16.msra.mxu0 %v3331
  %5458 = vmatprep.subr.bf16.mxu0 %v3336
  %5459 = vmatpush1.bf16.msra.mxu0 %v3335
  %5460 = vmatprep.subr.bf16.mxu0 %v3340
  %5461 = vmatpush1.bf16.msra.mxu0 %v3339
  %5462 = vmatprep.subr.bf16.mxu0 %v3344
  %5463 = vmatpush1.bf16.msra.mxu0 %v3343
  %5464 = vmatprep.subr.bf16.mxu0 %v3348
  %5465 = vmatpush1.bf16.msra.mxu0 %v3347
  %5466 = vmatprep.subr.bf16.mxu0 %v3352
  %5467 = vmatpush1.bf16.msra.mxu0 %v3351
  %5468 = vmatprep.subr.bf16.mxu0 %v3356
  %5469 = vmatpush1.bf16.msra.mxu0 %v3355
  %5470 = vmatprep.subr.bf16.mxu0 %v3360
  %5471 = vmatpush1.bf16.msra.mxu0 %v3359
  %5472 = vmatprep.subr.bf16.mxu0 %v3364
  %5473 = vmatpush1.bf16.msra.mxu0 %v3363
  %5474 = vmatprep.subr.bf16.mxu0 %v3368
  %5475 = vmatpush1.bf16.msra.mxu0 %v3367
  %5476 = vmatprep.subr.bf16.mxu0 %v3372
  %5477 = vmatpush1.bf16.msra.mxu0 %v3371
  %5478 = vmatprep.subr.bf16.mxu0 %v3376
  %5479 = vmatpush1.bf16.msra.mxu0 %v3375
  %5480 = vmatprep.subr.bf16.mxu0 %v3380
  %5481 = vmatpush1.bf16.msra.mxu0 %v3379
  %5482 = vmatprep.mubr.bf16.mxu0 %v1002
  %5483 = vmatmul.mubr.bf16.gmra.mrb[0].mxu0 %v1001
  %v5484 = vpop.f32.mrb[0].mxu0
  %v5485 = vadd.f32 %v5394, %v5484
  %v5486 = vpop.f32.mrb[0].mxu0
  %v5487 = vadd.f32 %v5396, %v5486
  %v5488 = vpop.f32.mrb[0].mxu0
  %v5489 = vadd.f32 %v5398, %v5488
  %v5490 = vpop.f32.mrb[0].mxu0
  %v5491 = vadd.f32 %v5400, %v5490
  %5492 = vmatprep.mubr.bf16.mxu0 %v1020
  %5493 = vmatmul.mubr.bf16.gmra.mrb[0].mxu0 %v1019
  %v5494 = vpop.f32.mrb[0].mxu0
  %v5495 = vadd.f32 %v5404, %v5494
  %v5496 = vpop.f32.mrb[0].mxu0
  %v5497 = vadd.f32 %v5406, %v5496
  %v5498 = vpop.f32.mrb[0].mxu0
  %v5499 = vadd.f32 %v5408, %v5498
  %v5500 = vpop.f32.mrb[0].mxu0
  %v5501 = vadd.f32 %v5410, %v5500
  %5502 = vmatprep.mubr.bf16.mxu0 %v1038
  %5503 = vmatmul.mubr.bf16.gmra.mrb[0].mxu0 %v1037
  %v5504 = vpop.f32.mrb[0].mxu0
  %v5505 = vadd.f32 %v5414, %v5504
  %v5506 = vpop.f32.mrb[0].mxu0
  %v5507 = vadd.f32 %v5416, %v5506
  %v5508 = vpop.f32.mrb[0].mxu0
  %v5509 = vadd.f32 %v5418, %v5508
  %v5510 = vpop.f32.mrb[0].mxu0
  %v5511 = vadd.f32 %v5420, %v5510
  %5512 = vmatprep.mubr.bf16.mxu0 %v1056
  %5513 = vmatmul.mubr.bf16.gmra.mrb[0].mxu0 %v1055
  %v5514 = vpop.f32.mrb[0].mxu0
  %v5515 = vadd.f32 %v5424, %v5514
  %v5516 = vpop.f32.mrb[0].mxu0
  %v5517 = vadd.f32 %v5426, %v5516
  %v5518 = vpop.f32.mrb[0].mxu0
  %v5519 = vadd.f32 %v5428, %v5518
  %v5520 = vpop.f32.mrb[0].mxu0
  %v5521 = vadd.f32 %v5430, %v5520
  %5522 = vmatprep.mubr.bf16.mxu0 %v1074
  %5523 = vmatmul.mubr.bf16.gmra.mrb[0].mxu0 %v1073
  %v5524 = vpop.f32.mrb[0].mxu0
  %v5525 = vadd.f32 %v5434, %v5524
  %v5526 = vpop.f32.mrb[0].mxu0
  %v5527 = vadd.f32 %v5436, %v5526
  %v5528 = vpop.f32.mrb[0].mxu0
  %v5529 = vadd.f32 %v5438, %v5528
  %v5530 = vpop.f32.mrb[0].mxu0
  %v5531 = vadd.f32 %v5440, %v5530
  %5532 = vmatprep.mubr.bf16.mxu0 %v1092
  %5533 = vmatmul.mubr.bf16.gmra.mrb[0].mxu0 %v1091
  %v5534 = vpop.f32.mrb[0].mxu0
  %v5535 = vadd.f32 %v5444, %v5534
  %v5536 = vpop.f32.mrb[0].mxu0
  %v5537 = vadd.f32 %v5446, %v5536
  %v5538 = vpop.f32.mrb[0].mxu0
  %v5539 = vpop.f32.mrb[0].mxu0
  %5540 = vdwg.mxu0
  %5541 = vmatprep.subr.bf16.mxu0 %v3384
  %5542 = vmatpush1.bf16.msra.mxu0 %v3383
  %5543 = vmatprep.subr.bf16.mxu0 %v3388
  %5544 = vmatpush1.bf16.msra.mxu0 %v3387
  %5545 = vmatprep.subr.bf16.mxu0 %v3392
  %5546 = vmatpush1.bf16.msra.mxu0 %v3391
  %5547 = vmatprep.subr.bf16.mxu0 %v3396
  %5548 = vmatpush1.bf16.msra.mxu0 %v3395
  %5549 = vmatprep.subr.bf16.mxu0 %v3400
  %5550 = vmatpush1.bf16.msra.mxu0 %v3399
  %5551 = vmatprep.subr.bf16.mxu0 %v3404
  %5552 = vmatpush1.bf16.msra.mxu0 %v3403
  %5553 = vmatprep.subr.bf16.mxu0 %v3408
  %5554 = vmatpush1.bf16.msra.mxu0 %v3407
  %5555 = vmatprep.subr.bf16.mxu0 %v3412
  %5556 = vmatpush1.bf16.msra.mxu0 %v3411
  %5557 = vmatprep.subr.bf16.mxu0 %v3416
  %5558 = vmatpush1.bf16.msra.mxu0 %v3415
  %5559 = vmatprep.subr.bf16.mxu0 %v3420
  %5560 = vmatpush1.bf16.msra.mxu0 %v3419
  %5561 = vmatprep.subr.bf16.mxu0 %v3424
  %5562 = vmatpush1.bf16.msra.mxu0 %v3423
  %5563 = vmatprep.subr.bf16.mxu0 %v3428
  %5564 = vmatpush1.bf16.msra.mxu0 %v3427
  %5565 = vmatprep.subr.bf16.mxu0 %v3432
  %5566 = vmatpush1.bf16.msra.mxu0 %v3431
  %5567 = vmatprep.subr.bf16.mxu0 %v3436
  %5568 = vmatpush1.bf16.msra.mxu0 %v3435
  %5569 = vmatprep.subr.bf16.mxu0 %v3440
  %5570 = vmatpush1.bf16.msra.mxu0 %v3439
  %5571 = vmatprep.subr.bf16.mxu0 %v3444
  %5572 = vmatpush1.bf16.msra.mxu0 %v3443
  %5573 = vmatprep.mubr.bf16.mxu0 %v1004
  %5574 = vmatmul.mubr.bf16.gmra.mrb[0].mxu0 %v1003
  %v5575 = vpop.f32.mrb[0].mxu0
  %v5576 = vadd.f32 %v5485, %v5575
  %v5577 = vpop.f32.mrb[0].mxu0
  %v5578 = vadd.f32 %v5487, %v5577
  %v5579 = vpop.f32.mrb[0].mxu0
  %v5580 = vadd.f32 %v5489, %v5579
  %v5581 = vpop.f32.mrb[0].mxu0
  %v5582 = vadd.f32 %v5491, %v5581
  %5583 = vmatprep.mubr.bf16.mxu0 %v1022
  %5584 = vmatmul.mubr.bf16.gmra.mrb[0].mxu0 %v1021
  %v5585 = vpop.f32.mrb[0].mxu0
  %v5586 = vadd.f32 %v5495, %v5585
  %v5587 = vpop.f32.mrb[0].mxu0
  %v5588 = vadd.f32 %v5497, %v5587
  %v5589 = vpop.f32.mrb[0].mxu0
  %v5590 = vadd.f32 %v5499, %v5589
  %v5591 = vpop.f32.mrb[0].mxu0
  %v5592 = vadd.f32 %v5501, %v5591
  %5593 = vmatprep.mubr.bf16.mxu0 %v1040
  %5594 = vmatmul.mubr.bf16.gmra.mrb[0].mxu0 %v1039
  %v5595 = vpop.f32.mrb[0].mxu0
  %v5596 = vadd.f32 %v5505, %v5595
  %v5597 = vpop.f32.mrb[0].mxu0
  %v5598 = vadd.f32 %v5507, %v5597
  %v5599 = vpop.f32.mrb[0].mxu0
  %v5600 = vadd.f32 %v5509, %v5599
  %v5601 = vpop.f32.mrb[0].mxu0
  %v5602 = vadd.f32 %v5511, %v5601
  %5603 = vmatprep.mubr.bf16.mxu0 %v1058
  %5604 = vmatmul.mubr.bf16.gmra.mrb[0].mxu0 %v1057
  %v5605 = vpop.f32.mrb[0].mxu0
  %v5606 = vadd.f32 %v5515, %v5605
  %v5607 = vpop.f32.mrb[0].mxu0
  %v5608 = vadd.f32 %v5517, %v5607
  %v5609 = vpop.f32.mrb[0].mxu0
  %v5610 = vadd.f32 %v5519, %v5609
  %v5611 = vpop.f32.mrb[0].mxu0
  %v5612 = vadd.f32 %v5521, %v5611
  %5613 = vmatprep.mubr.bf16.mxu0 %v1076
  %5614 = vmatmul.mubr.bf16.gmra.mrb[0].mxu0 %v1075
  %v5615 = vpop.f32.mrb[0].mxu0
  %v5616 = vadd.f32 %v5525, %v5615
  %v5617 = vpop.f32.mrb[0].mxu0
  %v5618 = vadd.f32 %v5527, %v5617
  %v5619 = vpop.f32.mrb[0].mxu0
  %v5620 = vadd.f32 %v5529, %v5619
  %v5621 = vpop.f32.mrb[0].mxu0
  %v5622 = vadd.f32 %v5531, %v5621
  %5623 = vmatprep.mubr.bf16.mxu0 %v1094
  %5624 = vmatmul.mubr.bf16.gmra.mrb[0].mxu0 %v1093
  %v5625 = vpop.f32.mrb[0].mxu0
  %v5626 = vadd.f32 %v5535, %v5625
  %v5627 = vpop.f32.mrb[0].mxu0
  %v5628 = vadd.f32 %v5537, %v5627
  %v5629 = vpop.f32.mrb[0].mxu0
  %v5630 = vpop.f32.mrb[0].mxu0
  %5631 = vdwg.mxu0
  %5632 = vmatprep.subr.bf16.mxu0 %v3448
  %5633 = vmatpush1.bf16.msra.mxu0 %v3447
  %5634 = vmatprep.subr.bf16.mxu0 %v3452
  %5635 = vmatpush1.bf16.msra.mxu0 %v3451
  %5636 = vmatprep.subr.bf16.mxu0 %v3456
  %5637 = vmatpush1.bf16.msra.mxu0 %v3455
  %5638 = vmatprep.subr.bf16.mxu0 %v3460
  %5639 = vmatpush1.bf16.msra.mxu0 %v3459
  %5640 = vmatprep.subr.bf16.mxu0 %v3464
  %5641 = vmatpush1.bf16.msra.mxu0 %v3463
  %5642 = vmatprep.subr.bf16.mxu0 %v3468
  %5643 = vmatpush1.bf16.msra.mxu0 %v3467
  %5644 = vmatprep.subr.bf16.mxu0 %v3472
  %5645 = vmatpush1.bf16.msra.mxu0 %v3471
  %5646 = vmatprep.subr.bf16.mxu0 %v3476
  %5647 = vmatpush1.bf16.msra.mxu0 %v3475
  %5648 = vmatprep.subr.bf16.mxu0 %v3480
  %5649 = vmatpush1.bf16.msra.mxu0 %v3479
  %5650 = vmatprep.subr.bf16.mxu0 %v3484
  %5651 = vmatpush1.bf16.msra.mxu0 %v3483
  %5652 = vmatprep.subr.bf16.mxu0 %v3488
  %5653 = vmatpush1.bf16.msra.mxu0 %v3487
  %5654 = vmatprep.subr.bf16.mxu0 %v3492
  %5655 = vmatpush1.bf16.msra.mxu0 %v3491
  %5656 = vmatprep.subr.bf16.mxu0 %v3496
  %5657 = vmatpush1.bf16.msra.mxu0 %v3495
  %5658 = vmatprep.subr.bf16.mxu0 %v3500
  %5659 = vmatpush1.bf16.msra.mxu0 %v3499
  %5660 = vmatprep.subr.bf16.mxu0 %v3504
  %5661 = vmatpush1.bf16.msra.mxu0 %v3503
  %5662 = vmatprep.subr.bf16.mxu0 %v3508
  %5663 = vmatpush1.bf16.msra.mxu0 %v3507
  %5664 = vmatprep.mubr.bf16.mxu0 %v1006
  %5665 = vmatmul.mubr.bf16.gmra.mrb[0].mxu0 %v1005
  %v5666 = vpop.f32.mrb[0].mxu0
  %v5667 = vadd.f32 %v5576, %v5666
  %v5668 = vpop.f32.mrb[0].mxu0
  %v5669 = vadd.f32 %v5578, %v5668
  %v5670 = vpop.f32.mrb[0].mxu0
  %v5671 = vadd.f32 %v5580, %v5670
  %v5672 = vpop.f32.mrb[0].mxu0
  %v5673 = vadd.f32 %v5582, %v5672
  %5674 = vmatprep.mubr.bf16.mxu0 %v1024
  %5675 = vmatmul.mubr.bf16.gmra.mrb[0].mxu0 %v1023
  %v5676 = vpop.f32.mrb[0].mxu0
  %v5677 = vadd.f32 %v5586, %v5676
  %v5678 = vpop.f32.mrb[0].mxu0
  %v5679 = vadd.f32 %v5588, %v5678
  %v5680 = vpop.f32.mrb[0].mxu0
  %v5681 = vadd.f32 %v5590, %v5680
  %v5682 = vpop.f32.mrb[0].mxu0
  %v5683 = vadd.f32 %v5592, %v5682
  %5684 = vmatprep.mubr.bf16.mxu0 %v1042
  %5685 = vmatmul.mubr.bf16.gmra.mrb[0].mxu0 %v1041
  %v5686 = vpop.f32.mrb[0].mxu0
  %v5687 = vadd.f32 %v5596, %v5686
  %v5688 = vpop.f32.mrb[0].mxu0
  %v5689 = vadd.f32 %v5598, %v5688
  %v5690 = vpop.f32.mrb[0].mxu0
  %v5691 = vadd.f32 %v5600, %v5690
  %v5692 = vpop.f32.mrb[0].mxu0
  %v5693 = vadd.f32 %v5602, %v5692
  %5694 = vmatprep.mubr.bf16.mxu0 %v1060
  %5695 = vmatmul.mubr.bf16.gmra.mrb[0].mxu0 %v1059
  %v5696 = vpop.f32.mrb[0].mxu0
  %v5697 = vadd.f32 %v5606, %v5696
  %v5698 = vpop.f32.mrb[0].mxu0
  %v5699 = vadd.f32 %v5608, %v5698
  %v5700 = vpop.f32.mrb[0].mxu0
  %v5701 = vadd.f32 %v5610, %v5700
  %v5702 = vpop.f32.mrb[0].mxu0
  %v5703 = vadd.f32 %v5612, %v5702
  %5704 = vmatprep.mubr.bf16.mxu0 %v1078
  %5705 = vmatmul.mubr.bf16.gmra.mrb[0].mxu0 %v1077
  %v5706 = vpop.f32.mrb[0].mxu0
  %v5707 = vadd.f32 %v5616, %v5706
  %v5708 = vpop.f32.mrb[0].mxu0
  %v5709 = vadd.f32 %v5618, %v5708
  %v5710 = vpop.f32.mrb[0].mxu0
  %v5711 = vadd.f32 %v5620, %v5710
  %v5712 = vpop.f32.mrb[0].mxu0
  %v5713 = vadd.f32 %v5622, %v5712
  %5714 = vmatprep.mubr.bf16.mxu0 %v1096
  %5715 = vmatmul.mubr.bf16.gmra.mrb[0].mxu0 %v1095
  %v5716 = vpop.f32.mrb[0].mxu0
  %v5717 = vadd.f32 %v5626, %v5716
  %v5718 = vpop.f32.mrb[0].mxu0
  %v5719 = vadd.f32 %v5628, %v5718
  %v5720 = vpop.f32.mrb[0].mxu0
  %v5721 = vpop.f32.mrb[0].mxu0
  %5722 = vdwg.mxu0
  %v5723 = vld [vmem:[%s2] sm:$0xf]
  %v5725 = vlaneseq
  %v5726 = vshrl.u32 %v5725, 7
  %v5727 = vsub.s32 0, %v5726
  %v5728 = vrot.slane %v5723, %v5727
  %v5729 = vlaneseq
  %v5730 = vshrl.u32 %v5729, 7
  %v5731 = vsub.s32 1, %v5730
  %v5732 = vrot.slane %v5723, %v5731
  %v5733 = vlaneseq
  %v5734 = vshrl.u32 %v5733, 7
  %v5735 = vsub.s32 2, %v5734
  %v5736 = vrot.slane %v5723, %v5735
  %v5737 = vlaneseq
  %v5738 = vshrl.u32 %v5737, 7
  %v5739 = vsub.s32 3, %v5738
  %v5740 = vrot.slane %v5723, %v5739
  %v5745 = vmul.f32 %v4848, %v5728
  %v5746 = vmul.f32 %v4850, %v5732
  %v5747 = vmul.f32 %v5667, %v5736
  %v5748 = vmul.f32 %v5669, %v5740
  %v5749 = vmul.f32 %v4852, %v5728
  %v5750 = vmul.f32 %v4854, %v5732
  %v5751 = vmul.f32 %v5671, %v5736
  %v5752 = vmul.f32 %v5673, %v5740
  %v5753 = vmul.f32 %v4858, %v5728
  %v5754 = vmul.f32 %v4860, %v5732
  %v5755 = vmul.f32 %v5677, %v5736
  %v5756 = vmul.f32 %v5679, %v5740
  %v5757 = vmul.f32 %v4862, %v5728
  %v5758 = vmul.f32 %v4864, %v5732
  %v5759 = vmul.f32 %v5681, %v5736
  %v5760 = vmul.f32 %v5683, %v5740
  %v5761 = vmul.f32 %v4868, %v5728
  %v5762 = vmul.f32 %v4870, %v5732
  %v5763 = vmul.f32 %v5687, %v5736
  %v5764 = vmul.f32 %v5689, %v5740
  %v5765 = vmul.f32 %v4872, %v5728
  %v5766 = vmul.f32 %v4874, %v5732
  %v5767 = vmul.f32 %v5691, %v5736
  %v5768 = vmul.f32 %v5693, %v5740
  %v5769 = vmul.f32 %v4878, %v5728
  %v5770 = vmul.f32 %v4880, %v5732
  %v5771 = vmul.f32 %v5697, %v5736
  %v5772 = vmul.f32 %v5699, %v5740
  %v5773 = vmul.f32 %v4882, %v5728
  %v5774 = vmul.f32 %v4884, %v5732
  %v5775 = vmul.f32 %v5701, %v5736
  %v5776 = vmul.f32 %v5703, %v5740
  %v5777 = vmul.f32 %v4888, %v5728
  %v5778 = vmul.f32 %v4890, %v5732
  %v5779 = vmul.f32 %v5707, %v5736
  %v5780 = vmul.f32 %v5709, %v5740
  %v5781 = vmul.f32 %v4892, %v5728
  %v5782 = vmul.f32 %v4894, %v5732
  %v5783 = vmul.f32 %v5711, %v5736
  %v5784 = vmul.f32 %v5713, %v5740
  %v5785 = vmul.f32 %v4898, %v5728
  %v5786 = vmul.f32 %v4900, %v5732
  %v5787 = vmul.f32 %v5717, %v5736
  %v5788 = vmul.f32 %v5719, %v5740
  %v5789 = vld [vmem:[%s3] sm:$0xf]
  %v5791 = vlaneseq
  %v5792 = vshrl.u32 %v5791, 7
  %v5793 = vsub.s32 0, %v5792
  %v5794 = vrot.slane %v5789, %v5793
  %v5795 = vlaneseq
  %v5796 = vshrl.u32 %v5795, 7
  %v5797 = vsub.s32 1, %v5796
  %v5798 = vrot.slane %v5789, %v5797
  %v5799 = vlaneseq
  %v5800 = vshrl.u32 %v5799, 7
  %v5801 = vsub.s32 2, %v5800
  %v5802 = vrot.slane %v5789, %v5801
  %v5803 = vlaneseq
  %v5804 = vshrl.u32 %v5803, 7
  %v5805 = vsub.s32 3, %v5804
  %v5806 = vrot.slane %v5789, %v5805
  %v5811 = vadd.f32 %v5745, %v5794
  %v5812 = vadd.f32 %v5746, %v5798
  %v5813 = vadd.f32 %v5747, %v5802
  %v5814 = vadd.f32 %v5748, %v5806
  %v5815 = vadd.f32 %v5749, %v5794
  %v5816 = vadd.f32 %v5750, %v5798
  %v5817 = vadd.f32 %v5751, %v5802
  %v5818 = vadd.f32 %v5752, %v5806
  %v5819 = vadd.f32 %v5753, %v5794
  %v5820 = vadd.f32 %v5754, %v5798
  %v5821 = vadd.f32 %v5755, %v5802
  %v5822 = vadd.f32 %v5756, %v5806
  %v5823 = vadd.f32 %v5757, %v5794
  %v5824 = vadd.f32 %v5758, %v5798
  %v5825 = vadd.f32 %v5759, %v5802
  %v5826 = vadd.f32 %v5760, %v5806
  %v5827 = vadd.f32 %v5761, %v5794
  %v5828 = vadd.f32 %v5762, %v5798
  %v5829 = vadd.f32 %v5763, %v5802
  %v5830 = vadd.f32 %v5764, %v5806
  %v5831 = vadd.f32 %v5765, %v5794
  %v5832 = vadd.f32 %v5766, %v5798
  %v5833 = vadd.f32 %v5767, %v5802
  %v5834 = vadd.f32 %v5768, %v5806
  %v5835 = vadd.f32 %v5769, %v5794
  %v5836 = vadd.f32 %v5770, %v5798
  %v5837 = vadd.f32 %v5771, %v5802
  %v5838 = vadd.f32 %v5772, %v5806
  %v5839 = vadd.f32 %v5773, %v5794
  %v5840 = vadd.f32 %v5774, %v5798
  %v5841 = vadd.f32 %v5775, %v5802
  %v5842 = vadd.f32 %v5776, %v5806
  %v5843 = vadd.f32 %v5777, %v5794
  %v5844 = vadd.f32 %v5778, %v5798
  %v5845 = vadd.f32 %v5779, %v5802
  %v5846 = vadd.f32 %v5780, %v5806
  %v5847 = vadd.f32 %v5781, %v5794
  %v5848 = vadd.f32 %v5782, %v5798
  %v5849 = vadd.f32 %v5783, %v5802
  %v5850 = vadd.f32 %v5784, %v5806
  %v5851 = vadd.f32 %v5785, %v5794
  %v5852 = vadd.f32 %v5786, %v5798
  %v5853 = vadd.f32 %v5787, %v5802
  %v5854 = vadd.f32 %v5788, %v5806
  %v5855 = vmax.f32 %v5811, 0.0
  %v5856 = vmax.f32 %v5812, 0.0
  %v5857 = vmax.f32 %v5813, 0.0
  %v5858 = vmax.f32 %v5814, 0.0
  %v5859 = vmax.f32 %v5815, 0.0
  %v5860 = vmax.f32 %v5816, 0.0
  %v5861 = vmax.f32 %v5817, 0.0
  %v5862 = vmax.f32 %v5818, 0.0
  %v5863 = vmax.f32 %v5819, 0.0
  %v5864 = vmax.f32 %v5820, 0.0
  %v5865 = vmax.f32 %v5821, 0.0
  %v5866 = vmax.f32 %v5822, 0.0
  %v5867 = vmax.f32 %v5823, 0.0
  %v5868 = vmax.f32 %v5824, 0.0
  %v5869 = vmax.f32 %v5825, 0.0
  %v5870 = vmax.f32 %v5826, 0.0
  %v5871 = vmax.f32 %v5827, 0.0
  %v5872 = vmax.f32 %v5828, 0.0
  %v5873 = vmax.f32 %v5829, 0.0
  %v5874 = vmax.f32 %v5830, 0.0
  %v5875 = vmax.f32 %v5831, 0.0
  %v5876 = vmax.f32 %v5832, 0.0
  %v5877 = vmax.f32 %v5833, 0.0
  %v5878 = vmax.f32 %v5834, 0.0
  %v5879 = vmax.f32 %v5835, 0.0
  %v5880 = vmax.f32 %v5836, 0.0
  %v5881 = vmax.f32 %v5837, 0.0
  %v5882 = vmax.f32 %v5838, 0.0
  %v5883 = vmax.f32 %v5839, 0.0
  %v5884 = vmax.f32 %v5840, 0.0
  %v5885 = vmax.f32 %v5841, 0.0
  %v5886 = vmax.f32 %v5842, 0.0
  %v5887 = vmax.f32 %v5843, 0.0
  %v5888 = vmax.f32 %v5844, 0.0
  %v5889 = vmax.f32 %v5845, 0.0
  %v5890 = vmax.f32 %v5846, 0.0
  %v5891 = vmax.f32 %v5847, 0.0
  %v5892 = vmax.f32 %v5848, 0.0
  %v5893 = vmax.f32 %v5849, 0.0
  %v5894 = vmax.f32 %v5850, 0.0
  %v5895 = vmax.f32 %v5851, 0.0
  %v5896 = vmax.f32 %v5852, 0.0
  %v5897 = vmax.f32 %v5853, 0.0
  %v5898 = vmax.f32 %v5854, 0.0
  %v5899 = vmax.f32 %v5855, %v5856
  %v5900 = vmax.f32 %v5859, %v5860
  %v5901 = vmax.f32 %v5863, %v5864
  %v5902 = vmax.f32 %v5867, %v5868
  %v5903 = vmax.f32 %v5871, %v5872
  %v5904 = vmax.f32 %v5875, %v5876
  %v5905 = vmax.f32 %v5879, %v5880
  %v5906 = vmax.f32 %v5883, %v5884
  %v5907 = vmax.f32 %v5887, %v5888
  %v5908 = vmax.f32 %v5891, %v5892
  %v5909 = vmax.f32 %v5895, %v5896
  %v5910 = vmax.f32 %v5857, %v5858
  %v5911 = vmax.f32 %v5861, %v5862
  %v5912 = vmax.f32 %v5865, %v5866
  %v5913 = vmax.f32 %v5869, %v5870
  %v5914 = vmax.f32 %v5873, %v5874
  %v5915 = vmax.f32 %v5877, %v5878
  %v5916 = vmax.f32 %v5881, %v5882
  %v5917 = vmax.f32 %v5885, %v5886
  %v5918 = vmax.f32 %v5889, %v5890
  %v5919 = vmax.f32 %v5893, %v5894
  %v5920 = vmax.f32 %v5897, %v5898
  %v5921 = vmax.f32 %v5899, %v5910
  %v5922 = vmax.f32 %v5900, %v5911
  %v5923 = vmax.f32 %v5901, %v5912
  %v5924 = vmax.f32 %v5902, %v5913
  %v5925 = vmax.f32 %v5903, %v5914
  %v5926 = vmax.f32 %v5904, %v5915
  %v5927 = vmax.f32 %v5905, %v5916
  %v5928 = vmax.f32 %v5906, %v5917
  %v5929 = vmax.f32 %v5907, %v5918
  %v5930 = vmax.f32 %v5908, %v5919
  %v5931 = vmax.f32 %v5909, %v5920
  %v5932 = vpack.c.bf16 %v5922, %v5921
  %v5933 = vpack.c.bf16 %v5924, %v5923
  %v5934 = vpack.c.bf16 %v5926, %v5925
  %v5935 = vpack.c.bf16 %v5928, %v5927
  %v5936 = vpack.c.bf16 %v5930, %v5929
  %v5937 = vpack.c.bf16 %v5931, %v5931
  %v5944 = vunpack.c.l.b16 %v5932
  %v5945 = vunpack.c.h.b16 %v5932
  %v5946 = vunpack.c.l.b16 %v5933
  %v5947 = vunpack.c.h.b16 %v5933
  %v5948 = vunpack.c.l.b16 %v5934
  %v5949 = vunpack.c.h.b16 %v5934
  %v5950 = vunpack.c.l.b16 %v5935
  %v5951 = vunpack.c.h.b16 %v5935
  %v5952 = vunpack.c.l.b16 %v5936
  %v5953 = vunpack.c.h.b16 %v5936
  %v5954 = vunpack.c.l.b16 %v5937
  %v5955 = vpack.c.b16 %v5944, %v5944
  %v5956 = vpack.c.b16 %v5945, %v5945
  %v5957 = vpack.c.b16 %v5946, %v5946
  %v5958 = vpack.c.b16 %v5947, %v5947
  %v5959 = vpack.c.b16 %v5948, %v5948
  %v5960 = vpack.c.b16 %v5949, %v5949
  %v5961 = vpack.c.b16 %v5950, %v5950
  %v5962 = vpack.c.b16 %v5951, %v5951
  %v5963 = vpack.c.b16 %v5952, %v5952
  %v5964 = vpack.c.b16 %v5953, %v5953
  %v5965 = vpack.c.b16 %v5954, %v5954
  %5977 = vst [vmem:[%s4] sm:$0xf] %v5955
  %5978 = vst [vmem:[%s4 + $0x4] sm:$0xf] %v5956
  %5979 = vst [vmem:[%s4 + $0x8] sm:$0xf] %v5957
  %5980 = vst [vmem:[%s4 + $0xc] sm:$0xf] %v5958
  %5981 = vst [vmem:[%s4 + $0x10] sm:$0xf] %v5959
  %5982 = vst [vmem:[%s4 + $0x14] sm:$0xf] %v5960
  %5983 = vst [vmem:[%s4 + $0x18] sm:$0xf] %v5961
  %5984 = vst [vmem:[%s4 + $0x1c] sm:$0xf] %v5962
  %5985 = vst [vmem:[%s4 + $0x20] sm:$0xf] %v5963
  %5986 = vst [vmem:[%s4 + $0x24] sm:$0xf] %v5964
  %vm5987 = vcmask 1042432
  %vm5988 = vsmask.f32 2304
  %vm5989 = vmand %vm5987, %vm5988
  %v5990 = vld [vmem:[%s4 + $0x28] sm:$0x7]
  %v5991 = vsel %vm5989, %v5965, %v5990
  %5992 = vst [vmem:[%s4 + $0x28] sm:$0x7] %v5991
  // Predicated region
  $region18: #{_lambda_.4} parent=0 // pred_check
    _
  $region19: #{_lambda_.4} parent=0 // pred_check_branch
    %5994 = sbr.rel (0) target = $region21
  $region20: #{_lambda_.4} parent=0 // pred_region
    _
  $region21: #{_lambda_.4} parent=0 // pred_fallthru
    _
  // Predicated region
  $region22: #{_lambda_.4} parent=0 // pred_check
    _
  $region23: #{_lambda_.4} parent=0 // pred_check_branch
    %5996 = sbr.rel (0) target = $region25
  $region24: #{_lambda_.4} parent=0 // pred_region
    _
  $region25: #{_lambda_.4} parent=0 // pred_fallthru
    _

// kernel: _lambda_.5
$region0: #{_lambda_.5}
  #allocation0 [shape = 'u32[]', space=smem, size = 0x4, offset = 0x4, fixed_abs, tag = 'smem constant byte address 0x4 - core index']
  #allocation1 [shape = 'u32[144,128]{1,0:T(1,128)}', space=vmem, size = 0x12000, scoped, tag = 'internal scratch']
  %s0 = inlined_call_operand.vmem [shape: bf16[72,1152], index: 0, kind: input, shape index: {}]
  %s1 = inlined_call_operand.vmem [shape: bf16[1152,256], index: 1, kind: input, shape index: {}]
  %s2 = inlined_call_operand.vmem [shape: f32[1,256], index: 2, kind: input, shape index: {}]
  %s3 = inlined_call_operand.vmem [shape: f32[1,256], index: 3, kind: input, shape index: {}]
  %s4 = inlined_call_operand.vmem [shape: f32[576,10], index: 4, kind: input, shape index: {}]
  %s5 = inlined_call_operand.vmem [shape: f32[1,10], index: 5, kind: input, shape index: {}]
  %s6 = inlined_call_operand.vmem [shape: f32[10,2], index: 6, kind: input, shape index: {}]
  %s7 = inlined_call_operand.vmem [shape: f32[1,2], index: 7, kind: input, shape index: {}]
  %s8 = inlined_call_operand.vmem [shape: f32[8,2], index: 8, kind: output, shape index: {}]
  %s9 = sld [smem:[#allocation0]]
  $region42: #{_lambda_.5} parent=0
    _
  %s11 = ssub.s32 1, %s9
  %s12 = scalar_select 0, %s11, %s9
  // Predicated region
  $region2: #{_lambda_.5} parent=0 // pred_check
    _
  $region3: #{_lambda_.5} parent=0 // pred_check_branch
    %14 = sbr.rel (0) target = $region5
  $region4: #{_lambda_.5} parent=0 // pred_region
    _
  $region5: #{_lambda_.5} parent=0 // pred_fallthru
    _
  // Predicated region
  $region6: #{_lambda_.5} parent=0 // pred_check
    _
  $region7: #{_lambda_.5} parent=0 // pred_check_branch
    %16 = sbr.rel (0) target = $region9
  $region8: #{_lambda_.5} parent=0 // pred_region
    _
  $region9: #{_lambda_.5} parent=0 // pred_fallthru
    _
  // Predicated region
  $region10: #{_lambda_.5} parent=0 // pred_check
    _
  $region11: #{_lambda_.5} parent=0 // pred_check_branch
    %18 = sbr.rel (0) target = $region13
  $region12: #{_lambda_.5} parent=0 // pred_region
    _
  $region13: #{_lambda_.5} parent=0 // pred_fallthru
    _
  // Predicated region
  $region14: #{_lambda_.5} parent=0 // pred_check
    _
  $region15: #{_lambda_.5} parent=0 // pred_check_branch
    %20 = sbr.rel (0) target = $region17
  $region16: #{_lambda_.5} parent=0 // pred_region
    _
  $region17: #{_lambda_.5} parent=0 // pred_fallthru
    _
  // Predicated region
  $region18: #{_lambda_.5} parent=0 // pred_check
    _
  $region19: #{_lambda_.5} parent=0 // pred_check_branch
    %22 = sbr.rel (0) target = $region21
  $region20: #{_lambda_.5} parent=0 // pred_region
    _
  $region21: #{_lambda_.5} parent=0 // pred_fallthru
    _
  // Predicated region
  $region22: #{_lambda_.5} parent=0 // pred_check
    _
  $region23: #{_lambda_.5} parent=0 // pred_check_branch
    %24 = sbr.rel (0) target = $region25
  $region24: #{_lambda_.5} parent=0 // pred_region
    _
  $region25: #{_lambda_.5} parent=0 // pred_fallthru
    _
  // Predicated region
  $region26: #{_lambda_.5} parent=0 // pred_check
    _
  $region27: #{_lambda_.5} parent=0 // pred_check_branch
    %26 = sbr.rel (0) target = $region29
  $region28: #{_lambda_.5} parent=0 // pred_region
    _
  $region29: #{_lambda_.5} parent=0 // pred_fallthru
    _
  // Predicated region
  $region30: #{_lambda_.5} parent=0 // pred_check
    _
  $region31: #{_lambda_.5} parent=0 // pred_check_branch
    %28 = sbr.rel (0) target = $region33
  $region32: #{_lambda_.5} parent=0 // pred_region
    _
  $region33: #{_lambda_.5} parent=0 // pred_fallthru
    _
  %v30 = vld [vmem:[%s0] sm:$0xff]
  %v31 = vld [vmem:[%s0 + $0x8] sm:$0xff]
  %v32 = vld [vmem:[%s0 + $0x10] sm:$0xff]
  %v33 = vld [vmem:[%s0 + $0x18] sm:$0xff]
  %v34 = vld [vmem:[%s0 + $0x20] sm:$0xf]
  %v35 = vld [vmem:[%s0 + $0x24] sm:$0xff]
  %v36 = vld [vmem:[%s0 + $0x2c] sm:$0xff]
  %v37 = vld [vmem:[%s0 + $0x34] sm:$0xff]
  %v38 = vld [vmem:[%s0 + $0x3c] sm:$0xff]
  %v39 = vld [vmem:[%s0 + $0x44] sm:$0xf]
  %v40 = vld [vmem:[%s0 + $0x48] sm:$0xff]
  %v41 = vld [vmem:[%s0 + $0x50] sm:$0xff]
  %v42 = vld [vmem:[%s0 + $0x58] sm:$0xff]
  %v43 = vld [vmem:[%s0 + $0x60] sm:$0xff]
  %v44 = vld [vmem:[%s0 + $0x68] sm:$0xf]
  %v45 = vld [vmem:[%s0 + $0x6c] sm:$0xff]
  %v46 = vld [vmem:[%s0 + $0x74] sm:$0xff]
  %v47 = vld [vmem:[%s0 + $0x7c] sm:$0xff]
  %v48 = vld [vmem:[%s0 + $0x84] sm:$0xff]
  %v49 = vld [vmem:[%s0 + $0x8c] sm:$0xf]
  %v50 = vld [vmem:[%s0 + $0x90] sm:$0xff]
  %v51 = vld [vmem:[%s0 + $0x98] sm:$0xff]
  %v52 = vld [vmem:[%s0 + $0xa0] sm:$0xff]
  %v53 = vld [vmem:[%s0 + $0xa8] sm:$0xff]
  %v54 = vld [vmem:[%s0 + $0xb0] sm:$0xf]
  %v55 = vld [vmem:[%s0 + $0xb4] sm:$0xff]
  %v56 = vld [vmem:[%s0 + $0xbc] sm:$0xff]
  %v57 = vld [vmem:[%s0 + $0xc4] sm:$0xff]
  %v58 = vld [vmem:[%s0 + $0xcc] sm:$0xff]
  %v59 = vld [vmem:[%s0 + $0xd4] sm:$0xf]
  %v60 = vld [vmem:[%s0 + $0xd8] sm:$0xff]
  %v61 = vld [vmem:[%s0 + $0xe0] sm:$0xff]
  %v62 = vld [vmem:[%s0 + $0xe8] sm:$0xff]
  %v63 = vld [vmem:[%s0 + $0xf0] sm:$0xff]
  %v64 = vld [vmem:[%s0 + $0xf8] sm:$0xf]
  %v65 = vld [vmem:[%s0 + $0xfc] sm:$0xff]
  %v66 = vld [vmem:[%s0 + $0x104] sm:$0xff]
  %v67 = vld [vmem:[%s0 + $0x10c] sm:$0xff]
  %v68 = vld [vmem:[%s0 + $0x114] sm:$0xff]
  %v69 = vld [vmem:[%s0 + $0x11c] sm:$0xf]
  %v70 = vld [vmem:[%s0 + $0x120] sm:$0xff]
  %v71 = vld [vmem:[%s0 + $0x128] sm:$0xff]
  %v72 = vld [vmem:[%s0 + $0x130] sm:$0xff]
  %v73 = vld [vmem:[%s0 + $0x138] sm:$0xff]
  %v74 = vld [vmem:[%s0 + $0x140] sm:$0xf]
  %v75 = vld [vmem:[%s1] sm:$0xff]
  %v76 = vld [vmem:[%s1 + $0x8] sm:$0xff]
  %v77 = vld [vmem:[%s1 + $0x10] sm:$0xff]
  %v78 = vld [vmem:[%s1 + $0x18] sm:$0xff]
  %v79 = vld [vmem:[%s1 + $0x20] sm:$0xff]
  %v80 = vld [vmem:[%s1 + $0x28] sm:$0xff]
  %v81 = vld [vmem:[%s1 + $0x30] sm:$0xff]
  %v82 = vld [vmem:[%s1 + $0x38] sm:$0xff]
  %v83 = vld [vmem:[%s1 + $0x40] sm:$0xff]
  %v84 = vld [vmem:[%s1 + $0x48] sm:$0xff]
  %v85 = vld [vmem:[%s1 + $0x50] sm:$0xff]
  %v86 = vld [vmem:[%s1 + $0x58] sm:$0xff]
  %v87 = vld [vmem:[%s1 + $0x60] sm:$0xff]
  %v88 = vld [vmem:[%s1 + $0x68] sm:$0xff]
  %v89 = vld [vmem:[%s1 + $0x70] sm:$0xff]
  %v90 = vld [vmem:[%s1 + $0x78] sm:$0xff]
  %v91 = vld [vmem:[%s1 + $0x80] sm:$0xff]
  %v92 = vld [vmem:[%s1 + $0x88] sm:$0xff]
  %v93 = vld [vmem:[%s1 + $0x90] sm:$0xff]
  %v94 = vld [vmem:[%s1 + $0x98] sm:$0xff]
  %v95 = vld [vmem:[%s1 + $0xa0] sm:$0xff]
  %v96 = vld [vmem:[%s1 + $0xa8] sm:$0xff]
  %v97 = vld [vmem:[%s1 + $0xb0] sm:$0xff]
  %v98 = vld [vmem:[%s1 + $0xb8] sm:$0xff]
  %v99 = vld [vmem:[%s1 + $0xc0] sm:$0xff]
  %v100 = vld [vmem:[%s1 + $0xc8] sm:$0xff]
  %v101 = vld [vmem:[%s1 + $0xd0] sm:$0xff]
  %v102 = vld [vmem:[%s1 + $0xd8] sm:$0xff]
  %v103 = vld [vmem:[%s1 + $0xe0] sm:$0xff]
  %v104 = vld [vmem:[%s1 + $0xe8] sm:$0xff]
  %v105 = vld [vmem:[%s1 + $0xf0] sm:$0xff]
  %v106 = vld [vmem:[%s1 + $0xf8] sm:$0xff]
  %v107 = vld [vmem:[%s1 + $0x100] sm:$0xff]
  %v108 = vld [vmem:[%s1 + $0x108] sm:$0xff]
  %v109 = vld [vmem:[%s1 + $0x110] sm:$0xff]
  %v110 = vld [vmem:[%s1 + $0x118] sm:$0xff]
  %v111 = vld [vmem:[%s1 + $0x120] sm:$0xff]
  %v112 = vld [vmem:[%s1 + $0x128] sm:$0xff]
  %v113 = vld [vmem:[%s1 + $0x130] sm:$0xff]
  %v114 = vld [vmem:[%s1 + $0x138] sm:$0xff]
  %v115 = vld [vmem:[%s1 + $0x140] sm:$0xff]
  %v116 = vld [vmem:[%s1 + $0x148] sm:$0xff]
  %v117 = vld [vmem:[%s1 + $0x150] sm:$0xff]
  %v118 = vld [vmem:[%s1 + $0x158] sm:$0xff]
  %v119 = vld [vmem:[%s1 + $0x160] sm:$0xff]
  %v120 = vld [vmem:[%s1 + $0x168] sm:$0xff]
  %v121 = vld [vmem:[%s1 + $0x170] sm:$0xff]
  %v122 = vld [vmem:[%s1 + $0x178] sm:$0xff]
  %v123 = vld [vmem:[%s1 + $0x180] sm:$0xff]
  %v124 = vld [vmem:[%s1 + $0x188] sm:$0xff]
  %v125 = vld [vmem:[%s1 + $0x190] sm:$0xff]
  %v126 = vld [vmem:[%s1 + $0x198] sm:$0xff]
  %v127 = vld [vmem:[%s1 + $0x1a0] sm:$0xff]
  %v128 = vld [vmem:[%s1 + $0x1a8] sm:$0xff]
  %v129 = vld [vmem:[%s1 + $0x1b0] sm:$0xff]
  %v130 = vld [vmem:[%s1 + $0x1b8] sm:$0xff]
  %v131 = vld [vmem:[%s1 + $0x1c0] sm:$0xff]
  %v132 = vld [vmem:[%s1 + $0x1c8] sm:$0xff]
  %v133 = vld [vmem:[%s1 + $0x1d0] sm:$0xff]
  %v134 = vld [vmem:[%s1 + $0x1d8] sm:$0xff]
  %v135 = vld [vmem:[%s1 + $0x1e0] sm:$0xff]
  %v136 = vld [vmem:[%s1 + $0x1e8] sm:$0xff]
  %v137 = vld [vmem:[%s1 + $0x1f0] sm:$0xff]
  %v138 = vld [vmem:[%s1 + $0x1f8] sm:$0xff]
  %v139 = vld [vmem:[%s1 + $0x200] sm:$0xff]
  %v140 = vld [vmem:[%s1 + $0x208] sm:$0xff]
  %v141 = vld [vmem:[%s1 + $0x210] sm:$0xff]
  %v142 = vld [vmem:[%s1 + $0x218] sm:$0xff]
  %v143 = vld [vmem:[%s1 + $0x220] sm:$0xff]
  %v144 = vld [vmem:[%s1 + $0x228] sm:$0xff]
  %v145 = vld [vmem:[%s1 + $0x230] sm:$0xff]
  %v146 = vld [vmem:[%s1 + $0x238] sm:$0xff]
  %v147 = vld [vmem:[%s1 + $0x240] sm:$0xff]
  %v148 = vld [vmem:[%s1 + $0x248] sm:$0xff]
  %v149 = vld [vmem:[%s1 + $0x250] sm:$0xff]
  %v150 = vld [vmem:[%s1 + $0x258] sm:$0xff]
  %v151 = vld [vmem:[%s1 + $0x260] sm:$0xff]
  %v152 = vld [vmem:[%s1 + $0x268] sm:$0xff]
  %v153 = vld [vmem:[%s1 + $0x270] sm:$0xff]
  %v154 = vld [vmem:[%s1 + $0x278] sm:$0xff]
  %v155 = vld [vmem:[%s1 + $0x280] sm:$0xff]
  %v156 = vld [vmem:[%s1 + $0x288] sm:$0xff]
  %v157 = vld [vmem:[%s1 + $0x290] sm:$0xff]
  %v158 = vld [vmem:[%s1 + $0x298] sm:$0xff]
  %v159 = vld [vmem:[%s1 + $0x2a0] sm:$0xff]
  %v160 = vld [vmem:[%s1 + $0x2a8] sm:$0xff]
  %v161 = vld [vmem:[%s1 + $0x2b0] sm:$0xff]
  %v162 = vld [vmem:[%s1 + $0x2b8] sm:$0xff]
  %v163 = vld [vmem:[%s1 + $0x2c0] sm:$0xff]
  %v164 = vld [vmem:[%s1 + $0x2c8] sm:$0xff]
  %v165 = vld [vmem:[%s1 + $0x2d0] sm:$0xff]
  %v166 = vld [vmem:[%s1 + $0x2d8] sm:$0xff]
  %v167 = vld [vmem:[%s1 + $0x2e0] sm:$0xff]
  %v168 = vld [vmem:[%s1 + $0x2e8] sm:$0xff]
  %v169 = vld [vmem:[%s1 + $0x2f0] sm:$0xff]
  %v170 = vld [vmem:[%s1 + $0x2f8] sm:$0xff]
  %v171 = vld [vmem:[%s1 + $0x300] sm:$0xff]
  %v172 = vld [vmem:[%s1 + $0x308] sm:$0xff]
  %v173 = vld [vmem:[%s1 + $0x310] sm:$0xff]
  %v174 = vld [vmem:[%s1 + $0x318] sm:$0xff]
  %v175 = vld [vmem:[%s1 + $0x320] sm:$0xff]
  %v176 = vld [vmem:[%s1 + $0x328] sm:$0xff]
  %v177 = vld [vmem:[%s1 + $0x330] sm:$0xff]
  %v178 = vld [vmem:[%s1 + $0x338] sm:$0xff]
  %v179 = vld [vmem:[%s1 + $0x340] sm:$0xff]
  %v180 = vld [vmem:[%s1 + $0x348] sm:$0xff]
  %v181 = vld [vmem:[%s1 + $0x350] sm:$0xff]
  %v182 = vld [vmem:[%s1 + $0x358] sm:$0xff]
  %v183 = vld [vmem:[%s1 + $0x360] sm:$0xff]
  %v184 = vld [vmem:[%s1 + $0x368] sm:$0xff]
  %v185 = vld [vmem:[%s1 + $0x370] sm:$0xff]
  %v186 = vld [vmem:[%s1 + $0x378] sm:$0xff]
  %v187 = vld [vmem:[%s1 + $0x380] sm:$0xff]
  %v188 = vld [vmem:[%s1 + $0x388] sm:$0xff]
  %v189 = vld [vmem:[%s1 + $0x390] sm:$0xff]
  %v190 = vld [vmem:[%s1 + $0x398] sm:$0xff]
  %v191 = vld [vmem:[%s1 + $0x3a0] sm:$0xff]
  %v192 = vld [vmem:[%s1 + $0x3a8] sm:$0xff]
  %v193 = vld [vmem:[%s1 + $0x3b0] sm:$0xff]
  %v194 = vld [vmem:[%s1 + $0x3b8] sm:$0xff]
  %v195 = vld [vmem:[%s1 + $0x3c0] sm:$0xff]
  %v196 = vld [vmem:[%s1 + $0x3c8] sm:$0xff]
  %v197 = vld [vmem:[%s1 + $0x3d0] sm:$0xff]
  %v198 = vld [vmem:[%s1 + $0x3d8] sm:$0xff]
  %v199 = vld [vmem:[%s1 + $0x3e0] sm:$0xff]
  %v200 = vld [vmem:[%s1 + $0x3e8] sm:$0xff]
  %v201 = vld [vmem:[%s1 + $0x3f0] sm:$0xff]
  %v202 = vld [vmem:[%s1 + $0x3f8] sm:$0xff]
  %v203 = vld [vmem:[%s1 + $0x400] sm:$0xff]
  %v204 = vld [vmem:[%s1 + $0x408] sm:$0xff]
  %v205 = vld [vmem:[%s1 + $0x410] sm:$0xff]
  %v206 = vld [vmem:[%s1 + $0x418] sm:$0xff]
  %v207 = vld [vmem:[%s1 + $0x420] sm:$0xff]
  %v208 = vld [vmem:[%s1 + $0x428] sm:$0xff]
  %v209 = vld [vmem:[%s1 + $0x430] sm:$0xff]
  %v210 = vld [vmem:[%s1 + $0x438] sm:$0xff]
  %v211 = vld [vmem:[%s1 + $0x440] sm:$0xff]
  %v212 = vld [vmem:[%s1 + $0x448] sm:$0xff]
  %v213 = vld [vmem:[%s1 + $0x450] sm:$0xff]
  %v214 = vld [vmem:[%s1 + $0x458] sm:$0xff]
  %v215 = vld [vmem:[%s1 + $0x460] sm:$0xff]
  %v216 = vld [vmem:[%s1 + $0x468] sm:$0xff]
  %v217 = vld [vmem:[%s1 + $0x470] sm:$0xff]
  %v218 = vld [vmem:[%s1 + $0x478] sm:$0xff]
  %v264 = vunpack.c.l.b16 %v30
  %v265 = vunpack.c.h.b16 %v30
  %v266 = vunpack.c.l.b16 %v31
  %v267 = vunpack.c.h.b16 %v31
  %v268 = vunpack.c.l.b16 %v32
  %v269 = vunpack.c.h.b16 %v32
  %v270 = vunpack.c.l.b16 %v33
  %v271 = vunpack.c.h.b16 %v33
  %v272 = vunpack.c.l.b16 %v34
  %v273 = vunpack.c.l.b16 %v35
  %v274 = vunpack.c.h.b16 %v35
  %v275 = vunpack.c.l.b16 %v36
  %v276 = vunpack.c.h.b16 %v36
  %v277 = vunpack.c.l.b16 %v37
  %v278 = vunpack.c.h.b16 %v37
  %v279 = vunpack.c.l.b16 %v38
  %v280 = vunpack.c.h.b16 %v38
  %v281 = vunpack.c.l.b16 %v39
  %v282 = vunpack.c.l.b16 %v40
  %v283 = vunpack.c.h.b16 %v40
  %v284 = vunpack.c.l.b16 %v41
  %v285 = vunpack.c.h.b16 %v41
  %v286 = vunpack.c.l.b16 %v42
  %v287 = vunpack.c.h.b16 %v42
  %v288 = vunpack.c.l.b16 %v43
  %v289 = vunpack.c.h.b16 %v43
  %v290 = vunpack.c.l.b16 %v44
  %v291 = vunpack.c.l.b16 %v45
  %v292 = vunpack.c.h.b16 %v45
  %v293 = vunpack.c.l.b16 %v46
  %v294 = vunpack.c.h.b16 %v46
  %v295 = vunpack.c.l.b16 %v47
  %v296 = vunpack.c.h.b16 %v47
  %v297 = vunpack.c.l.b16 %v48
  %v298 = vunpack.c.h.b16 %v48
  %v299 = vunpack.c.l.b16 %v49
  %v300 = vunpack.c.l.b16 %v50
  %v301 = vunpack.c.h.b16 %v50
  %v302 = vunpack.c.l.b16 %v51
  %v303 = vunpack.c.h.b16 %v51
  %v304 = vunpack.c.l.b16 %v52
  %v305 = vunpack.c.h.b16 %v52
  %v306 = vunpack.c.l.b16 %v53
  %v307 = vunpack.c.h.b16 %v53
  %v308 = vunpack.c.l.b16 %v54
  %v309 = vunpack.c.l.b16 %v55
  %v310 = vunpack.c.h.b16 %v55
  %v311 = vunpack.c.l.b16 %v56
  %v312 = vunpack.c.h.b16 %v56
  %v313 = vunpack.c.l.b16 %v57
  %v314 = vunpack.c.h.b16 %v57
  %v315 = vunpack.c.l.b16 %v58
  %v316 = vunpack.c.h.b16 %v58
  %v317 = vunpack.c.l.b16 %v59
  %v318 = vunpack.c.l.b16 %v60
  %v319 = vunpack.c.h.b16 %v60
  %v320 = vunpack.c.l.b16 %v61
  %v321 = vunpack.c.h.b16 %v61
  %v322 = vunpack.c.l.b16 %v62
  %v323 = vunpack.c.h.b16 %v62
  %v324 = vunpack.c.l.b16 %v63
  %v325 = vunpack.c.h.b16 %v63
  %v326 = vunpack.c.l.b16 %v64
  %v327 = vunpack.c.l.b16 %v65
  %v328 = vunpack.c.h.b16 %v65
  %v329 = vunpack.c.l.b16 %v66
  %v330 = vunpack.c.h.b16 %v66
  %v331 = vunpack.c.l.b16 %v67
  %v332 = vunpack.c.h.b16 %v67
  %v333 = vunpack.c.l.b16 %v68
  %v334 = vunpack.c.h.b16 %v68
  %v335 = vunpack.c.l.b16 %v69
  %v336 = vunpack.c.l.b16 %v70
  %v337 = vunpack.c.h.b16 %v70
  %v338 = vunpack.c.l.b16 %v71
  %v339 = vunpack.c.h.b16 %v71
  %v340 = vunpack.c.l.b16 %v72
  %v341 = vunpack.c.h.b16 %v72
  %v342 = vunpack.c.l.b16 %v73
  %v343 = vunpack.c.h.b16 %v73
  %v344 = vunpack.c.l.b16 %v74
  %v345 = vpack.c.b16 %v273, %v264
  %v346 = vpack.c.b16 %v274, %v265
  %v347 = vpack.c.b16 %v275, %v266
  %v348 = vpack.c.b16 %v276, %v267
  %v349 = vpack.c.b16 %v277, %v268
  %v350 = vpack.c.b16 %v278, %v269
  %v351 = vpack.c.b16 %v279, %v270
  %v352 = vpack.c.b16 %v280, %v271
  %v353 = vpack.c.b16 %v281, %v272
  %v354 = vpack.c.b16 %v291, %v282
  %v355 = vpack.c.b16 %v292, %v283
  %v356 = vpack.c.b16 %v293, %v284
  %v357 = vpack.c.b16 %v294, %v285
  %v358 = vpack.c.b16 %v295, %v286
  %v359 = vpack.c.b16 %v296, %v287
  %v360 = vpack.c.b16 %v297, %v288
  %v361 = vpack.c.b16 %v298, %v289
  %v362 = vpack.c.b16 %v299, %v290
  %v363 = vpack.c.b16 %v309, %v300
  %v364 = vpack.c.b16 %v310, %v301
  %v365 = vpack.c.b16 %v311, %v302
  %v366 = vpack.c.b16 %v312, %v303
  %v367 = vpack.c.b16 %v313, %v304
  %v368 = vpack.c.b16 %v314, %v305
  %v369 = vpack.c.b16 %v315, %v306
  %v370 = vpack.c.b16 %v316, %v307
  %v371 = vpack.c.b16 %v317, %v308
  %v372 = vpack.c.b16 %v327, %v318
  %v373 = vpack.c.b16 %v328, %v319
  %v374 = vpack.c.b16 %v329, %v320
  %v375 = vpack.c.b16 %v330, %v321
  %v376 = vpack.c.b16 %v331, %v322
  %v377 = vpack.c.b16 %v332, %v323
  %v378 = vpack.c.b16 %v333, %v324
  %v379 = vpack.c.b16 %v334, %v325
  %v380 = vpack.c.b16 %v335, %v326
  %v381 = vpack.c.b16 %v336, %v336
  %v382 = vpack.c.b16 %v337, %v337
  %v383 = vpack.c.b16 %v338, %v338
  %v384 = vpack.c.b16 %v339, %v339
  %v385 = vpack.c.b16 %v340, %v340
  %v386 = vpack.c.b16 %v341, %v341
  %v387 = vpack.c.b16 %v342, %v342
  %v388 = vpack.c.b16 %v343, %v343
  %v389 = vpack.c.b16 %v344, %v344
  %v579 = vunpack.c.l.b16 %v75
  %v580 = vunpack.c.h.b16 %v75
  %v581 = vunpack.c.l.b16 %v76
  %v582 = vunpack.c.h.b16 %v76
  %v583 = vunpack.c.l.b16 %v77
  %v584 = vunpack.c.h.b16 %v77
  %v585 = vunpack.c.l.b16 %v78
  %v586 = vunpack.c.h.b16 %v78
  %v587 = vunpack.c.l.b16 %v79
  %v588 = vunpack.c.h.b16 %v79
  %v589 = vunpack.c.l.b16 %v80
  %v590 = vunpack.c.h.b16 %v80
  %v591 = vunpack.c.l.b16 %v81
  %v592 = vunpack.c.h.b16 %v81
  %v593 = vunpack.c.l.b16 %v82
  %v594 = vunpack.c.h.b16 %v82
  %v595 = vunpack.c.l.b16 %v83
  %v596 = vunpack.c.h.b16 %v83
  %v597 = vunpack.c.l.b16 %v84
  %v598 = vunpack.c.h.b16 %v84
  %v599 = vunpack.c.l.b16 %v85
  %v600 = vunpack.c.h.b16 %v85
  %v601 = vunpack.c.l.b16 %v86
  %v602 = vunpack.c.h.b16 %v86
  %v603 = vunpack.c.l.b16 %v87
  %v604 = vunpack.c.h.b16 %v87
  %v605 = vunpack.c.l.b16 %v88
  %v606 = vunpack.c.h.b16 %v88
  %v607 = vunpack.c.l.b16 %v89
  %v608 = vunpack.c.h.b16 %v89
  %v609 = vunpack.c.l.b16 %v90
  %v610 = vunpack.c.h.b16 %v90
  %v611 = vunpack.c.l.b16 %v91
  %v612 = vunpack.c.h.b16 %v91
  %v613 = vunpack.c.l.b16 %v92
  %v614 = vunpack.c.h.b16 %v92
  %v615 = vunpack.c.l.b16 %v93
  %v616 = vunpack.c.h.b16 %v93
  %v617 = vunpack.c.l.b16 %v94
  %v618 = vunpack.c.h.b16 %v94
  %v619 = vunpack.c.l.b16 %v95
  %v620 = vunpack.c.h.b16 %v95
  %v621 = vunpack.c.l.b16 %v96
  %v622 = vunpack.c.h.b16 %v96
  %v623 = vunpack.c.l.b16 %v97
  %v624 = vunpack.c.h.b16 %v97
  %v625 = vunpack.c.l.b16 %v98
  %v626 = vunpack.c.h.b16 %v98
  %v627 = vunpack.c.l.b16 %v99
  %v628 = vunpack.c.h.b16 %v99
  %v629 = vunpack.c.l.b16 %v100
  %v630 = vunpack.c.h.b16 %v100
  %v631 = vunpack.c.l.b16 %v101
  %v632 = vunpack.c.h.b16 %v101
  %v633 = vunpack.c.l.b16 %v102
  %v634 = vunpack.c.h.b16 %v102
  %v635 = vunpack.c.l.b16 %v103
  %v636 = vunpack.c.h.b16 %v103
  %v637 = vunpack.c.l.b16 %v104
  %v638 = vunpack.c.h.b16 %v104
  %v639 = vunpack.c.l.b16 %v105
  %v640 = vunpack.c.h.b16 %v105
  %v641 = vunpack.c.l.b16 %v106
  %v642 = vunpack.c.h.b16 %v106
  %v643 = vunpack.c.l.b16 %v107
  %v644 = vunpack.c.h.b16 %v107
  %v645 = vunpack.c.l.b16 %v108
  %v646 = vunpack.c.h.b16 %v108
  %v647 = vunpack.c.l.b16 %v109
  %v648 = vunpack.c.h.b16 %v109
  %v649 = vunpack.c.l.b16 %v110
  %v650 = vunpack.c.h.b16 %v110
  %v651 = vunpack.c.l.b16 %v111
  %v652 = vunpack.c.h.b16 %v111
  %v653 = vunpack.c.l.b16 %v112
  %v654 = vunpack.c.h.b16 %v112
  %v655 = vunpack.c.l.b16 %v113
  %v656 = vunpack.c.h.b16 %v113
  %v657 = vunpack.c.l.b16 %v114
  %v658 = vunpack.c.h.b16 %v114
  %v659 = vunpack.c.l.b16 %v115
  %v660 = vunpack.c.h.b16 %v115
  %v661 = vunpack.c.l.b16 %v116
  %v662 = vunpack.c.h.b16 %v116
  %v663 = vunpack.c.l.b16 %v117
  %v664 = vunpack.c.h.b16 %v117
  %v665 = vunpack.c.l.b16 %v118
  %v666 = vunpack.c.h.b16 %v118
  %v667 = vunpack.c.l.b16 %v119
  %v668 = vunpack.c.h.b16 %v119
  %v669 = vunpack.c.l.b16 %v120
  %v670 = vunpack.c.h.b16 %v120
  %v671 = vunpack.c.l.b16 %v121
  %v672 = vunpack.c.h.b16 %v121
  %v673 = vunpack.c.l.b16 %v122
  %v674 = vunpack.c.h.b16 %v122
  %v675 = vunpack.c.l.b16 %v123
  %v676 = vunpack.c.h.b16 %v123
  %v677 = vunpack.c.l.b16 %v124
  %v678 = vunpack.c.h.b16 %v124
  %v679 = vunpack.c.l.b16 %v125
  %v680 = vunpack.c.h.b16 %v125
  %v681 = vunpack.c.l.b16 %v126
  %v682 = vunpack.c.h.b16 %v126
  %v683 = vunpack.c.l.b16 %v127
  %v684 = vunpack.c.h.b16 %v127
  %v685 = vunpack.c.l.b16 %v128
  %v686 = vunpack.c.h.b16 %v128
  %v687 = vunpack.c.l.b16 %v129
  %v688 = vunpack.c.h.b16 %v129
  %v689 = vunpack.c.l.b16 %v130
  %v690 = vunpack.c.h.b16 %v130
  %v691 = vunpack.c.l.b16 %v131
  %v692 = vunpack.c.h.b16 %v131
  %v693 = vunpack.c.l.b16 %v132
  %v694 = vunpack.c.h.b16 %v132
  %v695 = vunpack.c.l.b16 %v133
  %v696 = vunpack.c.h.b16 %v133
  %v697 = vunpack.c.l.b16 %v134
  %v698 = vunpack.c.h.b16 %v134
  %v699 = vunpack.c.l.b16 %v135
  %v700 = vunpack.c.h.b16 %v135
  %v701 = vunpack.c.l.b16 %v136
  %v702 = vunpack.c.h.b16 %v136
  %v703 = vunpack.c.l.b16 %v137
  %v704 = vunpack.c.h.b16 %v137
  %v705 = vunpack.c.l.b16 %v138
  %v706 = vunpack.c.h.b16 %v138
  %v707 = vunpack.c.l.b16 %v139
  %v708 = vunpack.c.h.b16 %v139
  %v709 = vunpack.c.l.b16 %v140
  %v710 = vunpack.c.h.b16 %v140
  %v711 = vunpack.c.l.b16 %v141
  %v712 = vunpack.c.h.b16 %v141
  %v713 = vunpack.c.l.b16 %v142
  %v714 = vunpack.c.h.b16 %v142
  %v715 = vunpack.c.l.b16 %v143
  %v716 = vunpack.c.h.b16 %v143
  %v717 = vunpack.c.l.b16 %v144
  %v718 = vunpack.c.h.b16 %v144
  %v719 = vunpack.c.l.b16 %v145
  %v720 = vunpack.c.h.b16 %v145
  %v721 = vunpack.c.l.b16 %v146
  %v722 = vunpack.c.h.b16 %v146
  %v723 = vunpack.c.l.b16 %v147
  %v724 = vunpack.c.h.b16 %v147
  %v725 = vunpack.c.l.b16 %v148
  %v726 = vunpack.c.h.b16 %v148
  %v727 = vunpack.c.l.b16 %v149
  %v728 = vunpack.c.h.b16 %v149
  %v729 = vunpack.c.l.b16 %v150
  %v730 = vunpack.c.h.b16 %v150
  %v731 = vunpack.c.l.b16 %v151
  %v732 = vunpack.c.h.b16 %v151
  %v733 = vunpack.c.l.b16 %v152
  %v734 = vunpack.c.h.b16 %v152
  %v735 = vunpack.c.l.b16 %v153
  %v736 = vunpack.c.h.b16 %v153
  %v737 = vunpack.c.l.b16 %v154
  %v738 = vunpack.c.h.b16 %v154
  %v739 = vunpack.c.l.b16 %v155
  %v740 = vunpack.c.h.b16 %v155
  %v741 = vunpack.c.l.b16 %v156
  %v742 = vunpack.c.h.b16 %v156
  %v743 = vunpack.c.l.b16 %v157
  %v744 = vunpack.c.h.b16 %v157
  %v745 = vunpack.c.l.b16 %v158
  %v746 = vunpack.c.h.b16 %v158
  %v747 = vunpack.c.l.b16 %v159
  %v748 = vunpack.c.h.b16 %v159
  %v749 = vunpack.c.l.b16 %v160
  %v750 = vunpack.c.h.b16 %v160
  %v751 = vunpack.c.l.b16 %v161
  %v752 = vunpack.c.h.b16 %v161
  %v753 = vunpack.c.l.b16 %v162
  %v754 = vunpack.c.h.b16 %v162
  %v755 = vunpack.c.l.b16 %v163
  %v756 = vunpack.c.h.b16 %v163
  %v757 = vunpack.c.l.b16 %v164
  %v758 = vunpack.c.h.b16 %v164
  %v759 = vunpack.c.l.b16 %v165
  %v760 = vunpack.c.h.b16 %v165
  %v761 = vunpack.c.l.b16 %v166
  %v762 = vunpack.c.h.b16 %v166
  %v763 = vunpack.c.l.b16 %v167
  %v764 = vunpack.c.h.b16 %v167
  %v765 = vunpack.c.l.b16 %v168
  %v766 = vunpack.c.h.b16 %v168
  %v767 = vunpack.c.l.b16 %v169
  %v768 = vunpack.c.h.b16 %v169
  %v769 = vunpack.c.l.b16 %v170
  %v770 = vunpack.c.h.b16 %v170
  %v771 = vunpack.c.l.b16 %v171
  %v772 = vunpack.c.h.b16 %v171
  %v773 = vunpack.c.l.b16 %v172
  %v774 = vunpack.c.h.b16 %v172
  %v775 = vunpack.c.l.b16 %v173
  %v776 = vunpack.c.h.b16 %v173
  %v777 = vunpack.c.l.b16 %v174
  %v778 = vunpack.c.h.b16 %v174
  %v779 = vunpack.c.l.b16 %v175
  %v780 = vunpack.c.h.b16 %v175
  %v781 = vunpack.c.l.b16 %v176
  %v782 = vunpack.c.h.b16 %v176
  %v783 = vunpack.c.l.b16 %v177
  %v784 = vunpack.c.h.b16 %v177
  %v785 = vunpack.c.l.b16 %v178
  %v786 = vunpack.c.h.b16 %v178
  %v787 = vunpack.c.l.b16 %v179
  %v788 = vunpack.c.h.b16 %v179
  %v789 = vunpack.c.l.b16 %v180
  %v790 = vunpack.c.h.b16 %v180
  %v791 = vunpack.c.l.b16 %v181
  %v792 = vunpack.c.h.b16 %v181
  %v793 = vunpack.c.l.b16 %v182
  %v794 = vunpack.c.h.b16 %v182
  %v795 = vunpack.c.l.b16 %v183
  %v796 = vunpack.c.h.b16 %v183
  %v797 = vunpack.c.l.b16 %v184
  %v798 = vunpack.c.h.b16 %v184
  %v799 = vunpack.c.l.b16 %v185
  %v800 = vunpack.c.h.b16 %v185
  %v801 = vunpack.c.l.b16 %v186
  %v802 = vunpack.c.h.b16 %v186
  %v803 = vunpack.c.l.b16 %v187
  %v804 = vunpack.c.h.b16 %v187
  %v805 = vunpack.c.l.b16 %v188
  %v806 = vunpack.c.h.b16 %v188
  %v807 = vunpack.c.l.b16 %v189
  %v808 = vunpack.c.h.b16 %v189
  %v809 = vunpack.c.l.b16 %v190
  %v810 = vunpack.c.h.b16 %v190
  %v811 = vunpack.c.l.b16 %v191
  %v812 = vunpack.c.h.b16 %v191
  %v813 = vunpack.c.l.b16 %v192
  %v814 = vunpack.c.h.b16 %v192
  %v815 = vunpack.c.l.b16 %v193
  %v816 = vunpack.c.h.b16 %v193
  %v817 = vunpack.c.l.b16 %v194
  %v818 = vunpack.c.h.b16 %v194
  %v819 = vunpack.c.l.b16 %v195
  %v820 = vunpack.c.h.b16 %v195
  %v821 = vunpack.c.l.b16 %v196
  %v822 = vunpack.c.h.b16 %v196
  %v823 = vunpack.c.l.b16 %v197
  %v824 = vunpack.c.h.b16 %v197
  %v825 = vunpack.c.l.b16 %v198
  %v826 = vunpack.c.h.b16 %v198
  %v827 = vunpack.c.l.b16 %v199
  %v828 = vunpack.c.h.b16 %v199
  %v829 = vunpack.c.l.b16 %v200
  %v830 = vunpack.c.h.b16 %v200
  %v831 = vunpack.c.l.b16 %v201
  %v832 = vunpack.c.h.b16 %v201
  %v833 = vunpack.c.l.b16 %v202
  %v834 = vunpack.c.h.b16 %v202
  %v835 = vunpack.c.l.b16 %v203
  %v836 = vunpack.c.h.b16 %v203
  %v837 = vunpack.c.l.b16 %v204
  %v838 = vunpack.c.h.b16 %v204
  %v839 = vunpack.c.l.b16 %v205
  %v840 = vunpack.c.h.b16 %v205
  %v841 = vunpack.c.l.b16 %v206
  %v842 = vunpack.c.h.b16 %v206
  %v843 = vunpack.c.l.b16 %v207
  %v844 = vunpack.c.h.b16 %v207
  %v845 = vunpack.c.l.b16 %v208
  %v846 = vunpack.c.h.b16 %v208
  %v847 = vunpack.c.l.b16 %v209
  %v848 = vunpack.c.h.b16 %v209
  %v849 = vunpack.c.l.b16 %v210
  %v850 = vunpack.c.h.b16 %v210
  %v851 = vunpack.c.l.b16 %v211
  %v852 = vunpack.c.h.b16 %v211
  %v853 = vunpack.c.l.b16 %v212
  %v854 = vunpack.c.h.b16 %v212
  %v855 = vunpack.c.l.b16 %v213
  %v856 = vunpack.c.h.b16 %v213
  %v857 = vunpack.c.l.b16 %v214
  %v858 = vunpack.c.h.b16 %v214
  %v859 = vunpack.c.l.b16 %v215
  %v860 = vunpack.c.h.b16 %v215
  %v861 = vunpack.c.l.b16 %v216
  %v862 = vunpack.c.h.b16 %v216
  %v863 = vunpack.c.l.b16 %v217
  %v864 = vunpack.c.h.b16 %v217
  %v865 = vunpack.c.l.b16 %v218
  %v866 = vunpack.c.h.b16 %v218
  %v867 = vpack.c.b16 %v581, %v579
  %v868 = vpack.c.b16 %v582, %v580
  %v869 = vpack.c.b16 %v585, %v583
  %v870 = vpack.c.b16 %v586, %v584
  %v871 = vpack.c.b16 %v589, %v587
  %v872 = vpack.c.b16 %v590, %v588
  %v873 = vpack.c.b16 %v593, %v591
  %v874 = vpack.c.b16 %v594, %v592
  %v875 = vpack.c.b16 %v597, %v595
  %v876 = vpack.c.b16 %v598, %v596
  %v877 = vpack.c.b16 %v601, %v599
  %v878 = vpack.c.b16 %v602, %v600
  %v879 = vpack.c.b16 %v605, %v603
  %v880 = vpack.c.b16 %v606, %v604
  %v881 = vpack.c.b16 %v609, %v607
  %v882 = vpack.c.b16 %v610, %v608
  %v883 = vpack.c.b16 %v613, %v611
  %v884 = vpack.c.b16 %v614, %v612
  %v885 = vpack.c.b16 %v617, %v615
  %v886 = vpack.c.b16 %v618, %v616
  %v887 = vpack.c.b16 %v621, %v619
  %v888 = vpack.c.b16 %v622, %v620
  %v889 = vpack.c.b16 %v625, %v623
  %v890 = vpack.c.b16 %v626, %v624
  %v891 = vpack.c.b16 %v629, %v627
  %v892 = vpack.c.b16 %v630, %v628
  %v893 = vpack.c.b16 %v633, %v631
  %v894 = vpack.c.b16 %v634, %v632
  %v895 = vpack.c.b16 %v637, %v635
  %v896 = vpack.c.b16 %v638, %v636
  %v897 = vpack.c.b16 %v641, %v639
  %v898 = vpack.c.b16 %v642, %v640
  %v899 = vpack.c.b16 %v645, %v643
  %v900 = vpack.c.b16 %v646, %v644
  %v901 = vpack.c.b16 %v649, %v647
  %v902 = vpack.c.b16 %v650, %v648
  %v903 = vpack.c.b16 %v653, %v651
  %v904 = vpack.c.b16 %v654, %v652
  %v905 = vpack.c.b16 %v657, %v655
  %v906 = vpack.c.b16 %v658, %v656
  %v907 = vpack.c.b16 %v661, %v659
  %v908 = vpack.c.b16 %v662, %v660
  %v909 = vpack.c.b16 %v665, %v663
  %v910 = vpack.c.b16 %v666, %v664
  %v911 = vpack.c.b16 %v669, %v667
  %v912 = vpack.c.b16 %v670, %v668
  %v913 = vpack.c.b16 %v673, %v671
  %v914 = vpack.c.b16 %v674, %v672
  %v915 = vpack.c.b16 %v677, %v675
  %v916 = vpack.c.b16 %v678, %v676
  %v917 = vpack.c.b16 %v681, %v679
  %v918 = vpack.c.b16 %v682, %v680
  %v919 = vpack.c.b16 %v685, %v683
  %v920 = vpack.c.b16 %v686, %v684
  %v921 = vpack.c.b16 %v689, %v687
  %v922 = vpack.c.b16 %v690, %v688
  %v923 = vpack.c.b16 %v693, %v691
  %v924 = vpack.c.b16 %v694, %v692
  %v925 = vpack.c.b16 %v697, %v695
  %v926 = vpack.c.b16 %v698, %v696
  %v927 = vpack.c.b16 %v701, %v699
  %v928 = vpack.c.b16 %v702, %v700
  %v929 = vpack.c.b16 %v705, %v703
  %v930 = vpack.c.b16 %v706, %v704
  %v931 = vpack.c.b16 %v709, %v707
  %v932 = vpack.c.b16 %v710, %v708
  %v933 = vpack.c.b16 %v713, %v711
  %v934 = vpack.c.b16 %v714, %v712
  %v935 = vpack.c.b16 %v717, %v715
  %v936 = vpack.c.b16 %v718, %v716
  %v937 = vpack.c.b16 %v721, %v719
  %v938 = vpack.c.b16 %v722, %v720
  %v939 = vpack.c.b16 %v725, %v723
  %v940 = vpack.c.b16 %v726, %v724
  %v941 = vpack.c.b16 %v729, %v727
  %v942 = vpack.c.b16 %v730, %v728
  %v943 = vpack.c.b16 %v733, %v731
  %v944 = vpack.c.b16 %v734, %v732
  %v945 = vpack.c.b16 %v737, %v735
  %v946 = vpack.c.b16 %v738, %v736
  %v947 = vpack.c.b16 %v741, %v739
  %v948 = vpack.c.b16 %v742, %v740
  %v949 = vpack.c.b16 %v745, %v743
  %v950 = vpack.c.b16 %v746, %v744
  %v951 = vpack.c.b16 %v749, %v747
  %v952 = vpack.c.b16 %v750, %v748
  %v953 = vpack.c.b16 %v753, %v751
  %v954 = vpack.c.b16 %v754, %v752
  %v955 = vpack.c.b16 %v757, %v755
  %v956 = vpack.c.b16 %v758, %v756
  %v957 = vpack.c.b16 %v761, %v759
  %v958 = vpack.c.b16 %v762, %v760
  %v959 = vpack.c.b16 %v765, %v763
  %v960 = vpack.c.b16 %v766, %v764
  %v961 = vpack.c.b16 %v769, %v767
  %v962 = vpack.c.b16 %v770, %v768
  %v963 = vpack.c.b16 %v773, %v771
  %v964 = vpack.c.b16 %v774, %v772
  %v965 = vpack.c.b16 %v777, %v775
  %v966 = vpack.c.b16 %v778, %v776
  %v967 = vpack.c.b16 %v781, %v779
  %v968 = vpack.c.b16 %v782, %v780
  %v969 = vpack.c.b16 %v785, %v783
  %v970 = vpack.c.b16 %v786, %v784
  %v971 = vpack.c.b16 %v789, %v787
  %v972 = vpack.c.b16 %v790, %v788
  %v973 = vpack.c.b16 %v793, %v791
  %v974 = vpack.c.b16 %v794, %v792
  %v975 = vpack.c.b16 %v797, %v795
  %v976 = vpack.c.b16 %v798, %v796
  %v977 = vpack.c.b16 %v801, %v799
  %v978 = vpack.c.b16 %v802, %v800
  %v979 = vpack.c.b16 %v805, %v803
  %v980 = vpack.c.b16 %v806, %v804
  %v981 = vpack.c.b16 %v809, %v807
  %v982 = vpack.c.b16 %v810, %v808
  %v983 = vpack.c.b16 %v813, %v811
  %v984 = vpack.c.b16 %v814, %v812
  %v985 = vpack.c.b16 %v817, %v815
  %v986 = vpack.c.b16 %v818, %v816
  %v987 = vpack.c.b16 %v821, %v819
  %v988 = vpack.c.b16 %v822, %v820
  %v989 = vpack.c.b16 %v825, %v823
  %v990 = vpack.c.b16 %v826, %v824
  %v991 = vpack.c.b16 %v829, %v827
  %v992 = vpack.c.b16 %v830, %v828
  %v993 = vpack.c.b16 %v833, %v831
  %v994 = vpack.c.b16 %v834, %v832
  %v995 = vpack.c.b16 %v837, %v835
  %v996 = vpack.c.b16 %v838, %v836
  %v997 = vpack.c.b16 %v841, %v839
  %v998 = vpack.c.b16 %v842, %v840
  %v999 = vpack.c.b16 %v845, %v843
  %v1000 = vpack.c.b16 %v846, %v844
  %v1001 = vpack.c.b16 %v849, %v847
  %v1002 = vpack.c.b16 %v850, %v848
  %v1003 = vpack.c.b16 %v853, %v851
  %v1004 = vpack.c.b16 %v854, %v852
  %v1005 = vpack.c.b16 %v857, %v855
  %v1006 = vpack.c.b16 %v858, %v856
  %v1007 = vpack.c.b16 %v861, %v859
  %v1008 = vpack.c.b16 %v862, %v860
  %v1009 = vpack.c.b16 %v865, %v863
  %v1010 = vpack.c.b16 %v866, %v864
  %1155 = vmatprep.subr.bf16.mxu0 %v868
  %1156 = vmatpush1.bf16.msra.mxu0 %v867
  %1157 = vmatprep.subr.bf16.mxu0 %v870
  %1158 = vmatpush1.bf16.msra.mxu0 %v869
  %1159 = vmatprep.subr.bf16.mxu0 %v872
  %1160 = vmatpush1.bf16.msra.mxu0 %v871
  %1161 = vmatprep.subr.bf16.mxu0 %v874
  %1162 = vmatpush1.bf16.msra.mxu0 %v873
  %1163 = vmatprep.subr.bf16.mxu0 %v876
  %1164 = vmatpush1.bf16.msra.mxu0 %v875
  %1165 = vmatprep.subr.bf16.mxu0 %v878
  %1166 = vmatpush1.bf16.msra.mxu0 %v877
  %1167 = vmatprep.subr.bf16.mxu0 %v880
  %1168 = vmatpush1.bf16.msra.mxu0 %v879
  %1169 = vmatprep.subr.bf16.mxu0 %v882
  %1170 = vmatpush1.bf16.msra.mxu0 %v881
  %1171 = vmatprep.subr.bf16.mxu0 %v884
  %1172 = vmatpush1.bf16.msra.mxu0 %v883
  %1173 = vmatprep.subr.bf16.mxu0 %v886
  %1174 = vmatpush1.bf16.msra.mxu0 %v885
  %1175 = vmatprep.subr.bf16.mxu0 %v888
  %1176 = vmatpush1.bf16.msra.mxu0 %v887
  %1177 = vmatprep.subr.bf16.mxu0 %v890
  %1178 = vmatpush1.bf16.msra.mxu0 %v889
  %1179 = vmatprep.subr.bf16.mxu0 %v892
  %1180 = vmatpush1.bf16.msra.mxu0 %v891
  %1181 = vmatprep.subr.bf16.mxu0 %v894
  %1182 = vmatpush1.bf16.msra.mxu0 %v893
  %1183 = vmatprep.subr.bf16.mxu0 %v896
  %1184 = vmatpush1.bf16.msra.mxu0 %v895
  %1185 = vmatprep.subr.bf16.mxu0 %v898
  %1186 = vmatpush1.bf16.msra.mxu0 %v897
  %1187 = vmatprep.mubr.bf16.mxu0 %v346
  %1188 = vmatmul.mubr.bf16.gmra.mrb[0].mxu0 %v345
  %v1189 = vpop.f32.mrb[0].mxu0
  %v1190 = vadd.f32 0.0, %v1189
  %v1191 = vpop.f32.mrb[0].mxu0
  %v1192 = vadd.f32 0.0, %v1191
  %v1193 = vpop.f32.mrb[0].mxu0
  %v1194 = vadd.f32 0.0, %v1193
  %v1195 = vpop.f32.mrb[0].mxu0
  %v1196 = vadd.f32 0.0, %v1195
  %1197 = vmatprep.mubr.bf16.mxu0 %v355
  %1198 = vmatmul.mubr.bf16.gmra.mrb[0].mxu0 %v354
  %v1199 = vpop.f32.mrb[0].mxu0
  %v1200 = vadd.f32 0.0, %v1199
  %v1201 = vpop.f32.mrb[0].mxu0
  %v1202 = vadd.f32 0.0, %v1201
  %v1203 = vpop.f32.mrb[0].mxu0
  %v1204 = vadd.f32 0.0, %v1203
  %v1205 = vpop.f32.mrb[0].mxu0
  %v1206 = vadd.f32 0.0, %v1205
  %1207 = vmatprep.mubr.bf16.mxu0 %v364
  %1208 = vmatmul.mubr.bf16.gmra.mrb[0].mxu0 %v363
  %v1209 = vpop.f32.mrb[0].mxu0
  %v1210 = vadd.f32 0.0, %v1209
  %v1211 = vpop.f32.mrb[0].mxu0
  %v1212 = vadd.f32 0.0, %v1211
  %v1213 = vpop.f32.mrb[0].mxu0
  %v1214 = vadd.f32 0.0, %v1213
  %v1215 = vpop.f32.mrb[0].mxu0
  %v1216 = vadd.f32 0.0, %v1215
  %1217 = vmatprep.mubr.bf16.mxu0 %v373
  %1218 = vmatmul.mubr.bf16.gmra.mrb[0].mxu0 %v372
  %v1219 = vpop.f32.mrb[0].mxu0
  %v1220 = vadd.f32 0.0, %v1219
  %v1221 = vpop.f32.mrb[0].mxu0
  %v1222 = vadd.f32 0.0, %v1221
  %v1223 = vpop.f32.mrb[0].mxu0
  %v1224 = vadd.f32 0.0, %v1223
  %v1225 = vpop.f32.mrb[0].mxu0
  %v1226 = vadd.f32 0.0, %v1225
  %1227 = vmatprep.mubr.bf16.mxu0 %v382
  %1228 = vmatmul.mubr.bf16.gmra.mrb[0].mxu0 %v381
  %v1229 = vpop.f32.mrb[0].mxu0
  %v1230 = vadd.f32 0.0, %v1229
  %v1231 = vpop.f32.mrb[0].mxu0
  %v1232 = vadd.f32 0.0, %v1231
  %v1233 = vpop.f32.mrb[0].mxu0
  %v1234 = vpop.f32.mrb[0].mxu0
  %1235 = vdwg.mxu0
  %1236 = vmatprep.subr.bf16.mxu0 %v900
  %1237 = vmatpush1.bf16.msra.mxu0 %v899
  %1238 = vmatprep.subr.bf16.mxu0 %v902
  %1239 = vmatpush1.bf16.msra.mxu0 %v901
  %1240 = vmatprep.subr.bf16.mxu0 %v904
  %1241 = vmatpush1.bf16.msra.mxu0 %v903
  %1242 = vmatprep.subr.bf16.mxu0 %v906
  %1243 = vmatpush1.bf16.msra.mxu0 %v905
  %1244 = vmatprep.subr.bf16.mxu0 %v908
  %1245 = vmatpush1.bf16.msra.mxu0 %v907
  %1246 = vmatprep.subr.bf16.mxu0 %v910
  %1247 = vmatpush1.bf16.msra.mxu0 %v909
  %1248 = vmatprep.subr.bf16.mxu0 %v912
  %1249 = vmatpush1.bf16.msra.mxu0 %v911
  %1250 = vmatprep.subr.bf16.mxu0 %v914
  %1251 = vmatpush1.bf16.msra.mxu0 %v913
  %1252 = vmatprep.subr.bf16.mxu0 %v916
  %1253 = vmatpush1.bf16.msra.mxu0 %v915
  %1254 = vmatprep.subr.bf16.mxu0 %v918
  %1255 = vmatpush1.bf16.msra.mxu0 %v917
  %1256 = vmatprep.subr.bf16.mxu0 %v920
  %1257 = vmatpush1.bf16.msra.mxu0 %v919
  %1258 = vmatprep.subr.bf16.mxu0 %v922
  %1259 = vmatpush1.bf16.msra.mxu0 %v921
  %1260 = vmatprep.subr.bf16.mxu0 %v924
  %1261 = vmatpush1.bf16.msra.mxu0 %v923
  %1262 = vmatprep.subr.bf16.mxu0 %v926
  %1263 = vmatpush1.bf16.msra.mxu0 %v925
  %1264 = vmatprep.subr.bf16.mxu0 %v928
  %1265 = vmatpush1.bf16.msra.mxu0 %v927
  %1266 = vmatprep.subr.bf16.mxu0 %v930
  %1267 = vmatpush1.bf16.msra.mxu0 %v929
  %1268 = vmatprep.mubr.bf16.mxu0 %v348
  %1269 = vmatmul.mubr.bf16.gmra.mrb[0].mxu0 %v347
  %v1270 = vpop.f32.mrb[0].mxu0
  %v1271 = vadd.f32 %v1190, %v1270
  %v1272 = vpop.f32.mrb[0].mxu0
  %v1273 = vadd.f32 %v1192, %v1272
  %v1274 = vpop.f32.mrb[0].mxu0
  %v1275 = vadd.f32 %v1194, %v1274
  %v1276 = vpop.f32.mrb[0].mxu0
  %v1277 = vadd.f32 %v1196, %v1276
  %1278 = vmatprep.mubr.bf16.mxu0 %v357
  %1279 = vmatmul.mubr.bf16.gmra.mrb[0].mxu0 %v356
  %v1280 = vpop.f32.mrb[0].mxu0
  %v1281 = vadd.f32 %v1200, %v1280
  %v1282 = vpop.f32.mrb[0].mxu0
  %v1283 = vadd.f32 %v1202, %v1282
  %v1284 = vpop.f32.mrb[0].mxu0
  %v1285 = vadd.f32 %v1204, %v1284
  %v1286 = vpop.f32.mrb[0].mxu0
  %v1287 = vadd.f32 %v1206, %v1286
  %1288 = vmatprep.mubr.bf16.mxu0 %v366
  %1289 = vmatmul.mubr.bf16.gmra.mrb[0].mxu0 %v365
  %v1290 = vpop.f32.mrb[0].mxu0
  %v1291 = vadd.f32 %v1210, %v1290
  %v1292 = vpop.f32.mrb[0].mxu0
  %v1293 = vadd.f32 %v1212, %v1292
  %v1294 = vpop.f32.mrb[0].mxu0
  %v1295 = vadd.f32 %v1214, %v1294
  %v1296 = vpop.f32.mrb[0].mxu0
  %v1297 = vadd.f32 %v1216, %v1296
  %1298 = vmatprep.mubr.bf16.mxu0 %v375
  %1299 = vmatmul.mubr.bf16.gmra.mrb[0].mxu0 %v374
  %v1300 = vpop.f32.mrb[0].mxu0
  %v1301 = vadd.f32 %v1220, %v1300
  %v1302 = vpop.f32.mrb[0].mxu0
  %v1303 = vadd.f32 %v1222, %v1302
  %v1304 = vpop.f32.mrb[0].mxu0
  %v1305 = vadd.f32 %v1224, %v1304
  %v1306 = vpop.f32.mrb[0].mxu0
  %v1307 = vadd.f32 %v1226, %v1306
  %1308 = vmatprep.mubr.bf16.mxu0 %v384
  %1309 = vmatmul.mubr.bf16.gmra.mrb[0].mxu0 %v383
  %v1310 = vpop.f32.mrb[0].mxu0
  %v1311 = vadd.f32 %v1230, %v1310
  %v1312 = vpop.f32.mrb[0].mxu0
  %v1313 = vadd.f32 %v1232, %v1312
  %v1314 = vpop.f32.mrb[0].mxu0
  %v1315 = vpop.f32.mrb[0].mxu0
  %1316 = vdwg.mxu0
  %1317 = vmatprep.subr.bf16.mxu0 %v932
  %1318 = vmatpush1.bf16.msra.mxu0 %v931
  %1319 = vmatprep.subr.bf16.mxu0 %v934
  %1320 = vmatpush1.bf16.msra.mxu0 %v933
  %1321 = vmatprep.subr.bf16.mxu0 %v936
  %1322 = vmatpush1.bf16.msra.mxu0 %v935
  %1323 = vmatprep.subr.bf16.mxu0 %v938
  %1324 = vmatpush1.bf16.msra.mxu0 %v937
  %1325 = vmatprep.subr.bf16.mxu0 %v940
  %1326 = vmatpush1.bf16.msra.mxu0 %v939
  %1327 = vmatprep.subr.bf16.mxu0 %v942
  %1328 = vmatpush1.bf16.msra.mxu0 %v941
  %1329 = vmatprep.subr.bf16.mxu0 %v944
  %1330 = vmatpush1.bf16.msra.mxu0 %v943
  %1331 = vmatprep.subr.bf16.mxu0 %v946
  %1332 = vmatpush1.bf16.msra.mxu0 %v945
  %1333 = vmatprep.subr.bf16.mxu0 %v948
  %1334 = vmatpush1.bf16.msra.mxu0 %v947
  %1335 = vmatprep.subr.bf16.mxu0 %v950
  %1336 = vmatpush1.bf16.msra.mxu0 %v949
  %1337 = vmatprep.subr.bf16.mxu0 %v952
  %1338 = vmatpush1.bf16.msra.mxu0 %v951
  %1339 = vmatprep.subr.bf16.mxu0 %v954
  %1340 = vmatpush1.bf16.msra.mxu0 %v953
  %1341 = vmatprep.subr.bf16.mxu0 %v956
  %1342 = vmatpush1.bf16.msra.mxu0 %v955
  %1343 = vmatprep.subr.bf16.mxu0 %v958
  %1344 = vmatpush1.bf16.msra.mxu0 %v957
  %1345 = vmatprep.subr.bf16.mxu0 %v960
  %1346 = vmatpush1.bf16.msra.mxu0 %v959
  %1347 = vmatprep.subr.bf16.mxu0 %v962
  %1348 = vmatpush1.bf16.msra.mxu0 %v961
  %1349 = vmatprep.mubr.bf16.mxu0 %v350
  %1350 = vmatmul.mubr.bf16.gmra.mrb[0].mxu0 %v349
  %v1351 = vpop.f32.mrb[0].mxu0
  %v1352 = vadd.f32 %v1271, %v1351
  %v1353 = vpop.f32.mrb[0].mxu0
  %v1354 = vadd.f32 %v1273, %v1353
  %v1355 = vpop.f32.mrb[0].mxu0
  %v1356 = vadd.f32 %v1275, %v1355
  %v1357 = vpop.f32.mrb[0].mxu0
  %v1358 = vadd.f32 %v1277, %v1357
  %1359 = vmatprep.mubr.bf16.mxu0 %v359
  %1360 = vmatmul.mubr.bf16.gmra.mrb[0].mxu0 %v358
  %v1361 = vpop.f32.mrb[0].mxu0
  %v1362 = vadd.f32 %v1281, %v1361
  %v1363 = vpop.f32.mrb[0].mxu0
  %v1364 = vadd.f32 %v1283, %v1363
  %v1365 = vpop.f32.mrb[0].mxu0
  %v1366 = vadd.f32 %v1285, %v1365
  %v1367 = vpop.f32.mrb[0].mxu0
  %v1368 = vadd.f32 %v1287, %v1367
  %1369 = vmatprep.mubr.bf16.mxu0 %v368
  %1370 = vmatmul.mubr.bf16.gmra.mrb[0].mxu0 %v367
  %v1371 = vpop.f32.mrb[0].mxu0
  %v1372 = vadd.f32 %v1291, %v1371
  %v1373 = vpop.f32.mrb[0].mxu0
  %v1374 = vadd.f32 %v1293, %v1373
  %v1375 = vpop.f32.mrb[0].mxu0
  %v1376 = vadd.f32 %v1295, %v1375
  %v1377 = vpop.f32.mrb[0].mxu0
  %v1378 = vadd.f32 %v1297, %v1377
  %1379 = vmatprep.mubr.bf16.mxu0 %v377
  %1380 = vmatmul.mubr.bf16.gmra.mrb[0].mxu0 %v376
  %v1381 = vpop.f32.mrb[0].mxu0
  %v1382 = vadd.f32 %v1301, %v1381
  %v1383 = vpop.f32.mrb[0].mxu0
  %v1384 = vadd.f32 %v1303, %v1383
  %v1385 = vpop.f32.mrb[0].mxu0
  %v1386 = vadd.f32 %v1305, %v1385
  %v1387 = vpop.f32.mrb[0].mxu0
  %v1388 = vadd.f32 %v1307, %v1387
  %1389 = vmatprep.mubr.bf16.mxu0 %v386
  %1390 = vmatmul.mubr.bf16.gmra.mrb[0].mxu0 %v385
  %v1391 = vpop.f32.mrb[0].mxu0
  %v1392 = vadd.f32 %v1311, %v1391
  %v1393 = vpop.f32.mrb[0].mxu0
  %v1394 = vadd.f32 %v1313, %v1393
  %v1395 = vpop.f32.mrb[0].mxu0
  %v1396 = vpop.f32.mrb[0].mxu0
  %1397 = vdwg.mxu0
  %1398 = vmatprep.subr.bf16.mxu0 %v964
  %1399 = vmatpush1.bf16.msra.mxu0 %v963
  %1400 = vmatprep.subr.bf16.mxu0 %v966
  %1401 = vmatpush1.bf16.msra.mxu0 %v965
  %1402 = vmatprep.subr.bf16.mxu0 %v968
  %1403 = vmatpush1.bf16.msra.mxu0 %v967
  %1404 = vmatprep.subr.bf16.mxu0 %v970
  %1405 = vmatpush1.bf16.msra.mxu0 %v969
  %1406 = vmatprep.subr.bf16.mxu0 %v972
  %1407 = vmatpush1.bf16.msra.mxu0 %v971
  %1408 = vmatprep.subr.bf16.mxu0 %v974
  %1409 = vmatpush1.bf16.msra.mxu0 %v973
  %1410 = vmatprep.subr.bf16.mxu0 %v976
  %1411 = vmatpush1.bf16.msra.mxu0 %v975
  %1412 = vmatprep.subr.bf16.mxu0 %v978
  %1413 = vmatpush1.bf16.msra.mxu0 %v977
  %1414 = vmatprep.subr.bf16.mxu0 %v980
  %1415 = vmatpush1.bf16.msra.mxu0 %v979
  %1416 = vmatprep.subr.bf16.mxu0 %v982
  %1417 = vmatpush1.bf16.msra.mxu0 %v981
  %1418 = vmatprep.subr.bf16.mxu0 %v984
  %1419 = vmatpush1.bf16.msra.mxu0 %v983
  %1420 = vmatprep.subr.bf16.mxu0 %v986
  %1421 = vmatpush1.bf16.msra.mxu0 %v985
  %1422 = vmatprep.subr.bf16.mxu0 %v988
  %1423 = vmatpush1.bf16.msra.mxu0 %v987
  %1424 = vmatprep.subr.bf16.mxu0 %v990
  %1425 = vmatpush1.bf16.msra.mxu0 %v989
  %1426 = vmatprep.subr.bf16.mxu0 %v992
  %1427 = vmatpush1.bf16.msra.mxu0 %v991
  %1428 = vmatprep.subr.bf16.mxu0 %v994
  %1429 = vmatpush1.bf16.msra.mxu0 %v993
  %1430 = vmatprep.mubr.bf16.mxu0 %v352
  %1431 = vmatmul.mubr.bf16.gmra.mrb[0].mxu0 %v351
  %v1432 = vpop.f32.mrb[0].mxu0
  %v1433 = vadd.f32 %v1352, %v1432
  %v1434 = vpop.f32.mrb[0].mxu0
  %v1435 = vadd.f32 %v1354, %v1434
  %v1436 = vpop.f32.mrb[0].mxu0
  %v1437 = vadd.f32 %v1356, %v1436
  %v1438 = vpop.f32.mrb[0].mxu0
  %v1439 = vadd.f32 %v1358, %v1438
  %1440 = vmatprep.mubr.bf16.mxu0 %v361
  %1441 = vmatmul.mubr.bf16.gmra.mrb[0].mxu0 %v360
  %v1442 = vpop.f32.mrb[0].mxu0
  %v1443 = vadd.f32 %v1362, %v1442
  %v1444 = vpop.f32.mrb[0].mxu0
  %v1445 = vadd.f32 %v1364, %v1444
  %v1446 = vpop.f32.mrb[0].mxu0
  %v1447 = vadd.f32 %v1366, %v1446
  %v1448 = vpop.f32.mrb[0].mxu0
  %v1449 = vadd.f32 %v1368, %v1448
  %1450 = vmatprep.mubr.bf16.mxu0 %v370
  %1451 = vmatmul.mubr.bf16.gmra.mrb[0].mxu0 %v369
  %v1452 = vpop.f32.mrb[0].mxu0
  %v1453 = vadd.f32 %v1372, %v1452
  %v1454 = vpop.f32.mrb[0].mxu0
  %v1455 = vadd.f32 %v1374, %v1454
  %v1456 = vpop.f32.mrb[0].mxu0
  %v1457 = vadd.f32 %v1376, %v1456
  %v1458 = vpop.f32.mrb[0].mxu0
  %v1459 = vadd.f32 %v1378, %v1458
  %1460 = vmatprep.mubr.bf16.mxu0 %v379
  %1461 = vmatmul.mubr.bf16.gmra.mrb[0].mxu0 %v378
  %v1462 = vpop.f32.mrb[0].mxu0
  %v1463 = vadd.f32 %v1382, %v1462
  %v1464 = vpop.f32.mrb[0].mxu0
  %v1465 = vadd.f32 %v1384, %v1464
  %v1466 = vpop.f32.mrb[0].mxu0
  %v1467 = vadd.f32 %v1386, %v1466
  %v1468 = vpop.f32.mrb[0].mxu0
  %v1469 = vadd.f32 %v1388, %v1468
  %1470 = vmatprep.mubr.bf16.mxu0 %v388
  %1471 = vmatmul.mubr.bf16.gmra.mrb[0].mxu0 %v387
  %v1472 = vpop.f32.mrb[0].mxu0
  %v1473 = vadd.f32 %v1392, %v1472
  %v1474 = vpop.f32.mrb[0].mxu0
  %v1475 = vadd.f32 %v1394, %v1474
  %v1476 = vpop.f32.mrb[0].mxu0
  %v1477 = vpop.f32.mrb[0].mxu0
  %1478 = vdwg.mxu0
  %1479 = vmatprep.subr.bf16.mxu0 %v996
  %1480 = vmatpush1.bf16.msra.mxu0 %v995
  %1481 = vmatprep.subr.bf16.mxu0 %v998
  %1482 = vmatpush1.bf16.msra.mxu0 %v997
  %1483 = vmatprep.subr.bf16.mxu0 %v1000
  %1484 = vmatpush1.bf16.msra.mxu0 %v999
  %1485 = vmatprep.subr.bf16.mxu0 %v1002
  %1486 = vmatpush1.bf16.msra.mxu0 %v1001
  %1487 = vmatprep.subr.bf16.mxu0 %v1004
  %1488 = vmatpush1.bf16.msra.mxu0 %v1003
  %1489 = vmatprep.subr.bf16.mxu0 %v1006
  %1490 = vmatpush1.bf16.msra.mxu0 %v1005
  %1491 = vmatprep.subr.bf16.mxu0 %v1008
  %1492 = vmatpush1.bf16.msra.mxu0 %v1007
  %1493 = vmatprep.subr.bf16.mxu0 %v1010
  %1494 = vmatpush1.bf16.msra.mxu0 %v1009
  %1495 = vmatprep.subr.bf16.mxu0 0
  %1496 = vmatpush1.bf16.msra.mxu0 0
  %1497 = vmatprep.subr.bf16.mxu0 0
  %1498 = vmatpush1.bf16.msra.mxu0 0
  %1499 = vmatprep.subr.bf16.mxu0 0
  %1500 = vmatpush1.bf16.msra.mxu0 0
  %1501 = vmatprep.subr.bf16.mxu0 0
  %1502 = vmatpush1.bf16.msra.mxu0 0
  %1503 = vmatprep.subr.bf16.mxu0 0
  %1504 = vmatpush1.bf16.msra.mxu0 0
  %1505 = vmatprep.subr.bf16.mxu0 0
  %1506 = vmatpush1.bf16.msra.mxu0 0
  %1507 = vmatprep.subr.bf16.mxu0 0
  %1508 = vmatpush1.bf16.msra.mxu0 0
  %1509 = vmatprep.subr.bf16.mxu0 0
  %1510 = vmatpush1.bf16.msra.mxu0 0
  %1511 = vmatprep.mubr.bf16.mxu0 0
  %1512 = vmatmul.mubr.bf16.gmra.mrb[0].mxu0 %v353
  %v1513 = vpop.f32.mrb[0].mxu0
  %v1514 = vadd.f32 %v1433, %v1513
  %v1515 = vpop.f32.mrb[0].mxu0
  %v1516 = vadd.f32 %v1435, %v1515
  %v1517 = vpop.f32.mrb[0].mxu0
  %v1518 = vadd.f32 %v1437, %v1517
  %v1519 = vpop.f32.mrb[0].mxu0
  %v1520 = vadd.f32 %v1439, %v1519
  %1521 = vmatprep.mubr.bf16.mxu0 0
  %1522 = vmatmul.mubr.bf16.gmra.mrb[0].mxu0 %v362
  %v1523 = vpop.f32.mrb[0].mxu0
  %v1524 = vadd.f32 %v1443, %v1523
  %v1525 = vpop.f32.mrb[0].mxu0
  %v1526 = vadd.f32 %v1445, %v1525
  %v1527 = vpop.f32.mrb[0].mxu0
  %v1528 = vadd.f32 %v1447, %v1527
  %v1529 = vpop.f32.mrb[0].mxu0
  %v1530 = vadd.f32 %v1449, %v1529
  %1531 = vmatprep.mubr.bf16.mxu0 0
  %1532 = vmatmul.mubr.bf16.gmra.mrb[0].mxu0 %v371
  %v1533 = vpop.f32.mrb[0].mxu0
  %v1534 = vadd.f32 %v1453, %v1533
  %v1535 = vpop.f32.mrb[0].mxu0
  %v1536 = vadd.f32 %v1455, %v1535
  %v1537 = vpop.f32.mrb[0].mxu0
  %v1538 = vadd.f32 %v1457, %v1537
  %v1539 = vpop.f32.mrb[0].mxu0
  %v1540 = vadd.f32 %v1459, %v1539
  %1541 = vmatprep.mubr.bf16.mxu0 0
  %1542 = vmatmul.mubr.bf16.gmra.mrb[0].mxu0 %v380
  %v1543 = vpop.f32.mrb[0].mxu0
  %v1544 = vadd.f32 %v1463, %v1543
  %v1545 = vpop.f32.mrb[0].mxu0
  %v1546 = vadd.f32 %v1465, %v1545
  %v1547 = vpop.f32.mrb[0].mxu0
  %v1548 = vadd.f32 %v1467, %v1547
  %v1549 = vpop.f32.mrb[0].mxu0
  %v1550 = vadd.f32 %v1469, %v1549
  %1551 = vmatprep.mubr.bf16.mxu0 0
  %1552 = vmatmul.mubr.bf16.gmra.mrb[0].mxu0 %v389
  %v1553 = vpop.f32.mrb[0].mxu0
  %v1554 = vadd.f32 %v1473, %v1553
  %v1555 = vpop.f32.mrb[0].mxu0
  %v1556 = vadd.f32 %v1475, %v1555
  %v1557 = vpop.f32.mrb[0].mxu0
  %v1558 = vpop.f32.mrb[0].mxu0
  %1559 = vdwg.mxu0
  %v1560 = vld [vmem:[%s2] sm:$0x3]
  %v1562 = vlaneseq
  %v1563 = vshrl.u32 %v1562, 7
  %v1564 = vsub.s32 0, %v1563
  %v1565 = vrot.slane %v1560, %v1564
  %v1566 = vlaneseq
  %v1567 = vshrl.u32 %v1566, 7
  %v1568 = vsub.s32 1, %v1567
  %v1569 = vrot.slane %v1560, %v1568
  %v1572 = vmul.f32 %v1514, %v1565
  %v1573 = vmul.f32 %v1516, %v1569
  %v1574 = vmul.f32 %v1518, %v1565
  %v1575 = vmul.f32 %v1520, %v1569
  %v1576 = vmul.f32 %v1524, %v1565
  %v1577 = vmul.f32 %v1526, %v1569
  %v1578 = vmul.f32 %v1528, %v1565
  %v1579 = vmul.f32 %v1530, %v1569
  %v1580 = vmul.f32 %v1534, %v1565
  %v1581 = vmul.f32 %v1536, %v1569
  %v1582 = vmul.f32 %v1538, %v1565
  %v1583 = vmul.f32 %v1540, %v1569
  %v1584 = vmul.f32 %v1544, %v1565
  %v1585 = vmul.f32 %v1546, %v1569
  %v1586 = vmul.f32 %v1548, %v1565
  %v1587 = vmul.f32 %v1550, %v1569
  %v1588 = vmul.f32 %v1554, %v1565
  %v1589 = vmul.f32 %v1556, %v1569
  %v1590 = vld [vmem:[%s3] sm:$0x3]
  %v1592 = vlaneseq
  %v1593 = vshrl.u32 %v1592, 7
  %v1594 = vsub.s32 0, %v1593
  %v1595 = vrot.slane %v1590, %v1594
  %v1596 = vlaneseq
  %v1597 = vshrl.u32 %v1596, 7
  %v1598 = vsub.s32 1, %v1597
  %v1599 = vrot.slane %v1590, %v1598
  %v1602 = vadd.f32 %v1572, %v1595
  %v1603 = vadd.f32 %v1573, %v1599
  %v1604 = vadd.f32 %v1574, %v1595
  %v1605 = vadd.f32 %v1575, %v1599
  %v1606 = vadd.f32 %v1576, %v1595
  %v1607 = vadd.f32 %v1577, %v1599
  %v1608 = vadd.f32 %v1578, %v1595
  %v1609 = vadd.f32 %v1579, %v1599
  %v1610 = vadd.f32 %v1580, %v1595
  %v1611 = vadd.f32 %v1581, %v1599
  %v1612 = vadd.f32 %v1582, %v1595
  %v1613 = vadd.f32 %v1583, %v1599
  %v1614 = vadd.f32 %v1584, %v1595
  %v1615 = vadd.f32 %v1585, %v1599
  %v1616 = vadd.f32 %v1586, %v1595
  %v1617 = vadd.f32 %v1587, %v1599
  %v1618 = vadd.f32 %v1588, %v1595
  %v1619 = vadd.f32 %v1589, %v1599
  %v1620 = vmax.f32 %v1602, 0.0
  %v1621 = vmax.f32 %v1603, 0.0
  %v1622 = vmax.f32 %v1604, 0.0
  %v1623 = vmax.f32 %v1605, 0.0
  %v1624 = vmax.f32 %v1606, 0.0
  %v1625 = vmax.f32 %v1607, 0.0
  %v1626 = vmax.f32 %v1608, 0.0
  %v1627 = vmax.f32 %v1609, 0.0
  %v1628 = vmax.f32 %v1610, 0.0
  %v1629 = vmax.f32 %v1611, 0.0
  %v1630 = vmax.f32 %v1612, 0.0
  %v1631 = vmax.f32 %v1613, 0.0
  %v1632 = vmax.f32 %v1614, 0.0
  %v1633 = vmax.f32 %v1615, 0.0
  %v1634 = vmax.f32 %v1616, 0.0
  %v1635 = vmax.f32 %v1617, 0.0
  %v1636 = vmax.f32 %v1618, 0.0
  %v1637 = vmax.f32 %v1619, 0.0
  %1647 = vrot.lane.b32.xlu0 %v1620, 64
  %v1648 = vpop.permute.xlu0 %1647
  %1649 = vrot.lane.b32.xlu0 %v1622, 64
  %v1650 = vpop.permute.xlu0 %1649
  %1651 = vrot.lane.b32.xlu0 %v1624, 64
  %v1652 = vpop.permute.xlu0 %1651
  %1653 = vrot.lane.b32.xlu0 %v1626, 64
  %v1654 = vpop.permute.xlu0 %1653
  %1655 = vrot.lane.b32.xlu0 %v1628, 64
  %v1656 = vpop.permute.xlu0 %1655
  %1657 = vrot.lane.b32.xlu0 %v1630, 64
  %v1658 = vpop.permute.xlu0 %1657
  %1659 = vrot.lane.b32.xlu0 %v1632, 64
  %v1660 = vpop.permute.xlu0 %1659
  %1661 = vrot.lane.b32.xlu0 %v1634, 64
  %v1662 = vpop.permute.xlu0 %1661
  %1663 = vrot.lane.b32.xlu0 %v1636, 64
  %v1664 = vpop.permute.xlu0 %1663
  %v1674 = vmax.f32 %v1620, %v1648
  %v1675 = vmax.f32 %v1622, %v1650
  %v1676 = vmax.f32 %v1624, %v1652
  %v1677 = vmax.f32 %v1626, %v1654
  %v1678 = vmax.f32 %v1628, %v1656
  %v1679 = vmax.f32 %v1630, %v1658
  %v1680 = vmax.f32 %v1632, %v1660
  %v1681 = vmax.f32 %v1634, %v1662
  %v1682 = vmax.f32 %v1636, %v1664
  %1692 = vrot.lane.b32.xlu0 %v1621, 64
  %v1693 = vpop.permute.xlu0 %1692
  %1694 = vrot.lane.b32.xlu0 %v1623, 64
  %v1695 = vpop.permute.xlu0 %1694
  %1696 = vrot.lane.b32.xlu0 %v1625, 64
  %v1697 = vpop.permute.xlu0 %1696
  %1698 = vrot.lane.b32.xlu0 %v1627, 64
  %v1699 = vpop.permute.xlu0 %1698
  %1700 = vrot.lane.b32.xlu0 %v1629, 64
  %v1701 = vpop.permute.xlu0 %1700
  %1702 = vrot.lane.b32.xlu0 %v1631, 64
  %v1703 = vpop.permute.xlu0 %1702
  %1704 = vrot.lane.b32.xlu0 %v1633, 64
  %v1705 = vpop.permute.xlu0 %1704
  %1706 = vrot.lane.b32.xlu0 %v1635, 64
  %v1707 = vpop.permute.xlu0 %1706
  %1708 = vrot.lane.b32.xlu0 %v1637, 64
  %v1709 = vpop.permute.xlu0 %1708
  %v1719 = vmax.f32 %v1621, %v1693
  %v1720 = vmax.f32 %v1623, %v1695
  %v1721 = vmax.f32 %v1625, %v1697
  %v1722 = vmax.f32 %v1627, %v1699
  %v1723 = vmax.f32 %v1629, %v1701
  %v1724 = vmax.f32 %v1631, %v1703
  %v1725 = vmax.f32 %v1633, %v1705
  %v1726 = vmax.f32 %v1635, %v1707
  %v1727 = vmax.f32 %v1637, %v1709
  %v1728 = vmax.f32 %v1674, %v1719
  %v1729 = vmax.f32 %v1675, %v1720
  %v1730 = vmax.f32 %v1676, %v1721
  %v1731 = vmax.f32 %v1677, %v1722
  %v1732 = vmax.f32 %v1678, %v1723
  %v1733 = vmax.f32 %v1679, %v1724
  %v1734 = vmax.f32 %v1680, %v1725
  %v1735 = vmax.f32 %v1681, %v1726
  %v1736 = vmax.f32 %v1682, %v1727
  %v1737 = vld [vmem:[%s4] sm:$0xff]
  %v1738 = vld [vmem:[%s4 + $0x8] sm:$0xff]
  %v1739 = vld [vmem:[%s4 + $0x10] sm:$0xff]
  %v1740 = vld [vmem:[%s4 + $0x18] sm:$0xff]
  %v1741 = vld [vmem:[%s4 + $0x20] sm:$0xff]
  %v1742 = vld [vmem:[%s4 + $0x28] sm:$0xff]
  %v1743 = vld [vmem:[%s4 + $0x30] sm:$0xff]
  %v1744 = vld [vmem:[%s4 + $0x38] sm:$0xff]
  %v1745 = vld [vmem:[%s4 + $0x40] sm:$0xff]
  %v1746 = vld [vmem:[%s4 + $0x48] sm:$0xff]
  %v1747 = vld [vmem:[%s4 + $0x50] sm:$0xff]
  %v1748 = vld [vmem:[%s4 + $0x58] sm:$0xff]
  %v1749 = vld [vmem:[%s4 + $0x60] sm:$0xff]
  %v1750 = vld [vmem:[%s4 + $0x68] sm:$0xff]
  %v1751 = vld [vmem:[%s4 + $0x70] sm:$0xff]
  %v1752 = vld [vmem:[%s4 + $0x78] sm:$0xff]
  %vm1753 = vcmask 523264
  %v1755 = vsel %vm1753, %v1729, 0
  %1757 = vmatprep.subr.mxu0 0.0
  %1758 = vmatpush1.msra.mxu0 %v1745
  %1759 = vmatprep.subr.mxu0 0.0
  %1760 = vmatpush1.msra.mxu0 %v1746
  %1761 = vmatprep.subr.mxu0 0.0
  %1762 = vmatpush1.msra.mxu0 %v1747
  %1763 = vmatprep.subr.mxu0 0.0
  %1764 = vmatpush1.msra.mxu0 %v1748
  %1765 = vmatprep.subr.mxu0 0.0
  %1766 = vmatpush1.msra.mxu0 %v1749
  %1767 = vmatprep.subr.mxu0 0.0
  %1768 = vmatpush1.msra.mxu0 %v1750
  %1769 = vmatprep.subr.mxu0 0.0
  %1770 = vmatpush1.msra.mxu0 %v1751
  %1771 = vmatprep.subr.mxu0 0.0
  %1772 = vmatpush1.msra.mxu0 %v1752
  %1773 = vmatprep.subr.mxu0 0.0
  %1774 = vmatpush1.msra.mxu0 0.0
  %1775 = vmatprep.subr.mxu0 0.0
  %1776 = vmatpush1.msra.mxu0 0.0
  %1777 = vmatprep.subr.mxu0 0.0
  %1778 = vmatpush1.msra.mxu0 0.0
  %1779 = vmatprep.subr.mxu0 0.0
  %1780 = vmatpush1.msra.mxu0 0.0
  %1781 = vmatprep.subr.mxu0 0.0
  %1782 = vmatpush1.msra.mxu0 0.0
  %1783 = vmatprep.subr.mxu0 0.0
  %1784 = vmatpush1.msra.mxu0 0.0
  %1785 = vmatprep.subr.mxu0 0.0
  %1786 = vmatpush1.msra.mxu0 0.0
  %1787 = vmatprep.subr.mxu0 0.0
  %1788 = vmatpush1.msra.mxu0 0.0
  %1789 = vmatprep.subr.mxu0 0.0
  %1790 = vmatpush1.msra.mxu0 0.0
  %1791 = vmatprep.subr.mxu0 0.0
  %1792 = vmatpush1.msra.mxu0 0.0
  %1793 = vmatprep.subr.mxu0 0.0
  %1794 = vmatpush1.msra.mxu0 0.0
  %1795 = vmatprep.subr.mxu0 0.0
  %1796 = vmatpush1.msra.mxu0 0.0
  %1797 = vmatprep.subr.mxu0 0.0
  %1798 = vmatpush1.msra.mxu0 0.0
  %1799 = vmatprep.subr.mxu0 0.0
  %1800 = vmatpush1.msra.mxu0 0.0
  %1801 = vmatprep.subr.mxu0 0.0
  %1802 = vmatpush1.msra.mxu0 0.0
  %1803 = vmatprep.subr.mxu0 0.0
  %1804 = vmatpush1.msra.mxu0 0.0
  %1805 = vmatprep.subr.mxu0 0.0
  %1806 = vmatpush1.msra.mxu0 0.0
  %1807 = vmatprep.subr.mxu0 0.0
  %1808 = vmatpush1.msra.mxu0 0.0
  %1809 = vmatprep.subr.mxu0 0.0
  %1810 = vmatpush1.msra.mxu0 0.0
  %1811 = vmatprep.subr.mxu0 0.0
  %1812 = vmatpush1.msra.mxu0 0.0
  %1813 = vmatprep.subr.mxu0 0.0
  %1814 = vmatpush1.msra.mxu0 0.0
  %1815 = vmatprep.subr.mxu0 0.0
  %1816 = vmatpush1.msra.mxu0 0.0
  %1817 = vmatprep.subr.mxu0 0.0
  %1818 = vmatpush1.msra.mxu0 0.0
  %1819 = vmatprep.subr.mxu0 0.0
  %1820 = vmatpush1.msra.mxu0 0.0
  %1821 = vmatprep.mubr.f32.mxu0 0.0
  %1822 = vmatmul.mubr.f32.gmra.mrb[0].mxu0 %v1755
  %v1823 = vpop.f32.mrb[0].mxu0
  %v1824 = vadd.f32 0.0, %v1823
  %v1825 = vpop.f32.mrb[0].mxu0
  %1826 = vdwg.mxu0
  %v1828 = vsel %vm1753, %v1728, 0
  %1830 = vmatprep.subr.mxu0 0.0
  %1831 = vmatpush1.msra.mxu0 %v1737
  %1832 = vmatprep.subr.mxu0 0.0
  %1833 = vmatpush1.msra.mxu0 %v1738
  %1834 = vmatprep.subr.mxu0 0.0
  %1835 = vmatpush1.msra.mxu0 %v1739
  %1836 = vmatprep.subr.mxu0 0.0
  %1837 = vmatpush1.msra.mxu0 %v1740
  %1838 = vmatprep.subr.mxu0 0.0
  %1839 = vmatpush1.msra.mxu0 %v1741
  %1840 = vmatprep.subr.mxu0 0.0
  %1841 = vmatpush1.msra.mxu0 %v1742
  %1842 = vmatprep.subr.mxu0 0.0
  %1843 = vmatpush1.msra.mxu0 %v1743
  %1844 = vmatprep.subr.mxu0 0.0
  %1845 = vmatpush1.msra.mxu0 %v1744
  %1846 = vmatprep.subr.mxu0 0.0
  %1847 = vmatpush1.msra.mxu0 0.0
  %1848 = vmatprep.subr.mxu0 0.0
  %1849 = vmatpush1.msra.mxu0 0.0
  %1850 = vmatprep.subr.mxu0 0.0
  %1851 = vmatpush1.msra.mxu0 0.0
  %1852 = vmatprep.subr.mxu0 0.0
  %1853 = vmatpush1.msra.mxu0 0.0
  %1854 = vmatprep.subr.mxu0 0.0
  %1855 = vmatpush1.msra.mxu0 0.0
  %1856 = vmatprep.subr.mxu0 0.0
  %1857 = vmatpush1.msra.mxu0 0.0
  %1858 = vmatprep.subr.mxu0 0.0
  %1859 = vmatpush1.msra.mxu0 0.0
  %1860 = vmatprep.subr.mxu0 0.0
  %1861 = vmatpush1.msra.mxu0 0.0
  %1862 = vmatprep.subr.mxu0 0.0
  %1863 = vmatpush1.msra.mxu0 0.0
  %1864 = vmatprep.subr.mxu0 0.0
  %1865 = vmatpush1.msra.mxu0 0.0
  %1866 = vmatprep.subr.mxu0 0.0
  %1867 = vmatpush1.msra.mxu0 0.0
  %1868 = vmatprep.subr.mxu0 0.0
  %1869 = vmatpush1.msra.mxu0 0.0
  %1870 = vmatprep.subr.mxu0 0.0
  %1871 = vmatpush1.msra.mxu0 0.0
  %1872 = vmatprep.subr.mxu0 0.0
  %1873 = vmatpush1.msra.mxu0 0.0
  %1874 = vmatprep.subr.mxu0 0.0
  %1875 = vmatpush1.msra.mxu0 0.0
  %1876 = vmatprep.subr.mxu0 0.0
  %1877 = vmatpush1.msra.mxu0 0.0
  %1878 = vmatprep.subr.mxu0 0.0
  %1879 = vmatpush1.msra.mxu0 0.0
  %1880 = vmatprep.subr.mxu0 0.0
  %1881 = vmatpush1.msra.mxu0 0.0
  %1882 = vmatprep.subr.mxu0 0.0
  %1883 = vmatpush1.msra.mxu0 0.0
  %1884 = vmatprep.subr.mxu0 0.0
  %1885 = vmatpush1.msra.mxu0 0.0
  %1886 = vmatprep.subr.mxu0 0.0
  %1887 = vmatpush1.msra.mxu0 0.0
  %1888 = vmatprep.subr.mxu0 0.0
  %1889 = vmatpush1.msra.mxu0 0.0
  %1890 = vmatprep.subr.mxu0 0.0
  %1891 = vmatpush1.msra.mxu0 0.0
  %1892 = vmatprep.subr.mxu0 0.0
  %1893 = vmatpush1.msra.mxu0 0.0
  %1894 = vmatprep.mubr.f32.mxu0 0.0
  %1895 = vmatmul.mubr.f32.gmra.mrb[0].mxu0 %v1828
  %v1896 = vpop.f32.mrb[0].mxu0
  %v1897 = vadd.f32 %v1824, %v1896
  %v1898 = vpop.f32.mrb[0].mxu0
  %1899 = vdwg.mxu0
  %v1900 = vld [vmem:[%s4 + $0x80] sm:$0xff]
  %v1901 = vld [vmem:[%s4 + $0x88] sm:$0xff]
  %v1902 = vld [vmem:[%s4 + $0x90] sm:$0xff]
  %v1903 = vld [vmem:[%s4 + $0x98] sm:$0xff]
  %v1904 = vld [vmem:[%s4 + $0xa0] sm:$0xff]
  %v1905 = vld [vmem:[%s4 + $0xa8] sm:$0xff]
  %v1906 = vld [vmem:[%s4 + $0xb0] sm:$0xff]
  %v1907 = vld [vmem:[%s4 + $0xb8] sm:$0xff]
  %v1909 = vsel %vm1753, %v1730, 0
  %1911 = vmatprep.subr.mxu0 0.0
  %1912 = vmatpush1.msra.mxu0 %v1900
  %1913 = vmatprep.subr.mxu0 0.0
  %1914 = vmatpush1.msra.mxu0 %v1901
  %1915 = vmatprep.subr.mxu0 0.0
  %1916 = vmatpush1.msra.mxu0 %v1902
  %1917 = vmatprep.subr.mxu0 0.0
  %1918 = vmatpush1.msra.mxu0 %v1903
  %1919 = vmatprep.subr.mxu0 0.0
  %1920 = vmatpush1.msra.mxu0 %v1904
  %1921 = vmatprep.subr.mxu0 0.0
  %1922 = vmatpush1.msra.mxu0 %v1905
  %1923 = vmatprep.subr.mxu0 0.0
  %1924 = vmatpush1.msra.mxu0 %v1906
  %1925 = vmatprep.subr.mxu0 0.0
  %1926 = vmatpush1.msra.mxu0 %v1907
  %1927 = vmatprep.subr.mxu0 0.0
  %1928 = vmatpush1.msra.mxu0 0.0
  %1929 = vmatprep.subr.mxu0 0.0
  %1930 = vmatpush1.msra.mxu0 0.0
  %1931 = vmatprep.subr.mxu0 0.0
  %1932 = vmatpush1.msra.mxu0 0.0
  %1933 = vmatprep.subr.mxu0 0.0
  %1934 = vmatpush1.msra.mxu0 0.0
  %1935 = vmatprep.subr.mxu0 0.0
  %1936 = vmatpush1.msra.mxu0 0.0
  %1937 = vmatprep.subr.mxu0 0.0
  %1938 = vmatpush1.msra.mxu0 0.0
  %1939 = vmatprep.subr.mxu0 0.0
  %1940 = vmatpush1.msra.mxu0 0.0
  %1941 = vmatprep.subr.mxu0 0.0
  %1942 = vmatpush1.msra.mxu0 0.0
  %1943 = vmatprep.subr.mxu0 0.0
  %1944 = vmatpush1.msra.mxu0 0.0
  %1945 = vmatprep.subr.mxu0 0.0
  %1946 = vmatpush1.msra.mxu0 0.0
  %1947 = vmatprep.subr.mxu0 0.0
  %1948 = vmatpush1.msra.mxu0 0.0
  %1949 = vmatprep.subr.mxu0 0.0
  %1950 = vmatpush1.msra.mxu0 0.0
  %1951 = vmatprep.subr.mxu0 0.0
  %1952 = vmatpush1.msra.mxu0 0.0
  %1953 = vmatprep.subr.mxu0 0.0
  %1954 = vmatpush1.msra.mxu0 0.0
  %1955 = vmatprep.subr.mxu0 0.0
  %1956 = vmatpush1.msra.mxu0 0.0
  %1957 = vmatprep.subr.mxu0 0.0
  %1958 = vmatpush1.msra.mxu0 0.0
  %1959 = vmatprep.subr.mxu0 0.0
  %1960 = vmatpush1.msra.mxu0 0.0
  %1961 = vmatprep.subr.mxu0 0.0
  %1962 = vmatpush1.msra.mxu0 0.0
  %1963 = vmatprep.subr.mxu0 0.0
  %1964 = vmatpush1.msra.mxu0 0.0
  %1965 = vmatprep.subr.mxu0 0.0
  %1966 = vmatpush1.msra.mxu0 0.0
  %1967 = vmatprep.subr.mxu0 0.0
  %1968 = vmatpush1.msra.mxu0 0.0
  %1969 = vmatprep.subr.mxu0 0.0
  %1970 = vmatpush1.msra.mxu0 0.0
  %1971 = vmatprep.subr.mxu0 0.0
  %1972 = vmatpush1.msra.mxu0 0.0
  %1973 = vmatprep.subr.mxu0 0.0
  %1974 = vmatpush1.msra.mxu0 0.0
  %1975 = vmatprep.mubr.f32.mxu0 0.0
  %1976 = vmatmul.mubr.f32.gmra.mrb[0].mxu0 %v1909
  %v1977 = vpop.f32.mrb[0].mxu0
  %v1978 = vadd.f32 0.0, %v1977
  %v1979 = vpop.f32.mrb[0].mxu0
  %1980 = vdwg.mxu0
  %v1981 = vadd.f32 %v1897, %v1978
  %v1982 = vld [vmem:[%s4 + $0xc0] sm:$0xff]
  %v1983 = vld [vmem:[%s4 + $0xc8] sm:$0xff]
  %v1984 = vld [vmem:[%s4 + $0xd0] sm:$0xff]
  %v1985 = vld [vmem:[%s4 + $0xd8] sm:$0xff]
  %v1986 = vld [vmem:[%s4 + $0xe0] sm:$0xff]
  %v1987 = vld [vmem:[%s4 + $0xe8] sm:$0xff]
  %v1988 = vld [vmem:[%s4 + $0xf0] sm:$0xff]
  %v1989 = vld [vmem:[%s4 + $0xf8] sm:$0xff]
  %v1991 = vsel %vm1753, %v1731, 0
  %1993 = vmatprep.subr.mxu0 0.0
  %1994 = vmatpush1.msra.mxu0 %v1982
  %1995 = vmatprep.subr.mxu0 0.0
  %1996 = vmatpush1.msra.mxu0 %v1983
  %1997 = vmatprep.subr.mxu0 0.0
  %1998 = vmatpush1.msra.mxu0 %v1984
  %1999 = vmatprep.subr.mxu0 0.0
  %2000 = vmatpush1.msra.mxu0 %v1985
  %2001 = vmatprep.subr.mxu0 0.0
  %2002 = vmatpush1.msra.mxu0 %v1986
  %2003 = vmatprep.subr.mxu0 0.0
  %2004 = vmatpush1.msra.mxu0 %v1987
  %2005 = vmatprep.subr.mxu0 0.0
  %2006 = vmatpush1.msra.mxu0 %v1988
  %2007 = vmatprep.subr.mxu0 0.0
  %2008 = vmatpush1.msra.mxu0 %v1989
  %2009 = vmatprep.subr.mxu0 0.0
  %2010 = vmatpush1.msra.mxu0 0.0
  %2011 = vmatprep.subr.mxu0 0.0
  %2012 = vmatpush1.msra.mxu0 0.0
  %2013 = vmatprep.subr.mxu0 0.0
  %2014 = vmatpush1.msra.mxu0 0.0
  %2015 = vmatprep.subr.mxu0 0.0
  %2016 = vmatpush1.msra.mxu0 0.0
  %2017 = vmatprep.subr.mxu0 0.0
  %2018 = vmatpush1.msra.mxu0 0.0
  %2019 = vmatprep.subr.mxu0 0.0
  %2020 = vmatpush1.msra.mxu0 0.0
  %2021 = vmatprep.subr.mxu0 0.0
  %2022 = vmatpush1.msra.mxu0 0.0
  %2023 = vmatprep.subr.mxu0 0.0
  %2024 = vmatpush1.msra.mxu0 0.0
  %2025 = vmatprep.subr.mxu0 0.0
  %2026 = vmatpush1.msra.mxu0 0.0
  %2027 = vmatprep.subr.mxu0 0.0
  %2028 = vmatpush1.msra.mxu0 0.0
  %2029 = vmatprep.subr.mxu0 0.0
  %2030 = vmatpush1.msra.mxu0 0.0
  %2031 = vmatprep.subr.mxu0 0.0
  %2032 = vmatpush1.msra.mxu0 0.0
  %2033 = vmatprep.subr.mxu0 0.0
  %2034 = vmatpush1.msra.mxu0 0.0
  %2035 = vmatprep.subr.mxu0 0.0
  %2036 = vmatpush1.msra.mxu0 0.0
  %2037 = vmatprep.subr.mxu0 0.0
  %2038 = vmatpush1.msra.mxu0 0.0
  %2039 = vmatprep.subr.mxu0 0.0
  %2040 = vmatpush1.msra.mxu0 0.0
  %2041 = vmatprep.subr.mxu0 0.0
  %2042 = vmatpush1.msra.mxu0 0.0
  %2043 = vmatprep.subr.mxu0 0.0
  %2044 = vmatpush1.msra.mxu0 0.0
  %2045 = vmatprep.subr.mxu0 0.0
  %2046 = vmatpush1.msra.mxu0 0.0
  %2047 = vmatprep.subr.mxu0 0.0
  %2048 = vmatpush1.msra.mxu0 0.0
  %2049 = vmatprep.subr.mxu0 0.0
  %2050 = vmatpush1.msra.mxu0 0.0
  %2051 = vmatprep.subr.mxu0 0.0
  %2052 = vmatpush1.msra.mxu0 0.0
  %2053 = vmatprep.subr.mxu0 0.0
  %2054 = vmatpush1.msra.mxu0 0.0
  %2055 = vmatprep.subr.mxu0 0.0
  %2056 = vmatpush1.msra.mxu0 0.0
  %2057 = vmatprep.mubr.f32.mxu0 0.0
  %2058 = vmatmul.mubr.f32.gmra.mrb[0].mxu0 %v1991
  %v2059 = vpop.f32.mrb[0].mxu0
  %v2060 = vadd.f32 0.0, %v2059
  %v2061 = vpop.f32.mrb[0].mxu0
  %2062 = vdwg.mxu0
  %v2063 = vadd.f32 %v1981, %v2060
  %v2064 = vld [vmem:[%s4 + $0x100] sm:$0xff]
  %v2065 = vld [vmem:[%s4 + $0x108] sm:$0xff]
  %v2066 = vld [vmem:[%s4 + $0x110] sm:$0xff]
  %v2067 = vld [vmem:[%s4 + $0x118] sm:$0xff]
  %v2068 = vld [vmem:[%s4 + $0x120] sm:$0xff]
  %v2069 = vld [vmem:[%s4 + $0x128] sm:$0xff]
  %v2070 = vld [vmem:[%s4 + $0x130] sm:$0xff]
  %v2071 = vld [vmem:[%s4 + $0x138] sm:$0xff]
  %v2073 = vsel %vm1753, %v1732, 0
  %2075 = vmatprep.subr.mxu0 0.0
  %2076 = vmatpush1.msra.mxu0 %v2064
  %2077 = vmatprep.subr.mxu0 0.0
  %2078 = vmatpush1.msra.mxu0 %v2065
  %2079 = vmatprep.subr.mxu0 0.0
  %2080 = vmatpush1.msra.mxu0 %v2066
  %2081 = vmatprep.subr.mxu0 0.0
  %2082 = vmatpush1.msra.mxu0 %v2067
  %2083 = vmatprep.subr.mxu0 0.0
  %2084 = vmatpush1.msra.mxu0 %v2068
  %2085 = vmatprep.subr.mxu0 0.0
  %2086 = vmatpush1.msra.mxu0 %v2069
  %2087 = vmatprep.subr.mxu0 0.0
  %2088 = vmatpush1.msra.mxu0 %v2070
  %2089 = vmatprep.subr.mxu0 0.0
  %2090 = vmatpush1.msra.mxu0 %v2071
  %2091 = vmatprep.subr.mxu0 0.0
  %2092 = vmatpush1.msra.mxu0 0.0
  %2093 = vmatprep.subr.mxu0 0.0
  %2094 = vmatpush1.msra.mxu0 0.0
  %2095 = vmatprep.subr.mxu0 0.0
  %2096 = vmatpush1.msra.mxu0 0.0
  %2097 = vmatprep.subr.mxu0 0.0
  %2098 = vmatpush1.msra.mxu0 0.0
  %2099 = vmatprep.subr.mxu0 0.0
  %2100 = vmatpush1.msra.mxu0 0.0
  %2101 = vmatprep.subr.mxu0 0.0
  %2102 = vmatpush1.msra.mxu0 0.0
  %2103 = vmatprep.subr.mxu0 0.0
  %2104 = vmatpush1.msra.mxu0 0.0
  %2105 = vmatprep.subr.mxu0 0.0
  %2106 = vmatpush1.msra.mxu0 0.0
  %2107 = vmatprep.subr.mxu0 0.0
  %2108 = vmatpush1.msra.mxu0 0.0
  %2109 = vmatprep.subr.mxu0 0.0
  %2110 = vmatpush1.msra.mxu0 0.0
  %2111 = vmatprep.subr.mxu0 0.0
  %2112 = vmatpush1.msra.mxu0 0.0
  %2113 = vmatprep.subr.mxu0 0.0
  %2114 = vmatpush1.msra.mxu0 0.0
  %2115 = vmatprep.subr.mxu0 0.0
  %2116 = vmatpush1.msra.mxu0 0.0
  %2117 = vmatprep.subr.mxu0 0.0
  %2118 = vmatpush1.msra.mxu0 0.0
  %2119 = vmatprep.subr.mxu0 0.0
  %2120 = vmatpush1.msra.mxu0 0.0
  %2121 = vmatprep.subr.mxu0 0.0
  %2122 = vmatpush1.msra.mxu0 0.0
  %2123 = vmatprep.subr.mxu0 0.0
  %2124 = vmatpush1.msra.mxu0 0.0
  %2125 = vmatprep.subr.mxu0 0.0
  %2126 = vmatpush1.msra.mxu0 0.0
  %2127 = vmatprep.subr.mxu0 0.0
  %2128 = vmatpush1.msra.mxu0 0.0
  %2129 = vmatprep.subr.mxu0 0.0
  %2130 = vmatpush1.msra.mxu0 0.0
  %2131 = vmatprep.subr.mxu0 0.0
  %2132 = vmatpush1.msra.mxu0 0.0
  %2133 = vmatprep.subr.mxu0 0.0
  %2134 = vmatpush1.msra.mxu0 0.0
  %2135 = vmatprep.subr.mxu0 0.0
  %2136 = vmatpush1.msra.mxu0 0.0
  %2137 = vmatprep.subr.mxu0 0.0
  %2138 = vmatpush1.msra.mxu0 0.0
  %2139 = vmatprep.mubr.f32.mxu0 0.0
  %2140 = vmatmul.mubr.f32.gmra.mrb[0].mxu0 %v2073
  %v2141 = vpop.f32.mrb[0].mxu0
  %v2142 = vadd.f32 0.0, %v2141
  %v2143 = vpop.f32.mrb[0].mxu0
  %2144 = vdwg.mxu0
  %v2145 = vadd.f32 %v2063, %v2142
  %v2146 = vld [vmem:[%s4 + $0x140] sm:$0xff]
  %v2147 = vld [vmem:[%s4 + $0x148] sm:$0xff]
  %v2148 = vld [vmem:[%s4 + $0x150] sm:$0xff]
  %v2149 = vld [vmem:[%s4 + $0x158] sm:$0xff]
  %v2150 = vld [vmem:[%s4 + $0x160] sm:$0xff]
  %v2151 = vld [vmem:[%s4 + $0x168] sm:$0xff]
  %v2152 = vld [vmem:[%s4 + $0x170] sm:$0xff]
  %v2153 = vld [vmem:[%s4 + $0x178] sm:$0xff]
  %v2155 = vsel %vm1753, %v1733, 0
  %2157 = vmatprep.subr.mxu0 0.0
  %2158 = vmatpush1.msra.mxu0 %v2146
  %2159 = vmatprep.subr.mxu0 0.0
  %2160 = vmatpush1.msra.mxu0 %v2147
  %2161 = vmatprep.subr.mxu0 0.0
  %2162 = vmatpush1.msra.mxu0 %v2148
  %2163 = vmatprep.subr.mxu0 0.0
  %2164 = vmatpush1.msra.mxu0 %v2149
  %2165 = vmatprep.subr.mxu0 0.0
  %2166 = vmatpush1.msra.mxu0 %v2150
  %2167 = vmatprep.subr.mxu0 0.0
  %2168 = vmatpush1.msra.mxu0 %v2151
  %2169 = vmatprep.subr.mxu0 0.0
  %2170 = vmatpush1.msra.mxu0 %v2152
  %2171 = vmatprep.subr.mxu0 0.0
  %2172 = vmatpush1.msra.mxu0 %v2153
  %2173 = vmatprep.subr.mxu0 0.0
  %2174 = vmatpush1.msra.mxu0 0.0
  %2175 = vmatprep.subr.mxu0 0.0
  %2176 = vmatpush1.msra.mxu0 0.0
  %2177 = vmatprep.subr.mxu0 0.0
  %2178 = vmatpush1.msra.mxu0 0.0
  %2179 = vmatprep.subr.mxu0 0.0
  %2180 = vmatpush1.msra.mxu0 0.0
  %2181 = vmatprep.subr.mxu0 0.0
  %2182 = vmatpush1.msra.mxu0 0.0
  %2183 = vmatprep.subr.mxu0 0.0
  %2184 = vmatpush1.msra.mxu0 0.0
  %2185 = vmatprep.subr.mxu0 0.0
  %2186 = vmatpush1.msra.mxu0 0.0
  %2187 = vmatprep.subr.mxu0 0.0
  %2188 = vmatpush1.msra.mxu0 0.0
  %2189 = vmatprep.subr.mxu0 0.0
  %2190 = vmatpush1.msra.mxu0 0.0
  %2191 = vmatprep.subr.mxu0 0.0
  %2192 = vmatpush1.msra.mxu0 0.0
  %2193 = vmatprep.subr.mxu0 0.0
  %2194 = vmatpush1.msra.mxu0 0.0
  %2195 = vmatprep.subr.mxu0 0.0
  %2196 = vmatpush1.msra.mxu0 0.0
  %2197 = vmatprep.subr.mxu0 0.0
  %2198 = vmatpush1.msra.mxu0 0.0
  %2199 = vmatprep.subr.mxu0 0.0
  %2200 = vmatpush1.msra.mxu0 0.0
  %2201 = vmatprep.subr.mxu0 0.0
  %2202 = vmatpush1.msra.mxu0 0.0
  %2203 = vmatprep.subr.mxu0 0.0
  %2204 = vmatpush1.msra.mxu0 0.0
  %2205 = vmatprep.subr.mxu0 0.0
  %2206 = vmatpush1.msra.mxu0 0.0
  %2207 = vmatprep.subr.mxu0 0.0
  %2208 = vmatpush1.msra.mxu0 0.0
  %2209 = vmatprep.subr.mxu0 0.0
  %2210 = vmatpush1.msra.mxu0 0.0
  %2211 = vmatprep.subr.mxu0 0.0
  %2212 = vmatpush1.msra.mxu0 0.0
  %2213 = vmatprep.subr.mxu0 0.0
  %2214 = vmatpush1.msra.mxu0 0.0
  %2215 = vmatprep.subr.mxu0 0.0
  %2216 = vmatpush1.msra.mxu0 0.0
  %2217 = vmatprep.subr.mxu0 0.0
  %2218 = vmatpush1.msra.mxu0 0.0
  %2219 = vmatprep.subr.mxu0 0.0
  %2220 = vmatpush1.msra.mxu0 0.0
  %2221 = vmatprep.mubr.f32.mxu0 0.0
  %2222 = vmatmul.mubr.f32.gmra.mrb[0].mxu0 %v2155
  %v2223 = vpop.f32.mrb[0].mxu0
  %v2224 = vadd.f32 0.0, %v2223
  %v2225 = vpop.f32.mrb[0].mxu0
  %2226 = vdwg.mxu0
  %v2227 = vadd.f32 %v2145, %v2224
  %v2228 = vld [vmem:[%s4 + $0x180] sm:$0xff]
  %v2229 = vld [vmem:[%s4 + $0x188] sm:$0xff]
  %v2230 = vld [vmem:[%s4 + $0x190] sm:$0xff]
  %v2231 = vld [vmem:[%s4 + $0x198] sm:$0xff]
  %v2232 = vld [vmem:[%s4 + $0x1a0] sm:$0xff]
  %v2233 = vld [vmem:[%s4 + $0x1a8] sm:$0xff]
  %v2234 = vld [vmem:[%s4 + $0x1b0] sm:$0xff]
  %v2235 = vld [vmem:[%s4 + $0x1b8] sm:$0xff]
  %v2237 = vsel %vm1753, %v1734, 0
  %2239 = vmatprep.subr.mxu0 0.0
  %2240 = vmatpush1.msra.mxu0 %v2228
  %2241 = vmatprep.subr.mxu0 0.0
  %2242 = vmatpush1.msra.mxu0 %v2229
  %2243 = vmatprep.subr.mxu0 0.0
  %2244 = vmatpush1.msra.mxu0 %v2230
  %2245 = vmatprep.subr.mxu0 0.0
  %2246 = vmatpush1.msra.mxu0 %v2231
  %2247 = vmatprep.subr.mxu0 0.0
  %2248 = vmatpush1.msra.mxu0 %v2232
  %2249 = vmatprep.subr.mxu0 0.0
  %2250 = vmatpush1.msra.mxu0 %v2233
  %2251 = vmatprep.subr.mxu0 0.0
  %2252 = vmatpush1.msra.mxu0 %v2234
  %2253 = vmatprep.subr.mxu0 0.0
  %2254 = vmatpush1.msra.mxu0 %v2235
  %2255 = vmatprep.subr.mxu0 0.0
  %2256 = vmatpush1.msra.mxu0 0.0
  %2257 = vmatprep.subr.mxu0 0.0
  %2258 = vmatpush1.msra.mxu0 0.0
  %2259 = vmatprep.subr.mxu0 0.0
  %2260 = vmatpush1.msra.mxu0 0.0
  %2261 = vmatprep.subr.mxu0 0.0
  %2262 = vmatpush1.msra.mxu0 0.0
  %2263 = vmatprep.subr.mxu0 0.0
  %2264 = vmatpush1.msra.mxu0 0.0
  %2265 = vmatprep.subr.mxu0 0.0
  %2266 = vmatpush1.msra.mxu0 0.0
  %2267 = vmatprep.subr.mxu0 0.0
  %2268 = vmatpush1.msra.mxu0 0.0
  %2269 = vmatprep.subr.mxu0 0.0
  %2270 = vmatpush1.msra.mxu0 0.0
  %2271 = vmatprep.subr.mxu0 0.0
  %2272 = vmatpush1.msra.mxu0 0.0
  %2273 = vmatprep.subr.mxu0 0.0
  %2274 = vmatpush1.msra.mxu0 0.0
  %2275 = vmatprep.subr.mxu0 0.0
  %2276 = vmatpush1.msra.mxu0 0.0
  %2277 = vmatprep.subr.mxu0 0.0
  %2278 = vmatpush1.msra.mxu0 0.0
  %2279 = vmatprep.subr.mxu0 0.0
  %2280 = vmatpush1.msra.mxu0 0.0
  %2281 = vmatprep.subr.mxu0 0.0
  %2282 = vmatpush1.msra.mxu0 0.0
  %2283 = vmatprep.subr.mxu0 0.0
  %2284 = vmatpush1.msra.mxu0 0.0
  %2285 = vmatprep.subr.mxu0 0.0
  %2286 = vmatpush1.msra.mxu0 0.0
  %2287 = vmatprep.subr.mxu0 0.0
  %2288 = vmatpush1.msra.mxu0 0.0
  %2289 = vmatprep.subr.mxu0 0.0
  %2290 = vmatpush1.msra.mxu0 0.0
  %2291 = vmatprep.subr.mxu0 0.0
  %2292 = vmatpush1.msra.mxu0 0.0
  %2293 = vmatprep.subr.mxu0 0.0
  %2294 = vmatpush1.msra.mxu0 0.0
  %2295 = vmatprep.subr.mxu0 0.0
  %2296 = vmatpush1.msra.mxu0 0.0
  %2297 = vmatprep.subr.mxu0 0.0
  %2298 = vmatpush1.msra.mxu0 0.0
  %2299 = vmatprep.subr.mxu0 0.0
  %2300 = vmatpush1.msra.mxu0 0.0
  %2301 = vmatprep.subr.mxu0 0.0
  %2302 = vmatpush1.msra.mxu0 0.0
  %2303 = vmatprep.mubr.f32.mxu0 0.0
  %2304 = vmatmul.mubr.f32.gmra.mrb[0].mxu0 %v2237
  %v2305 = vpop.f32.mrb[0].mxu0
  %v2306 = vadd.f32 0.0, %v2305
  %v2307 = vpop.f32.mrb[0].mxu0
  %2308 = vdwg.mxu0
  %v2309 = vadd.f32 %v2227, %v2306
  %v2310 = vld [vmem:[%s4 + $0x1c0] sm:$0xff]
  %v2311 = vld [vmem:[%s4 + $0x1c8] sm:$0xff]
  %v2312 = vld [vmem:[%s4 + $0x1d0] sm:$0xff]
  %v2313 = vld [vmem:[%s4 + $0x1d8] sm:$0xff]
  %v2314 = vld [vmem:[%s4 + $0x1e0] sm:$0xff]
  %v2315 = vld [vmem:[%s4 + $0x1e8] sm:$0xff]
  %v2316 = vld [vmem:[%s4 + $0x1f0] sm:$0xff]
  %v2317 = vld [vmem:[%s4 + $0x1f8] sm:$0xff]
  %v2319 = vsel %vm1753, %v1735, 0
  %2321 = vmatprep.subr.mxu0 0.0
  %2322 = vmatpush1.msra.mxu0 %v2310
  %2323 = vmatprep.subr.mxu0 0.0
  %2324 = vmatpush1.msra.mxu0 %v2311
  %2325 = vmatprep.subr.mxu0 0.0
  %2326 = vmatpush1.msra.mxu0 %v2312
  %2327 = vmatprep.subr.mxu0 0.0
  %2328 = vmatpush1.msra.mxu0 %v2313
  %2329 = vmatprep.subr.mxu0 0.0
  %2330 = vmatpush1.msra.mxu0 %v2314
  %2331 = vmatprep.subr.mxu0 0.0
  %2332 = vmatpush1.msra.mxu0 %v2315
  %2333 = vmatprep.subr.mxu0 0.0
  %2334 = vmatpush1.msra.mxu0 %v2316
  %2335 = vmatprep.subr.mxu0 0.0
  %2336 = vmatpush1.msra.mxu0 %v2317
  %2337 = vmatprep.subr.mxu0 0.0
  %2338 = vmatpush1.msra.mxu0 0.0
  %2339 = vmatprep.subr.mxu0 0.0
  %2340 = vmatpush1.msra.mxu0 0.0
  %2341 = vmatprep.subr.mxu0 0.0
  %2342 = vmatpush1.msra.mxu0 0.0
  %2343 = vmatprep.subr.mxu0 0.0
  %2344 = vmatpush1.msra.mxu0 0.0
  %2345 = vmatprep.subr.mxu0 0.0
  %2346 = vmatpush1.msra.mxu0 0.0
  %2347 = vmatprep.subr.mxu0 0.0
  %2348 = vmatpush1.msra.mxu0 0.0
  %2349 = vmatprep.subr.mxu0 0.0
  %2350 = vmatpush1.msra.mxu0 0.0
  %2351 = vmatprep.subr.mxu0 0.0
  %2352 = vmatpush1.msra.mxu0 0.0
  %2353 = vmatprep.subr.mxu0 0.0
  %2354 = vmatpush1.msra.mxu0 0.0
  %2355 = vmatprep.subr.mxu0 0.0
  %2356 = vmatpush1.msra.mxu0 0.0
  %2357 = vmatprep.subr.mxu0 0.0
  %2358 = vmatpush1.msra.mxu0 0.0
  %2359 = vmatprep.subr.mxu0 0.0
  %2360 = vmatpush1.msra.mxu0 0.0
  %2361 = vmatprep.subr.mxu0 0.0
  %2362 = vmatpush1.msra.mxu0 0.0
  %2363 = vmatprep.subr.mxu0 0.0
  %2364 = vmatpush1.msra.mxu0 0.0
  %2365 = vmatprep.subr.mxu0 0.0
  %2366 = vmatpush1.msra.mxu0 0.0
  %2367 = vmatprep.subr.mxu0 0.0
  %2368 = vmatpush1.msra.mxu0 0.0
  %2369 = vmatprep.subr.mxu0 0.0
  %2370 = vmatpush1.msra.mxu0 0.0
  %2371 = vmatprep.subr.mxu0 0.0
  %2372 = vmatpush1.msra.mxu0 0.0
  %2373 = vmatprep.subr.mxu0 0.0
  %2374 = vmatpush1.msra.mxu0 0.0
  %2375 = vmatprep.subr.mxu0 0.0
  %2376 = vmatpush1.msra.mxu0 0.0
  %2377 = vmatprep.subr.mxu0 0.0
  %2378 = vmatpush1.msra.mxu0 0.0
  %2379 = vmatprep.subr.mxu0 0.0
  %2380 = vmatpush1.msra.mxu0 0.0
  %2381 = vmatprep.subr.mxu0 0.0
  %2382 = vmatpush1.msra.mxu0 0.0
  %2383 = vmatprep.subr.mxu0 0.0
  %2384 = vmatpush1.msra.mxu0 0.0
  %2385 = vmatprep.mubr.f32.mxu0 0.0
  %2386 = vmatmul.mubr.f32.gmra.mrb[0].mxu0 %v2319
  %v2387 = vpop.f32.mrb[0].mxu0
  %v2388 = vadd.f32 0.0, %v2387
  %v2389 = vpop.f32.mrb[0].mxu0
  %2390 = vdwg.mxu0
  %v2391 = vadd.f32 %v2309, %v2388
  %v2392 = vld [vmem:[%s4 + $0x200] sm:$0xff]
  %v2393 = vld [vmem:[%s4 + $0x208] sm:$0xff]
  %v2394 = vld [vmem:[%s4 + $0x210] sm:$0xff]
  %v2395 = vld [vmem:[%s4 + $0x218] sm:$0xff]
  %v2396 = vld [vmem:[%s4 + $0x220] sm:$0xff]
  %v2397 = vld [vmem:[%s4 + $0x228] sm:$0xff]
  %v2398 = vld [vmem:[%s4 + $0x230] sm:$0xff]
  %v2399 = vld [vmem:[%s4 + $0x238] sm:$0xff]
  %v2401 = vsel %vm1753, %v1736, 0
  %2403 = vmatprep.subr.mxu0 0.0
  %2404 = vmatpush1.msra.mxu0 %v2392
  %2405 = vmatprep.subr.mxu0 0.0
  %2406 = vmatpush1.msra.mxu0 %v2393
  %2407 = vmatprep.subr.mxu0 0.0
  %2408 = vmatpush1.msra.mxu0 %v2394
  %2409 = vmatprep.subr.mxu0 0.0
  %2410 = vmatpush1.msra.mxu0 %v2395
  %2411 = vmatprep.subr.mxu0 0.0
  %2412 = vmatpush1.msra.mxu0 %v2396
  %2413 = vmatprep.subr.mxu0 0.0
  %2414 = vmatpush1.msra.mxu0 %v2397
  %2415 = vmatprep.subr.mxu0 0.0
  %2416 = vmatpush1.msra.mxu0 %v2398
  %2417 = vmatprep.subr.mxu0 0.0
  %2418 = vmatpush1.msra.mxu0 %v2399
  %2419 = vmatprep.subr.mxu0 0.0
  %2420 = vmatpush1.msra.mxu0 0.0
  %2421 = vmatprep.subr.mxu0 0.0
  %2422 = vmatpush1.msra.mxu0 0.0
  %2423 = vmatprep.subr.mxu0 0.0
  %2424 = vmatpush1.msra.mxu0 0.0
  %2425 = vmatprep.subr.mxu0 0.0
  %2426 = vmatpush1.msra.mxu0 0.0
  %2427 = vmatprep.subr.mxu0 0.0
  %2428 = vmatpush1.msra.mxu0 0.0
  %2429 = vmatprep.subr.mxu0 0.0
  %2430 = vmatpush1.msra.mxu0 0.0
  %2431 = vmatprep.subr.mxu0 0.0
  %2432 = vmatpush1.msra.mxu0 0.0
  %2433 = vmatprep.subr.mxu0 0.0
  %2434 = vmatpush1.msra.mxu0 0.0
  %2435 = vmatprep.subr.mxu0 0.0
  %2436 = vmatpush1.msra.mxu0 0.0
  %2437 = vmatprep.subr.mxu0 0.0
  %2438 = vmatpush1.msra.mxu0 0.0
  %2439 = vmatprep.subr.mxu0 0.0
  %2440 = vmatpush1.msra.mxu0 0.0
  %2441 = vmatprep.subr.mxu0 0.0
  %2442 = vmatpush1.msra.mxu0 0.0
  %2443 = vmatprep.subr.mxu0 0.0
  %2444 = vmatpush1.msra.mxu0 0.0
  %2445 = vmatprep.subr.mxu0 0.0
  %2446 = vmatpush1.msra.mxu0 0.0
  %2447 = vmatprep.subr.mxu0 0.0
  %2448 = vmatpush1.msra.mxu0 0.0
  %2449 = vmatprep.subr.mxu0 0.0
  %2450 = vmatpush1.msra.mxu0 0.0
  %2451 = vmatprep.subr.mxu0 0.0
  %2452 = vmatpush1.msra.mxu0 0.0
  %2453 = vmatprep.subr.mxu0 0.0
  %2454 = vmatpush1.msra.mxu0 0.0
  %2455 = vmatprep.subr.mxu0 0.0
  %2456 = vmatpush1.msra.mxu0 0.0
  %2457 = vmatprep.subr.mxu0 0.0
  %2458 = vmatpush1.msra.mxu0 0.0
  %2459 = vmatprep.subr.mxu0 0.0
  %2460 = vmatpush1.msra.mxu0 0.0
  %2461 = vmatprep.subr.mxu0 0.0
  %2462 = vmatpush1.msra.mxu0 0.0
  %2463 = vmatprep.subr.mxu0 0.0
  %2464 = vmatpush1.msra.mxu0 0.0
  %2465 = vmatprep.subr.mxu0 0.0
  %2466 = vmatpush1.msra.mxu0 0.0
  %2467 = vmatprep.mubr.f32.mxu0 0.0
  %2468 = vmatmul.mubr.f32.gmra.mrb[0].mxu0 %v2401
  %v2469 = vpop.f32.mrb[0].mxu0
  %v2470 = vadd.f32 0.0, %v2469
  %v2471 = vpop.f32.mrb[0].mxu0
  %2472 = vdwg.mxu0
  %v2473 = vadd.f32 %v2391, %v2470
  %v2474 = vld [vmem:[%s5] sm:$0x1]
  %v2476 = vlaneseq
  %v2477 = vshrl.u32 %v2476, 7
  %v2478 = vsub.s32 0, %v2477
  %v2479 = vrot.slane %v2474, %v2478
  %v2481 = vadd.f32 %v2473, %v2479
  %v2482 = vmax.f32 %v2481, 0.0
  %v2483 = vld [vmem:[%s6] sm:$0xff]
  %v2484 = vld [vmem:[%s6 + $0x8] sm:$0x3]
  %v2485 = vld [vmem:[%s7] sm:$0x1]
  %v2487 = vlaneseq
  %v2488 = vshrl.u32 %v2487, 7
  %v2489 = vsub.s32 0, %v2488
  %v2490 = vrot.slane %v2485, %v2489
  %vm2492 = vcmask 80896
  %v2494 = vsel %vm2492, %v2482, 0
  %vm2496 = vcmask 1041408
  %v2498 = vsel %vm2496, %v2484, 0
  %2500 = vmatprep.subr.mxu0 0.0
  %2501 = vmatpush1.msra.mxu0 %v2483
  %2502 = vmatprep.subr.mxu0 0.0
  %2503 = vmatpush1.msra.mxu0 %v2498
  %2504 = vmatprep.subr.mxu0 0.0
  %2505 = vmatpush1.msra.mxu0 0.0
  %2506 = vmatprep.subr.mxu0 0.0
  %2507 = vmatpush1.msra.mxu0 0.0
  %2508 = vmatprep.subr.mxu0 0.0
  %2509 = vmatpush1.msra.mxu0 0.0
  %2510 = vmatprep.subr.mxu0 0.0
  %2511 = vmatpush1.msra.mxu0 0.0
  %2512 = vmatprep.subr.mxu0 0.0
  %2513 = vmatpush1.msra.mxu0 0.0
  %2514 = vmatprep.subr.mxu0 0.0
  %2515 = vmatpush1.msra.mxu0 0.0
  %2516 = vmatprep.subr.mxu0 0.0
  %2517 = vmatpush1.msra.mxu0 0.0
  %2518 = vmatprep.subr.mxu0 0.0
  %2519 = vmatpush1.msra.mxu0 0.0
  %2520 = vmatprep.subr.mxu0 0.0
  %2521 = vmatpush1.msra.mxu0 0.0
  %2522 = vmatprep.subr.mxu0 0.0
  %2523 = vmatpush1.msra.mxu0 0.0
  %2524 = vmatprep.subr.mxu0 0.0
  %2525 = vmatpush1.msra.mxu0 0.0
  %2526 = vmatprep.subr.mxu0 0.0
  %2527 = vmatpush1.msra.mxu0 0.0
  %2528 = vmatprep.subr.mxu0 0.0
  %2529 = vmatpush1.msra.mxu0 0.0
  %2530 = vmatprep.subr.mxu0 0.0
  %2531 = vmatpush1.msra.mxu0 0.0
  %2532 = vmatprep.subr.mxu0 0.0
  %2533 = vmatpush1.msra.mxu0 0.0
  %2534 = vmatprep.subr.mxu0 0.0
  %2535 = vmatpush1.msra.mxu0 0.0
  %2536 = vmatprep.subr.mxu0 0.0
  %2537 = vmatpush1.msra.mxu0 0.0
  %2538 = vmatprep.subr.mxu0 0.0
  %2539 = vmatpush1.msra.mxu0 0.0
  %2540 = vmatprep.subr.mxu0 0.0
  %2541 = vmatpush1.msra.mxu0 0.0
  %2542 = vmatprep.subr.mxu0 0.0
  %2543 = vmatpush1.msra.mxu0 0.0
  %2544 = vmatprep.subr.mxu0 0.0
  %2545 = vmatpush1.msra.mxu0 0.0
  %2546 = vmatprep.subr.mxu0 0.0
  %2547 = vmatpush1.msra.mxu0 0.0
  %2548 = vmatprep.subr.mxu0 0.0
  %2549 = vmatpush1.msra.mxu0 0.0
  %2550 = vmatprep.subr.mxu0 0.0
  %2551 = vmatpush1.msra.mxu0 0.0
  %2552 = vmatprep.subr.mxu0 0.0
  %2553 = vmatpush1.msra.mxu0 0.0
  %2554 = vmatprep.subr.mxu0 0.0
  %2555 = vmatpush1.msra.mxu0 0.0
  %2556 = vmatprep.subr.mxu0 0.0
  %2557 = vmatpush1.msra.mxu0 0.0
  %2558 = vmatprep.subr.mxu0 0.0
  %2559 = vmatpush1.msra.mxu0 0.0
  %2560 = vmatprep.subr.mxu0 0.0
  %2561 = vmatpush1.msra.mxu0 0.0
  %2562 = vmatprep.subr.mxu0 0.0
  %2563 = vmatpush1.msra.mxu0 0.0
  %2564 = vmatprep.mubr.f32.mxu0 0.0
  %2565 = vmatmul.mubr.f32.gmra.mrb[0].mxu0 %v2494
  %v2566 = vpop.f32.mrb[0].mxu0
  %v2567 = vadd.f32 %v2490, %v2566
  %v2568 = vpop.f32.mrb[0].mxu0
  %2569 = vdwg.mxu0
  %vm2570 = vcmask 15360
  %2571 = vst.msk [vmem:[%s8] sm:$0xff] %vm2570, %v2567
  // Predicated region
  $region34: #{_lambda_.5} parent=0 // pred_check
    _
  $region35: #{_lambda_.5} parent=0 // pred_check_branch
    %2573 = sbr.rel (0) target = $region37
  $region36: #{_lambda_.5} parent=0 // pred_region
    _
  $region37: #{_lambda_.5} parent=0 // pred_fallthru
    _
  // Predicated region
  $region38: #{_lambda_.5} parent=0 // pred_check
    _
  $region39: #{_lambda_.5} parent=0 // pred_check_branch
    %2575 = sbr.rel (0) target = $region41
  $region40: #{_lambda_.5} parent=0 // pred_region
    _
  $region41: #{_lambda_.5} parent=0 // pred_fallthru
    _

</llo_original>
